<compile_context>
chip_gen: v7x
topology: tpu7x:2x2x1
jax: 0.10.0
libtpu: 0.0.40
codegen_flags: <defaults>
</compile_context>

<pallas_src>
import functools

import jax
import jax.numpy as jnp
from jax import lax
from jax.experimental import pallas as pl
from jax.experimental.pallas import tpu as pltpu


# --------------------------------------------------------------------------
# Fused Pallas kernel
# --------------------------------------------------------------------------
def _lm_fused_kernel(x_ref, h0_ref, c0_ref,
                     wih0_ref, whh0_ref, b0_ref,
                     wih1_ref, whh1_ref, b1_ref,
                     wih2_ref, whh2_ref, b2_ref,
                     fcw_ref, fcb_ref,
                     pred_ref, hN_ref, cN_ref,
                     h_sc, c_sc, gx_sc, af_sc, ab_sc, bf_sc, bb_sc):
    """Whole LanguageModel forward in one kernel.

    x_ref:   (T*B, E)    time-major flattened embedded input (row = t*B + b)
    h0/c0:   (6, B, H)   initial states, layer-major / direction-minor
    wihL:    (D_L, 8H)   [W_ih_fwd^T | W_ih_bwd^T]   (gate order i,f,g,o)
    whhL:    (H, 8H)     [W_hh_fwd^T | W_hh_bwd^T]
    bL:      (1, 8H)     [b_fwd | b_bwd]  (b_ih + b_hh)
    fcw:     (2H, Vpad)  FC weight^T, zero-padded to a 128-lane multiple
    fcb:     (1, Vpad)   FC bias, padded columns = -1e30
    pred:    (T*B, Vpad) log-probs (lane-dense; sliced in the wrapper)
    hN/cN:   (6, B, H)   final hidden / cell states
    h_sc/c_sc: (2B, H)   stacked state carry (rows 0:B fwd, B:2B bwd)
    gx_sc:   (T*B, 8H)   bulk-precomputed input gate contributions (bias folded)
    af/ab/bf/bb: (T*B, H) ping-pong per-direction activation buffers
    """
    TB, _ = x_ref.shape
    _, B, H = h0_ref.shape
    T = TB // B
    B2 = 2 * B
    G = 4 * H

    # Hoisted once: row mask selecting fwd-weight columns for rows < B.
    row = lax.broadcasted_iota(jnp.int32, (B2, G), 0)
    is_fwd = row < B

    def bulk_input_proj_l0(wih_ref, b_ref):
        # Layer 0: ONE tall matmul over all T*B rows for both directions,
        # bias folded in (replaces T tiny per-step MXU pushes).
        gx_sc[...] = (jnp.dot(x_ref[...], wih_ref[...],
                              preferred_element_type=jnp.float32)
                      + b_ref[...])

    def bulk_input_proj(f_buf, b_buf, wih_ref, b_ref):
        # Layers 1/2: prev layer's fwd/bwd outputs hit the two row halves of
        # W_ih separately -> no lane concat anywhere, still bulk matmuls.
        w = wih_ref[...]                                     # (2H, 8H)
        gx_sc[...] = (jnp.dot(f_buf[...], w[0:H, :],
                              preferred_element_type=jnp.float32)
                      + jnp.dot(b_buf[...], w[H:2 * H, :],
                                preferred_element_type=jnp.float32)
                      + b_ref[...])

    def run_recurrence(layer, out_f, out_b, whh_ref):
        # Stacked initial state: rows [0:B] forward, rows [B:2B] backward.
        h_sc[0:B, :] = h0_ref[2 * layer].astype(jnp.float32)
        h_sc[B:B2, :] = h0_ref[2 * layer + 1].astype(jnp.float32)
        c_sc[0:B, :] = c0_ref[2 * layer].astype(jnp.float32)
        c_sc[B:B2, :] = c0_ref[2 * layer + 1].astype(jnp.float32)

        whh = whh_ref[...]                                   # (H, 8H) in VMEM

        def step(t, carry):
            rt = T - 1 - t
            # Only the hidden projection remains inside the time loop.
            hp = jnp.dot(h_sc[...], whh, preferred_element_type=jnp.float32)
            # fwd rows use cols [0:4H], bwd rows use [4H:8H] (minor at H=32;
            # a block-diagonal W_hh would remove the discarded half).
            h_gate = jnp.where(is_fwd, hp[:, 0:G], hp[:, G:2 * G])   # (2B, 4H)
            # Precomputed input-gate contributions (bias already folded in).
            gx_f = gx_sc[pl.ds(t * B, B), :][:, 0:G]                 # (B, 4H)
            gx_b = gx_sc[pl.ds(rt * B, B), :][:, G:2 * G]            # (B, 4H)
            gates = jnp.concatenate([gx_f, gx_b], axis=0) + h_gate   # (2B, 4H)
            # PyTorch gate order: i, f, g, o.
            i_g = jax.nn.sigmoid(gates[:, 0 * H:1 * H])
            f_g = jax.nn.sigmoid(gates[:, 1 * H:2 * H])
            g_g = jnp.tanh(gates[:, 2 * H:3 * H])
            o_g = jax.nn.sigmoid(gates[:, 3 * H:4 * H])
            c_new = f_g * c_sc[...] + i_g * g_g
            h_new = o_g * jnp.tanh(c_new)
            h_sc[...] = h_new
            c_sc[...] = c_new
            # Per-direction activation buffers in VMEM (no HBM writeback).
            out_f[pl.ds(t * B, B), :] = h_new[0:B, :]
            out_b[pl.ds(rt * B, B), :] = h_new[B:B2, :]
            return carry

        # Short fixed trip count: fori_loop keeps LLO visibility while bounding
        # vreg live ranges (full unroll only when T is small).
        lax.fori_loop(0, T, step, 0, unroll=T <= 16)

        # Final states written ONCE per layer (not every timestep).
        hN_ref[2 * layer] = h_sc[0:B, :].astype(hN_ref.dtype)
        hN_ref[2 * layer + 1] = h_sc[B:B2, :].astype(hN_ref.dtype)
        cN_ref[2 * layer] = c_sc[0:B, :].astype(cN_ref.dtype)
        cN_ref[2 * layer + 1] = c_sc[B:B2, :].astype(cN_ref.dtype)

    # Layer 0 reads the embedded input; layers 1/2 ping-pong VMEM buffers.
    bulk_input_proj_l0(wih0_ref, b0_ref)
    run_recurrence(0, af_sc, ab_sc, whh0_ref)
    # TODO(synk): training-mode inter-layer dropout (p=0.2) omitted (eval mode).
    bulk_input_proj(af_sc, ab_sc, wih1_ref, b1_ref)
    run_recurrence(1, bf_sc, bb_sc, whh1_ref)
    bulk_input_proj(bf_sc, bb_sc, wih2_ref, b2_ref)
    run_recurrence(2, af_sc, ab_sc, whh2_ref)

    # FC (2H -> Vpad) + log_softmax; fc weight split into row halves so the
    # fwd/bwd buffers never need a lane concat.  Padded columns carry -1e30
    # bias so exp() underflows to 0 and the normalizer is unchanged.
    fw = fcw_ref[...]                                        # (2H, Vpad)
    logits = (jnp.dot(af_sc[...], fw[0:H, :], preferred_element_type=jnp.float32)
              + jnp.dot(ab_sc[...], fw[H:2 * H, :],
                        preferred_element_type=jnp.float32)
              + fcb_ref[...])                                # (T*B, Vpad)
    m = jnp.max(logits, axis=-1, keepdims=True)
    z = logits - m
    lse = jnp.log(jnp.sum(jnp.exp(z), axis=-1, keepdims=True))
    pred_ref[...] = (z - lse).astype(pred_ref.dtype)
    # NOTE: if B*T grows, tile this FC over 128-256 row blocks (own grid axis,
    # 'parallel') so the pred writeback DMA overlaps with compute.


# --------------------------------------------------------------------------
# Wrapper
# --------------------------------------------------------------------------
def _full_spec(shape):
    n = len(shape)
    return pl.BlockSpec(tuple(shape), lambda i, _n=n: (0,) * _n)


@functools.partial(jax.jit, static_argnames=("out_dim", "need_hidden"))
def language_model_forward(inp, h0, c0, params, out_dim, need_hidden=False):
    """Matches LanguageModel.forward (eval mode).

    inp: (B, T, E) batch_first embedded input
    h0, c0: (num_layers * 2, B, H) = (6, B, H)
    out_dim: vocab_size + 1 (static)
    returns pred (B, T, out_dim) log-probs (and h (6, B, H) if need_hidden)
    """
    B, T, E = inp.shape
    L2, _, H = h0.shape                      # L2 = 2 * num_layers = 6
    Vpad = params["fc_w_t"].shape[1]

    # (B, T, E) -> time-major rows (t*B + b), so bulk projections and the
    # per-step row slices need no in-kernel relayout.
    x_flat = jnp.transpose(inp, (1, 0, 2)).reshape(T * B, E)

    l0, l1, l2 = params["lstm"]
    args = (x_flat, h0, c0,
            l0["w_ih"], l0["w_hh"], l0["b"],
            l1["w_ih"], l1["w_hh"], l1["b"],
            l2["w_ih"], l2["w_hh"], l2["b"],
            params["fc_w_t"], params["fc_b"])

    pred_flat, hN, cN = pl.pallas_call(
        _lm_fused_kernel,
        out_shape=(jax.ShapeDtypeStruct((T * B, Vpad), inp.dtype),
                   jax.ShapeDtypeStruct((L2, B, H), inp.dtype),
                   jax.ShapeDtypeStruct((L2, B, H), inp.dtype)),
        grid_spec=pltpu.PrefetchScalarGridSpec(
            num_scalar_prefetch=0,
            grid=(1,),                                   # single fused step
            in_specs=[_full_spec(a.shape) for a in args],
            out_specs=[_full_spec((T * B, Vpad)),
                       _full_spec((L2, B, H)),
                       _full_spec((L2, B, H))],
            scratch_shapes=[
                pltpu.VMEM((2 * B, H), jnp.float32),      # h carry (stacked dirs)
                pltpu.VMEM((2 * B, H), jnp.float32),      # c carry
                pltpu.VMEM((T * B, 8 * H), jnp.float32),  # bulk input-gate proj
                pltpu.VMEM((T * B, H), jnp.float32),      # act A fwd
                pltpu.VMEM((T * B, H), jnp.float32),      # act A bwd
                pltpu.VMEM((T * B, H), jnp.float32),      # act B fwd
                pltpu.VMEM((T * B, H), jnp.float32),      # act B bwd
            ]),
        compiler_params=pltpu.CompilerParams(
            dimension_semantics=("arbitrary",)),
    )(*args)

    del cN  # c_n is produced (cheap) for future stateful (h, c) threading.

    # (T*B, Vpad) -> (B, T, out_dim): un-pad lanes, back to batch_first.
    pred = jnp.transpose(pred_flat.reshape(T, B, Vpad)[:, :, :out_dim],
                         (1, 0, 2))
    if need_hidden:
        return pred, hN
    return pred


# --------------------------------------------------------------------------
# Deterministic parameter construction (shapes per nn.LSTM / nn.Linear)
# --------------------------------------------------------------------------
def init_params(key, embedding_dim, hidden_dim, vocab_size, num_layers=3):
    H = hidden_dim
    scale = 1.0 / float(H) ** 0.5
    params = {"lstm": []}
    k = key
    for layer in range(num_layers):
        in_size = embedding_dim if layer == 0 else 2 * H
        w_ih_dirs, w_hh_dirs, b_dirs = [], [], []
        for _tag in ("f", "b"):
            k, k1, k2, k3, k4 = jax.random.split(k, 5)
            w_ih = jax.random.uniform(k1, (4 * H, in_size), jnp.float32, -scale, scale)
            w_hh = jax.random.uniform(k2, (4 * H, H), jnp.float32, -scale, scale)
            b_ih = jax.random.uniform(k3, (4 * H,), jnp.float32, -scale, scale)
            b_hh = jax.random.uniform(k4, (4 * H,), jnp.float32, -scale, scale)
            w_ih_dirs.append(w_ih.T)                 # (in, 4H)
            w_hh_dirs.append(w_hh.T)                 # (H, 4H)
            b_dirs.append(b_ih + b_hh)               # (4H,)
        params["lstm"].append({
            "w_ih": jnp.concatenate(w_ih_dirs, axis=1),          # (in, 8H)
            "w_hh": jnp.concatenate(w_hh_dirs, axis=1),          # (H, 8H)
            "b": jnp.concatenate(b_dirs).reshape(1, 8 * H),      # (1, 8H)
        })

    k, kf1, kf2 = jax.random.split(k, 3)
    fscale = 1.0 / float(2 * H) ** 0.5
    out_dim = vocab_size + 1
    vpad = max(128, ((out_dim + 127) // 128) * 128)   # lane-dense FC output
    fc_w = jax.random.uniform(kf1, (out_dim, 2 * H), jnp.float32, -fscale, fscale)
    fc_b = jax.random.uniform(kf2, (out_dim,), jnp.float32, -fscale, fscale)
    params["fc_w_t"] = jnp.zeros((2 * H, vpad), jnp.float32).at[:, :out_dim].set(fc_w.T)
    params["fc_b"] = jnp.full((1, vpad), -1e30, jnp.float32).at[0, :out_dim].set(fc_b)
    return params


# --------------------------------------------------------------------------
# Pure-JAX (XLA) reference for numerical cross-checking
# --------------------------------------------------------------------------
def _reference_forward(inp, h0, c0, params, out_dim):
    B, T, E = inp.shape
    H = h0.shape[2]
    layer_in = jnp.transpose(inp, (1, 0, 2))          # (T, B, E) time-major
    h_finals = []
    for layer, p in enumerate(params["lstm"]):
        w_ih, w_hh, b = p["w_ih"], p["w_hh"], p["b"][0]
        dir_outs = []
        for d in range(2):                            # 0: fwd, 1: bwd
            wi = w_ih[:, d * 4 * H:(d + 1) * 4 * H]
            wh = w_hh[:, d * 4 * H:(d + 1) * 4 * H]
            bd = b[d * 4 * H:(d + 1) * 4 * H]
            h = h0[2 * layer + d]
            c = c0[2 * layer + d]
            seq = [None] * T
            t_order = range(T) if d == 0 else range(T - 1, -1, -1)
            for t in t_order:
                g = layer_in[t] @ wi + h @ wh + bd
                i = jax.nn.sigmoid(g[:, 0:H])
                f = jax.nn.sigmoid(g[:, H:2 * H])
                gg = jnp.tanh(g[:, 2 * H:3 * H])
                o = jax.nn.sigmoid(g[:, 3 * H:4 * H])
                c = f * c + i * gg
                h = o * jnp.tanh(c)
                seq[t] = h
            dir_outs.append(jnp.stack(seq, axis=0))   # (T, B, H)
            h_finals.append(h)
        layer_in = jnp.concatenate(dir_outs, axis=-1)  # (T, B, 2H)
    logits = layer_in @ params["fc_w_t"] + params["fc_b"][0]
    pred = jax.nn.log_softmax(logits[:, :, :out_dim], axis=-1)
    return jnp.transpose(pred, (1, 0, 2)), jnp.stack(h_finals, axis=0)


# --------------------------------------------------------------------------
if __name__ == "__main__":
    B, T = 2, 8                 # batch, (max_seq_len - 1)
    EMB = 16                    # embedding_dim
    HID = 32                    # hidden_dim
    VOCAB = 50                  # vocab_size (fc outputs VOCAB + 1)
    NUM_LAYERS = 3

    key = jax.random.PRNGKey(0)
    k_p, k_x, k_h, k_c = jax.random.split(key, 4)

    params = init_params(k_p, EMB, HID, VOCAB, NUM_LAYERS)
    inp = jax.random.normal(k_x, (B, T, EMB), jnp.float32)
    h0 = jax.random.normal(k_h, (NUM_LAYERS * 2, B, HID), jnp.float32)
    c0 = jax.random.normal(k_c, (NUM_LAYERS * 2, B, HID), jnp.float32)

    pred, h = language_model_forward(inp, h0, c0, params,
                                     out_dim=VOCAB + 1, need_hidden=True)
    jax.block_until_ready((pred, h))

    assert pred.shape == (B, T, VOCAB + 1), pred.shape
    assert h.shape == (NUM_LAYERS * 2, B, HID), h.shape
    assert bool(jnp.all(jnp.isfinite(pred)))
    # log_softmax rows must exp-sum to ~1 (padding masked correctly)
    assert jnp.allclose(jnp.sum(jnp.exp(pred), axis=-1), 1.0, atol=1e-4)

    # Cross-check against the pure-JAX/XLA reference (same params, f32 math).
    pred_ref, h_ref = _reference_forward(inp, h0, c0, params, VOCAB + 1)
    assert jnp.allclose(pred, pred_ref, atol=5e-2), \
        float(jnp.max(jnp.abs(pred - pred_ref)))
    assert jnp.allclose(h, h_ref, atol=5e-2), \
        float(jnp.max(jnp.abs(h - h_ref)))

    print("KERNEL_OK")
</pallas_src>

<mosaic_0001>
module attributes {stable_mosaic.version = 11 : i64} {
  func.func @_lm_fused_kernel(%arg0: i32, %arg1: memref<16x16xf32, #tpu.memory_space<vmem>>, %arg2: memref<6x2x32xf32, #tpu.memory_space<vmem>>, %arg3: memref<6x2x32xf32, #tpu.memory_space<vmem>>, %arg4: memref<16x256xf32, #tpu.memory_space<vmem>>, %arg5: memref<32x256xf32, #tpu.memory_space<vmem>>, %arg6: memref<1x256xf32, #tpu.memory_space<vmem>>, %arg7: memref<64x256xf32, #tpu.memory_space<vmem>>, %arg8: memref<32x256xf32, #tpu.memory_space<vmem>>, %arg9: memref<1x256xf32, #tpu.memory_space<vmem>>, %arg10: memref<64x256xf32, #tpu.memory_space<vmem>>, %arg11: memref<32x256xf32, #tpu.memory_space<vmem>>, %arg12: memref<1x256xf32, #tpu.memory_space<vmem>>, %arg13: memref<64x128xf32, #tpu.memory_space<vmem>>, %arg14: memref<1x128xf32, #tpu.memory_space<vmem>>, %arg15: memref<16x128xf32, #tpu.memory_space<vmem>>, %arg16: memref<6x2x32xf32, #tpu.memory_space<vmem>>, %arg17: memref<6x2x32xf32, #tpu.memory_space<vmem>>, %arg18: memref<4x32xf32, #tpu.memory_space<vmem>>, %arg19: memref<4x32xf32, #tpu.memory_space<vmem>>, %arg20: memref<16x256xf32, #tpu.memory_space<vmem>>, %arg21: memref<16x32xf32, #tpu.memory_space<vmem>>, %arg22: memref<16x32xf32, #tpu.memory_space<vmem>>, %arg23: memref<16x32xf32, #tpu.memory_space<vmem>>, %arg24: memref<16x32xf32, #tpu.memory_space<vmem>>) attributes {dimension_semantics = [#tpu.dimension_semantics<arbitrary>], iteration_bounds = array<i64: 1>, scalar_prefetch = 0 : i64, scratch_operands = 7 : i64, tpu.core_type = #tpu.core_type<tc>, window_params = [{pipeline_mode = #tpu.pipeline_mode<synchronous>, transform_indices = @transform_0, window_bounds = array<i64: 16, 16>}, {pipeline_mode = #tpu.pipeline_mode<synchronous>, transform_indices = @transform_1, window_bounds = array<i64: 6, 2, 32>}, {pipeline_mode = #tpu.pipeline_mode<synchronous>, transform_indices = @transform_2, window_bounds = array<i64: 6, 2, 32>}, {pipeline_mode = #tpu.pipeline_mode<synchronous>, transform_indices = @transform_3, window_bounds = array<i64: 16, 256>}, {pipeline_mode = #tpu.pipeline_mode<synchronous>, transform_indices = @transform_4, window_bounds = array<i64: 32, 256>}, {pipeline_mode = #tpu.pipeline_mode<synchronous>, transform_indices = @transform_5, window_bounds = array<i64: 1, 256>}, {pipeline_mode = #tpu.pipeline_mode<synchronous>, transform_indices = @transform_6, window_bounds = array<i64: 64, 256>}, {pipeline_mode = #tpu.pipeline_mode<synchronous>, transform_indices = @transform_7, window_bounds = array<i64: 32, 256>}, {pipeline_mode = #tpu.pipeline_mode<synchronous>, transform_indices = @transform_8, window_bounds = array<i64: 1, 256>}, {pipeline_mode = #tpu.pipeline_mode<synchronous>, transform_indices = @transform_9, window_bounds = array<i64: 64, 256>}, {pipeline_mode = #tpu.pipeline_mode<synchronous>, transform_indices = @transform_10, window_bounds = array<i64: 32, 256>}, {pipeline_mode = #tpu.pipeline_mode<synchronous>, transform_indices = @transform_11, window_bounds = array<i64: 1, 256>}, {pipeline_mode = #tpu.pipeline_mode<synchronous>, transform_indices = @transform_12, window_bounds = array<i64: 64, 128>}, {pipeline_mode = #tpu.pipeline_mode<synchronous>, transform_indices = @transform_13, window_bounds = array<i64: 1, 128>}, {pipeline_mode = #tpu.pipeline_mode<synchronous>, transform_indices = @transform_14, window_bounds = array<i64: 16, 128>}, {pipeline_mode = #tpu.pipeline_mode<synchronous>, transform_indices = @transform_15, window_bounds = array<i64: 6, 2, 32>}, {pipeline_mode = #tpu.pipeline_mode<synchronous>, transform_indices = @transform_16, window_bounds = array<i64: 6, 2, 32>}]} {
    %0 = tpu.iota {dimensions = array<i32: 0>} : vector<4x128xi32>
    %c2_i32 = arith.constant 2 : i32
    %1 = vector.broadcast %c2_i32 : i32 to vector<4x128xi32>
    %2 = arith.cmpi slt, %0, %1 : vector<4x128xi32>
    %c0 = arith.constant 0 : index
    %c0_0 = arith.constant 0 : index
    %3 = vector.load %arg1[%c0, %c0_0] : memref<16x16xf32, #tpu.memory_space<vmem>>, vector<16x16xf32>
    %c0_1 = arith.constant 0 : index
    %c0_2 = arith.constant 0 : index
    %4 = vector.load %arg4[%c0_1, %c0_2] : memref<16x256xf32, #tpu.memory_space<vmem>>, vector<16x256xf32>
    %cst = arith.constant dense<0.000000e+00> : vector<16x256xf32>
    %5 = tpu.matmul %3, %4, %cst {dimension_numbers = #tpu.dot_dimension_numbers<[1], [0], [0], [1], [0, 0, 1, 1], [], []>} : vector<16x16xf32>, vector<16x256xf32>, vector<16x256xf32> -> vector<16x256xf32>
    %c0_3 = arith.constant 0 : index
    %c0_4 = arith.constant 0 : index
    %6 = vector.load %arg6[%c0_3, %c0_4] : memref<1x256xf32, #tpu.memory_space<vmem>>, vector<1x256xf32>
    %7 = vector.broadcast %6 : vector<1x256xf32> to vector<16x256xf32>
    %8 = arith.addf %5, %7 : vector<16x256xf32>
    %c0_5 = arith.constant 0 : index
    %c0_6 = arith.constant 0 : index
    %9 = vector.load %arg20[%c0_5, %c0_6] : memref<16x256xf32, #tpu.memory_space<vmem>>, vector<16x256xf32>
    tpu.vector_store %arg20[%c0_5, %c0_6], %8 {strides = array<i32>} : memref<16x256xf32, #tpu.memory_space<vmem>>, vector<16x256xf32>,
    %c0_7 = arith.constant 0 : index
    %c0_8 = arith.constant 0 : index
    %c0_9 = arith.constant 0 : index
    %10 = vector.load %arg2[%c0_7, %c0_8, %c0_9] : memref<6x2x32xf32, #tpu.memory_space<vmem>>, vector<1x2x32xf32>
    %11 = vector.shape_cast %10 : vector<1x2x32xf32> to vector<2x32xf32>
    %c0_10 = arith.constant 0 : index
    %c0_11 = arith.constant 0 : index
    %12 = vector.load %arg18[%c0_10, %c0_11] : memref<4x32xf32, #tpu.memory_space<vmem>>, vector<2x32xf32>
    tpu.vector_store %arg18[%c0_10, %c0_11], %11 {strides = array<i32>} : memref<4x32xf32, #tpu.memory_space<vmem>>, vector<2x32xf32>,
    %c1 = arith.constant 1 : index
    %c0_12 = arith.constant 0 : index
    %c0_13 = arith.constant 0 : index
    %13 = vector.load %arg2[%c1, %c0_12, %c0_13] : memref<6x2x32xf32, #tpu.memory_space<vmem>>, vector<1x2x32xf32>
    %14 = vector.shape_cast %13 : vector<1x2x32xf32> to vector<2x32xf32>
    %c2 = arith.constant 2 : index
    %c0_14 = arith.constant 0 : index
    %15 = vector.load %arg18[%c2, %c0_14] : memref<4x32xf32, #tpu.memory_space<vmem>>, vector<2x32xf32>
    tpu.vector_store %arg18[%c2, %c0_14], %14 {strides = array<i32>} : memref<4x32xf32, #tpu.memory_space<vmem>>, vector<2x32xf32>,
    %c0_15 = arith.constant 0 : index
    %c0_16 = arith.constant 0 : index
    %c0_17 = arith.constant 0 : index
    %16 = vector.load %arg3[%c0_15, %c0_16, %c0_17] : memref<6x2x32xf32, #tpu.memory_space<vmem>>, vector<1x2x32xf32>
    %17 = vector.shape_cast %16 : vector<1x2x32xf32> to vector<2x32xf32>
    %c0_18 = arith.constant 0 : index
    %c0_19 = arith.constant 0 : index
    %18 = vector.load %arg19[%c0_18, %c0_19] : memref<4x32xf32, #tpu.memory_space<vmem>>, vector<2x32xf32>
    tpu.vector_store %arg19[%c0_18, %c0_19], %17 {strides = array<i32>} : memref<4x32xf32, #tpu.memory_space<vmem>>, vector<2x32xf32>,
    %c1_20 = arith.constant 1 : index
    %c0_21 = arith.constant 0 : index
    %c0_22 = arith.constant 0 : index
    %19 = vector.load %arg3[%c1_20, %c0_21, %c0_22] : memref<6x2x32xf32, #tpu.memory_space<vmem>>, vector<1x2x32xf32>
    %20 = vector.shape_cast %19 : vector<1x2x32xf32> to vector<2x32xf32>
    %c2_23 = arith.constant 2 : index
    %c0_24 = arith.constant 0 : index
    %21 = vector.load %arg19[%c2_23, %c0_24] : memref<4x32xf32, #tpu.memory_space<vmem>>, vector<2x32xf32>
    tpu.vector_store %arg19[%c2_23, %c0_24], %20 {strides = array<i32>} : memref<4x32xf32, #tpu.memory_space<vmem>>, vector<2x32xf32>,
    %c0_25 = arith.constant 0 : index
    %c0_26 = arith.constant 0 : index
    %22 = vector.load %arg5[%c0_25, %c0_26] : memref<32x256xf32, #tpu.memory_space<vmem>>, vector<32x256xf32>
    %c0_i32 = arith.constant 0 : i32
    %c7_i32 = arith.constant 7 : i32
    %23 = arith.subi %c7_i32, %c0_i32 : i32
    %c0_27 = arith.constant 0 : index
    %c0_28 = arith.constant 0 : index
    %24 = vector.load %arg18[%c0_27, %c0_28] : memref<4x32xf32, #tpu.memory_space<vmem>>, vector<4x32xf32>
    %cst_29 = arith.constant dense<0.000000e+00> : vector<4x256xf32>
    %25 = tpu.matmul %24, %22, %cst_29 {dimension_numbers = #tpu.dot_dimension_numbers<[1], [0], [0], [1], [0, 0, 1, 1], [], []>} : vector<4x32xf32>, vector<32x256xf32>, vector<4x256xf32> -> vector<4x256xf32>
    %26 = vector.extract_strided_slice %25 {offsets = [0, 0], sizes = [4, 128], strides = [1, 1]} : vector<4x256xf32> to vector<4x128xf32>
    %27 = vector.extract_strided_slice %25 {offsets = [0, 128], sizes = [4, 128], strides = [1, 1]} : vector<4x256xf32> to vector<4x128xf32>
    %28 = arith.select %2, %26, %27 : vector<4x128xi1>, vector<4x128xf32>
    %c2_i32_30 = arith.constant 2 : i32
    %29 = arith.muli %c0_i32, %c2_i32_30 : i32
    %30 = arith.index_cast %29 : i32 to index
    %c0_31 = arith.constant 0 : index
    %31 = vector.load %arg20[%30, %c0_31] : memref<16x256xf32, #tpu.memory_space<vmem>>, vector<2x256xf32>
    %32 = vector.extract_strided_slice %31 {offsets = [0, 0], sizes = [2, 128], strides = [1, 1]} : vector<2x256xf32> to vector<2x128xf32>
    %c2_i32_32 = arith.constant 2 : i32
    %33 = arith.muli %23, %c2_i32_32 : i32
    %34 = arith.index_cast %33 : i32 to index
    %c0_33 = arith.constant 0 : index
    %35 = vector.load %arg20[%34, %c0_33] : memref<16x256xf32, #tpu.memory_space<vmem>>, vector<2x256xf32>
    %36 = vector.extract_strided_slice %35 {offsets = [0, 128], sizes = [2, 128], strides = [1, 1]} : vector<2x256xf32> to vector<2x128xf32>
    %37 = tpu.concatenate %32, %36 in 0 : vector<2x128xf32>, vector<2x128xf32> -> vector<4x128xf32>
    %38 = arith.addf %37, %28 : vector<4x128xf32>
    %39 = vector.extract_strided_slice %38 {offsets = [0, 0], sizes = [4, 32], strides = [1, 1]} : vector<4x128xf32> to vector<4x32xf32>
    %40 = arith.negf %39 : vector<4x32xf32>
    %41 = math.exp %40 : vector<4x32xf32>
    %cst_34 = arith.constant 1.000000e+00 : f32
    %42 = vector.broadcast %cst_34 : f32 to vector<4x32xf32>
    %43 = arith.addf %42, %41 : vector<4x32xf32>
    %44 = arith.divf %42, %43 : vector<4x32xf32>
    %45 = vector.extract_strided_slice %38 {offsets = [0, 32], sizes = [4, 32], strides = [1, 1]} : vector<4x128xf32> to vector<4x32xf32>
    %46 = arith.negf %45 : vector<4x32xf32>
    %47 = math.exp %46 : vector<4x32xf32>
    %cst_35 = arith.constant 1.000000e+00 : f32
    %48 = vector.broadcast %cst_35 : f32 to vector<4x32xf32>
    %49 = arith.addf %48, %47 : vector<4x32xf32>
    %50 = arith.divf %48, %49 : vector<4x32xf32>
    %51 = vector.extract_strided_slice %38 {offsets = [0, 64], sizes = [4, 32], strides = [1, 1]} : vector<4x128xf32> to vector<4x32xf32>
    %52 = math.tanh %51 : vector<4x32xf32>
    %53 = vector.extract_strided_slice %38 {offsets = [0, 96], sizes = [4, 32], strides = [1, 1]} : vector<4x128xf32> to vector<4x32xf32>
    %54 = arith.negf %53 : vector<4x32xf32>
    %55 = math.exp %54 : vector<4x32xf32>
    %cst_36 = arith.constant 1.000000e+00 : f32
    %56 = vector.broadcast %cst_36 : f32 to vector<4x32xf32>
    %57 = arith.addf %56, %55 : vector<4x32xf32>
    %58 = arith.divf %56, %57 : vector<4x32xf32>
    %c0_37 = arith.constant 0 : index
    %c0_38 = arith.constant 0 : index
    %59 = vector.load %arg19[%c0_37, %c0_38] : memref<4x32xf32, #tpu.memory_space<vmem>>, vector<4x32xf32>
    %60 = arith.mulf %50, %59 : vector<4x32xf32>
    %61 = arith.mulf %44, %52 : vector<4x32xf32>
    %62 = arith.addf %60, %61 : vector<4x32xf32>
    %63 = math.tanh %62 : vector<4x32xf32>
    %64 = arith.mulf %58, %63 : vector<4x32xf32>
    %c0_39 = arith.constant 0 : index
    %c0_40 = arith.constant 0 : index
    %65 = vector.load %arg18[%c0_39, %c0_40] : memref<4x32xf32, #tpu.memory_space<vmem>>, vector<4x32xf32>
    tpu.vector_store %arg18[%c0_39, %c0_40], %64 {strides = array<i32>} : memref<4x32xf32, #tpu.memory_space<vmem>>, vector<4x32xf32>,
    %c0_41 = arith.constant 0 : index
    %c0_42 = arith.constant 0 : index
    %66 = vector.load %arg19[%c0_41, %c0_42] : memref<4x32xf32, #tpu.memory_space<vmem>>, vector<4x32xf32>
    tpu.vector_store %arg19[%c0_41, %c0_42], %62 {strides = array<i32>} : memref<4x32xf32, #tpu.memory_space<vmem>>, vector<4x32xf32>,
    %67 = vector.extract_strided_slice %64 {offsets = [0, 0], sizes = [2, 32], strides = [1, 1]} : vector<4x32xf32> to vector<2x32xf32>
    %c2_i32_43 = arith.constant 2 : i32
    %68 = arith.muli %c0_i32, %c2_i32_43 : i32
    %69 = arith.index_cast %68 : i32 to index
    %c0_44 = arith.constant 0 : index
    %70 = vector.load %arg21[%69, %c0_44] : memref<16x32xf32, #tpu.memory_space<vmem>>, vector<2x32xf32>
    tpu.vector_store %arg21[%69, %c0_44], %67 {strides = array<i32>} : memref<16x32xf32, #tpu.memory_space<vmem>>, vector<2x32xf32>,
    %71 = vector.extract_strided_slice %64 {offsets = [2, 0], sizes = [2, 32], strides = [1, 1]} : vector<4x32xf32> to vector<2x32xf32>
    %c2_i32_45 = arith.constant 2 : i32
    %72 = arith.muli %23, %c2_i32_45 : i32
    %73 = arith.index_cast %72 : i32 to index
    %c0_46 = arith.constant 0 : index
    %74 = vector.load %arg22[%73, %c0_46] : memref<16x32xf32, #tpu.memory_space<vmem>>, vector<2x32xf32>
    tpu.vector_store %arg22[%73, %c0_46], %71 {strides = array<i32>} : memref<16x32xf32, #tpu.memory_space<vmem>>, vector<2x32xf32>,
    %c1_i32 = arith.constant 1 : i32
    %c7_i32_47 = arith.constant 7 : i32
    %75 = arith.subi %c7_i32_47, %c1_i32 : i32
    %c0_48 = arith.constant 0 : index
    %c0_49 = arith.constant 0 : index
    %76 = vector.load %arg18[%c0_48, %c0_49] : memref<4x32xf32, #tpu.memory_space<vmem>>, vector<4x32xf32>
    %cst_50 = arith.constant dense<0.000000e+00> : vector<4x256xf32>
    %77 = tpu.matmul %76, %22, %cst_50 {dimension_numbers = #tpu.dot_dimension_numbers<[1], [0], [0], [1], [0, 0, 1, 1], [], []>} : vector<4x32xf32>, vector<32x256xf32>, vector<4x256xf32> -> vector<4x256xf32>
    %78 = vector.extract_strided_slice %77 {offsets = [0, 0], sizes = [4, 128], strides = [1, 1]} : vector<4x256xf32> to vector<4x128xf32>
    %79 = vector.extract_strided_slice %77 {offsets = [0, 128], sizes = [4, 128], strides = [1, 1]} : vector<4x256xf32> to vector<4x128xf32>
    %80 = arith.select %2, %78, %79 : vector<4x128xi1>, vector<4x128xf32>
    %c2_i32_51 = arith.constant 2 : i32
    %81 = arith.muli %c1_i32, %c2_i32_51 : i32
    %82 = arith.index_cast %81 : i32 to index
    %c0_52 = arith.constant 0 : index
    %83 = vector.load %arg20[%82, %c0_52] : memref<16x256xf32, #tpu.memory_space<vmem>>, vector<2x256xf32>
    %84 = vector.extract_strided_slice %83 {offsets = [0, 0], sizes = [2, 128], strides = [1, 1]} : vector<2x256xf32> to vector<2x128xf32>
    %c2_i32_53 = arith.constant 2 : i32
    %85 = arith.muli %75, %c2_i32_53 : i32
    %86 = arith.index_cast %85 : i32 to index
    %c0_54 = arith.constant 0 : index
    %87 = vector.load %arg20[%86, %c0_54] : memref<16x256xf32, #tpu.memory_space<vmem>>, vector<2x256xf32>
    %88 = vector.extract_strided_slice %87 {offsets = [0, 128], sizes = [2, 128], strides = [1, 1]} : vector<2x256xf32> to vector<2x128xf32>
    %89 = tpu.concatenate %84, %88 in 0 : vector<2x128xf32>, vector<2x128xf32> -> vector<4x128xf32>
    %90 = arith.addf %89, %80 : vector<4x128xf32>
    %91 = vector.extract_strided_slice %90 {offsets = [0, 0], sizes = [4, 32], strides = [1, 1]} : vector<4x128xf32> to vector<4x32xf32>
    %92 = arith.negf %91 : vector<4x32xf32>
    %93 = math.exp %92 : vector<4x32xf32>
    %cst_55 = arith.constant 1.000000e+00 : f32
    %94 = vector.broadcast %cst_55 : f32 to vector<4x32xf32>
    %95 = arith.addf %94, %93 : vector<4x32xf32>
    %96 = arith.divf %94, %95 : vector<4x32xf32>
    %97 = vector.extract_strided_slice %90 {offsets = [0, 32], sizes = [4, 32], strides = [1, 1]} : vector<4x128xf32> to vector<4x32xf32>
    %98 = arith.negf %97 : vector<4x32xf32>
    %99 = math.exp %98 : vector<4x32xf32>
    %cst_56 = arith.constant 1.000000e+00 : f32
    %100 = vector.broadcast %cst_56 : f32 to vector<4x32xf32>
    %101 = arith.addf %100, %99 : vector<4x32xf32>
    %102 = arith.divf %100, %101 : vector<4x32xf32>
    %103 = vector.extract_strided_slice %90 {offsets = [0, 64], sizes = [4, 32], strides = [1, 1]} : vector<4x128xf32> to vector<4x32xf32>
    %104 = math.tanh %103 : vector<4x32xf32>
    %105 = vector.extract_strided_slice %90 {offsets = [0, 96], sizes = [4, 32], strides = [1, 1]} : vector<4x128xf32> to vector<4x32xf32>
    %106 = arith.negf %105 : vector<4x32xf32>
    %107 = math.exp %106 : vector<4x32xf32>
    %cst_57 = arith.constant 1.000000e+00 : f32
    %108 = vector.broadcast %cst_57 : f32 to vector<4x32xf32>
    %109 = arith.addf %108, %107 : vector<4x32xf32>
    %110 = arith.divf %108, %109 : vector<4x32xf32>
    %c0_58 = arith.constant 0 : index
    %c0_59 = arith.constant 0 : index
    %111 = vector.load %arg19[%c0_58, %c0_59] : memref<4x32xf32, #tpu.memory_space<vmem>>, vector<4x32xf32>
    %112 = arith.mulf %102, %111 : vector<4x32xf32>
    %113 = arith.mulf %96, %104 : vector<4x32xf32>
    %114 = arith.addf %112, %113 : vector<4x32xf32>
    %115 = math.tanh %114 : vector<4x32xf32>
    %116 = arith.mulf %110, %115 : vector<4x32xf32>
    %c0_60 = arith.constant 0 : index
    %c0_61 = arith.constant 0 : index
    %117 = vector.load %arg18[%c0_60, %c0_61] : memref<4x32xf32, #tpu.memory_space<vmem>>, vector<4x32xf32>
    tpu.vector_store %arg18[%c0_60, %c0_61], %116 {strides = array<i32>} : memref<4x32xf32, #tpu.memory_space<vmem>>, vector<4x32xf32>,
    %c0_62 = arith.constant 0 : index
    %c0_63 = arith.constant 0 : index
    %118 = vector.load %arg19[%c0_62, %c0_63] : memref<4x32xf32, #tpu.memory_space<vmem>>, vector<4x32xf32>
    tpu.vector_store %arg19[%c0_62, %c0_63], %114 {strides = array<i32>} : memref<4x32xf32, #tpu.memory_space<vmem>>, vector<4x32xf32>,
    %119 = vector.extract_strided_slice %116 {offsets = [0, 0], sizes = [2, 32], strides = [1, 1]} : vector<4x32xf32> to vector<2x32xf32>
    %c2_i32_64 = arith.constant 2 : i32
    %120 = arith.muli %c1_i32, %c2_i32_64 : i32
    %121 = arith.index_cast %120 : i32 to index
    %c0_65 = arith.constant 0 : index
    %122 = vector.load %arg21[%121, %c0_65] : memref<16x32xf32, #tpu.memory_space<vmem>>, vector<2x32xf32>
    tpu.vector_store %arg21[%121, %c0_65], %119 {strides = array<i32>} : memref<16x32xf32, #tpu.memory_space<vmem>>, vector<2x32xf32>,
    %123 = vector.extract_strided_slice %116 {offsets = [2, 0], sizes = [2, 32], strides = [1, 1]} : vector<4x32xf32> to vector<2x32xf32>
    %c2_i32_66 = arith.constant 2 : i32
    %124 = arith.muli %75, %c2_i32_66 : i32
    %125 = arith.index_cast %124 : i32 to index
    %c0_67 = arith.constant 0 : index
    %126 = vector.load %arg22[%125, %c0_67] : memref<16x32xf32, #tpu.memory_space<vmem>>, vector<2x32xf32>
    tpu.vector_store %arg22[%125, %c0_67], %123 {strides = array<i32>} : memref<16x32xf32, #tpu.memory_space<vmem>>, vector<2x32xf32>,
    %c2_i32_68 = arith.constant 2 : i32
    %c7_i32_69 = arith.constant 7 : i32
    %127 = arith.subi %c7_i32_69, %c2_i32_68 : i32
    %c0_70 = arith.constant 0 : index
    %c0_71 = arith.constant 0 : index
    %128 = vector.load %arg18[%c0_70, %c0_71] : memref<4x32xf32, #tpu.memory_space<vmem>>, vector<4x32xf32>
    %cst_72 = arith.constant dense<0.000000e+00> : vector<4x256xf32>
    %129 = tpu.matmul %128, %22, %cst_72 {dimension_numbers = #tpu.dot_dimension_numbers<[1], [0], [0], [1], [0, 0, 1, 1], [], []>} : vector<4x32xf32>, vector<32x256xf32>, vector<4x256xf32> -> vector<4x256xf32>
    %130 = vector.extract_strided_slice %129 {offsets = [0, 0], sizes = [4, 128], strides = [1, 1]} : vector<4x256xf32> to vector<4x128xf32>
    %131 = vector.extract_strided_slice %129 {offsets = [0, 128], sizes = [4, 128], strides = [1, 1]} : vector<4x256xf32> to vector<4x128xf32>
    %132 = arith.select %2, %130, %131 : vector<4x128xi1>, vector<4x128xf32>
    %c2_i32_73 = arith.constant 2 : i32
    %133 = arith.muli %c2_i32_68, %c2_i32_73 : i32
    %134 = arith.index_cast %133 : i32 to index
    %c0_74 = arith.constant 0 : index
    %135 = vector.load %arg20[%134, %c0_74] : memref<16x256xf32, #tpu.memory_space<vmem>>, vector<2x256xf32>
    %136 = vector.extract_strided_slice %135 {offsets = [0, 0], sizes = [2, 128], strides = [1, 1]} : vector<2x256xf32> to vector<2x128xf32>
    %c2_i32_75 = arith.constant 2 : i32
    %137 = arith.muli %127, %c2_i32_75 : i32
    %138 = arith.index_cast %137 : i32 to index
    %c0_76 = arith.constant 0 : index
    %139 = vector.load %arg20[%138, %c0_76] : memref<16x256xf32, #tpu.memory_space<vmem>>, vector<2x256xf32>
    %140 = vector.extract_strided_slice %139 {offsets = [0, 128], sizes = [2, 128], strides = [1, 1]} : vector<2x256xf32> to vector<2x128xf32>
    %141 = tpu.concatenate %136, %140 in 0 : vector<2x128xf32>, vector<2x128xf32> -> vector<4x128xf32>
    %142 = arith.addf %141, %132 : vector<4x128xf32>
    %143 = vector.extract_strided_slice %142 {offsets = [0, 0], sizes = [4, 32], strides = [1, 1]} : vector<4x128xf32> to vector<4x32xf32>
    %144 = arith.negf %143 : vector<4x32xf32>
    %145 = math.exp %144 : vector<4x32xf32>
    %cst_77 = arith.constant 1.000000e+00 : f32
    %146 = vector.broadcast %cst_77 : f32 to vector<4x32xf32>
    %147 = arith.addf %146, %145 : vector<4x32xf32>
    %148 = arith.divf %146, %147 : vector<4x32xf32>
    %149 = vector.extract_strided_slice %142 {offsets = [0, 32], sizes = [4, 32], strides = [1, 1]} : vector<4x128xf32> to vector<4x32xf32>
    %150 = arith.negf %149 : vector<4x32xf32>
    %151 = math.exp %150 : vector<4x32xf32>
    %cst_78 = arith.constant 1.000000e+00 : f32
    %152 = vector.broadcast %cst_78 : f32 to vector<4x32xf32>
    %153 = arith.addf %152, %151 : vector<4x32xf32>
    %154 = arith.divf %152, %153 : vector<4x32xf32>
    %155 = vector.extract_strided_slice %142 {offsets = [0, 64], sizes = [4, 32], strides = [1, 1]} : vector<4x128xf32> to vector<4x32xf32>
    %156 = math.tanh %155 : vector<4x32xf32>
    %157 = vector.extract_strided_slice %142 {offsets = [0, 96], sizes = [4, 32], strides = [1, 1]} : vector<4x128xf32> to vector<4x32xf32>
    %158 = arith.negf %157 : vector<4x32xf32>
    %159 = math.exp %158 : vector<4x32xf32>
    %cst_79 = arith.constant 1.000000e+00 : f32
    %160 = vector.broadcast %cst_79 : f32 to vector<4x32xf32>
    %161 = arith.addf %160, %159 : vector<4x32xf32>
    %162 = arith.divf %160, %161 : vector<4x32xf32>
    %c0_80 = arith.constant 0 : index
    %c0_81 = arith.constant 0 : index
    %163 = vector.load %arg19[%c0_80, %c0_81] : memref<4x32xf32, #tpu.memory_space<vmem>>, vector<4x32xf32>
    %164 = arith.mulf %154, %163 : vector<4x32xf32>
    %165 = arith.mulf %148, %156 : vector<4x32xf32>
    %166 = arith.addf %164, %165 : vector<4x32xf32>
    %167 = math.tanh %166 : vector<4x32xf32>
    %168 = arith.mulf %162, %167 : vector<4x32xf32>
    %c0_82 = arith.constant 0 : index
    %c0_83 = arith.constant 0 : index
    %169 = vector.load %arg18[%c0_82, %c0_83] : memref<4x32xf32, #tpu.memory_space<vmem>>, vector<4x32xf32>
    tpu.vector_store %arg18[%c0_82, %c0_83], %168 {strides = array<i32>} : memref<4x32xf32, #tpu.memory_space<vmem>>, vector<4x32xf32>,
    %c0_84 = arith.constant 0 : index
    %c0_85 = arith.constant 0 : index
    %170 = vector.load %arg19[%c0_84, %c0_85] : memref<4x32xf32, #tpu.memory_space<vmem>>, vector<4x32xf32>
    tpu.vector_store %arg19[%c0_84, %c0_85], %166 {strides = array<i32>} : memref<4x32xf32, #tpu.memory_space<vmem>>, vector<4x32xf32>,
    %171 = vector.extract_strided_slice %168 {offsets = [0, 0], sizes = [2, 32], strides = [1, 1]} : vector<4x32xf32> to vector<2x32xf32>
    %c2_i32_86 = arith.constant 2 : i32
    %172 = arith.muli %c2_i32_68, %c2_i32_86 : i32
    %173 = arith.index_cast %172 : i32 to index
    %c0_87 = arith.constant 0 : index
    %174 = vector.load %arg21[%173, %c0_87] : memref<16x32xf32, #tpu.memory_space<vmem>>, vector<2x32xf32>
    tpu.vector_store %arg21[%173, %c0_87], %171 {strides = array<i32>} : memref<16x32xf32, #tpu.memory_space<vmem>>, vector<2x32xf32>,
    %175 = vector.extract_strided_slice %168 {offsets = [2, 0], sizes = [2, 32], strides = [1, 1]} : vector<4x32xf32> to vector<2x32xf32>
    %c2_i32_88 = arith.constant 2 : i32
    %176 = arith.muli %127, %c2_i32_88 : i32
    %177 = arith.index_cast %176 : i32 to index
    %c0_89 = arith.constant 0 : index
    %178 = vector.load %arg22[%177, %c0_89] : memref<16x32xf32, #tpu.memory_space<vmem>>, vector<2x32xf32>
    tpu.vector_store %arg22[%177, %c0_89], %175 {strides = array<i32>} : memref<16x32xf32, #tpu.memory_space<vmem>>, vector<2x32xf32>,
    %c3_i32 = arith.constant 3 : i32
    %c7_i32_90 = arith.constant 7 : i32
    %179 = arith.subi %c7_i32_90, %c3_i32 : i32
    %c0_91 = arith.constant 0 : index
    %c0_92 = arith.constant 0 : index
    %180 = vector.load %arg18[%c0_91, %c0_92] : memref<4x32xf32, #tpu.memory_space<vmem>>, vector<4x32xf32>
    %cst_93 = arith.constant dense<0.000000e+00> : vector<4x256xf32>
    %181 = tpu.matmul %180, %22, %cst_93 {dimension_numbers = #tpu.dot_dimension_numbers<[1], [0], [0], [1], [0, 0, 1, 1], [], []>} : vector<4x32xf32>, vector<32x256xf32>, vector<4x256xf32> -> vector<4x256xf32>
    %182 = vector.extract_strided_slice %181 {offsets = [0, 0], sizes = [4, 128], strides = [1, 1]} : vector<4x256xf32> to vector<4x128xf32>
    %183 = vector.extract_strided_slice %181 {offsets = [0, 128], sizes = [4, 128], strides = [1, 1]} : vector<4x256xf32> to vector<4x128xf32>
    %184 = arith.select %2, %182, %183 : vector<4x128xi1>, vector<4x128xf32>
    %c2_i32_94 = arith.constant 2 : i32
    %185 = arith.muli %c3_i32, %c2_i32_94 : i32
    %186 = arith.index_cast %185 : i32 to index
    %c0_95 = arith.constant 0 : index
    %187 = vector.load %arg20[%186, %c0_95] : memref<16x256xf32, #tpu.memory_space<vmem>>, vector<2x256xf32>
    %188 = vector.extract_strided_slice %187 {offsets = [0, 0], sizes = [2, 128], strides = [1, 1]} : vector<2x256xf32> to vector<2x128xf32>
    %c2_i32_96 = arith.constant 2 : i32
    %189 = arith.muli %179, %c2_i32_96 : i32
    %190 = arith.index_cast %189 : i32 to index
    %c0_97 = arith.constant 0 : index
    %191 = vector.load %arg20[%190, %c0_97] : memref<16x256xf32, #tpu.memory_space<vmem>>, vector<2x256xf32>
    %192 = vector.extract_strided_slice %191 {offsets = [0, 128], sizes = [2, 128], strides = [1, 1]} : vector<2x256xf32> to vector<2x128xf32>
    %193 = tpu.concatenate %188, %192 in 0 : vector<2x128xf32>, vector<2x128xf32> -> vector<4x128xf32>
    %194 = arith.addf %193, %184 : vector<4x128xf32>
    %195 = vector.extract_strided_slice %194 {offsets = [0, 0], sizes = [4, 32], strides = [1, 1]} : vector<4x128xf32> to vector<4x32xf32>
    %196 = arith.negf %195 : vector<4x32xf32>
    %197 = math.exp %196 : vector<4x32xf32>
    %cst_98 = arith.constant 1.000000e+00 : f32
    %198 = vector.broadcast %cst_98 : f32 to vector<4x32xf32>
    %199 = arith.addf %198, %197 : vector<4x32xf32>
    %200 = arith.divf %198, %199 : vector<4x32xf32>
    %201 = vector.extract_strided_slice %194 {offsets = [0, 32], sizes = [4, 32], strides = [1, 1]} : vector<4x128xf32> to vector<4x32xf32>
    %202 = arith.negf %201 : vector<4x32xf32>
    %203 = math.exp %202 : vector<4x32xf32>
    %cst_99 = arith.constant 1.000000e+00 : f32
    %204 = vector.broadcast %cst_99 : f32 to vector<4x32xf32>
    %205 = arith.addf %204, %203 : vector<4x32xf32>
    %206 = arith.divf %204, %205 : vector<4x32xf32>
    %207 = vector.extract_strided_slice %194 {offsets = [0, 64], sizes = [4, 32], strides = [1, 1]} : vector<4x128xf32> to vector<4x32xf32>
    %208 = math.tanh %207 : vector<4x32xf32>
    %209 = vector.extract_strided_slice %194 {offsets = [0, 96], sizes = [4, 32], strides = [1, 1]} : vector<4x128xf32> to vector<4x32xf32>
    %210 = arith.negf %209 : vector<4x32xf32>
    %211 = math.exp %210 : vector<4x32xf32>
    %cst_100 = arith.constant 1.000000e+00 : f32
    %212 = vector.broadcast %cst_100 : f32 to vector<4x32xf32>
    %213 = arith.addf %212, %211 : vector<4x32xf32>
    %214 = arith.divf %212, %213 : vector<4x32xf32>
    %c0_101 = arith.constant 0 : index
    %c0_102 = arith.constant 0 : index
    %215 = vector.load %arg19[%c0_101, %c0_102] : memref<4x32xf32, #tpu.memory_space<vmem>>, vector<4x32xf32>
    %216 = arith.mulf %206, %215 : vector<4x32xf32>
    %217 = arith.mulf %200, %208 : vector<4x32xf32>
    %218 = arith.addf %216, %217 : vector<4x32xf32>
    %219 = math.tanh %218 : vector<4x32xf32>
    %220 = arith.mulf %214, %219 : vector<4x32xf32>
    %c0_103 = arith.constant 0 : index
    %c0_104 = arith.constant 0 : index
    %221 = vector.load %arg18[%c0_103, %c0_104] : memref<4x32xf32, #tpu.memory_space<vmem>>, vector<4x32xf32>
    tpu.vector_store %arg18[%c0_103, %c0_104], %220 {strides = array<i32>} : memref<4x32xf32, #tpu.memory_space<vmem>>, vector<4x32xf32>,
    %c0_105 = arith.constant 0 : index
    %c0_106 = arith.constant 0 : index
    %222 = vector.load %arg19[%c0_105, %c0_106] : memref<4x32xf32, #tpu.memory_space<vmem>>, vector<4x32xf32>
    tpu.vector_store %arg19[%c0_105, %c0_106], %218 {strides = array<i32>} : memref<4x32xf32, #tpu.memory_space<vmem>>, vector<4x32xf32>,
    %223 = vector.extract_strided_slice %220 {offsets = [0, 0], sizes = [2, 32], strides = [1, 1]} : vector<4x32xf32> to vector<2x32xf32>
    %c2_i32_107 = arith.constant 2 : i32
    %224 = arith.muli %c3_i32, %c2_i32_107 : i32
    %225 = arith.index_cast %224 : i32 to index
    %c0_108 = arith.constant 0 : index
    %226 = vector.load %arg21[%225, %c0_108] : memref<16x32xf32, #tpu.memory_space<vmem>>, vector<2x32xf32>
    tpu.vector_store %arg21[%225, %c0_108], %223 {strides = array<i32>} : memref<16x32xf32, #tpu.memory_space<vmem>>, vector<2x32xf32>,
    %227 = vector.extract_strided_slice %220 {offsets = [2, 0], sizes = [2, 32], strides = [1, 1]} : vector<4x32xf32> to vector<2x32xf32>
    %c2_i32_109 = arith.constant 2 : i32
    %228 = arith.muli %179, %c2_i32_109 : i32
    %229 = arith.index_cast %228 : i32 to index
    %c0_110 = arith.constant 0 : index
    %230 = vector.load %arg22[%229, %c0_110] : memref<16x32xf32, #tpu.memory_space<vmem>>, vector<2x32xf32>
    tpu.vector_store %arg22[%229, %c0_110], %227 {strides = array<i32>} : memref<16x32xf32, #tpu.memory_space<vmem>>, vector<2x32xf32>,
    %c4_i32 = arith.constant 4 : i32
    %c7_i32_111 = arith.constant 7 : i32
    %231 = arith.subi %c7_i32_111, %c4_i32 : i32
    %c0_112 = arith.constant 0 : index
    %c0_113 = arith.constant 0 : index
    %232 = vector.load %arg18[%c0_112, %c0_113] : memref<4x32xf32, #tpu.memory_space<vmem>>, vector<4x32xf32>
    %cst_114 = arith.constant dense<0.000000e+00> : vector<4x256xf32>
    %233 = tpu.matmul %232, %22, %cst_114 {dimension_numbers = #tpu.dot_dimension_numbers<[1], [0], [0], [1], [0, 0, 1, 1], [], []>} : vector<4x32xf32>, vector<32x256xf32>, vector<4x256xf32> -> vector<4x256xf32>
    %234 = vector.extract_strided_slice %233 {offsets = [0, 0], sizes = [4, 128], strides = [1, 1]} : vector<4x256xf32> to vector<4x128xf32>
    %235 = vector.extract_strided_slice %233 {offsets = [0, 128], sizes = [4, 128], strides = [1, 1]} : vector<4x256xf32> to vector<4x128xf32>
    %236 = arith.select %2, %234, %235 : vector<4x128xi1>, vector<4x128xf32>
    %c2_i32_115 = arith.constant 2 : i32
    %237 = arith.muli %c4_i32, %c2_i32_115 : i32
    %238 = arith.index_cast %237 : i32 to index
    %c0_116 = arith.constant 0 : index
    %239 = vector.load %arg20[%238, %c0_116] : memref<16x256xf32, #tpu.memory_space<vmem>>, vector<2x256xf32>
    %240 = vector.extract_strided_slice %239 {offsets = [0, 0], sizes = [2, 128], strides = [1, 1]} : vector<2x256xf32> to vector<2x128xf32>
    %c2_i32_117 = arith.constant 2 : i32
    %241 = arith.muli %231, %c2_i32_117 : i32
    %242 = arith.index_cast %241 : i32 to index
    %c0_118 = arith.constant 0 : index
    %243 = vector.load %arg20[%242, %c0_118] : memref<16x256xf32, #tpu.memory_space<vmem>>, vector<2x256xf32>
    %244 = vector.extract_strided_slice %243 {offsets = [0, 128], sizes = [2, 128], strides = [1, 1]} : vector<2x256xf32> to vector<2x128xf32>
    %245 = tpu.concatenate %240, %244 in 0 : vector<2x128xf32>, vector<2x128xf32> -> vector<4x128xf32>
    %246 = arith.addf %245, %236 : vector<4x128xf32>
    %247 = vector.extract_strided_slice %246 {offsets = [0, 0], sizes = [4, 32], strides = [1, 1]} : vector<4x128xf32> to vector<4x32xf32>
    %248 = arith.negf %247 : vector<4x32xf32>
    %249 = math.exp %248 : vector<4x32xf32>
    %cst_119 = arith.constant 1.000000e+00 : f32
    %250 = vector.broadcast %cst_119 : f32 to vector<4x32xf32>
    %251 = arith.addf %250, %249 : vector<4x32xf32>
    %252 = arith.divf %250, %251 : vector<4x32xf32>
    %253 = vector.extract_strided_slice %246 {offsets = [0, 32], sizes = [4, 32], strides = [1, 1]} : vector<4x128xf32> to vector<4x32xf32>
    %254 = arith.negf %253 : vector<4x32xf32>
    %255 = math.exp %254 : vector<4x32xf32>
    %cst_120 = arith.constant 1.000000e+00 : f32
    %256 = vector.broadcast %cst_120 : f32 to vector<4x32xf32>
    %257 = arith.addf %256, %255 : vector<4x32xf32>
    %258 = arith.divf %256, %257 : vector<4x32xf32>
    %259 = vector.extract_strided_slice %246 {offsets = [0, 64], sizes = [4, 32], strides = [1, 1]} : vector<4x128xf32> to vector<4x32xf32>
    %260 = math.tanh %259 : vector<4x32xf32>
    %261 = vector.extract_strided_slice %246 {offsets = [0, 96], sizes = [4, 32], strides = [1, 1]} : vector<4x128xf32> to vector<4x32xf32>
    %262 = arith.negf %261 : vector<4x32xf32>
    %263 = math.exp %262 : vector<4x32xf32>
    %cst_121 = arith.constant 1.000000e+00 : f32
    %264 = vector.broadcast %cst_121 : f32 to vector<4x32xf32>
    %265 = arith.addf %264, %263 : vector<4x32xf32>
    %266 = arith.divf %264, %265 : vector<4x32xf32>
    %c0_122 = arith.constant 0 : index
    %c0_123 = arith.constant 0 : index
    %267 = vector.load %arg19[%c0_122, %c0_123] : memref<4x32xf32, #tpu.memory_space<vmem>>, vector<4x32xf32>
    %268 = arith.mulf %258, %267 : vector<4x32xf32>
    %269 = arith.mulf %252, %260 : vector<4x32xf32>
    %270 = arith.addf %268, %269 : vector<4x32xf32>
    %271 = math.tanh %270 : vector<4x32xf32>
    %272 = arith.mulf %266, %271 : vector<4x32xf32>
    %c0_124 = arith.constant 0 : index
    %c0_125 = arith.constant 0 : index
    %273 = vector.load %arg18[%c0_124, %c0_125] : memref<4x32xf32, #tpu.memory_space<vmem>>, vector<4x32xf32>
    tpu.vector_store %arg18[%c0_124, %c0_125], %272 {strides = array<i32>} : memref<4x32xf32, #tpu.memory_space<vmem>>, vector<4x32xf32>,
    %c0_126 = arith.constant 0 : index
    %c0_127 = arith.constant 0 : index
    %274 = vector.load %arg19[%c0_126, %c0_127] : memref<4x32xf32, #tpu.memory_space<vmem>>, vector<4x32xf32>
    tpu.vector_store %arg19[%c0_126, %c0_127], %270 {strides = array<i32>} : memref<4x32xf32, #tpu.memory_space<vmem>>, vector<4x32xf32>,
    %275 = vector.extract_strided_slice %272 {offsets = [0, 0], sizes = [2, 32], strides = [1, 1]} : vector<4x32xf32> to vector<2x32xf32>
    %c2_i32_128 = arith.constant 2 : i32
    %276 = arith.muli %c4_i32, %c2_i32_128 : i32
    %277 = arith.index_cast %276 : i32 to index
    %c0_129 = arith.constant 0 : index
    %278 = vector.load %arg21[%277, %c0_129] : memref<16x32xf32, #tpu.memory_space<vmem>>, vector<2x32xf32>
    tpu.vector_store %arg21[%277, %c0_129], %275 {strides = array<i32>} : memref<16x32xf32, #tpu.memory_space<vmem>>, vector<2x32xf32>,
    %279 = vector.extract_strided_slice %272 {offsets = [2, 0], sizes = [2, 32], strides = [1, 1]} : vector<4x32xf32> to vector<2x32xf32>
    %c2_i32_130 = arith.constant 2 : i32
    %280 = arith.muli %231, %c2_i32_130 : i32
    %281 = arith.index_cast %280 : i32 to index
    %c0_131 = arith.constant 0 : index
    %282 = vector.load %arg22[%281, %c0_131] : memref<16x32xf32, #tpu.memory_space<vmem>>, vector<2x32xf32>
    tpu.vector_store %arg22[%281, %c0_131], %279 {strides = array<i32>} : memref<16x32xf32, #tpu.memory_space<vmem>>, vector<2x32xf32>,
    %c5_i32 = arith.constant 5 : i32
    %c7_i32_132 = arith.constant 7 : i32
    %283 = arith.subi %c7_i32_132, %c5_i32 : i32
    %c0_133 = arith.constant 0 : index
    %c0_134 = arith.constant 0 : index
    %284 = vector.load %arg18[%c0_133, %c0_134] : memref<4x32xf32, #tpu.memory_space<vmem>>, vector<4x32xf32>
    %cst_135 = arith.constant dense<0.000000e+00> : vector<4x256xf32>
    %285 = tpu.matmul %284, %22, %cst_135 {dimension_numbers = #tpu.dot_dimension_numbers<[1], [0], [0], [1], [0, 0, 1, 1], [], []>} : vector<4x32xf32>, vector<32x256xf32>, vector<4x256xf32> -> vector<4x256xf32>
    %286 = vector.extract_strided_slice %285 {offsets = [0, 0], sizes = [4, 128], strides = [1, 1]} : vector<4x256xf32> to vector<4x128xf32>
    %287 = vector.extract_strided_slice %285 {offsets = [0, 128], sizes = [4, 128], strides = [1, 1]} : vector<4x256xf32> to vector<4x128xf32>
    %288 = arith.select %2, %286, %287 : vector<4x128xi1>, vector<4x128xf32>
    %c2_i32_136 = arith.constant 2 : i32
    %289 = arith.muli %c5_i32, %c2_i32_136 : i32
    %290 = arith.index_cast %289 : i32 to index
    %c0_137 = arith.constant 0 : index
    %291 = vector.load %arg20[%290, %c0_137] : memref<16x256xf32, #tpu.memory_space<vmem>>, vector<2x256xf32>
    %292 = vector.extract_strided_slice %291 {offsets = [0, 0], sizes = [2, 128], strides = [1, 1]} : vector<2x256xf32> to vector<2x128xf32>
    %c2_i32_138 = arith.constant 2 : i32
    %293 = arith.muli %283, %c2_i32_138 : i32
    %294 = arith.index_cast %293 : i32 to index
    %c0_139 = arith.constant 0 : index
    %295 = vector.load %arg20[%294, %c0_139] : memref<16x256xf32, #tpu.memory_space<vmem>>, vector<2x256xf32>
    %296 = vector.extract_strided_slice %295 {offsets = [0, 128], sizes = [2, 128], strides = [1, 1]} : vector<2x256xf32> to vector<2x128xf32>
    %297 = tpu.concatenate %292, %296 in 0 : vector<2x128xf32>, vector<2x128xf32> -> vector<4x128xf32>
    %298 = arith.addf %297, %288 : vector<4x128xf32>
    %299 = vector.extract_strided_slice %298 {offsets = [0, 0], sizes = [4, 32], strides = [1, 1]} : vector<4x128xf32> to vector<4x32xf32>
    %300 = arith.negf %299 : vector<4x32xf32>
    %301 = math.exp %300 : vector<4x32xf32>
    %cst_140 = arith.constant 1.000000e+00 : f32
    %302 = vector.broadcast %cst_140 : f32 to vector<4x32xf32>
    %303 = arith.addf %302, %301 : vector<4x32xf32>
    %304 = arith.divf %302, %303 : vector<4x32xf32>
    %305 = vector.extract_strided_slice %298 {offsets = [0, 32], sizes = [4, 32], strides = [1, 1]} : vector<4x128xf32> to vector<4x32xf32>
    %306 = arith.negf %305 : vector<4x32xf32>
    %307 = math.exp %306 : vector<4x32xf32>
    %cst_141 = arith.constant 1.000000e+00 : f32
    %308 = vector.broadcast %cst_141 : f32 to vector<4x32xf32>
    %309 = arith.addf %308, %307 : vector<4x32xf32>
    %310 = arith.divf %308, %309 : vector<4x32xf32>
    %311 = vector.extract_strided_slice %298 {offsets = [0, 64], sizes = [4, 32], strides = [1, 1]} : vector<4x128xf32> to vector<4x32xf32>
    %312 = math.tanh %311 : vector<4x32xf32>
    %313 = vector.extract_strided_slice %298 {offsets = [0, 96], sizes = [4, 32], strides = [1, 1]} : vector<4x128xf32> to vector<4x32xf32>
    %314 = arith.negf %313 : vector<4x32xf32>
    %315 = math.exp %314 : vector<4x32xf32>
    %cst_142 = arith.constant 1.000000e+00 : f32
    %316 = vector.broadcast %cst_142 : f32 to vector<4x32xf32>
    %317 = arith.addf %316, %315 : vector<4x32xf32>
    %318 = arith.divf %316, %317 : vector<4x32xf32>
    %c0_143 = arith.constant 0 : index
    %c0_144 = arith.constant 0 : index
    %319 = vector.load %arg19[%c0_143, %c0_144] : memref<4x32xf32, #tpu.memory_space<vmem>>, vector<4x32xf32>
    %320 = arith.mulf %310, %319 : vector<4x32xf32>
    %321 = arith.mulf %304, %312 : vector<4x32xf32>
    %322 = arith.addf %320, %321 : vector<4x32xf32>
    %323 = math.tanh %322 : vector<4x32xf32>
    %324 = arith.mulf %318, %323 : vector<4x32xf32>
    %c0_145 = arith.constant 0 : index
    %c0_146 = arith.constant 0 : index
    %325 = vector.load %arg18[%c0_145, %c0_146] : memref<4x32xf32, #tpu.memory_space<vmem>>, vector<4x32xf32>
    tpu.vector_store %arg18[%c0_145, %c0_146], %324 {strides = array<i32>} : memref<4x32xf32, #tpu.memory_space<vmem>>, vector<4x32xf32>,
    %c0_147 = arith.constant 0 : index
    %c0_148 = arith.constant 0 : index
    %326 = vector.load %arg19[%c0_147, %c0_148] : memref<4x32xf32, #tpu.memory_space<vmem>>, vector<4x32xf32>
    tpu.vector_store %arg19[%c0_147, %c0_148], %322 {strides = array<i32>} : memref<4x32xf32, #tpu.memory_space<vmem>>, vector<4x32xf32>,
    %327 = vector.extract_strided_slice %324 {offsets = [0, 0], sizes = [2, 32], strides = [1, 1]} : vector<4x32xf32> to vector<2x32xf32>
    %c2_i32_149 = arith.constant 2 : i32
    %328 = arith.muli %c5_i32, %c2_i32_149 : i32
    %329 = arith.index_cast %328 : i32 to index
    %c0_150 = arith.constant 0 : index
    %330 = vector.load %arg21[%329, %c0_150] : memref<16x32xf32, #tpu.memory_space<vmem>>, vector<2x32xf32>
    tpu.vector_store %arg21[%329, %c0_150], %327 {strides = array<i32>} : memref<16x32xf32, #tpu.memory_space<vmem>>, vector<2x32xf32>,
    %331 = vector.extract_strided_slice %324 {offsets = [2, 0], sizes = [2, 32], strides = [1, 1]} : vector<4x32xf32> to vector<2x32xf32>
    %c2_i32_151 = arith.constant 2 : i32
    %332 = arith.muli %283, %c2_i32_151 : i32
    %333 = arith.index_cast %332 : i32 to index
    %c0_152 = arith.constant 0 : index
    %334 = vector.load %arg22[%333, %c0_152] : memref<16x32xf32, #tpu.memory_space<vmem>>, vector<2x32xf32>
    tpu.vector_store %arg22[%333, %c0_152], %331 {strides = array<i32>} : memref<16x32xf32, #tpu.memory_space<vmem>>, vector<2x32xf32>,
    %c6_i32 = arith.constant 6 : i32
    %c7_i32_153 = arith.constant 7 : i32
    %335 = arith.subi %c7_i32_153, %c6_i32 : i32
    %c0_154 = arith.constant 0 : index
    %c0_155 = arith.constant 0 : index
    %336 = vector.load %arg18[%c0_154, %c0_155] : memref<4x32xf32, #tpu.memory_space<vmem>>, vector<4x32xf32>
    %cst_156 = arith.constant dense<0.000000e+00> : vector<4x256xf32>
    %337 = tpu.matmul %336, %22, %cst_156 {dimension_numbers = #tpu.dot_dimension_numbers<[1], [0], [0], [1], [0, 0, 1, 1], [], []>} : vector<4x32xf32>, vector<32x256xf32>, vector<4x256xf32> -> vector<4x256xf32>
    %338 = vector.extract_strided_slice %337 {offsets = [0, 0], sizes = [4, 128], strides = [1, 1]} : vector<4x256xf32> to vector<4x128xf32>
    %339 = vector.extract_strided_slice %337 {offsets = [0, 128], sizes = [4, 128], strides = [1, 1]} : vector<4x256xf32> to vector<4x128xf32>
    %340 = arith.select %2, %338, %339 : vector<4x128xi1>, vector<4x128xf32>
    %c2_i32_157 = arith.constant 2 : i32
    %341 = arith.muli %c6_i32, %c2_i32_157 : i32
    %342 = arith.index_cast %341 : i32 to index
    %c0_158 = arith.constant 0 : index
    %343 = vector.load %arg20[%342, %c0_158] : memref<16x256xf32, #tpu.memory_space<vmem>>, vector<2x256xf32>
    %344 = vector.extract_strided_slice %343 {offsets = [0, 0], sizes = [2, 128], strides = [1, 1]} : vector<2x256xf32> to vector<2x128xf32>
    %c2_i32_159 = arith.constant 2 : i32
    %345 = arith.muli %335, %c2_i32_159 : i32
    %346 = arith.index_cast %345 : i32 to index
    %c0_160 = arith.constant 0 : index
    %347 = vector.load %arg20[%346, %c0_160] : memref<16x256xf32, #tpu.memory_space<vmem>>, vector<2x256xf32>
    %348 = vector.extract_strided_slice %347 {offsets = [0, 128], sizes = [2, 128], strides = [1, 1]} : vector<2x256xf32> to vector<2x128xf32>
    %349 = tpu.concatenate %344, %348 in 0 : vector<2x128xf32>, vector<2x128xf32> -> vector<4x128xf32>
    %350 = arith.addf %349, %340 : vector<4x128xf32>
    %351 = vector.extract_strided_slice %350 {offsets = [0, 0], sizes = [4, 32], strides = [1, 1]} : vector<4x128xf32> to vector<4x32xf32>
    %352 = arith.negf %351 : vector<4x32xf32>
    %353 = math.exp %352 : vector<4x32xf32>
    %cst_161 = arith.constant 1.000000e+00 : f32
    %354 = vector.broadcast %cst_161 : f32 to vector<4x32xf32>
    %355 = arith.addf %354, %353 : vector<4x32xf32>
    %356 = arith.divf %354, %355 : vector<4x32xf32>
    %357 = vector.extract_strided_slice %350 {offsets = [0, 32], sizes = [4, 32], strides = [1, 1]} : vector<4x128xf32> to vector<4x32xf32>
    %358 = arith.negf %357 : vector<4x32xf32>
    %359 = math.exp %358 : vector<4x32xf32>
    %cst_162 = arith.constant 1.000000e+00 : f32
    %360 = vector.broadcast %cst_162 : f32 to vector<4x32xf32>
    %361 = arith.addf %360, %359 : vector<4x32xf32>
    %362 = arith.divf %360, %361 : vector<4x32xf32>
    %363 = vector.extract_strided_slice %350 {offsets = [0, 64], sizes = [4, 32], strides = [1, 1]} : vector<4x128xf32> to vector<4x32xf32>
    %364 = math.tanh %363 : vector<4x32xf32>
    %365 = vector.extract_strided_slice %350 {offsets = [0, 96], sizes = [4, 32], strides = [1, 1]} : vector<4x128xf32> to vector<4x32xf32>
    %366 = arith.negf %365 : vector<4x32xf32>
    %367 = math.exp %366 : vector<4x32xf32>
    %cst_163 = arith.constant 1.000000e+00 : f32
    %368 = vector.broadcast %cst_163 : f32 to vector<4x32xf32>
    %369 = arith.addf %368, %367 : vector<4x32xf32>
    %370 = arith.divf %368, %369 : vector<4x32xf32>
    %c0_164 = arith.constant 0 : index
    %c0_165 = arith.constant 0 : index
    %371 = vector.load %arg19[%c0_164, %c0_165] : memref<4x32xf32, #tpu.memory_space<vmem>>, vector<4x32xf32>
    %372 = arith.mulf %362, %371 : vector<4x32xf32>
    %373 = arith.mulf %356, %364 : vector<4x32xf32>
    %374 = arith.addf %372, %373 : vector<4x32xf32>
    %375 = math.tanh %374 : vector<4x32xf32>
    %376 = arith.mulf %370, %375 : vector<4x32xf32>
    %c0_166 = arith.constant 0 : index
    %c0_167 = arith.constant 0 : index
    %377 = vector.load %arg18[%c0_166, %c0_167] : memref<4x32xf32, #tpu.memory_space<vmem>>, vector<4x32xf32>
    tpu.vector_store %arg18[%c0_166, %c0_167], %376 {strides = array<i32>} : memref<4x32xf32, #tpu.memory_space<vmem>>, vector<4x32xf32>,
    %c0_168 = arith.constant 0 : index
    %c0_169 = arith.constant 0 : index
    %378 = vector.load %arg19[%c0_168, %c0_169] : memref<4x32xf32, #tpu.memory_space<vmem>>, vector<4x32xf32>
    tpu.vector_store %arg19[%c0_168, %c0_169], %374 {strides = array<i32>} : memref<4x32xf32, #tpu.memory_space<vmem>>, vector<4x32xf32>,
    %379 = vector.extract_strided_slice %376 {offsets = [0, 0], sizes = [2, 32], strides = [1, 1]} : vector<4x32xf32> to vector<2x32xf32>
    %c2_i32_170 = arith.constant 2 : i32
    %380 = arith.muli %c6_i32, %c2_i32_170 : i32
    %381 = arith.index_cast %380 : i32 to index
    %c0_171 = arith.constant 0 : index
    %382 = vector.load %arg21[%381, %c0_171] : memref<16x32xf32, #tpu.memory_space<vmem>>, vector<2x32xf32>
    tpu.vector_store %arg21[%381, %c0_171], %379 {strides = array<i32>} : memref<16x32xf32, #tpu.memory_space<vmem>>, vector<2x32xf32>,
    %383 = vector.extract_strided_slice %376 {offsets = [2, 0], sizes = [2, 32], strides = [1, 1]} : vector<4x32xf32> to vector<2x32xf32>
    %c2_i32_172 = arith.constant 2 : i32
    %384 = arith.muli %335, %c2_i32_172 : i32
    %385 = arith.index_cast %384 : i32 to index
    %c0_173 = arith.constant 0 : index
    %386 = vector.load %arg22[%385, %c0_173] : memref<16x32xf32, #tpu.memory_space<vmem>>, vector<2x32xf32>
    tpu.vector_store %arg22[%385, %c0_173], %383 {strides = array<i32>} : memref<16x32xf32, #tpu.memory_space<vmem>>, vector<2x32xf32>,
    %c7_i32_174 = arith.constant 7 : i32
    %c7_i32_175 = arith.constant 7 : i32
    %387 = arith.subi %c7_i32_175, %c7_i32_174 : i32
    %c0_176 = arith.constant 0 : index
    %c0_177 = arith.constant 0 : index
    %388 = vector.load %arg18[%c0_176, %c0_177] : memref<4x32xf32, #tpu.memory_space<vmem>>, vector<4x32xf32>
    %cst_178 = arith.constant dense<0.000000e+00> : vector<4x256xf32>
    %389 = tpu.matmul %388, %22, %cst_178 {dimension_numbers = #tpu.dot_dimension_numbers<[1], [0], [0], [1], [0, 0, 1, 1], [], []>} : vector<4x32xf32>, vector<32x256xf32>, vector<4x256xf32> -> vector<4x256xf32>
    %390 = vector.extract_strided_slice %389 {offsets = [0, 0], sizes = [4, 128], strides = [1, 1]} : vector<4x256xf32> to vector<4x128xf32>
    %391 = vector.extract_strided_slice %389 {offsets = [0, 128], sizes = [4, 128], strides = [1, 1]} : vector<4x256xf32> to vector<4x128xf32>
    %392 = arith.select %2, %390, %391 : vector<4x128xi1>, vector<4x128xf32>
    %c2_i32_179 = arith.constant 2 : i32
    %393 = arith.muli %c7_i32_174, %c2_i32_179 : i32
    %394 = arith.index_cast %393 : i32 to index
    %c0_180 = arith.constant 0 : index
    %395 = vector.load %arg20[%394, %c0_180] : memref<16x256xf32, #tpu.memory_space<vmem>>, vector<2x256xf32>
    %396 = vector.extract_strided_slice %395 {offsets = [0, 0], sizes = [2, 128], strides = [1, 1]} : vector<2x256xf32> to vector<2x128xf32>
    %c2_i32_181 = arith.constant 2 : i32
    %397 = arith.muli %387, %c2_i32_181 : i32
    %398 = arith.index_cast %397 : i32 to index
    %c0_182 = arith.constant 0 : index
    %399 = vector.load %arg20[%398, %c0_182] : memref<16x256xf32, #tpu.memory_space<vmem>>, vector<2x256xf32>
    %400 = vector.extract_strided_slice %399 {offsets = [0, 128], sizes = [2, 128], strides = [1, 1]} : vector<2x256xf32> to vector<2x128xf32>
    %401 = tpu.concatenate %396, %400 in 0 : vector<2x128xf32>, vector<2x128xf32> -> vector<4x128xf32>
    %402 = arith.addf %401, %392 : vector<4x128xf32>
    %403 = vector.extract_strided_slice %402 {offsets = [0, 0], sizes = [4, 32], strides = [1, 1]} : vector<4x128xf32> to vector<4x32xf32>
    %404 = arith.negf %403 : vector<4x32xf32>
    %405 = math.exp %404 : vector<4x32xf32>
    %cst_183 = arith.constant 1.000000e+00 : f32
    %406 = vector.broadcast %cst_183 : f32 to vector<4x32xf32>
    %407 = arith.addf %406, %405 : vector<4x32xf32>
    %408 = arith.divf %406, %407 : vector<4x32xf32>
    %409 = vector.extract_strided_slice %402 {offsets = [0, 32], sizes = [4, 32], strides = [1, 1]} : vector<4x128xf32> to vector<4x32xf32>
    %410 = arith.negf %409 : vector<4x32xf32>
    %411 = math.exp %410 : vector<4x32xf32>
    %cst_184 = arith.constant 1.000000e+00 : f32
    %412 = vector.broadcast %cst_184 : f32 to vector<4x32xf32>
    %413 = arith.addf %412, %411 : vector<4x32xf32>
    %414 = arith.divf %412, %413 : vector<4x32xf32>
    %415 = vector.extract_strided_slice %402 {offsets = [0, 64], sizes = [4, 32], strides = [1, 1]} : vector<4x128xf32> to vector<4x32xf32>
    %416 = math.tanh %415 : vector<4x32xf32>
    %417 = vector.extract_strided_slice %402 {offsets = [0, 96], sizes = [4, 32], strides = [1, 1]} : vector<4x128xf32> to vector<4x32xf32>
    %418 = arith.negf %417 : vector<4x32xf32>
    %419 = math.exp %418 : vector<4x32xf32>
    %cst_185 = arith.constant 1.000000e+00 : f32
    %420 = vector.broadcast %cst_185 : f32 to vector<4x32xf32>
    %421 = arith.addf %420, %419 : vector<4x32xf32>
    %422 = arith.divf %420, %421 : vector<4x32xf32>
    %c0_186 = arith.constant 0 : index
    %c0_187 = arith.constant 0 : index
    %423 = vector.load %arg19[%c0_186, %c0_187] : memref<4x32xf32, #tpu.memory_space<vmem>>, vector<4x32xf32>
    %424 = arith.mulf %414, %423 : vector<4x32xf32>
    %425 = arith.mulf %408, %416 : vector<4x32xf32>
    %426 = arith.addf %424, %425 : vector<4x32xf32>
    %427 = math.tanh %426 : vector<4x32xf32>
    %428 = arith.mulf %422, %427 : vector<4x32xf32>
    %c0_188 = arith.constant 0 : index
    %c0_189 = arith.constant 0 : index
    %429 = vector.load %arg18[%c0_188, %c0_189] : memref<4x32xf32, #tpu.memory_space<vmem>>, vector<4x32xf32>
    tpu.vector_store %arg18[%c0_188, %c0_189], %428 {strides = array<i32>} : memref<4x32xf32, #tpu.memory_space<vmem>>, vector<4x32xf32>,
    %c0_190 = arith.constant 0 : index
    %c0_191 = arith.constant 0 : index
    %430 = vector.load %arg19[%c0_190, %c0_191] : memref<4x32xf32, #tpu.memory_space<vmem>>, vector<4x32xf32>
    tpu.vector_store %arg19[%c0_190, %c0_191], %426 {strides = array<i32>} : memref<4x32xf32, #tpu.memory_space<vmem>>, vector<4x32xf32>,
    %431 = vector.extract_strided_slice %428 {offsets = [0, 0], sizes = [2, 32], strides = [1, 1]} : vector<4x32xf32> to vector<2x32xf32>
    %c2_i32_192 = arith.constant 2 : i32
    %432 = arith.muli %c7_i32_174, %c2_i32_192 : i32
    %433 = arith.index_cast %432 : i32 to index
    %c0_193 = arith.constant 0 : index
    %434 = vector.load %arg21[%433, %c0_193] : memref<16x32xf32, #tpu.memory_space<vmem>>, vector<2x32xf32>
    tpu.vector_store %arg21[%433, %c0_193], %431 {strides = array<i32>} : memref<16x32xf32, #tpu.memory_space<vmem>>, vector<2x32xf32>,
    %435 = vector.extract_strided_slice %428 {offsets = [2, 0], sizes = [2, 32], strides = [1, 1]} : vector<4x32xf32> to vector<2x32xf32>
    %c2_i32_194 = arith.constant 2 : i32
    %436 = arith.muli %387, %c2_i32_194 : i32
    %437 = arith.index_cast %436 : i32 to index
    %c0_195 = arith.constant 0 : index
    %438 = vector.load %arg22[%437, %c0_195] : memref<16x32xf32, #tpu.memory_space<vmem>>, vector<2x32xf32>
    tpu.vector_store %arg22[%437, %c0_195], %435 {strides = array<i32>} : memref<16x32xf32, #tpu.memory_space<vmem>>, vector<2x32xf32>,
    %c8_i32 = arith.constant 8 : i32
    %c0_196 = arith.constant 0 : index
    %c0_197 = arith.constant 0 : index
    %439 = vector.load %arg18[%c0_196, %c0_197] : memref<4x32xf32, #tpu.memory_space<vmem>>, vector<2x32xf32>
    %c0_198 = arith.constant 0 : index
    %c0_199 = arith.constant 0 : index
    %c0_200 = arith.constant 0 : index
    %440 = vector.load %arg16[%c0_198, %c0_199, %c0_200] : memref<6x2x32xf32, #tpu.memory_space<vmem>>, vector<1x2x32xf32>
    %441 = vector.shape_cast %440 : vector<1x2x32xf32> to vector<2x32xf32>
    %442 = vector.shape_cast %439 : vector<2x32xf32> to vector<1x2x32xf32>
    tpu.vector_store %arg16[%c0_198, %c0_199, %c0_200], %442 {strides = array<i32>} : memref<6x2x32xf32, #tpu.memory_space<vmem>>, vector<1x2x32xf32>,
    %c2_201 = arith.constant 2 : index
    %c0_202 = arith.constant 0 : index
    %443 = vector.load %arg18[%c2_201, %c0_202] : memref<4x32xf32, #tpu.memory_space<vmem>>, vector<2x32xf32>
    %c1_203 = arith.constant 1 : index
    %c0_204 = arith.constant 0 : index
    %c0_205 = arith.constant 0 : index
    %444 = vector.load %arg16[%c1_203, %c0_204, %c0_205] : memref<6x2x32xf32, #tpu.memory_space<vmem>>, vector<1x2x32xf32>
    %445 = vector.shape_cast %444 : vector<1x2x32xf32> to vector<2x32xf32>
    %446 = vector.shape_cast %443 : vector<2x32xf32> to vector<1x2x32xf32>
    tpu.vector_store %arg16[%c1_203, %c0_204, %c0_205], %446 {strides = array<i32>} : memref<6x2x32xf32, #tpu.memory_space<vmem>>, vector<1x2x32xf32>,
    %c0_206 = arith.constant 0 : index
    %c0_207 = arith.constant 0 : index
    %447 = vector.load %arg19[%c0_206, %c0_207] : memref<4x32xf32, #tpu.memory_space<vmem>>, vector<2x32xf32>
    %c0_208 = arith.constant 0 : index
    %c0_209 = arith.constant 0 : index
    %c0_210 = arith.constant 0 : index
    %448 = vector.load %arg17[%c0_208, %c0_209, %c0_210] : memref<6x2x32xf32, #tpu.memory_space<vmem>>, vector<1x2x32xf32>
    %449 = vector.shape_cast %448 : vector<1x2x32xf32> to vector<2x32xf32>
    %450 = vector.shape_cast %447 : vector<2x32xf32> to vector<1x2x32xf32>
    tpu.vector_store %arg17[%c0_208, %c0_209, %c0_210], %450 {strides = array<i32>} : memref<6x2x32xf32, #tpu.memory_space<vmem>>, vector<1x2x32xf32>,
    %c2_211 = arith.constant 2 : index
    %c0_212 = arith.constant 0 : index
    %451 = vector.load %arg19[%c2_211, %c0_212] : memref<4x32xf32, #tpu.memory_space<vmem>>, vector<2x32xf32>
    %c1_213 = arith.constant 1 : index
    %c0_214 = arith.constant 0 : index
    %c0_215 = arith.constant 0 : index
    %452 = vector.load %arg17[%c1_213, %c0_214, %c0_215] : memref<6x2x32xf32, #tpu.memory_space<vmem>>, vector<1x2x32xf32>
    %453 = vector.shape_cast %452 : vector<1x2x32xf32> to vector<2x32xf32>
    %454 = vector.shape_cast %451 : vector<2x32xf32> to vector<1x2x32xf32>
    tpu.vector_store %arg17[%c1_213, %c0_214, %c0_215], %454 {strides = array<i32>} : memref<6x2x32xf32, #tpu.memory_space<vmem>>, vector<1x2x32xf32>,
    %c0_216 = arith.constant 0 : index
    %c0_217 = arith.constant 0 : index
    %455 = vector.load %arg7[%c0_216, %c0_217] : memref<64x256xf32, #tpu.memory_space<vmem>>, vector<64x256xf32>
    %c0_218 = arith.constant 0 : index
    %c0_219 = arith.constant 0 : index
    %456 = vector.load %arg21[%c0_218, %c0_219] : memref<16x32xf32, #tpu.memory_space<vmem>>, vector<16x32xf32>
    %457 = vector.extract_strided_slice %455 {offsets = [0, 0], sizes = [32, 256], strides = [1, 1]} : vector<64x256xf32> to vector<32x256xf32>
    %cst_220 = arith.constant dense<0.000000e+00> : vector<16x256xf32>
    %458 = tpu.matmul %456, %457, %cst_220 {dimension_numbers = #tpu.dot_dimension_numbers<[1], [0], [0], [1], [0, 0, 1, 1], [], []>} : vector<16x32xf32>, vector<32x256xf32>, vector<16x256xf32> -> vector<16x256xf32>
    %c0_221 = arith.constant 0 : index
    %c0_222 = arith.constant 0 : index
    %459 = vector.load %arg22[%c0_221, %c0_222] : memref<16x32xf32, #tpu.memory_space<vmem>>, vector<16x32xf32>
    %460 = vector.extract_strided_slice %455 {offsets = [32, 0], sizes = [32, 256], strides = [1, 1]} : vector<64x256xf32> to vector<32x256xf32>
    %cst_223 = arith.constant dense<0.000000e+00> : vector<16x256xf32>
    %461 = tpu.matmul %459, %460, %cst_223 {dimension_numbers = #tpu.dot_dimension_numbers<[1], [0], [0], [1], [0, 0, 1, 1], [], []>} : vector<16x32xf32>, vector<32x256xf32>, vector<16x256xf32> -> vector<16x256xf32>
    %462 = arith.addf %458, %461 : vector<16x256xf32>
    %c0_224 = arith.constant 0 : index
    %c0_225 = arith.constant 0 : index
    %463 = vector.load %arg9[%c0_224, %c0_225] : memref<1x256xf32, #tpu.memory_space<vmem>>, vector<1x256xf32>
    %464 = vector.broadcast %463 : vector<1x256xf32> to vector<16x256xf32>
    %465 = arith.addf %462, %464 : vector<16x256xf32>
    %c0_226 = arith.constant 0 : index
    %c0_227 = arith.constant 0 : index
    %466 = vector.load %arg20[%c0_226, %c0_227] : memref<16x256xf32, #tpu.memory_space<vmem>>, vector<16x256xf32>
    tpu.vector_store %arg20[%c0_226, %c0_227], %465 {strides = array<i32>} : memref<16x256xf32, #tpu.memory_space<vmem>>, vector<16x256xf32>,
    %c2_228 = arith.constant 2 : index
    %c0_229 = arith.constant 0 : index
    %c0_230 = arith.constant 0 : index
    %467 = vector.load %arg2[%c2_228, %c0_229, %c0_230] : memref<6x2x32xf32, #tpu.memory_space<vmem>>, vector<1x2x32xf32>
    %468 = vector.shape_cast %467 : vector<1x2x32xf32> to vector<2x32xf32>
    %c0_231 = arith.constant 0 : index
    %c0_232 = arith.constant 0 : index
    %469 = vector.load %arg18[%c0_231, %c0_232] : memref<4x32xf32, #tpu.memory_space<vmem>>, vector<2x32xf32>
    tpu.vector_store %arg18[%c0_231, %c0_232], %468 {strides = array<i32>} : memref<4x32xf32, #tpu.memory_space<vmem>>, vector<2x32xf32>,
    %c3 = arith.constant 3 : index
    %c0_233 = arith.constant 0 : index
    %c0_234 = arith.constant 0 : index
    %470 = vector.load %arg2[%c3, %c0_233, %c0_234] : memref<6x2x32xf32, #tpu.memory_space<vmem>>, vector<1x2x32xf32>
    %471 = vector.shape_cast %470 : vector<1x2x32xf32> to vector<2x32xf32>
    %c2_235 = arith.constant 2 : index
    %c0_236 = arith.constant 0 : index
    %472 = vector.load %arg18[%c2_235, %c0_236] : memref<4x32xf32, #tpu.memory_space<vmem>>, vector<2x32xf32>
    tpu.vector_store %arg18[%c2_235, %c0_236], %471 {strides = array<i32>} : memref<4x32xf32, #tpu.memory_space<vmem>>, vector<2x32xf32>,
    %c2_237 = arith.constant 2 : index
    %c0_238 = arith.constant 0 : index
    %c0_239 = arith.constant 0 : index
    %473 = vector.load %arg3[%c2_237, %c0_238, %c0_239] : memref<6x2x32xf32, #tpu.memory_space<vmem>>, vector<1x2x32xf32>
    %474 = vector.shape_cast %473 : vector<1x2x32xf32> to vector<2x32xf32>
    %c0_240 = arith.constant 0 : index
    %c0_241 = arith.constant 0 : index
    %475 = vector.load %arg19[%c0_240, %c0_241] : memref<4x32xf32, #tpu.memory_space<vmem>>, vector<2x32xf32>
    tpu.vector_store %arg19[%c0_240, %c0_241], %474 {strides = array<i32>} : memref<4x32xf32, #tpu.memory_space<vmem>>, vector<2x32xf32>,
    %c3_242 = arith.constant 3 : index
    %c0_243 = arith.constant 0 : index
    %c0_244 = arith.constant 0 : index
    %476 = vector.load %arg3[%c3_242, %c0_243, %c0_244] : memref<6x2x32xf32, #tpu.memory_space<vmem>>, vector<1x2x32xf32>
    %477 = vector.shape_cast %476 : vector<1x2x32xf32> to vector<2x32xf32>
    %c2_245 = arith.constant 2 : index
    %c0_246 = arith.constant 0 : index
    %478 = vector.load %arg19[%c2_245, %c0_246] : memref<4x32xf32, #tpu.memory_space<vmem>>, vector<2x32xf32>
    tpu.vector_store %arg19[%c2_245, %c0_246], %477 {strides = array<i32>} : memref<4x32xf32, #tpu.memory_space<vmem>>, vector<2x32xf32>,
    %c0_247 = arith.constant 0 : index
    %c0_248 = arith.constant 0 : index
    %479 = vector.load %arg8[%c0_247, %c0_248] : memref<32x256xf32, #tpu.memory_space<vmem>>, vector<32x256xf32>
    %c0_i32_249 = arith.constant 0 : i32
    %c7_i32_250 = arith.constant 7 : i32
    %480 = arith.subi %c7_i32_250, %c0_i32_249 : i32
    %c0_251 = arith.constant 0 : index
    %c0_252 = arith.constant 0 : index
    %481 = vector.load %arg18[%c0_251, %c0_252] : memref<4x32xf32, #tpu.memory_space<vmem>>, vector<4x32xf32>
    %cst_253 = arith.constant dense<0.000000e+00> : vector<4x256xf32>
    %482 = tpu.matmul %481, %479, %cst_253 {dimension_numbers = #tpu.dot_dimension_numbers<[1], [0], [0], [1], [0, 0, 1, 1], [], []>} : vector<4x32xf32>, vector<32x256xf32>, vector<4x256xf32> -> vector<4x256xf32>
    %483 = vector.extract_strided_slice %482 {offsets = [0, 0], sizes = [4, 128], strides = [1, 1]} : vector<4x256xf32> to vector<4x128xf32>
    %484 = vector.extract_strided_slice %482 {offsets = [0, 128], sizes = [4, 128], strides = [1, 1]} : vector<4x256xf32> to vector<4x128xf32>
    %485 = arith.select %2, %483, %484 : vector<4x128xi1>, vector<4x128xf32>
    %c2_i32_254 = arith.constant 2 : i32
    %486 = arith.muli %c0_i32_249, %c2_i32_254 : i32
    %487 = arith.index_cast %486 : i32 to index
    %c0_255 = arith.constant 0 : index
    %488 = vector.load %arg20[%487, %c0_255] : memref<16x256xf32, #tpu.memory_space<vmem>>, vector<2x256xf32>
    %489 = vector.extract_strided_slice %488 {offsets = [0, 0], sizes = [2, 128], strides = [1, 1]} : vector<2x256xf32> to vector<2x128xf32>
    %c2_i32_256 = arith.constant 2 : i32
    %490 = arith.muli %480, %c2_i32_256 : i32
    %491 = arith.index_cast %490 : i32 to index
    %c0_257 = arith.constant 0 : index
    %492 = vector.load %arg20[%491, %c0_257] : memref<16x256xf32, #tpu.memory_space<vmem>>, vector<2x256xf32>
    %493 = vector.extract_strided_slice %492 {offsets = [0, 128], sizes = [2, 128], strides = [1, 1]} : vector<2x256xf32> to vector<2x128xf32>
    %494 = tpu.concatenate %489, %493 in 0 : vector<2x128xf32>, vector<2x128xf32> -> vector<4x128xf32>
    %495 = arith.addf %494, %485 : vector<4x128xf32>
    %496 = vector.extract_strided_slice %495 {offsets = [0, 0], sizes = [4, 32], strides = [1, 1]} : vector<4x128xf32> to vector<4x32xf32>
    %497 = arith.negf %496 : vector<4x32xf32>
    %498 = math.exp %497 : vector<4x32xf32>
    %cst_258 = arith.constant 1.000000e+00 : f32
    %499 = vector.broadcast %cst_258 : f32 to vector<4x32xf32>
    %500 = arith.addf %499, %498 : vector<4x32xf32>
    %501 = arith.divf %499, %500 : vector<4x32xf32>
    %502 = vector.extract_strided_slice %495 {offsets = [0, 32], sizes = [4, 32], strides = [1, 1]} : vector<4x128xf32> to vector<4x32xf32>
    %503 = arith.negf %502 : vector<4x32xf32>
    %504 = math.exp %503 : vector<4x32xf32>
    %cst_259 = arith.constant 1.000000e+00 : f32
    %505 = vector.broadcast %cst_259 : f32 to vector<4x32xf32>
    %506 = arith.addf %505, %504 : vector<4x32xf32>
    %507 = arith.divf %505, %506 : vector<4x32xf32>
    %508 = vector.extract_strided_slice %495 {offsets = [0, 64], sizes = [4, 32], strides = [1, 1]} : vector<4x128xf32> to vector<4x32xf32>
    %509 = math.tanh %508 : vector<4x32xf32>
    %510 = vector.extract_strided_slice %495 {offsets = [0, 96], sizes = [4, 32], strides = [1, 1]} : vector<4x128xf32> to vector<4x32xf32>
    %511 = arith.negf %510 : vector<4x32xf32>
    %512 = math.exp %511 : vector<4x32xf32>
    %cst_260 = arith.constant 1.000000e+00 : f32
    %513 = vector.broadcast %cst_260 : f32 to vector<4x32xf32>
    %514 = arith.addf %513, %512 : vector<4x32xf32>
    %515 = arith.divf %513, %514 : vector<4x32xf32>
    %c0_261 = arith.constant 0 : index
    %c0_262 = arith.constant 0 : index
    %516 = vector.load %arg19[%c0_261, %c0_262] : memref<4x32xf32, #tpu.memory_space<vmem>>, vector<4x32xf32>
    %517 = arith.mulf %507, %516 : vector<4x32xf32>
    %518 = arith.mulf %501, %509 : vector<4x32xf32>
    %519 = arith.addf %517, %518 : vector<4x32xf32>
    %520 = math.tanh %519 : vector<4x32xf32>
    %521 = arith.mulf %515, %520 : vector<4x32xf32>
    %c0_263 = arith.constant 0 : index
    %c0_264 = arith.constant 0 : index
    %522 = vector.load %arg18[%c0_263, %c0_264] : memref<4x32xf32, #tpu.memory_space<vmem>>, vector<4x32xf32>
    tpu.vector_store %arg18[%c0_263, %c0_264], %521 {strides = array<i32>} : memref<4x32xf32, #tpu.memory_space<vmem>>, vector<4x32xf32>,
    %c0_265 = arith.constant 0 : index
    %c0_266 = arith.constant 0 : index
    %523 = vector.load %arg19[%c0_265, %c0_266] : memref<4x32xf32, #tpu.memory_space<vmem>>, vector<4x32xf32>
    tpu.vector_store %arg19[%c0_265, %c0_266], %519 {strides = array<i32>} : memref<4x32xf32, #tpu.memory_space<vmem>>, vector<4x32xf32>,
    %524 = vector.extract_strided_slice %521 {offsets = [0, 0], sizes = [2, 32], strides = [1, 1]} : vector<4x32xf32> to vector<2x32xf32>
    %c2_i32_267 = arith.constant 2 : i32
    %525 = arith.muli %c0_i32_249, %c2_i32_267 : i32
    %526 = arith.index_cast %525 : i32 to index
    %c0_268 = arith.constant 0 : index
    %527 = vector.load %arg23[%526, %c0_268] : memref<16x32xf32, #tpu.memory_space<vmem>>, vector<2x32xf32>
    tpu.vector_store %arg23[%526, %c0_268], %524 {strides = array<i32>} : memref<16x32xf32, #tpu.memory_space<vmem>>, vector<2x32xf32>,
    %528 = vector.extract_strided_slice %521 {offsets = [2, 0], sizes = [2, 32], strides = [1, 1]} : vector<4x32xf32> to vector<2x32xf32>
    %c2_i32_269 = arith.constant 2 : i32
    %529 = arith.muli %480, %c2_i32_269 : i32
    %530 = arith.index_cast %529 : i32 to index
    %c0_270 = arith.constant 0 : index
    %531 = vector.load %arg24[%530, %c0_270] : memref<16x32xf32, #tpu.memory_space<vmem>>, vector<2x32xf32>
    tpu.vector_store %arg24[%530, %c0_270], %528 {strides = array<i32>} : memref<16x32xf32, #tpu.memory_space<vmem>>, vector<2x32xf32>,
    %c1_i32_271 = arith.constant 1 : i32
    %c7_i32_272 = arith.constant 7 : i32
    %532 = arith.subi %c7_i32_272, %c1_i32_271 : i32
    %c0_273 = arith.constant 0 : index
    %c0_274 = arith.constant 0 : index
    %533 = vector.load %arg18[%c0_273, %c0_274] : memref<4x32xf32, #tpu.memory_space<vmem>>, vector<4x32xf32>
    %cst_275 = arith.constant dense<0.000000e+00> : vector<4x256xf32>
    %534 = tpu.matmul %533, %479, %cst_275 {dimension_numbers = #tpu.dot_dimension_numbers<[1], [0], [0], [1], [0, 0, 1, 1], [], []>} : vector<4x32xf32>, vector<32x256xf32>, vector<4x256xf32> -> vector<4x256xf32>
    %535 = vector.extract_strided_slice %534 {offsets = [0, 0], sizes = [4, 128], strides = [1, 1]} : vector<4x256xf32> to vector<4x128xf32>
    %536 = vector.extract_strided_slice %534 {offsets = [0, 128], sizes = [4, 128], strides = [1, 1]} : vector<4x256xf32> to vector<4x128xf32>
    %537 = arith.select %2, %535, %536 : vector<4x128xi1>, vector<4x128xf32>
    %c2_i32_276 = arith.constant 2 : i32
    %538 = arith.muli %c1_i32_271, %c2_i32_276 : i32
    %539 = arith.index_cast %538 : i32 to index
    %c0_277 = arith.constant 0 : index
    %540 = vector.load %arg20[%539, %c0_277] : memref<16x256xf32, #tpu.memory_space<vmem>>, vector<2x256xf32>
    %541 = vector.extract_strided_slice %540 {offsets = [0, 0], sizes = [2, 128], strides = [1, 1]} : vector<2x256xf32> to vector<2x128xf32>
    %c2_i32_278 = arith.constant 2 : i32
    %542 = arith.muli %532, %c2_i32_278 : i32
    %543 = arith.index_cast %542 : i32 to index
    %c0_279 = arith.constant 0 : index
    %544 = vector.load %arg20[%543, %c0_279] : memref<16x256xf32, #tpu.memory_space<vmem>>, vector<2x256xf32>
    %545 = vector.extract_strided_slice %544 {offsets = [0, 128], sizes = [2, 128], strides = [1, 1]} : vector<2x256xf32> to vector<2x128xf32>
    %546 = tpu.concatenate %541, %545 in 0 : vector<2x128xf32>, vector<2x128xf32> -> vector<4x128xf32>
    %547 = arith.addf %546, %537 : vector<4x128xf32>
    %548 = vector.extract_strided_slice %547 {offsets = [0, 0], sizes = [4, 32], strides = [1, 1]} : vector<4x128xf32> to vector<4x32xf32>
    %549 = arith.negf %548 : vector<4x32xf32>
    %550 = math.exp %549 : vector<4x32xf32>
    %cst_280 = arith.constant 1.000000e+00 : f32
    %551 = vector.broadcast %cst_280 : f32 to vector<4x32xf32>
    %552 = arith.addf %551, %550 : vector<4x32xf32>
    %553 = arith.divf %551, %552 : vector<4x32xf32>
    %554 = vector.extract_strided_slice %547 {offsets = [0, 32], sizes = [4, 32], strides = [1, 1]} : vector<4x128xf32> to vector<4x32xf32>
    %555 = arith.negf %554 : vector<4x32xf32>
    %556 = math.exp %555 : vector<4x32xf32>
    %cst_281 = arith.constant 1.000000e+00 : f32
    %557 = vector.broadcast %cst_281 : f32 to vector<4x32xf32>
    %558 = arith.addf %557, %556 : vector<4x32xf32>
    %559 = arith.divf %557, %558 : vector<4x32xf32>
    %560 = vector.extract_strided_slice %547 {offsets = [0, 64], sizes = [4, 32], strides = [1, 1]} : vector<4x128xf32> to vector<4x32xf32>
    %561 = math.tanh %560 : vector<4x32xf32>
    %562 = vector.extract_strided_slice %547 {offsets = [0, 96], sizes = [4, 32], strides = [1, 1]} : vector<4x128xf32> to vector<4x32xf32>
    %563 = arith.negf %562 : vector<4x32xf32>
    %564 = math.exp %563 : vector<4x32xf32>
    %cst_282 = arith.constant 1.000000e+00 : f32
    %565 = vector.broadcast %cst_282 : f32 to vector<4x32xf32>
    %566 = arith.addf %565, %564 : vector<4x32xf32>
    %567 = arith.divf %565, %566 : vector<4x32xf32>
    %c0_283 = arith.constant 0 : index
    %c0_284 = arith.constant 0 : index
    %568 = vector.load %arg19[%c0_283, %c0_284] : memref<4x32xf32, #tpu.memory_space<vmem>>, vector<4x32xf32>
    %569 = arith.mulf %559, %568 : vector<4x32xf32>
    %570 = arith.mulf %553, %561 : vector<4x32xf32>
    %571 = arith.addf %569, %570 : vector<4x32xf32>
    %572 = math.tanh %571 : vector<4x32xf32>
    %573 = arith.mulf %567, %572 : vector<4x32xf32>
    %c0_285 = arith.constant 0 : index
    %c0_286 = arith.constant 0 : index
    %574 = vector.load %arg18[%c0_285, %c0_286] : memref<4x32xf32, #tpu.memory_space<vmem>>, vector<4x32xf32>
    tpu.vector_store %arg18[%c0_285, %c0_286], %573 {strides = array<i32>} : memref<4x32xf32, #tpu.memory_space<vmem>>, vector<4x32xf32>,
    %c0_287 = arith.constant 0 : index
    %c0_288 = arith.constant 0 : index
    %575 = vector.load %arg19[%c0_287, %c0_288] : memref<4x32xf32, #tpu.memory_space<vmem>>, vector<4x32xf32>
    tpu.vector_store %arg19[%c0_287, %c0_288], %571 {strides = array<i32>} : memref<4x32xf32, #tpu.memory_space<vmem>>, vector<4x32xf32>,
    %576 = vector.extract_strided_slice %573 {offsets = [0, 0], sizes = [2, 32], strides = [1, 1]} : vector<4x32xf32> to vector<2x32xf32>
    %c2_i32_289 = arith.constant 2 : i32
    %577 = arith.muli %c1_i32_271, %c2_i32_289 : i32
    %578 = arith.index_cast %577 : i32 to index
    %c0_290 = arith.constant 0 : index
    %579 = vector.load %arg23[%578, %c0_290] : memref<16x32xf32, #tpu.memory_space<vmem>>, vector<2x32xf32>
    tpu.vector_store %arg23[%578, %c0_290], %576 {strides = array<i32>} : memref<16x32xf32, #tpu.memory_space<vmem>>, vector<2x32xf32>,
    %580 = vector.extract_strided_slice %573 {offsets = [2, 0], sizes = [2, 32], strides = [1, 1]} : vector<4x32xf32> to vector<2x32xf32>
    %c2_i32_291 = arith.constant 2 : i32
    %581 = arith.muli %532, %c2_i32_291 : i32
    %582 = arith.index_cast %581 : i32 to index
    %c0_292 = arith.constant 0 : index
    %583 = vector.load %arg24[%582, %c0_292] : memref<16x32xf32, #tpu.memory_space<vmem>>, vector<2x32xf32>
    tpu.vector_store %arg24[%582, %c0_292], %580 {strides = array<i32>} : memref<16x32xf32, #tpu.memory_space<vmem>>, vector<2x32xf32>,
    %c2_i32_293 = arith.constant 2 : i32
    %c7_i32_294 = arith.constant 7 : i32
    %584 = arith.subi %c7_i32_294, %c2_i32_293 : i32
    %c0_295 = arith.constant 0 : index
    %c0_296 = arith.constant 0 : index
    %585 = vector.load %arg18[%c0_295, %c0_296] : memref<4x32xf32, #tpu.memory_space<vmem>>, vector<4x32xf32>
    %cst_297 = arith.constant dense<0.000000e+00> : vector<4x256xf32>
    %586 = tpu.matmul %585, %479, %cst_297 {dimension_numbers = #tpu.dot_dimension_numbers<[1], [0], [0], [1], [0, 0, 1, 1], [], []>} : vector<4x32xf32>, vector<32x256xf32>, vector<4x256xf32> -> vector<4x256xf32>
    %587 = vector.extract_strided_slice %586 {offsets = [0, 0], sizes = [4, 128], strides = [1, 1]} : vector<4x256xf32> to vector<4x128xf32>
    %588 = vector.extract_strided_slice %586 {offsets = [0, 128], sizes = [4, 128], strides = [1, 1]} : vector<4x256xf32> to vector<4x128xf32>
    %589 = arith.select %2, %587, %588 : vector<4x128xi1>, vector<4x128xf32>
    %c2_i32_298 = arith.constant 2 : i32
    %590 = arith.muli %c2_i32_293, %c2_i32_298 : i32
    %591 = arith.index_cast %590 : i32 to index
    %c0_299 = arith.constant 0 : index
    %592 = vector.load %arg20[%591, %c0_299] : memref<16x256xf32, #tpu.memory_space<vmem>>, vector<2x256xf32>
    %593 = vector.extract_strided_slice %592 {offsets = [0, 0], sizes = [2, 128], strides = [1, 1]} : vector<2x256xf32> to vector<2x128xf32>
    %c2_i32_300 = arith.constant 2 : i32
    %594 = arith.muli %584, %c2_i32_300 : i32
    %595 = arith.index_cast %594 : i32 to index
    %c0_301 = arith.constant 0 : index
    %596 = vector.load %arg20[%595, %c0_301] : memref<16x256xf32, #tpu.memory_space<vmem>>, vector<2x256xf32>
    %597 = vector.extract_strided_slice %596 {offsets = [0, 128], sizes = [2, 128], strides = [1, 1]} : vector<2x256xf32> to vector<2x128xf32>
    %598 = tpu.concatenate %593, %597 in 0 : vector<2x128xf32>, vector<2x128xf32> -> vector<4x128xf32>
    %599 = arith.addf %598, %589 : vector<4x128xf32>
    %600 = vector.extract_strided_slice %599 {offsets = [0, 0], sizes = [4, 32], strides = [1, 1]} : vector<4x128xf32> to vector<4x32xf32>
    %601 = arith.negf %600 : vector<4x32xf32>
    %602 = math.exp %601 : vector<4x32xf32>
    %cst_302 = arith.constant 1.000000e+00 : f32
    %603 = vector.broadcast %cst_302 : f32 to vector<4x32xf32>
    %604 = arith.addf %603, %602 : vector<4x32xf32>
    %605 = arith.divf %603, %604 : vector<4x32xf32>
    %606 = vector.extract_strided_slice %599 {offsets = [0, 32], sizes = [4, 32], strides = [1, 1]} : vector<4x128xf32> to vector<4x32xf32>
    %607 = arith.negf %606 : vector<4x32xf32>
    %608 = math.exp %607 : vector<4x32xf32>
    %cst_303 = arith.constant 1.000000e+00 : f32
    %609 = vector.broadcast %cst_303 : f32 to vector<4x32xf32>
    %610 = arith.addf %609, %608 : vector<4x32xf32>
    %611 = arith.divf %609, %610 : vector<4x32xf32>
    %612 = vector.extract_strided_slice %599 {offsets = [0, 64], sizes = [4, 32], strides = [1, 1]} : vector<4x128xf32> to vector<4x32xf32>
    %613 = math.tanh %612 : vector<4x32xf32>
    %614 = vector.extract_strided_slice %599 {offsets = [0, 96], sizes = [4, 32], strides = [1, 1]} : vector<4x128xf32> to vector<4x32xf32>
    %615 = arith.negf %614 : vector<4x32xf32>
    %616 = math.exp %615 : vector<4x32xf32>
    %cst_304 = arith.constant 1.000000e+00 : f32
    %617 = vector.broadcast %cst_304 : f32 to vector<4x32xf32>
    %618 = arith.addf %617, %616 : vector<4x32xf32>
    %619 = arith.divf %617, %618 : vector<4x32xf32>
    %c0_305 = arith.constant 0 : index
    %c0_306 = arith.constant 0 : index
    %620 = vector.load %arg19[%c0_305, %c0_306] : memref<4x32xf32, #tpu.memory_space<vmem>>, vector<4x32xf32>
    %621 = arith.mulf %611, %620 : vector<4x32xf32>
    %622 = arith.mulf %605, %613 : vector<4x32xf32>
    %623 = arith.addf %621, %622 : vector<4x32xf32>
    %624 = math.tanh %623 : vector<4x32xf32>
    %625 = arith.mulf %619, %624 : vector<4x32xf32>
    %c0_307 = arith.constant 0 : index
    %c0_308 = arith.constant 0 : index
    %626 = vector.load %arg18[%c0_307, %c0_308] : memref<4x32xf32, #tpu.memory_space<vmem>>, vector<4x32xf32>
    tpu.vector_store %arg18[%c0_307, %c0_308], %625 {strides = array<i32>} : memref<4x32xf32, #tpu.memory_space<vmem>>, vector<4x32xf32>,
    %c0_309 = arith.constant 0 : index
    %c0_310 = arith.constant 0 : index
    %627 = vector.load %arg19[%c0_309, %c0_310] : memref<4x32xf32, #tpu.memory_space<vmem>>, vector<4x32xf32>
    tpu.vector_store %arg19[%c0_309, %c0_310], %623 {strides = array<i32>} : memref<4x32xf32, #tpu.memory_space<vmem>>, vector<4x32xf32>,
    %628 = vector.extract_strided_slice %625 {offsets = [0, 0], sizes = [2, 32], strides = [1, 1]} : vector<4x32xf32> to vector<2x32xf32>
    %c2_i32_311 = arith.constant 2 : i32
    %629 = arith.muli %c2_i32_293, %c2_i32_311 : i32
    %630 = arith.index_cast %629 : i32 to index
    %c0_312 = arith.constant 0 : index
    %631 = vector.load %arg23[%630, %c0_312] : memref<16x32xf32, #tpu.memory_space<vmem>>, vector<2x32xf32>
    tpu.vector_store %arg23[%630, %c0_312], %628 {strides = array<i32>} : memref<16x32xf32, #tpu.memory_space<vmem>>, vector<2x32xf32>,
    %632 = vector.extract_strided_slice %625 {offsets = [2, 0], sizes = [2, 32], strides = [1, 1]} : vector<4x32xf32> to vector<2x32xf32>
    %c2_i32_313 = arith.constant 2 : i32
    %633 = arith.muli %584, %c2_i32_313 : i32
    %634 = arith.index_cast %633 : i32 to index
    %c0_314 = arith.constant 0 : index
    %635 = vector.load %arg24[%634, %c0_314] : memref<16x32xf32, #tpu.memory_space<vmem>>, vector<2x32xf32>
    tpu.vector_store %arg24[%634, %c0_314], %632 {strides = array<i32>} : memref<16x32xf32, #tpu.memory_space<vmem>>, vector<2x32xf32>,
    %c3_i32_315 = arith.constant 3 : i32
    %c7_i32_316 = arith.constant 7 : i32
    %636 = arith.subi %c7_i32_316, %c3_i32_315 : i32
    %c0_317 = arith.constant 0 : index
    %c0_318 = arith.constant 0 : index
    %637 = vector.load %arg18[%c0_317, %c0_318] : memref<4x32xf32, #tpu.memory_space<vmem>>, vector<4x32xf32>
    %cst_319 = arith.constant dense<0.000000e+00> : vector<4x256xf32>
    %638 = tpu.matmul %637, %479, %cst_319 {dimension_numbers = #tpu.dot_dimension_numbers<[1], [0], [0], [1], [0, 0, 1, 1], [], []>} : vector<4x32xf32>, vector<32x256xf32>, vector<4x256xf32> -> vector<4x256xf32>
    %639 = vector.extract_strided_slice %638 {offsets = [0, 0], sizes = [4, 128], strides = [1, 1]} : vector<4x256xf32> to vector<4x128xf32>
    %640 = vector.extract_strided_slice %638 {offsets = [0, 128], sizes = [4, 128], strides = [1, 1]} : vector<4x256xf32> to vector<4x128xf32>
    %641 = arith.select %2, %639, %640 : vector<4x128xi1>, vector<4x128xf32>
    %c2_i32_320 = arith.constant 2 : i32
    %642 = arith.muli %c3_i32_315, %c2_i32_320 : i32
    %643 = arith.index_cast %642 : i32 to index
    %c0_321 = arith.constant 0 : index
    %644 = vector.load %arg20[%643, %c0_321] : memref<16x256xf32, #tpu.memory_space<vmem>>, vector<2x256xf32>
    %645 = vector.extract_strided_slice %644 {offsets = [0, 0], sizes = [2, 128], strides = [1, 1]} : vector<2x256xf32> to vector<2x128xf32>
    %c2_i32_322 = arith.constant 2 : i32
    %646 = arith.muli %636, %c2_i32_322 : i32
    %647 = arith.index_cast %646 : i32 to index
    %c0_323 = arith.constant 0 : index
    %648 = vector.load %arg20[%647, %c0_323] : memref<16x256xf32, #tpu.memory_space<vmem>>, vector<2x256xf32>
    %649 = vector.extract_strided_slice %648 {offsets = [0, 128], sizes = [2, 128], strides = [1, 1]} : vector<2x256xf32> to vector<2x128xf32>
    %650 = tpu.concatenate %645, %649 in 0 : vector<2x128xf32>, vector<2x128xf32> -> vector<4x128xf32>
    %651 = arith.addf %650, %641 : vector<4x128xf32>
    %652 = vector.extract_strided_slice %651 {offsets = [0, 0], sizes = [4, 32], strides = [1, 1]} : vector<4x128xf32> to vector<4x32xf32>
    %653 = arith.negf %652 : vector<4x32xf32>
    %654 = math.exp %653 : vector<4x32xf32>
    %cst_324 = arith.constant 1.000000e+00 : f32
    %655 = vector.broadcast %cst_324 : f32 to vector<4x32xf32>
    %656 = arith.addf %655, %654 : vector<4x32xf32>
    %657 = arith.divf %655, %656 : vector<4x32xf32>
    %658 = vector.extract_strided_slice %651 {offsets = [0, 32], sizes = [4, 32], strides = [1, 1]} : vector<4x128xf32> to vector<4x32xf32>
    %659 = arith.negf %658 : vector<4x32xf32>
    %660 = math.exp %659 : vector<4x32xf32>
    %cst_325 = arith.constant 1.000000e+00 : f32
    %661 = vector.broadcast %cst_325 : f32 to vector<4x32xf32>
    %662 = arith.addf %661, %660 : vector<4x32xf32>
    %663 = arith.divf %661, %662 : vector<4x32xf32>
    %664 = vector.extract_strided_slice %651 {offsets = [0, 64], sizes = [4, 32], strides = [1, 1]} : vector<4x128xf32> to vector<4x32xf32>
    %665 = math.tanh %664 : vector<4x32xf32>
    %666 = vector.extract_strided_slice %651 {offsets = [0, 96], sizes = [4, 32], strides = [1, 1]} : vector<4x128xf32> to vector<4x32xf32>
    %667 = arith.negf %666 : vector<4x32xf32>
    %668 = math.exp %667 : vector<4x32xf32>
    %cst_326 = arith.constant 1.000000e+00 : f32
    %669 = vector.broadcast %cst_326 : f32 to vector<4x32xf32>
    %670 = arith.addf %669, %668 : vector<4x32xf32>
    %671 = arith.divf %669, %670 : vector<4x32xf32>
    %c0_327 = arith.constant 0 : index
    %c0_328 = arith.constant 0 : index
    %672 = vector.load %arg19[%c0_327, %c0_328] : memref<4x32xf32, #tpu.memory_space<vmem>>, vector<4x32xf32>
    %673 = arith.mulf %663, %672 : vector<4x32xf32>
    %674 = arith.mulf %657, %665 : vector<4x32xf32>
    %675 = arith.addf %673, %674 : vector<4x32xf32>
    %676 = math.tanh %675 : vector<4x32xf32>
    %677 = arith.mulf %671, %676 : vector<4x32xf32>
    %c0_329 = arith.constant 0 : index
    %c0_330 = arith.constant 0 : index
    %678 = vector.load %arg18[%c0_329, %c0_330] : memref<4x32xf32, #tpu.memory_space<vmem>>, vector<4x32xf32>
    tpu.vector_store %arg18[%c0_329, %c0_330], %677 {strides = array<i32>} : memref<4x32xf32, #tpu.memory_space<vmem>>, vector<4x32xf32>,
    %c0_331 = arith.constant 0 : index
    %c0_332 = arith.constant 0 : index
    %679 = vector.load %arg19[%c0_331, %c0_332] : memref<4x32xf32, #tpu.memory_space<vmem>>, vector<4x32xf32>
    tpu.vector_store %arg19[%c0_331, %c0_332], %675 {strides = array<i32>} : memref<4x32xf32, #tpu.memory_space<vmem>>, vector<4x32xf32>,
    %680 = vector.extract_strided_slice %677 {offsets = [0, 0], sizes = [2, 32], strides = [1, 1]} : vector<4x32xf32> to vector<2x32xf32>
    %c2_i32_333 = arith.constant 2 : i32
    %681 = arith.muli %c3_i32_315, %c2_i32_333 : i32
    %682 = arith.index_cast %681 : i32 to index
    %c0_334 = arith.constant 0 : index
    %683 = vector.load %arg23[%682, %c0_334] : memref<16x32xf32, #tpu.memory_space<vmem>>, vector<2x32xf32>
    tpu.vector_store %arg23[%682, %c0_334], %680 {strides = array<i32>} : memref<16x32xf32, #tpu.memory_space<vmem>>, vector<2x32xf32>,
    %684 = vector.extract_strided_slice %677 {offsets = [2, 0], sizes = [2, 32], strides = [1, 1]} : vector<4x32xf32> to vector<2x32xf32>
    %c2_i32_335 = arith.constant 2 : i32
    %685 = arith.muli %636, %c2_i32_335 : i32
    %686 = arith.index_cast %685 : i32 to index
    %c0_336 = arith.constant 0 : index
    %687 = vector.load %arg24[%686, %c0_336] : memref<16x32xf32, #tpu.memory_space<vmem>>, vector<2x32xf32>
    tpu.vector_store %arg24[%686, %c0_336], %684 {strides = array<i32>} : memref<16x32xf32, #tpu.memory_space<vmem>>, vector<2x32xf32>,
    %c4_i32_337 = arith.constant 4 : i32
    %c7_i32_338 = arith.constant 7 : i32
    %688 = arith.subi %c7_i32_338, %c4_i32_337 : i32
    %c0_339 = arith.constant 0 : index
    %c0_340 = arith.constant 0 : index
    %689 = vector.load %arg18[%c0_339, %c0_340] : memref<4x32xf32, #tpu.memory_space<vmem>>, vector<4x32xf32>
    %cst_341 = arith.constant dense<0.000000e+00> : vector<4x256xf32>
    %690 = tpu.matmul %689, %479, %cst_341 {dimension_numbers = #tpu.dot_dimension_numbers<[1], [0], [0], [1], [0, 0, 1, 1], [], []>} : vector<4x32xf32>, vector<32x256xf32>, vector<4x256xf32> -> vector<4x256xf32>
    %691 = vector.extract_strided_slice %690 {offsets = [0, 0], sizes = [4, 128], strides = [1, 1]} : vector<4x256xf32> to vector<4x128xf32>
    %692 = vector.extract_strided_slice %690 {offsets = [0, 128], sizes = [4, 128], strides = [1, 1]} : vector<4x256xf32> to vector<4x128xf32>
    %693 = arith.select %2, %691, %692 : vector<4x128xi1>, vector<4x128xf32>
    %c2_i32_342 = arith.constant 2 : i32
    %694 = arith.muli %c4_i32_337, %c2_i32_342 : i32
    %695 = arith.index_cast %694 : i32 to index
    %c0_343 = arith.constant 0 : index
    %696 = vector.load %arg20[%695, %c0_343] : memref<16x256xf32, #tpu.memory_space<vmem>>, vector<2x256xf32>
    %697 = vector.extract_strided_slice %696 {offsets = [0, 0], sizes = [2, 128], strides = [1, 1]} : vector<2x256xf32> to vector<2x128xf32>
    %c2_i32_344 = arith.constant 2 : i32
    %698 = arith.muli %688, %c2_i32_344 : i32
    %699 = arith.index_cast %698 : i32 to index
    %c0_345 = arith.constant 0 : index
    %700 = vector.load %arg20[%699, %c0_345] : memref<16x256xf32, #tpu.memory_space<vmem>>, vector<2x256xf32>
    %701 = vector.extract_strided_slice %700 {offsets = [0, 128], sizes = [2, 128], strides = [1, 1]} : vector<2x256xf32> to vector<2x128xf32>
    %702 = tpu.concatenate %697, %701 in 0 : vector<2x128xf32>, vector<2x128xf32> -> vector<4x128xf32>
    %703 = arith.addf %702, %693 : vector<4x128xf32>
    %704 = vector.extract_strided_slice %703 {offsets = [0, 0], sizes = [4, 32], strides = [1, 1]} : vector<4x128xf32> to vector<4x32xf32>
    %705 = arith.negf %704 : vector<4x32xf32>
    %706 = math.exp %705 : vector<4x32xf32>
    %cst_346 = arith.constant 1.000000e+00 : f32
    %707 = vector.broadcast %cst_346 : f32 to vector<4x32xf32>
    %708 = arith.addf %707, %706 : vector<4x32xf32>
    %709 = arith.divf %707, %708 : vector<4x32xf32>
    %710 = vector.extract_strided_slice %703 {offsets = [0, 32], sizes = [4, 32], strides = [1, 1]} : vector<4x128xf32> to vector<4x32xf32>
    %711 = arith.negf %710 : vector<4x32xf32>
    %712 = math.exp %711 : vector<4x32xf32>
    %cst_347 = arith.constant 1.000000e+00 : f32
    %713 = vector.broadcast %cst_347 : f32 to vector<4x32xf32>
    %714 = arith.addf %713, %712 : vector<4x32xf32>
    %715 = arith.divf %713, %714 : vector<4x32xf32>
    %716 = vector.extract_strided_slice %703 {offsets = [0, 64], sizes = [4, 32], strides = [1, 1]} : vector<4x128xf32> to vector<4x32xf32>
    %717 = math.tanh %716 : vector<4x32xf32>
    %718 = vector.extract_strided_slice %703 {offsets = [0, 96], sizes = [4, 32], strides = [1, 1]} : vector<4x128xf32> to vector<4x32xf32>
    %719 = arith.negf %718 : vector<4x32xf32>
    %720 = math.exp %719 : vector<4x32xf32>
    %cst_348 = arith.constant 1.000000e+00 : f32
    %721 = vector.broadcast %cst_348 : f32 to vector<4x32xf32>
    %722 = arith.addf %721, %720 : vector<4x32xf32>
    %723 = arith.divf %721, %722 : vector<4x32xf32>
    %c0_349 = arith.constant 0 : index
    %c0_350 = arith.constant 0 : index
    %724 = vector.load %arg19[%c0_349, %c0_350] : memref<4x32xf32, #tpu.memory_space<vmem>>, vector<4x32xf32>
    %725 = arith.mulf %715, %724 : vector<4x32xf32>
    %726 = arith.mulf %709, %717 : vector<4x32xf32>
    %727 = arith.addf %725, %726 : vector<4x32xf32>
    %728 = math.tanh %727 : vector<4x32xf32>
    %729 = arith.mulf %723, %728 : vector<4x32xf32>
    %c0_351 = arith.constant 0 : index
    %c0_352 = arith.constant 0 : index
    %730 = vector.load %arg18[%c0_351, %c0_352] : memref<4x32xf32, #tpu.memory_space<vmem>>, vector<4x32xf32>
    tpu.vector_store %arg18[%c0_351, %c0_352], %729 {strides = array<i32>} : memref<4x32xf32, #tpu.memory_space<vmem>>, vector<4x32xf32>,
    %c0_353 = arith.constant 0 : index
    %c0_354 = arith.constant 0 : index
    %731 = vector.load %arg19[%c0_353, %c0_354] : memref<4x32xf32, #tpu.memory_space<vmem>>, vector<4x32xf32>
    tpu.vector_store %arg19[%c0_353, %c0_354], %727 {strides = array<i32>} : memref<4x32xf32, #tpu.memory_space<vmem>>, vector<4x32xf32>,
    %732 = vector.extract_strided_slice %729 {offsets = [0, 0], sizes = [2, 32], strides = [1, 1]} : vector<4x32xf32> to vector<2x32xf32>
    %c2_i32_355 = arith.constant 2 : i32
    %733 = arith.muli %c4_i32_337, %c2_i32_355 : i32
    %734 = arith.index_cast %733 : i32 to index
    %c0_356 = arith.constant 0 : index
    %735 = vector.load %arg23[%734, %c0_356] : memref<16x32xf32, #tpu.memory_space<vmem>>, vector<2x32xf32>
    tpu.vector_store %arg23[%734, %c0_356], %732 {strides = array<i32>} : memref<16x32xf32, #tpu.memory_space<vmem>>, vector<2x32xf32>,
    %736 = vector.extract_strided_slice %729 {offsets = [2, 0], sizes = [2, 32], strides = [1, 1]} : vector<4x32xf32> to vector<2x32xf32>
    %c2_i32_357 = arith.constant 2 : i32
    %737 = arith.muli %688, %c2_i32_357 : i32
    %738 = arith.index_cast %737 : i32 to index
    %c0_358 = arith.constant 0 : index
    %739 = vector.load %arg24[%738, %c0_358] : memref<16x32xf32, #tpu.memory_space<vmem>>, vector<2x32xf32>
    tpu.vector_store %arg24[%738, %c0_358], %736 {strides = array<i32>} : memref<16x32xf32, #tpu.memory_space<vmem>>, vector<2x32xf32>,
    %c5_i32_359 = arith.constant 5 : i32
    %c7_i32_360 = arith.constant 7 : i32
    %740 = arith.subi %c7_i32_360, %c5_i32_359 : i32
    %c0_361 = arith.constant 0 : index
    %c0_362 = arith.constant 0 : index
    %741 = vector.load %arg18[%c0_361, %c0_362] : memref<4x32xf32, #tpu.memory_space<vmem>>, vector<4x32xf32>
    %cst_363 = arith.constant dense<0.000000e+00> : vector<4x256xf32>
    %742 = tpu.matmul %741, %479, %cst_363 {dimension_numbers = #tpu.dot_dimension_numbers<[1], [0], [0], [1], [0, 0, 1, 1], [], []>} : vector<4x32xf32>, vector<32x256xf32>, vector<4x256xf32> -> vector<4x256xf32>
    %743 = vector.extract_strided_slice %742 {offsets = [0, 0], sizes = [4, 128], strides = [1, 1]} : vector<4x256xf32> to vector<4x128xf32>
    %744 = vector.extract_strided_slice %742 {offsets = [0, 128], sizes = [4, 128], strides = [1, 1]} : vector<4x256xf32> to vector<4x128xf32>
    %745 = arith.select %2, %743, %744 : vector<4x128xi1>, vector<4x128xf32>
    %c2_i32_364 = arith.constant 2 : i32
    %746 = arith.muli %c5_i32_359, %c2_i32_364 : i32
    %747 = arith.index_cast %746 : i32 to index
    %c0_365 = arith.constant 0 : index
    %748 = vector.load %arg20[%747, %c0_365] : memref<16x256xf32, #tpu.memory_space<vmem>>, vector<2x256xf32>
    %749 = vector.extract_strided_slice %748 {offsets = [0, 0], sizes = [2, 128], strides = [1, 1]} : vector<2x256xf32> to vector<2x128xf32>
    %c2_i32_366 = arith.constant 2 : i32
    %750 = arith.muli %740, %c2_i32_366 : i32
    %751 = arith.index_cast %750 : i32 to index
    %c0_367 = arith.constant 0 : index
    %752 = vector.load %arg20[%751, %c0_367] : memref<16x256xf32, #tpu.memory_space<vmem>>, vector<2x256xf32>
    %753 = vector.extract_strided_slice %752 {offsets = [0, 128], sizes = [2, 128], strides = [1, 1]} : vector<2x256xf32> to vector<2x128xf32>
    %754 = tpu.concatenate %749, %753 in 0 : vector<2x128xf32>, vector<2x128xf32> -> vector<4x128xf32>
    %755 = arith.addf %754, %745 : vector<4x128xf32>
    %756 = vector.extract_strided_slice %755 {offsets = [0, 0], sizes = [4, 32], strides = [1, 1]} : vector<4x128xf32> to vector<4x32xf32>
    %757 = arith.negf %756 : vector<4x32xf32>
    %758 = math.exp %757 : vector<4x32xf32>
    %cst_368 = arith.constant 1.000000e+00 : f32
    %759 = vector.broadcast %cst_368 : f32 to vector<4x32xf32>
    %760 = arith.addf %759, %758 : vector<4x32xf32>
    %761 = arith.divf %759, %760 : vector<4x32xf32>
    %762 = vector.extract_strided_slice %755 {offsets = [0, 32], sizes = [4, 32], strides = [1, 1]} : vector<4x128xf32> to vector<4x32xf32>
    %763 = arith.negf %762 : vector<4x32xf32>
    %764 = math.exp %763 : vector<4x32xf32>
    %cst_369 = arith.constant 1.000000e+00 : f32
    %765 = vector.broadcast %cst_369 : f32 to vector<4x32xf32>
    %766 = arith.addf %765, %764 : vector<4x32xf32>
    %767 = arith.divf %765, %766 : vector<4x32xf32>
    %768 = vector.extract_strided_slice %755 {offsets = [0, 64], sizes = [4, 32], strides = [1, 1]} : vector<4x128xf32> to vector<4x32xf32>
    %769 = math.tanh %768 : vector<4x32xf32>
    %770 = vector.extract_strided_slice %755 {offsets = [0, 96], sizes = [4, 32], strides = [1, 1]} : vector<4x128xf32> to vector<4x32xf32>
    %771 = arith.negf %770 : vector<4x32xf32>
    %772 = math.exp %771 : vector<4x32xf32>
    %cst_370 = arith.constant 1.000000e+00 : f32
    %773 = vector.broadcast %cst_370 : f32 to vector<4x32xf32>
    %774 = arith.addf %773, %772 : vector<4x32xf32>
    %775 = arith.divf %773, %774 : vector<4x32xf32>
    %c0_371 = arith.constant 0 : index
    %c0_372 = arith.constant 0 : index
    %776 = vector.load %arg19[%c0_371, %c0_372] : memref<4x32xf32, #tpu.memory_space<vmem>>, vector<4x32xf32>
    %777 = arith.mulf %767, %776 : vector<4x32xf32>
    %778 = arith.mulf %761, %769 : vector<4x32xf32>
    %779 = arith.addf %777, %778 : vector<4x32xf32>
    %780 = math.tanh %779 : vector<4x32xf32>
    %781 = arith.mulf %775, %780 : vector<4x32xf32>
    %c0_373 = arith.constant 0 : index
    %c0_374 = arith.constant 0 : index
    %782 = vector.load %arg18[%c0_373, %c0_374] : memref<4x32xf32, #tpu.memory_space<vmem>>, vector<4x32xf32>
    tpu.vector_store %arg18[%c0_373, %c0_374], %781 {strides = array<i32>} : memref<4x32xf32, #tpu.memory_space<vmem>>, vector<4x32xf32>,
    %c0_375 = arith.constant 0 : index
    %c0_376 = arith.constant 0 : index
    %783 = vector.load %arg19[%c0_375, %c0_376] : memref<4x32xf32, #tpu.memory_space<vmem>>, vector<4x32xf32>
    tpu.vector_store %arg19[%c0_375, %c0_376], %779 {strides = array<i32>} : memref<4x32xf32, #tpu.memory_space<vmem>>, vector<4x32xf32>,
    %784 = vector.extract_strided_slice %781 {offsets = [0, 0], sizes = [2, 32], strides = [1, 1]} : vector<4x32xf32> to vector<2x32xf32>
    %c2_i32_377 = arith.constant 2 : i32
    %785 = arith.muli %c5_i32_359, %c2_i32_377 : i32
    %786 = arith.index_cast %785 : i32 to index
    %c0_378 = arith.constant 0 : index
    %787 = vector.load %arg23[%786, %c0_378] : memref<16x32xf32, #tpu.memory_space<vmem>>, vector<2x32xf32>
    tpu.vector_store %arg23[%786, %c0_378], %784 {strides = array<i32>} : memref<16x32xf32, #tpu.memory_space<vmem>>, vector<2x32xf32>,
    %788 = vector.extract_strided_slice %781 {offsets = [2, 0], sizes = [2, 32], strides = [1, 1]} : vector<4x32xf32> to vector<2x32xf32>
    %c2_i32_379 = arith.constant 2 : i32
    %789 = arith.muli %740, %c2_i32_379 : i32
    %790 = arith.index_cast %789 : i32 to index
    %c0_380 = arith.constant 0 : index
    %791 = vector.load %arg24[%790, %c0_380] : memref<16x32xf32, #tpu.memory_space<vmem>>, vector<2x32xf32>
    tpu.vector_store %arg24[%790, %c0_380], %788 {strides = array<i32>} : memref<16x32xf32, #tpu.memory_space<vmem>>, vector<2x32xf32>,
    %c6_i32_381 = arith.constant 6 : i32
    %c7_i32_382 = arith.constant 7 : i32
    %792 = arith.subi %c7_i32_382, %c6_i32_381 : i32
    %c0_383 = arith.constant 0 : index
    %c0_384 = arith.constant 0 : index
    %793 = vector.load %arg18[%c0_383, %c0_384] : memref<4x32xf32, #tpu.memory_space<vmem>>, vector<4x32xf32>
    %cst_385 = arith.constant dense<0.000000e+00> : vector<4x256xf32>
    %794 = tpu.matmul %793, %479, %cst_385 {dimension_numbers = #tpu.dot_dimension_numbers<[1], [0], [0], [1], [0, 0, 1, 1], [], []>} : vector<4x32xf32>, vector<32x256xf32>, vector<4x256xf32> -> vector<4x256xf32>
    %795 = vector.extract_strided_slice %794 {offsets = [0, 0], sizes = [4, 128], strides = [1, 1]} : vector<4x256xf32> to vector<4x128xf32>
    %796 = vector.extract_strided_slice %794 {offsets = [0, 128], sizes = [4, 128], strides = [1, 1]} : vector<4x256xf32> to vector<4x128xf32>
    %797 = arith.select %2, %795, %796 : vector<4x128xi1>, vector<4x128xf32>
    %c2_i32_386 = arith.constant 2 : i32
    %798 = arith.muli %c6_i32_381, %c2_i32_386 : i32
    %799 = arith.index_cast %798 : i32 to index
    %c0_387 = arith.constant 0 : index
    %800 = vector.load %arg20[%799, %c0_387] : memref<16x256xf32, #tpu.memory_space<vmem>>, vector<2x256xf32>
    %801 = vector.extract_strided_slice %800 {offsets = [0, 0], sizes = [2, 128], strides = [1, 1]} : vector<2x256xf32> to vector<2x128xf32>
    %c2_i32_388 = arith.constant 2 : i32
    %802 = arith.muli %792, %c2_i32_388 : i32
    %803 = arith.index_cast %802 : i32 to index
    %c0_389 = arith.constant 0 : index
    %804 = vector.load %arg20[%803, %c0_389] : memref<16x256xf32, #tpu.memory_space<vmem>>, vector<2x256xf32>
    %805 = vector.extract_strided_slice %804 {offsets = [0, 128], sizes = [2, 128], strides = [1, 1]} : vector<2x256xf32> to vector<2x128xf32>
    %806 = tpu.concatenate %801, %805 in 0 : vector<2x128xf32>, vector<2x128xf32> -> vector<4x128xf32>
    %807 = arith.addf %806, %797 : vector<4x128xf32>
    %808 = vector.extract_strided_slice %807 {offsets = [0, 0], sizes = [4, 32], strides = [1, 1]} : vector<4x128xf32> to vector<4x32xf32>
    %809 = arith.negf %808 : vector<4x32xf32>
    %810 = math.exp %809 : vector<4x32xf32>
    %cst_390 = arith.constant 1.000000e+00 : f32
    %811 = vector.broadcast %cst_390 : f32 to vector<4x32xf32>
    %812 = arith.addf %811, %810 : vector<4x32xf32>
    %813 = arith.divf %811, %812 : vector<4x32xf32>
    %814 = vector.extract_strided_slice %807 {offsets = [0, 32], sizes = [4, 32], strides = [1, 1]} : vector<4x128xf32> to vector<4x32xf32>
    %815 = arith.negf %814 : vector<4x32xf32>
    %816 = math.exp %815 : vector<4x32xf32>
    %cst_391 = arith.constant 1.000000e+00 : f32
    %817 = vector.broadcast %cst_391 : f32 to vector<4x32xf32>
    %818 = arith.addf %817, %816 : vector<4x32xf32>
    %819 = arith.divf %817, %818 : vector<4x32xf32>
    %820 = vector.extract_strided_slice %807 {offsets = [0, 64], sizes = [4, 32], strides = [1, 1]} : vector<4x128xf32> to vector<4x32xf32>
    %821 = math.tanh %820 : vector<4x32xf32>
    %822 = vector.extract_strided_slice %807 {offsets = [0, 96], sizes = [4, 32], strides = [1, 1]} : vector<4x128xf32> to vector<4x32xf32>
    %823 = arith.negf %822 : vector<4x32xf32>
    %824 = math.exp %823 : vector<4x32xf32>
    %cst_392 = arith.constant 1.000000e+00 : f32
    %825 = vector.broadcast %cst_392 : f32 to vector<4x32xf32>
    %826 = arith.addf %825, %824 : vector<4x32xf32>
    %827 = arith.divf %825, %826 : vector<4x32xf32>
    %c0_393 = arith.constant 0 : index
    %c0_394 = arith.constant 0 : index
    %828 = vector.load %arg19[%c0_393, %c0_394] : memref<4x32xf32, #tpu.memory_space<vmem>>, vector<4x32xf32>
    %829 = arith.mulf %819, %828 : vector<4x32xf32>
    %830 = arith.mulf %813, %821 : vector<4x32xf32>
    %831 = arith.addf %829, %830 : vector<4x32xf32>
    %832 = math.tanh %831 : vector<4x32xf32>
    %833 = arith.mulf %827, %832 : vector<4x32xf32>
    %c0_395 = arith.constant 0 : index
    %c0_396 = arith.constant 0 : index
    %834 = vector.load %arg18[%c0_395, %c0_396] : memref<4x32xf32, #tpu.memory_space<vmem>>, vector<4x32xf32>
    tpu.vector_store %arg18[%c0_395, %c0_396], %833 {strides = array<i32>} : memref<4x32xf32, #tpu.memory_space<vmem>>, vector<4x32xf32>,
    %c0_397 = arith.constant 0 : index
    %c0_398 = arith.constant 0 : index
    %835 = vector.load %arg19[%c0_397, %c0_398] : memref<4x32xf32, #tpu.memory_space<vmem>>, vector<4x32xf32>
    tpu.vector_store %arg19[%c0_397, %c0_398], %831 {strides = array<i32>} : memref<4x32xf32, #tpu.memory_space<vmem>>, vector<4x32xf32>,
    %836 = vector.extract_strided_slice %833 {offsets = [0, 0], sizes = [2, 32], strides = [1, 1]} : vector<4x32xf32> to vector<2x32xf32>
    %c2_i32_399 = arith.constant 2 : i32
    %837 = arith.muli %c6_i32_381, %c2_i32_399 : i32
    %838 = arith.index_cast %837 : i32 to index
    %c0_400 = arith.constant 0 : index
    %839 = vector.load %arg23[%838, %c0_400] : memref<16x32xf32, #tpu.memory_space<vmem>>, vector<2x32xf32>
    tpu.vector_store %arg23[%838, %c0_400], %836 {strides = array<i32>} : memref<16x32xf32, #tpu.memory_space<vmem>>, vector<2x32xf32>,
    %840 = vector.extract_strided_slice %833 {offsets = [2, 0], sizes = [2, 32], strides = [1, 1]} : vector<4x32xf32> to vector<2x32xf32>
    %c2_i32_401 = arith.constant 2 : i32
    %841 = arith.muli %792, %c2_i32_401 : i32
    %842 = arith.index_cast %841 : i32 to index
    %c0_402 = arith.constant 0 : index
    %843 = vector.load %arg24[%842, %c0_402] : memref<16x32xf32, #tpu.memory_space<vmem>>, vector<2x32xf32>
    tpu.vector_store %arg24[%842, %c0_402], %840 {strides = array<i32>} : memref<16x32xf32, #tpu.memory_space<vmem>>, vector<2x32xf32>,
    %c7_i32_403 = arith.constant 7 : i32
    %c7_i32_404 = arith.constant 7 : i32
    %844 = arith.subi %c7_i32_404, %c7_i32_403 : i32
    %c0_405 = arith.constant 0 : index
    %c0_406 = arith.constant 0 : index
    %845 = vector.load %arg18[%c0_405, %c0_406] : memref<4x32xf32, #tpu.memory_space<vmem>>, vector<4x32xf32>
    %cst_407 = arith.constant dense<0.000000e+00> : vector<4x256xf32>
    %846 = tpu.matmul %845, %479, %cst_407 {dimension_numbers = #tpu.dot_dimension_numbers<[1], [0], [0], [1], [0, 0, 1, 1], [], []>} : vector<4x32xf32>, vector<32x256xf32>, vector<4x256xf32> -> vector<4x256xf32>
    %847 = vector.extract_strided_slice %846 {offsets = [0, 0], sizes = [4, 128], strides = [1, 1]} : vector<4x256xf32> to vector<4x128xf32>
    %848 = vector.extract_strided_slice %846 {offsets = [0, 128], sizes = [4, 128], strides = [1, 1]} : vector<4x256xf32> to vector<4x128xf32>
    %849 = arith.select %2, %847, %848 : vector<4x128xi1>, vector<4x128xf32>
    %c2_i32_408 = arith.constant 2 : i32
    %850 = arith.muli %c7_i32_403, %c2_i32_408 : i32
    %851 = arith.index_cast %850 : i32 to index
    %c0_409 = arith.constant 0 : index
    %852 = vector.load %arg20[%851, %c0_409] : memref<16x256xf32, #tpu.memory_space<vmem>>, vector<2x256xf32>
    %853 = vector.extract_strided_slice %852 {offsets = [0, 0], sizes = [2, 128], strides = [1, 1]} : vector<2x256xf32> to vector<2x128xf32>
    %c2_i32_410 = arith.constant 2 : i32
    %854 = arith.muli %844, %c2_i32_410 : i32
    %855 = arith.index_cast %854 : i32 to index
    %c0_411 = arith.constant 0 : index
    %856 = vector.load %arg20[%855, %c0_411] : memref<16x256xf32, #tpu.memory_space<vmem>>, vector<2x256xf32>
    %857 = vector.extract_strided_slice %856 {offsets = [0, 128], sizes = [2, 128], strides = [1, 1]} : vector<2x256xf32> to vector<2x128xf32>
    %858 = tpu.concatenate %853, %857 in 0 : vector<2x128xf32>, vector<2x128xf32> -> vector<4x128xf32>
    %859 = arith.addf %858, %849 : vector<4x128xf32>
    %860 = vector.extract_strided_slice %859 {offsets = [0, 0], sizes = [4, 32], strides = [1, 1]} : vector<4x128xf32> to vector<4x32xf32>
    %861 = arith.negf %860 : vector<4x32xf32>
    %862 = math.exp %861 : vector<4x32xf32>
    %cst_412 = arith.constant 1.000000e+00 : f32
    %863 = vector.broadcast %cst_412 : f32 to vector<4x32xf32>
    %864 = arith.addf %863, %862 : vector<4x32xf32>
    %865 = arith.divf %863, %864 : vector<4x32xf32>
    %866 = vector.extract_strided_slice %859 {offsets = [0, 32], sizes = [4, 32], strides = [1, 1]} : vector<4x128xf32> to vector<4x32xf32>
    %867 = arith.negf %866 : vector<4x32xf32>
    %868 = math.exp %867 : vector<4x32xf32>
    %cst_413 = arith.constant 1.000000e+00 : f32
    %869 = vector.broadcast %cst_413 : f32 to vector<4x32xf32>
    %870 = arith.addf %869, %868 : vector<4x32xf32>
    %871 = arith.divf %869, %870 : vector<4x32xf32>
    %872 = vector.extract_strided_slice %859 {offsets = [0, 64], sizes = [4, 32], strides = [1, 1]} : vector<4x128xf32> to vector<4x32xf32>
    %873 = math.tanh %872 : vector<4x32xf32>
    %874 = vector.extract_strided_slice %859 {offsets = [0, 96], sizes = [4, 32], strides = [1, 1]} : vector<4x128xf32> to vector<4x32xf32>
    %875 = arith.negf %874 : vector<4x32xf32>
    %876 = math.exp %875 : vector<4x32xf32>
    %cst_414 = arith.constant 1.000000e+00 : f32
    %877 = vector.broadcast %cst_414 : f32 to vector<4x32xf32>
    %878 = arith.addf %877, %876 : vector<4x32xf32>
    %879 = arith.divf %877, %878 : vector<4x32xf32>
    %c0_415 = arith.constant 0 : index
    %c0_416 = arith.constant 0 : index
    %880 = vector.load %arg19[%c0_415, %c0_416] : memref<4x32xf32, #tpu.memory_space<vmem>>, vector<4x32xf32>
    %881 = arith.mulf %871, %880 : vector<4x32xf32>
    %882 = arith.mulf %865, %873 : vector<4x32xf32>
    %883 = arith.addf %881, %882 : vector<4x32xf32>
    %884 = math.tanh %883 : vector<4x32xf32>
    %885 = arith.mulf %879, %884 : vector<4x32xf32>
    %c0_417 = arith.constant 0 : index
    %c0_418 = arith.constant 0 : index
    %886 = vector.load %arg18[%c0_417, %c0_418] : memref<4x32xf32, #tpu.memory_space<vmem>>, vector<4x32xf32>
    tpu.vector_store %arg18[%c0_417, %c0_418], %885 {strides = array<i32>} : memref<4x32xf32, #tpu.memory_space<vmem>>, vector<4x32xf32>,
    %c0_419 = arith.constant 0 : index
    %c0_420 = arith.constant 0 : index
    %887 = vector.load %arg19[%c0_419, %c0_420] : memref<4x32xf32, #tpu.memory_space<vmem>>, vector<4x32xf32>
    tpu.vector_store %arg19[%c0_419, %c0_420], %883 {strides = array<i32>} : memref<4x32xf32, #tpu.memory_space<vmem>>, vector<4x32xf32>,
    %888 = vector.extract_strided_slice %885 {offsets = [0, 0], sizes = [2, 32], strides = [1, 1]} : vector<4x32xf32> to vector<2x32xf32>
    %c2_i32_421 = arith.constant 2 : i32
    %889 = arith.muli %c7_i32_403, %c2_i32_421 : i32
    %890 = arith.index_cast %889 : i32 to index
    %c0_422 = arith.constant 0 : index
    %891 = vector.load %arg23[%890, %c0_422] : memref<16x32xf32, #tpu.memory_space<vmem>>, vector<2x32xf32>
    tpu.vector_store %arg23[%890, %c0_422], %888 {strides = array<i32>} : memref<16x32xf32, #tpu.memory_space<vmem>>, vector<2x32xf32>,
    %892 = vector.extract_strided_slice %885 {offsets = [2, 0], sizes = [2, 32], strides = [1, 1]} : vector<4x32xf32> to vector<2x32xf32>
    %c2_i32_423 = arith.constant 2 : i32
    %893 = arith.muli %844, %c2_i32_423 : i32
    %894 = arith.index_cast %893 : i32 to index
    %c0_424 = arith.constant 0 : index
    %895 = vector.load %arg24[%894, %c0_424] : memref<16x32xf32, #tpu.memory_space<vmem>>, vector<2x32xf32>
    tpu.vector_store %arg24[%894, %c0_424], %892 {strides = array<i32>} : memref<16x32xf32, #tpu.memory_space<vmem>>, vector<2x32xf32>,
    %c8_i32_425 = arith.constant 8 : i32
    %c0_426 = arith.constant 0 : index
    %c0_427 = arith.constant 0 : index
    %896 = vector.load %arg18[%c0_426, %c0_427] : memref<4x32xf32, #tpu.memory_space<vmem>>, vector<2x32xf32>
    %c2_428 = arith.constant 2 : index
    %c0_429 = arith.constant 0 : index
    %c0_430 = arith.constant 0 : index
    %897 = vector.load %arg16[%c2_428, %c0_429, %c0_430] : memref<6x2x32xf32, #tpu.memory_space<vmem>>, vector<1x2x32xf32>
    %898 = vector.shape_cast %897 : vector<1x2x32xf32> to vector<2x32xf32>
    %899 = vector.shape_cast %896 : vector<2x32xf32> to vector<1x2x32xf32>
    tpu.vector_store %arg16[%c2_428, %c0_429, %c0_430], %899 {strides = array<i32>} : memref<6x2x32xf32, #tpu.memory_space<vmem>>, vector<1x2x32xf32>,
    %c2_431 = arith.constant 2 : index
    %c0_432 = arith.constant 0 : index
    %900 = vector.load %arg18[%c2_431, %c0_432] : memref<4x32xf32, #tpu.memory_space<vmem>>, vector<2x32xf32>
    %c3_433 = arith.constant 3 : index
    %c0_434 = arith.constant 0 : index
    %c0_435 = arith.constant 0 : index
    %901 = vector.load %arg16[%c3_433, %c0_434, %c0_435] : memref<6x2x32xf32, #tpu.memory_space<vmem>>, vector<1x2x32xf32>
    %902 = vector.shape_cast %901 : vector<1x2x32xf32> to vector<2x32xf32>
    %903 = vector.shape_cast %900 : vector<2x32xf32> to vector<1x2x32xf32>
    tpu.vector_store %arg16[%c3_433, %c0_434, %c0_435], %903 {strides = array<i32>} : memref<6x2x32xf32, #tpu.memory_space<vmem>>, vector<1x2x32xf32>,
    %c0_436 = arith.constant 0 : index
    %c0_437 = arith.constant 0 : index
    %904 = vector.load %arg19[%c0_436, %c0_437] : memref<4x32xf32, #tpu.memory_space<vmem>>, vector<2x32xf32>
    %c2_438 = arith.constant 2 : index
    %c0_439 = arith.constant 0 : index
    %c0_440 = arith.constant 0 : index
    %905 = vector.load %arg17[%c2_438, %c0_439, %c0_440] : memref<6x2x32xf32, #tpu.memory_space<vmem>>, vector<1x2x32xf32>
    %906 = vector.shape_cast %905 : vector<1x2x32xf32> to vector<2x32xf32>
    %907 = vector.shape_cast %904 : vector<2x32xf32> to vector<1x2x32xf32>
    tpu.vector_store %arg17[%c2_438, %c0_439, %c0_440], %907 {strides = array<i32>} : memref<6x2x32xf32, #tpu.memory_space<vmem>>, vector<1x2x32xf32>,
    %c2_441 = arith.constant 2 : index
    %c0_442 = arith.constant 0 : index
    %908 = vector.load %arg19[%c2_441, %c0_442] : memref<4x32xf32, #tpu.memory_space<vmem>>, vector<2x32xf32>
    %c3_443 = arith.constant 3 : index
    %c0_444 = arith.constant 0 : index
    %c0_445 = arith.constant 0 : index
    %909 = vector.load %arg17[%c3_443, %c0_444, %c0_445] : memref<6x2x32xf32, #tpu.memory_space<vmem>>, vector<1x2x32xf32>
    %910 = vector.shape_cast %909 : vector<1x2x32xf32> to vector<2x32xf32>
    %911 = vector.shape_cast %908 : vector<2x32xf32> to vector<1x2x32xf32>
    tpu.vector_store %arg17[%c3_443, %c0_444, %c0_445], %911 {strides = array<i32>} : memref<6x2x32xf32, #tpu.memory_space<vmem>>, vector<1x2x32xf32>,
    %c0_446 = arith.constant 0 : index
    %c0_447 = arith.constant 0 : index
    %912 = vector.load %arg10[%c0_446, %c0_447] : memref<64x256xf32, #tpu.memory_space<vmem>>, vector<64x256xf32>
    %c0_448 = arith.constant 0 : index
    %c0_449 = arith.constant 0 : index
    %913 = vector.load %arg23[%c0_448, %c0_449] : memref<16x32xf32, #tpu.memory_space<vmem>>, vector<16x32xf32>
    %914 = vector.extract_strided_slice %912 {offsets = [0, 0], sizes = [32, 256], strides = [1, 1]} : vector<64x256xf32> to vector<32x256xf32>
    %cst_450 = arith.constant dense<0.000000e+00> : vector<16x256xf32>
    %915 = tpu.matmul %913, %914, %cst_450 {dimension_numbers = #tpu.dot_dimension_numbers<[1], [0], [0], [1], [0, 0, 1, 1], [], []>} : vector<16x32xf32>, vector<32x256xf32>, vector<16x256xf32> -> vector<16x256xf32>
    %c0_451 = arith.constant 0 : index
    %c0_452 = arith.constant 0 : index
    %916 = vector.load %arg24[%c0_451, %c0_452] : memref<16x32xf32, #tpu.memory_space<vmem>>, vector<16x32xf32>
    %917 = vector.extract_strided_slice %912 {offsets = [32, 0], sizes = [32, 256], strides = [1, 1]} : vector<64x256xf32> to vector<32x256xf32>
    %cst_453 = arith.constant dense<0.000000e+00> : vector<16x256xf32>
    %918 = tpu.matmul %916, %917, %cst_453 {dimension_numbers = #tpu.dot_dimension_numbers<[1], [0], [0], [1], [0, 0, 1, 1], [], []>} : vector<16x32xf32>, vector<32x256xf32>, vector<16x256xf32> -> vector<16x256xf32>
    %919 = arith.addf %915, %918 : vector<16x256xf32>
    %c0_454 = arith.constant 0 : index
    %c0_455 = arith.constant 0 : index
    %920 = vector.load %arg12[%c0_454, %c0_455] : memref<1x256xf32, #tpu.memory_space<vmem>>, vector<1x256xf32>
    %921 = vector.broadcast %920 : vector<1x256xf32> to vector<16x256xf32>
    %922 = arith.addf %919, %921 : vector<16x256xf32>
    %c0_456 = arith.constant 0 : index
    %c0_457 = arith.constant 0 : index
    %923 = vector.load %arg20[%c0_456, %c0_457] : memref<16x256xf32, #tpu.memory_space<vmem>>, vector<16x256xf32>
    tpu.vector_store %arg20[%c0_456, %c0_457], %922 {strides = array<i32>} : memref<16x256xf32, #tpu.memory_space<vmem>>, vector<16x256xf32>,
    %c4 = arith.constant 4 : index
    %c0_458 = arith.constant 0 : index
    %c0_459 = arith.constant 0 : index
    %924 = vector.load %arg2[%c4, %c0_458, %c0_459] : memref<6x2x32xf32, #tpu.memory_space<vmem>>, vector<1x2x32xf32>
    %925 = vector.shape_cast %924 : vector<1x2x32xf32> to vector<2x32xf32>
    %c0_460 = arith.constant 0 : index
    %c0_461 = arith.constant 0 : index
    %926 = vector.load %arg18[%c0_460, %c0_461] : memref<4x32xf32, #tpu.memory_space<vmem>>, vector<2x32xf32>
    tpu.vector_store %arg18[%c0_460, %c0_461], %925 {strides = array<i32>} : memref<4x32xf32, #tpu.memory_space<vmem>>, vector<2x32xf32>,
    %c5 = arith.constant 5 : index
    %c0_462 = arith.constant 0 : index
    %c0_463 = arith.constant 0 : index
    %927 = vector.load %arg2[%c5, %c0_462, %c0_463] : memref<6x2x32xf32, #tpu.memory_space<vmem>>, vector<1x2x32xf32>
    %928 = vector.shape_cast %927 : vector<1x2x32xf32> to vector<2x32xf32>
    %c2_464 = arith.constant 2 : index
    %c0_465 = arith.constant 0 : index
    %929 = vector.load %arg18[%c2_464, %c0_465] : memref<4x32xf32, #tpu.memory_space<vmem>>, vector<2x32xf32>
    tpu.vector_store %arg18[%c2_464, %c0_465], %928 {strides = array<i32>} : memref<4x32xf32, #tpu.memory_space<vmem>>, vector<2x32xf32>,
    %c4_466 = arith.constant 4 : index
    %c0_467 = arith.constant 0 : index
    %c0_468 = arith.constant 0 : index
    %930 = vector.load %arg3[%c4_466, %c0_467, %c0_468] : memref<6x2x32xf32, #tpu.memory_space<vmem>>, vector<1x2x32xf32>
    %931 = vector.shape_cast %930 : vector<1x2x32xf32> to vector<2x32xf32>
    %c0_469 = arith.constant 0 : index
    %c0_470 = arith.constant 0 : index
    %932 = vector.load %arg19[%c0_469, %c0_470] : memref<4x32xf32, #tpu.memory_space<vmem>>, vector<2x32xf32>
    tpu.vector_store %arg19[%c0_469, %c0_470], %931 {strides = array<i32>} : memref<4x32xf32, #tpu.memory_space<vmem>>, vector<2x32xf32>,
    %c5_471 = arith.constant 5 : index
    %c0_472 = arith.constant 0 : index
    %c0_473 = arith.constant 0 : index
    %933 = vector.load %arg3[%c5_471, %c0_472, %c0_473] : memref<6x2x32xf32, #tpu.memory_space<vmem>>, vector<1x2x32xf32>
    %934 = vector.shape_cast %933 : vector<1x2x32xf32> to vector<2x32xf32>
    %c2_474 = arith.constant 2 : index
    %c0_475 = arith.constant 0 : index
    %935 = vector.load %arg19[%c2_474, %c0_475] : memref<4x32xf32, #tpu.memory_space<vmem>>, vector<2x32xf32>
    tpu.vector_store %arg19[%c2_474, %c0_475], %934 {strides = array<i32>} : memref<4x32xf32, #tpu.memory_space<vmem>>, vector<2x32xf32>,
    %c0_476 = arith.constant 0 : index
    %c0_477 = arith.constant 0 : index
    %936 = vector.load %arg11[%c0_476, %c0_477] : memref<32x256xf32, #tpu.memory_space<vmem>>, vector<32x256xf32>
    %c0_i32_478 = arith.constant 0 : i32
    %c7_i32_479 = arith.constant 7 : i32
    %937 = arith.subi %c7_i32_479, %c0_i32_478 : i32
    %c0_480 = arith.constant 0 : index
    %c0_481 = arith.constant 0 : index
    %938 = vector.load %arg18[%c0_480, %c0_481] : memref<4x32xf32, #tpu.memory_space<vmem>>, vector<4x32xf32>
    %cst_482 = arith.constant dense<0.000000e+00> : vector<4x256xf32>
    %939 = tpu.matmul %938, %936, %cst_482 {dimension_numbers = #tpu.dot_dimension_numbers<[1], [0], [0], [1], [0, 0, 1, 1], [], []>} : vector<4x32xf32>, vector<32x256xf32>, vector<4x256xf32> -> vector<4x256xf32>
    %940 = vector.extract_strided_slice %939 {offsets = [0, 0], sizes = [4, 128], strides = [1, 1]} : vector<4x256xf32> to vector<4x128xf32>
    %941 = vector.extract_strided_slice %939 {offsets = [0, 128], sizes = [4, 128], strides = [1, 1]} : vector<4x256xf32> to vector<4x128xf32>
    %942 = arith.select %2, %940, %941 : vector<4x128xi1>, vector<4x128xf32>
    %c2_i32_483 = arith.constant 2 : i32
    %943 = arith.muli %c0_i32_478, %c2_i32_483 : i32
    %944 = arith.index_cast %943 : i32 to index
    %c0_484 = arith.constant 0 : index
    %945 = vector.load %arg20[%944, %c0_484] : memref<16x256xf32, #tpu.memory_space<vmem>>, vector<2x256xf32>
    %946 = vector.extract_strided_slice %945 {offsets = [0, 0], sizes = [2, 128], strides = [1, 1]} : vector<2x256xf32> to vector<2x128xf32>
    %c2_i32_485 = arith.constant 2 : i32
    %947 = arith.muli %937, %c2_i32_485 : i32
    %948 = arith.index_cast %947 : i32 to index
    %c0_486 = arith.constant 0 : index
    %949 = vector.load %arg20[%948, %c0_486] : memref<16x256xf32, #tpu.memory_space<vmem>>, vector<2x256xf32>
    %950 = vector.extract_strided_slice %949 {offsets = [0, 128], sizes = [2, 128], strides = [1, 1]} : vector<2x256xf32> to vector<2x128xf32>
    %951 = tpu.concatenate %946, %950 in 0 : vector<2x128xf32>, vector<2x128xf32> -> vector<4x128xf32>
    %952 = arith.addf %951, %942 : vector<4x128xf32>
    %953 = vector.extract_strided_slice %952 {offsets = [0, 0], sizes = [4, 32], strides = [1, 1]} : vector<4x128xf32> to vector<4x32xf32>
    %954 = arith.negf %953 : vector<4x32xf32>
    %955 = math.exp %954 : vector<4x32xf32>
    %cst_487 = arith.constant 1.000000e+00 : f32
    %956 = vector.broadcast %cst_487 : f32 to vector<4x32xf32>
    %957 = arith.addf %956, %955 : vector<4x32xf32>
    %958 = arith.divf %956, %957 : vector<4x32xf32>
    %959 = vector.extract_strided_slice %952 {offsets = [0, 32], sizes = [4, 32], strides = [1, 1]} : vector<4x128xf32> to vector<4x32xf32>
    %960 = arith.negf %959 : vector<4x32xf32>
    %961 = math.exp %960 : vector<4x32xf32>
    %cst_488 = arith.constant 1.000000e+00 : f32
    %962 = vector.broadcast %cst_488 : f32 to vector<4x32xf32>
    %963 = arith.addf %962, %961 : vector<4x32xf32>
    %964 = arith.divf %962, %963 : vector<4x32xf32>
    %965 = vector.extract_strided_slice %952 {offsets = [0, 64], sizes = [4, 32], strides = [1, 1]} : vector<4x128xf32> to vector<4x32xf32>
    %966 = math.tanh %965 : vector<4x32xf32>
    %967 = vector.extract_strided_slice %952 {offsets = [0, 96], sizes = [4, 32], strides = [1, 1]} : vector<4x128xf32> to vector<4x32xf32>
    %968 = arith.negf %967 : vector<4x32xf32>
    %969 = math.exp %968 : vector<4x32xf32>
    %cst_489 = arith.constant 1.000000e+00 : f32
    %970 = vector.broadcast %cst_489 : f32 to vector<4x32xf32>
    %971 = arith.addf %970, %969 : vector<4x32xf32>
    %972 = arith.divf %970, %971 : vector<4x32xf32>
    %c0_490 = arith.constant 0 : index
    %c0_491 = arith.constant 0 : index
    %973 = vector.load %arg19[%c0_490, %c0_491] : memref<4x32xf32, #tpu.memory_space<vmem>>, vector<4x32xf32>
    %974 = arith.mulf %964, %973 : vector<4x32xf32>
    %975 = arith.mulf %958, %966 : vector<4x32xf32>
    %976 = arith.addf %974, %975 : vector<4x32xf32>
    %977 = math.tanh %976 : vector<4x32xf32>
    %978 = arith.mulf %972, %977 : vector<4x32xf32>
    %c0_492 = arith.constant 0 : index
    %c0_493 = arith.constant 0 : index
    %979 = vector.load %arg18[%c0_492, %c0_493] : memref<4x32xf32, #tpu.memory_space<vmem>>, vector<4x32xf32>
    tpu.vector_store %arg18[%c0_492, %c0_493], %978 {strides = array<i32>} : memref<4x32xf32, #tpu.memory_space<vmem>>, vector<4x32xf32>,
    %c0_494 = arith.constant 0 : index
    %c0_495 = arith.constant 0 : index
    %980 = vector.load %arg19[%c0_494, %c0_495] : memref<4x32xf32, #tpu.memory_space<vmem>>, vector<4x32xf32>
    tpu.vector_store %arg19[%c0_494, %c0_495], %976 {strides = array<i32>} : memref<4x32xf32, #tpu.memory_space<vmem>>, vector<4x32xf32>,
    %981 = vector.extract_strided_slice %978 {offsets = [0, 0], sizes = [2, 32], strides = [1, 1]} : vector<4x32xf32> to vector<2x32xf32>
    %c2_i32_496 = arith.constant 2 : i32
    %982 = arith.muli %c0_i32_478, %c2_i32_496 : i32
    %983 = arith.index_cast %982 : i32 to index
    %c0_497 = arith.constant 0 : index
    %984 = vector.load %arg21[%983, %c0_497] : memref<16x32xf32, #tpu.memory_space<vmem>>, vector<2x32xf32>
    tpu.vector_store %arg21[%983, %c0_497], %981 {strides = array<i32>} : memref<16x32xf32, #tpu.memory_space<vmem>>, vector<2x32xf32>,
    %985 = vector.extract_strided_slice %978 {offsets = [2, 0], sizes = [2, 32], strides = [1, 1]} : vector<4x32xf32> to vector<2x32xf32>
    %c2_i32_498 = arith.constant 2 : i32
    %986 = arith.muli %937, %c2_i32_498 : i32
    %987 = arith.index_cast %986 : i32 to index
    %c0_499 = arith.constant 0 : index
    %988 = vector.load %arg22[%987, %c0_499] : memref<16x32xf32, #tpu.memory_space<vmem>>, vector<2x32xf32>
    tpu.vector_store %arg22[%987, %c0_499], %985 {strides = array<i32>} : memref<16x32xf32, #tpu.memory_space<vmem>>, vector<2x32xf32>,
    %c1_i32_500 = arith.constant 1 : i32
    %c7_i32_501 = arith.constant 7 : i32
    %989 = arith.subi %c7_i32_501, %c1_i32_500 : i32
    %c0_502 = arith.constant 0 : index
    %c0_503 = arith.constant 0 : index
    %990 = vector.load %arg18[%c0_502, %c0_503] : memref<4x32xf32, #tpu.memory_space<vmem>>, vector<4x32xf32>
    %cst_504 = arith.constant dense<0.000000e+00> : vector<4x256xf32>
    %991 = tpu.matmul %990, %936, %cst_504 {dimension_numbers = #tpu.dot_dimension_numbers<[1], [0], [0], [1], [0, 0, 1, 1], [], []>} : vector<4x32xf32>, vector<32x256xf32>, vector<4x256xf32> -> vector<4x256xf32>
    %992 = vector.extract_strided_slice %991 {offsets = [0, 0], sizes = [4, 128], strides = [1, 1]} : vector<4x256xf32> to vector<4x128xf32>
    %993 = vector.extract_strided_slice %991 {offsets = [0, 128], sizes = [4, 128], strides = [1, 1]} : vector<4x256xf32> to vector<4x128xf32>
    %994 = arith.select %2, %992, %993 : vector<4x128xi1>, vector<4x128xf32>
    %c2_i32_505 = arith.constant 2 : i32
    %995 = arith.muli %c1_i32_500, %c2_i32_505 : i32
    %996 = arith.index_cast %995 : i32 to index
    %c0_506 = arith.constant 0 : index
    %997 = vector.load %arg20[%996, %c0_506] : memref<16x256xf32, #tpu.memory_space<vmem>>, vector<2x256xf32>
    %998 = vector.extract_strided_slice %997 {offsets = [0, 0], sizes = [2, 128], strides = [1, 1]} : vector<2x256xf32> to vector<2x128xf32>
    %c2_i32_507 = arith.constant 2 : i32
    %999 = arith.muli %989, %c2_i32_507 : i32
    %1000 = arith.index_cast %999 : i32 to index
    %c0_508 = arith.constant 0 : index
    %1001 = vector.load %arg20[%1000, %c0_508] : memref<16x256xf32, #tpu.memory_space<vmem>>, vector<2x256xf32>
    %1002 = vector.extract_strided_slice %1001 {offsets = [0, 128], sizes = [2, 128], strides = [1, 1]} : vector<2x256xf32> to vector<2x128xf32>
    %1003 = tpu.concatenate %998, %1002 in 0 : vector<2x128xf32>, vector<2x128xf32> -> vector<4x128xf32>
    %1004 = arith.addf %1003, %994 : vector<4x128xf32>
    %1005 = vector.extract_strided_slice %1004 {offsets = [0, 0], sizes = [4, 32], strides = [1, 1]} : vector<4x128xf32> to vector<4x32xf32>
    %1006 = arith.negf %1005 : vector<4x32xf32>
    %1007 = math.exp %1006 : vector<4x32xf32>
    %cst_509 = arith.constant 1.000000e+00 : f32
    %1008 = vector.broadcast %cst_509 : f32 to vector<4x32xf32>
    %1009 = arith.addf %1008, %1007 : vector<4x32xf32>
    %1010 = arith.divf %1008, %1009 : vector<4x32xf32>
    %1011 = vector.extract_strided_slice %1004 {offsets = [0, 32], sizes = [4, 32], strides = [1, 1]} : vector<4x128xf32> to vector<4x32xf32>
    %1012 = arith.negf %1011 : vector<4x32xf32>
    %1013 = math.exp %1012 : vector<4x32xf32>
    %cst_510 = arith.constant 1.000000e+00 : f32
    %1014 = vector.broadcast %cst_510 : f32 to vector<4x32xf32>
    %1015 = arith.addf %1014, %1013 : vector<4x32xf32>
    %1016 = arith.divf %1014, %1015 : vector<4x32xf32>
    %1017 = vector.extract_strided_slice %1004 {offsets = [0, 64], sizes = [4, 32], strides = [1, 1]} : vector<4x128xf32> to vector<4x32xf32>
    %1018 = math.tanh %1017 : vector<4x32xf32>
    %1019 = vector.extract_strided_slice %1004 {offsets = [0, 96], sizes = [4, 32], strides = [1, 1]} : vector<4x128xf32> to vector<4x32xf32>
    %1020 = arith.negf %1019 : vector<4x32xf32>
    %1021 = math.exp %1020 : vector<4x32xf32>
    %cst_511 = arith.constant 1.000000e+00 : f32
    %1022 = vector.broadcast %cst_511 : f32 to vector<4x32xf32>
    %1023 = arith.addf %1022, %1021 : vector<4x32xf32>
    %1024 = arith.divf %1022, %1023 : vector<4x32xf32>
    %c0_512 = arith.constant 0 : index
    %c0_513 = arith.constant 0 : index
    %1025 = vector.load %arg19[%c0_512, %c0_513] : memref<4x32xf32, #tpu.memory_space<vmem>>, vector<4x32xf32>
    %1026 = arith.mulf %1016, %1025 : vector<4x32xf32>
    %1027 = arith.mulf %1010, %1018 : vector<4x32xf32>
    %1028 = arith.addf %1026, %1027 : vector<4x32xf32>
    %1029 = math.tanh %1028 : vector<4x32xf32>
    %1030 = arith.mulf %1024, %1029 : vector<4x32xf32>
    %c0_514 = arith.constant 0 : index
    %c0_515 = arith.constant 0 : index
    %1031 = vector.load %arg18[%c0_514, %c0_515] : memref<4x32xf32, #tpu.memory_space<vmem>>, vector<4x32xf32>
    tpu.vector_store %arg18[%c0_514, %c0_515], %1030 {strides = array<i32>} : memref<4x32xf32, #tpu.memory_space<vmem>>, vector<4x32xf32>,
    %c0_516 = arith.constant 0 : index
    %c0_517 = arith.constant 0 : index
    %1032 = vector.load %arg19[%c0_516, %c0_517] : memref<4x32xf32, #tpu.memory_space<vmem>>, vector<4x32xf32>
    tpu.vector_store %arg19[%c0_516, %c0_517], %1028 {strides = array<i32>} : memref<4x32xf32, #tpu.memory_space<vmem>>, vector<4x32xf32>,
    %1033 = vector.extract_strided_slice %1030 {offsets = [0, 0], sizes = [2, 32], strides = [1, 1]} : vector<4x32xf32> to vector<2x32xf32>
    %c2_i32_518 = arith.constant 2 : i32
    %1034 = arith.muli %c1_i32_500, %c2_i32_518 : i32
    %1035 = arith.index_cast %1034 : i32 to index
    %c0_519 = arith.constant 0 : index
    %1036 = vector.load %arg21[%1035, %c0_519] : memref<16x32xf32, #tpu.memory_space<vmem>>, vector<2x32xf32>
    tpu.vector_store %arg21[%1035, %c0_519], %1033 {strides = array<i32>} : memref<16x32xf32, #tpu.memory_space<vmem>>, vector<2x32xf32>,
    %1037 = vector.extract_strided_slice %1030 {offsets = [2, 0], sizes = [2, 32], strides = [1, 1]} : vector<4x32xf32> to vector<2x32xf32>
    %c2_i32_520 = arith.constant 2 : i32
    %1038 = arith.muli %989, %c2_i32_520 : i32
    %1039 = arith.index_cast %1038 : i32 to index
    %c0_521 = arith.constant 0 : index
    %1040 = vector.load %arg22[%1039, %c0_521] : memref<16x32xf32, #tpu.memory_space<vmem>>, vector<2x32xf32>
    tpu.vector_store %arg22[%1039, %c0_521], %1037 {strides = array<i32>} : memref<16x32xf32, #tpu.memory_space<vmem>>, vector<2x32xf32>,
    %c2_i32_522 = arith.constant 2 : i32
    %c7_i32_523 = arith.constant 7 : i32
    %1041 = arith.subi %c7_i32_523, %c2_i32_522 : i32
    %c0_524 = arith.constant 0 : index
    %c0_525 = arith.constant 0 : index
    %1042 = vector.load %arg18[%c0_524, %c0_525] : memref<4x32xf32, #tpu.memory_space<vmem>>, vector<4x32xf32>
    %cst_526 = arith.constant dense<0.000000e+00> : vector<4x256xf32>
    %1043 = tpu.matmul %1042, %936, %cst_526 {dimension_numbers = #tpu.dot_dimension_numbers<[1], [0], [0], [1], [0, 0, 1, 1], [], []>} : vector<4x32xf32>, vector<32x256xf32>, vector<4x256xf32> -> vector<4x256xf32>
    %1044 = vector.extract_strided_slice %1043 {offsets = [0, 0], sizes = [4, 128], strides = [1, 1]} : vector<4x256xf32> to vector<4x128xf32>
    %1045 = vector.extract_strided_slice %1043 {offsets = [0, 128], sizes = [4, 128], strides = [1, 1]} : vector<4x256xf32> to vector<4x128xf32>
    %1046 = arith.select %2, %1044, %1045 : vector<4x128xi1>, vector<4x128xf32>
    %c2_i32_527 = arith.constant 2 : i32
    %1047 = arith.muli %c2_i32_522, %c2_i32_527 : i32
    %1048 = arith.index_cast %1047 : i32 to index
    %c0_528 = arith.constant 0 : index
    %1049 = vector.load %arg20[%1048, %c0_528] : memref<16x256xf32, #tpu.memory_space<vmem>>, vector<2x256xf32>
    %1050 = vector.extract_strided_slice %1049 {offsets = [0, 0], sizes = [2, 128], strides = [1, 1]} : vector<2x256xf32> to vector<2x128xf32>
    %c2_i32_529 = arith.constant 2 : i32
    %1051 = arith.muli %1041, %c2_i32_529 : i32
    %1052 = arith.index_cast %1051 : i32 to index
    %c0_530 = arith.constant 0 : index
    %1053 = vector.load %arg20[%1052, %c0_530] : memref<16x256xf32, #tpu.memory_space<vmem>>, vector<2x256xf32>
    %1054 = vector.extract_strided_slice %1053 {offsets = [0, 128], sizes = [2, 128], strides = [1, 1]} : vector<2x256xf32> to vector<2x128xf32>
    %1055 = tpu.concatenate %1050, %1054 in 0 : vector<2x128xf32>, vector<2x128xf32> -> vector<4x128xf32>
    %1056 = arith.addf %1055, %1046 : vector<4x128xf32>
    %1057 = vector.extract_strided_slice %1056 {offsets = [0, 0], sizes = [4, 32], strides = [1, 1]} : vector<4x128xf32> to vector<4x32xf32>
    %1058 = arith.negf %1057 : vector<4x32xf32>
    %1059 = math.exp %1058 : vector<4x32xf32>
    %cst_531 = arith.constant 1.000000e+00 : f32
    %1060 = vector.broadcast %cst_531 : f32 to vector<4x32xf32>
    %1061 = arith.addf %1060, %1059 : vector<4x32xf32>
    %1062 = arith.divf %1060, %1061 : vector<4x32xf32>
    %1063 = vector.extract_strided_slice %1056 {offsets = [0, 32], sizes = [4, 32], strides = [1, 1]} : vector<4x128xf32> to vector<4x32xf32>
    %1064 = arith.negf %1063 : vector<4x32xf32>
    %1065 = math.exp %1064 : vector<4x32xf32>
    %cst_532 = arith.constant 1.000000e+00 : f32
    %1066 = vector.broadcast %cst_532 : f32 to vector<4x32xf32>
    %1067 = arith.addf %1066, %1065 : vector<4x32xf32>
    %1068 = arith.divf %1066, %1067 : vector<4x32xf32>
    %1069 = vector.extract_strided_slice %1056 {offsets = [0, 64], sizes = [4, 32], strides = [1, 1]} : vector<4x128xf32> to vector<4x32xf32>
    %1070 = math.tanh %1069 : vector<4x32xf32>
    %1071 = vector.extract_strided_slice %1056 {offsets = [0, 96], sizes = [4, 32], strides = [1, 1]} : vector<4x128xf32> to vector<4x32xf32>
    %1072 = arith.negf %1071 : vector<4x32xf32>
    %1073 = math.exp %1072 : vector<4x32xf32>
    %cst_533 = arith.constant 1.000000e+00 : f32
    %1074 = vector.broadcast %cst_533 : f32 to vector<4x32xf32>
    %1075 = arith.addf %1074, %1073 : vector<4x32xf32>
    %1076 = arith.divf %1074, %1075 : vector<4x32xf32>
    %c0_534 = arith.constant 0 : index
    %c0_535 = arith.constant 0 : index
    %1077 = vector.load %arg19[%c0_534, %c0_535] : memref<4x32xf32, #tpu.memory_space<vmem>>, vector<4x32xf32>
    %1078 = arith.mulf %1068, %1077 : vector<4x32xf32>
    %1079 = arith.mulf %1062, %1070 : vector<4x32xf32>
    %1080 = arith.addf %1078, %1079 : vector<4x32xf32>
    %1081 = math.tanh %1080 : vector<4x32xf32>
    %1082 = arith.mulf %1076, %1081 : vector<4x32xf32>
    %c0_536 = arith.constant 0 : index
    %c0_537 = arith.constant 0 : index
    %1083 = vector.load %arg18[%c0_536, %c0_537] : memref<4x32xf32, #tpu.memory_space<vmem>>, vector<4x32xf32>
    tpu.vector_store %arg18[%c0_536, %c0_537], %1082 {strides = array<i32>} : memref<4x32xf32, #tpu.memory_space<vmem>>, vector<4x32xf32>,
    %c0_538 = arith.constant 0 : index
    %c0_539 = arith.constant 0 : index
    %1084 = vector.load %arg19[%c0_538, %c0_539] : memref<4x32xf32, #tpu.memory_space<vmem>>, vector<4x32xf32>
    tpu.vector_store %arg19[%c0_538, %c0_539], %1080 {strides = array<i32>} : memref<4x32xf32, #tpu.memory_space<vmem>>, vector<4x32xf32>,
    %1085 = vector.extract_strided_slice %1082 {offsets = [0, 0], sizes = [2, 32], strides = [1, 1]} : vector<4x32xf32> to vector<2x32xf32>
    %c2_i32_540 = arith.constant 2 : i32
    %1086 = arith.muli %c2_i32_522, %c2_i32_540 : i32
    %1087 = arith.index_cast %1086 : i32 to index
    %c0_541 = arith.constant 0 : index
    %1088 = vector.load %arg21[%1087, %c0_541] : memref<16x32xf32, #tpu.memory_space<vmem>>, vector<2x32xf32>
    tpu.vector_store %arg21[%1087, %c0_541], %1085 {strides = array<i32>} : memref<16x32xf32, #tpu.memory_space<vmem>>, vector<2x32xf32>,
    %1089 = vector.extract_strided_slice %1082 {offsets = [2, 0], sizes = [2, 32], strides = [1, 1]} : vector<4x32xf32> to vector<2x32xf32>
    %c2_i32_542 = arith.constant 2 : i32
    %1090 = arith.muli %1041, %c2_i32_542 : i32
    %1091 = arith.index_cast %1090 : i32 to index
    %c0_543 = arith.constant 0 : index
    %1092 = vector.load %arg22[%1091, %c0_543] : memref<16x32xf32, #tpu.memory_space<vmem>>, vector<2x32xf32>
    tpu.vector_store %arg22[%1091, %c0_543], %1089 {strides = array<i32>} : memref<16x32xf32, #tpu.memory_space<vmem>>, vector<2x32xf32>,
    %c3_i32_544 = arith.constant 3 : i32
    %c7_i32_545 = arith.constant 7 : i32
    %1093 = arith.subi %c7_i32_545, %c3_i32_544 : i32
    %c0_546 = arith.constant 0 : index
    %c0_547 = arith.constant 0 : index
    %1094 = vector.load %arg18[%c0_546, %c0_547] : memref<4x32xf32, #tpu.memory_space<vmem>>, vector<4x32xf32>
    %cst_548 = arith.constant dense<0.000000e+00> : vector<4x256xf32>
    %1095 = tpu.matmul %1094, %936, %cst_548 {dimension_numbers = #tpu.dot_dimension_numbers<[1], [0], [0], [1], [0, 0, 1, 1], [], []>} : vector<4x32xf32>, vector<32x256xf32>, vector<4x256xf32> -> vector<4x256xf32>
    %1096 = vector.extract_strided_slice %1095 {offsets = [0, 0], sizes = [4, 128], strides = [1, 1]} : vector<4x256xf32> to vector<4x128xf32>
    %1097 = vector.extract_strided_slice %1095 {offsets = [0, 128], sizes = [4, 128], strides = [1, 1]} : vector<4x256xf32> to vector<4x128xf32>
    %1098 = arith.select %2, %1096, %1097 : vector<4x128xi1>, vector<4x128xf32>
    %c2_i32_549 = arith.constant 2 : i32
    %1099 = arith.muli %c3_i32_544, %c2_i32_549 : i32
    %1100 = arith.index_cast %1099 : i32 to index
    %c0_550 = arith.constant 0 : index
    %1101 = vector.load %arg20[%1100, %c0_550] : memref<16x256xf32, #tpu.memory_space<vmem>>, vector<2x256xf32>
    %1102 = vector.extract_strided_slice %1101 {offsets = [0, 0], sizes = [2, 128], strides = [1, 1]} : vector<2x256xf32> to vector<2x128xf32>
    %c2_i32_551 = arith.constant 2 : i32
    %1103 = arith.muli %1093, %c2_i32_551 : i32
    %1104 = arith.index_cast %1103 : i32 to index
    %c0_552 = arith.constant 0 : index
    %1105 = vector.load %arg20[%1104, %c0_552] : memref<16x256xf32, #tpu.memory_space<vmem>>, vector<2x256xf32>
    %1106 = vector.extract_strided_slice %1105 {offsets = [0, 128], sizes = [2, 128], strides = [1, 1]} : vector<2x256xf32> to vector<2x128xf32>
    %1107 = tpu.concatenate %1102, %1106 in 0 : vector<2x128xf32>, vector<2x128xf32> -> vector<4x128xf32>
    %1108 = arith.addf %1107, %1098 : vector<4x128xf32>
    %1109 = vector.extract_strided_slice %1108 {offsets = [0, 0], sizes = [4, 32], strides = [1, 1]} : vector<4x128xf32> to vector<4x32xf32>
    %1110 = arith.negf %1109 : vector<4x32xf32>
    %1111 = math.exp %1110 : vector<4x32xf32>
    %cst_553 = arith.constant 1.000000e+00 : f32
    %1112 = vector.broadcast %cst_553 : f32 to vector<4x32xf32>
    %1113 = arith.addf %1112, %1111 : vector<4x32xf32>
    %1114 = arith.divf %1112, %1113 : vector<4x32xf32>
    %1115 = vector.extract_strided_slice %1108 {offsets = [0, 32], sizes = [4, 32], strides = [1, 1]} : vector<4x128xf32> to vector<4x32xf32>
    %1116 = arith.negf %1115 : vector<4x32xf32>
    %1117 = math.exp %1116 : vector<4x32xf32>
    %cst_554 = arith.constant 1.000000e+00 : f32
    %1118 = vector.broadcast %cst_554 : f32 to vector<4x32xf32>
    %1119 = arith.addf %1118, %1117 : vector<4x32xf32>
    %1120 = arith.divf %1118, %1119 : vector<4x32xf32>
    %1121 = vector.extract_strided_slice %1108 {offsets = [0, 64], sizes = [4, 32], strides = [1, 1]} : vector<4x128xf32> to vector<4x32xf32>
    %1122 = math.tanh %1121 : vector<4x32xf32>
    %1123 = vector.extract_strided_slice %1108 {offsets = [0, 96], sizes = [4, 32], strides = [1, 1]} : vector<4x128xf32> to vector<4x32xf32>
    %1124 = arith.negf %1123 : vector<4x32xf32>
    %1125 = math.exp %1124 : vector<4x32xf32>
    %cst_555 = arith.constant 1.000000e+00 : f32
    %1126 = vector.broadcast %cst_555 : f32 to vector<4x32xf32>
    %1127 = arith.addf %1126, %1125 : vector<4x32xf32>
    %1128 = arith.divf %1126, %1127 : vector<4x32xf32>
    %c0_556 = arith.constant 0 : index
    %c0_557 = arith.constant 0 : index
    %1129 = vector.load %arg19[%c0_556, %c0_557] : memref<4x32xf32, #tpu.memory_space<vmem>>, vector<4x32xf32>
    %1130 = arith.mulf %1120, %1129 : vector<4x32xf32>
    %1131 = arith.mulf %1114, %1122 : vector<4x32xf32>
    %1132 = arith.addf %1130, %1131 : vector<4x32xf32>
    %1133 = math.tanh %1132 : vector<4x32xf32>
    %1134 = arith.mulf %1128, %1133 : vector<4x32xf32>
    %c0_558 = arith.constant 0 : index
    %c0_559 = arith.constant 0 : index
    %1135 = vector.load %arg18[%c0_558, %c0_559] : memref<4x32xf32, #tpu.memory_space<vmem>>, vector<4x32xf32>
    tpu.vector_store %arg18[%c0_558, %c0_559], %1134 {strides = array<i32>} : memref<4x32xf32, #tpu.memory_space<vmem>>, vector<4x32xf32>,
    %c0_560 = arith.constant 0 : index
    %c0_561 = arith.constant 0 : index
    %1136 = vector.load %arg19[%c0_560, %c0_561] : memref<4x32xf32, #tpu.memory_space<vmem>>, vector<4x32xf32>
    tpu.vector_store %arg19[%c0_560, %c0_561], %1132 {strides = array<i32>} : memref<4x32xf32, #tpu.memory_space<vmem>>, vector<4x32xf32>,
    %1137 = vector.extract_strided_slice %1134 {offsets = [0, 0], sizes = [2, 32], strides = [1, 1]} : vector<4x32xf32> to vector<2x32xf32>
    %c2_i32_562 = arith.constant 2 : i32
    %1138 = arith.muli %c3_i32_544, %c2_i32_562 : i32
    %1139 = arith.index_cast %1138 : i32 to index
    %c0_563 = arith.constant 0 : index
    %1140 = vector.load %arg21[%1139, %c0_563] : memref<16x32xf32, #tpu.memory_space<vmem>>, vector<2x32xf32>
    tpu.vector_store %arg21[%1139, %c0_563], %1137 {strides = array<i32>} : memref<16x32xf32, #tpu.memory_space<vmem>>, vector<2x32xf32>,
    %1141 = vector.extract_strided_slice %1134 {offsets = [2, 0], sizes = [2, 32], strides = [1, 1]} : vector<4x32xf32> to vector<2x32xf32>
    %c2_i32_564 = arith.constant 2 : i32
    %1142 = arith.muli %1093, %c2_i32_564 : i32
    %1143 = arith.index_cast %1142 : i32 to index
    %c0_565 = arith.constant 0 : index
    %1144 = vector.load %arg22[%1143, %c0_565] : memref<16x32xf32, #tpu.memory_space<vmem>>, vector<2x32xf32>
    tpu.vector_store %arg22[%1143, %c0_565], %1141 {strides = array<i32>} : memref<16x32xf32, #tpu.memory_space<vmem>>, vector<2x32xf32>,
    %c4_i32_566 = arith.constant 4 : i32
    %c7_i32_567 = arith.constant 7 : i32
    %1145 = arith.subi %c7_i32_567, %c4_i32_566 : i32
    %c0_568 = arith.constant 0 : index
    %c0_569 = arith.constant 0 : index
    %1146 = vector.load %arg18[%c0_568, %c0_569] : memref<4x32xf32, #tpu.memory_space<vmem>>, vector<4x32xf32>
    %cst_570 = arith.constant dense<0.000000e+00> : vector<4x256xf32>
    %1147 = tpu.matmul %1146, %936, %cst_570 {dimension_numbers = #tpu.dot_dimension_numbers<[1], [0], [0], [1], [0, 0, 1, 1], [], []>} : vector<4x32xf32>, vector<32x256xf32>, vector<4x256xf32> -> vector<4x256xf32>
    %1148 = vector.extract_strided_slice %1147 {offsets = [0, 0], sizes = [4, 128], strides = [1, 1]} : vector<4x256xf32> to vector<4x128xf32>
    %1149 = vector.extract_strided_slice %1147 {offsets = [0, 128], sizes = [4, 128], strides = [1, 1]} : vector<4x256xf32> to vector<4x128xf32>
    %1150 = arith.select %2, %1148, %1149 : vector<4x128xi1>, vector<4x128xf32>
    %c2_i32_571 = arith.constant 2 : i32
    %1151 = arith.muli %c4_i32_566, %c2_i32_571 : i32
    %1152 = arith.index_cast %1151 : i32 to index
    %c0_572 = arith.constant 0 : index
    %1153 = vector.load %arg20[%1152, %c0_572] : memref<16x256xf32, #tpu.memory_space<vmem>>, vector<2x256xf32>
    %1154 = vector.extract_strided_slice %1153 {offsets = [0, 0], sizes = [2, 128], strides = [1, 1]} : vector<2x256xf32> to vector<2x128xf32>
    %c2_i32_573 = arith.constant 2 : i32
    %1155 = arith.muli %1145, %c2_i32_573 : i32
    %1156 = arith.index_cast %1155 : i32 to index
    %c0_574 = arith.constant 0 : index
    %1157 = vector.load %arg20[%1156, %c0_574] : memref<16x256xf32, #tpu.memory_space<vmem>>, vector<2x256xf32>
    %1158 = vector.extract_strided_slice %1157 {offsets = [0, 128], sizes = [2, 128], strides = [1, 1]} : vector<2x256xf32> to vector<2x128xf32>
    %1159 = tpu.concatenate %1154, %1158 in 0 : vector<2x128xf32>, vector<2x128xf32> -> vector<4x128xf32>
    %1160 = arith.addf %1159, %1150 : vector<4x128xf32>
    %1161 = vector.extract_strided_slice %1160 {offsets = [0, 0], sizes = [4, 32], strides = [1, 1]} : vector<4x128xf32> to vector<4x32xf32>
    %1162 = arith.negf %1161 : vector<4x32xf32>
    %1163 = math.exp %1162 : vector<4x32xf32>
    %cst_575 = arith.constant 1.000000e+00 : f32
    %1164 = vector.broadcast %cst_575 : f32 to vector<4x32xf32>
    %1165 = arith.addf %1164, %1163 : vector<4x32xf32>
    %1166 = arith.divf %1164, %1165 : vector<4x32xf32>
    %1167 = vector.extract_strided_slice %1160 {offsets = [0, 32], sizes = [4, 32], strides = [1, 1]} : vector<4x128xf32> to vector<4x32xf32>
    %1168 = arith.negf %1167 : vector<4x32xf32>
    %1169 = math.exp %1168 : vector<4x32xf32>
    %cst_576 = arith.constant 1.000000e+00 : f32
    %1170 = vector.broadcast %cst_576 : f32 to vector<4x32xf32>
    %1171 = arith.addf %1170, %1169 : vector<4x32xf32>
    %1172 = arith.divf %1170, %1171 : vector<4x32xf32>
    %1173 = vector.extract_strided_slice %1160 {offsets = [0, 64], sizes = [4, 32], strides = [1, 1]} : vector<4x128xf32> to vector<4x32xf32>
    %1174 = math.tanh %1173 : vector<4x32xf32>
    %1175 = vector.extract_strided_slice %1160 {offsets = [0, 96], sizes = [4, 32], strides = [1, 1]} : vector<4x128xf32> to vector<4x32xf32>
    %1176 = arith.negf %1175 : vector<4x32xf32>
    %1177 = math.exp %1176 : vector<4x32xf32>
    %cst_577 = arith.constant 1.000000e+00 : f32
    %1178 = vector.broadcast %cst_577 : f32 to vector<4x32xf32>
    %1179 = arith.addf %1178, %1177 : vector<4x32xf32>
    %1180 = arith.divf %1178, %1179 : vector<4x32xf32>
    %c0_578 = arith.constant 0 : index
    %c0_579 = arith.constant 0 : index
    %1181 = vector.load %arg19[%c0_578, %c0_579] : memref<4x32xf32, #tpu.memory_space<vmem>>, vector<4x32xf32>
    %1182 = arith.mulf %1172, %1181 : vector<4x32xf32>
    %1183 = arith.mulf %1166, %1174 : vector<4x32xf32>
    %1184 = arith.addf %1182, %1183 : vector<4x32xf32>
    %1185 = math.tanh %1184 : vector<4x32xf32>
    %1186 = arith.mulf %1180, %1185 : vector<4x32xf32>
    %c0_580 = arith.constant 0 : index
    %c0_581 = arith.constant 0 : index
    %1187 = vector.load %arg18[%c0_580, %c0_581] : memref<4x32xf32, #tpu.memory_space<vmem>>, vector<4x32xf32>
    tpu.vector_store %arg18[%c0_580, %c0_581], %1186 {strides = array<i32>} : memref<4x32xf32, #tpu.memory_space<vmem>>, vector<4x32xf32>,
    %c0_582 = arith.constant 0 : index
    %c0_583 = arith.constant 0 : index
    %1188 = vector.load %arg19[%c0_582, %c0_583] : memref<4x32xf32, #tpu.memory_space<vmem>>, vector<4x32xf32>
    tpu.vector_store %arg19[%c0_582, %c0_583], %1184 {strides = array<i32>} : memref<4x32xf32, #tpu.memory_space<vmem>>, vector<4x32xf32>,
    %1189 = vector.extract_strided_slice %1186 {offsets = [0, 0], sizes = [2, 32], strides = [1, 1]} : vector<4x32xf32> to vector<2x32xf32>
    %c2_i32_584 = arith.constant 2 : i32
    %1190 = arith.muli %c4_i32_566, %c2_i32_584 : i32
    %1191 = arith.index_cast %1190 : i32 to index
    %c0_585 = arith.constant 0 : index
    %1192 = vector.load %arg21[%1191, %c0_585] : memref<16x32xf32, #tpu.memory_space<vmem>>, vector<2x32xf32>
    tpu.vector_store %arg21[%1191, %c0_585], %1189 {strides = array<i32>} : memref<16x32xf32, #tpu.memory_space<vmem>>, vector<2x32xf32>,
    %1193 = vector.extract_strided_slice %1186 {offsets = [2, 0], sizes = [2, 32], strides = [1, 1]} : vector<4x32xf32> to vector<2x32xf32>
    %c2_i32_586 = arith.constant 2 : i32
    %1194 = arith.muli %1145, %c2_i32_586 : i32
    %1195 = arith.index_cast %1194 : i32 to index
    %c0_587 = arith.constant 0 : index
    %1196 = vector.load %arg22[%1195, %c0_587] : memref<16x32xf32, #tpu.memory_space<vmem>>, vector<2x32xf32>
    tpu.vector_store %arg22[%1195, %c0_587], %1193 {strides = array<i32>} : memref<16x32xf32, #tpu.memory_space<vmem>>, vector<2x32xf32>,
    %c5_i32_588 = arith.constant 5 : i32
    %c7_i32_589 = arith.constant 7 : i32
    %1197 = arith.subi %c7_i32_589, %c5_i32_588 : i32
    %c0_590 = arith.constant 0 : index
    %c0_591 = arith.constant 0 : index
    %1198 = vector.load %arg18[%c0_590, %c0_591] : memref<4x32xf32, #tpu.memory_space<vmem>>, vector<4x32xf32>
    %cst_592 = arith.constant dense<0.000000e+00> : vector<4x256xf32>
    %1199 = tpu.matmul %1198, %936, %cst_592 {dimension_numbers = #tpu.dot_dimension_numbers<[1], [0], [0], [1], [0, 0, 1, 1], [], []>} : vector<4x32xf32>, vector<32x256xf32>, vector<4x256xf32> -> vector<4x256xf32>
    %1200 = vector.extract_strided_slice %1199 {offsets = [0, 0], sizes = [4, 128], strides = [1, 1]} : vector<4x256xf32> to vector<4x128xf32>
    %1201 = vector.extract_strided_slice %1199 {offsets = [0, 128], sizes = [4, 128], strides = [1, 1]} : vector<4x256xf32> to vector<4x128xf32>
    %1202 = arith.select %2, %1200, %1201 : vector<4x128xi1>, vector<4x128xf32>
    %c2_i32_593 = arith.constant 2 : i32
    %1203 = arith.muli %c5_i32_588, %c2_i32_593 : i32
    %1204 = arith.index_cast %1203 : i32 to index
    %c0_594 = arith.constant 0 : index
    %1205 = vector.load %arg20[%1204, %c0_594] : memref<16x256xf32, #tpu.memory_space<vmem>>, vector<2x256xf32>
    %1206 = vector.extract_strided_slice %1205 {offsets = [0, 0], sizes = [2, 128], strides = [1, 1]} : vector<2x256xf32> to vector<2x128xf32>
    %c2_i32_595 = arith.constant 2 : i32
    %1207 = arith.muli %1197, %c2_i32_595 : i32
    %1208 = arith.index_cast %1207 : i32 to index
    %c0_596 = arith.constant 0 : index
    %1209 = vector.load %arg20[%1208, %c0_596] : memref<16x256xf32, #tpu.memory_space<vmem>>, vector<2x256xf32>
    %1210 = vector.extract_strided_slice %1209 {offsets = [0, 128], sizes = [2, 128], strides = [1, 1]} : vector<2x256xf32> to vector<2x128xf32>
    %1211 = tpu.concatenate %1206, %1210 in 0 : vector<2x128xf32>, vector<2x128xf32> -> vector<4x128xf32>
    %1212 = arith.addf %1211, %1202 : vector<4x128xf32>
    %1213 = vector.extract_strided_slice %1212 {offsets = [0, 0], sizes = [4, 32], strides = [1, 1]} : vector<4x128xf32> to vector<4x32xf32>
    %1214 = arith.negf %1213 : vector<4x32xf32>
    %1215 = math.exp %1214 : vector<4x32xf32>
    %cst_597 = arith.constant 1.000000e+00 : f32
    %1216 = vector.broadcast %cst_597 : f32 to vector<4x32xf32>
    %1217 = arith.addf %1216, %1215 : vector<4x32xf32>
    %1218 = arith.divf %1216, %1217 : vector<4x32xf32>
    %1219 = vector.extract_strided_slice %1212 {offsets = [0, 32], sizes = [4, 32], strides = [1, 1]} : vector<4x128xf32> to vector<4x32xf32>
    %1220 = arith.negf %1219 : vector<4x32xf32>
    %1221 = math.exp %1220 : vector<4x32xf32>
    %cst_598 = arith.constant 1.000000e+00 : f32
    %1222 = vector.broadcast %cst_598 : f32 to vector<4x32xf32>
    %1223 = arith.addf %1222, %1221 : vector<4x32xf32>
    %1224 = arith.divf %1222, %1223 : vector<4x32xf32>
    %1225 = vector.extract_strided_slice %1212 {offsets = [0, 64], sizes = [4, 32], strides = [1, 1]} : vector<4x128xf32> to vector<4x32xf32>
    %1226 = math.tanh %1225 : vector<4x32xf32>
    %1227 = vector.extract_strided_slice %1212 {offsets = [0, 96], sizes = [4, 32], strides = [1, 1]} : vector<4x128xf32> to vector<4x32xf32>
    %1228 = arith.negf %1227 : vector<4x32xf32>
    %1229 = math.exp %1228 : vector<4x32xf32>
    %cst_599 = arith.constant 1.000000e+00 : f32
    %1230 = vector.broadcast %cst_599 : f32 to vector<4x32xf32>
    %1231 = arith.addf %1230, %1229 : vector<4x32xf32>
    %1232 = arith.divf %1230, %1231 : vector<4x32xf32>
    %c0_600 = arith.constant 0 : index
    %c0_601 = arith.constant 0 : index
    %1233 = vector.load %arg19[%c0_600, %c0_601] : memref<4x32xf32, #tpu.memory_space<vmem>>, vector<4x32xf32>
    %1234 = arith.mulf %1224, %1233 : vector<4x32xf32>
    %1235 = arith.mulf %1218, %1226 : vector<4x32xf32>
    %1236 = arith.addf %1234, %1235 : vector<4x32xf32>
    %1237 = math.tanh %1236 : vector<4x32xf32>
    %1238 = arith.mulf %1232, %1237 : vector<4x32xf32>
    %c0_602 = arith.constant 0 : index
    %c0_603 = arith.constant 0 : index
    %1239 = vector.load %arg18[%c0_602, %c0_603] : memref<4x32xf32, #tpu.memory_space<vmem>>, vector<4x32xf32>
    tpu.vector_store %arg18[%c0_602, %c0_603], %1238 {strides = array<i32>} : memref<4x32xf32, #tpu.memory_space<vmem>>, vector<4x32xf32>,
    %c0_604 = arith.constant 0 : index
    %c0_605 = arith.constant 0 : index
    %1240 = vector.load %arg19[%c0_604, %c0_605] : memref<4x32xf32, #tpu.memory_space<vmem>>, vector<4x32xf32>
    tpu.vector_store %arg19[%c0_604, %c0_605], %1236 {strides = array<i32>} : memref<4x32xf32, #tpu.memory_space<vmem>>, vector<4x32xf32>,
    %1241 = vector.extract_strided_slice %1238 {offsets = [0, 0], sizes = [2, 32], strides = [1, 1]} : vector<4x32xf32> to vector<2x32xf32>
    %c2_i32_606 = arith.constant 2 : i32
    %1242 = arith.muli %c5_i32_588, %c2_i32_606 : i32
    %1243 = arith.index_cast %1242 : i32 to index
    %c0_607 = arith.constant 0 : index
    %1244 = vector.load %arg21[%1243, %c0_607] : memref<16x32xf32, #tpu.memory_space<vmem>>, vector<2x32xf32>
    tpu.vector_store %arg21[%1243, %c0_607], %1241 {strides = array<i32>} : memref<16x32xf32, #tpu.memory_space<vmem>>, vector<2x32xf32>,
    %1245 = vector.extract_strided_slice %1238 {offsets = [2, 0], sizes = [2, 32], strides = [1, 1]} : vector<4x32xf32> to vector<2x32xf32>
    %c2_i32_608 = arith.constant 2 : i32
    %1246 = arith.muli %1197, %c2_i32_608 : i32
    %1247 = arith.index_cast %1246 : i32 to index
    %c0_609 = arith.constant 0 : index
    %1248 = vector.load %arg22[%1247, %c0_609] : memref<16x32xf32, #tpu.memory_space<vmem>>, vector<2x32xf32>
    tpu.vector_store %arg22[%1247, %c0_609], %1245 {strides = array<i32>} : memref<16x32xf32, #tpu.memory_space<vmem>>, vector<2x32xf32>,
    %c6_i32_610 = arith.constant 6 : i32
    %c7_i32_611 = arith.constant 7 : i32
    %1249 = arith.subi %c7_i32_611, %c6_i32_610 : i32
    %c0_612 = arith.constant 0 : index
    %c0_613 = arith.constant 0 : index
    %1250 = vector.load %arg18[%c0_612, %c0_613] : memref<4x32xf32, #tpu.memory_space<vmem>>, vector<4x32xf32>
    %cst_614 = arith.constant dense<0.000000e+00> : vector<4x256xf32>
    %1251 = tpu.matmul %1250, %936, %cst_614 {dimension_numbers = #tpu.dot_dimension_numbers<[1], [0], [0], [1], [0, 0, 1, 1], [], []>} : vector<4x32xf32>, vector<32x256xf32>, vector<4x256xf32> -> vector<4x256xf32>
    %1252 = vector.extract_strided_slice %1251 {offsets = [0, 0], sizes = [4, 128], strides = [1, 1]} : vector<4x256xf32> to vector<4x128xf32>
    %1253 = vector.extract_strided_slice %1251 {offsets = [0, 128], sizes = [4, 128], strides = [1, 1]} : vector<4x256xf32> to vector<4x128xf32>
    %1254 = arith.select %2, %1252, %1253 : vector<4x128xi1>, vector<4x128xf32>
    %c2_i32_615 = arith.constant 2 : i32
    %1255 = arith.muli %c6_i32_610, %c2_i32_615 : i32
    %1256 = arith.index_cast %1255 : i32 to index
    %c0_616 = arith.constant 0 : index
    %1257 = vector.load %arg20[%1256, %c0_616] : memref<16x256xf32, #tpu.memory_space<vmem>>, vector<2x256xf32>
    %1258 = vector.extract_strided_slice %1257 {offsets = [0, 0], sizes = [2, 128], strides = [1, 1]} : vector<2x256xf32> to vector<2x128xf32>
    %c2_i32_617 = arith.constant 2 : i32
    %1259 = arith.muli %1249, %c2_i32_617 : i32
    %1260 = arith.index_cast %1259 : i32 to index
    %c0_618 = arith.constant 0 : index
    %1261 = vector.load %arg20[%1260, %c0_618] : memref<16x256xf32, #tpu.memory_space<vmem>>, vector<2x256xf32>
    %1262 = vector.extract_strided_slice %1261 {offsets = [0, 128], sizes = [2, 128], strides = [1, 1]} : vector<2x256xf32> to vector<2x128xf32>
    %1263 = tpu.concatenate %1258, %1262 in 0 : vector<2x128xf32>, vector<2x128xf32> -> vector<4x128xf32>
    %1264 = arith.addf %1263, %1254 : vector<4x128xf32>
    %1265 = vector.extract_strided_slice %1264 {offsets = [0, 0], sizes = [4, 32], strides = [1, 1]} : vector<4x128xf32> to vector<4x32xf32>
    %1266 = arith.negf %1265 : vector<4x32xf32>
    %1267 = math.exp %1266 : vector<4x32xf32>
    %cst_619 = arith.constant 1.000000e+00 : f32
    %1268 = vector.broadcast %cst_619 : f32 to vector<4x32xf32>
    %1269 = arith.addf %1268, %1267 : vector<4x32xf32>
    %1270 = arith.divf %1268, %1269 : vector<4x32xf32>
    %1271 = vector.extract_strided_slice %1264 {offsets = [0, 32], sizes = [4, 32], strides = [1, 1]} : vector<4x128xf32> to vector<4x32xf32>
    %1272 = arith.negf %1271 : vector<4x32xf32>
    %1273 = math.exp %1272 : vector<4x32xf32>
    %cst_620 = arith.constant 1.000000e+00 : f32
    %1274 = vector.broadcast %cst_620 : f32 to vector<4x32xf32>
    %1275 = arith.addf %1274, %1273 : vector<4x32xf32>
    %1276 = arith.divf %1274, %1275 : vector<4x32xf32>
    %1277 = vector.extract_strided_slice %1264 {offsets = [0, 64], sizes = [4, 32], strides = [1, 1]} : vector<4x128xf32> to vector<4x32xf32>
    %1278 = math.tanh %1277 : vector<4x32xf32>
    %1279 = vector.extract_strided_slice %1264 {offsets = [0, 96], sizes = [4, 32], strides = [1, 1]} : vector<4x128xf32> to vector<4x32xf32>
    %1280 = arith.negf %1279 : vector<4x32xf32>
    %1281 = math.exp %1280 : vector<4x32xf32>
    %cst_621 = arith.constant 1.000000e+00 : f32
    %1282 = vector.broadcast %cst_621 : f32 to vector<4x32xf32>
    %1283 = arith.addf %1282, %1281 : vector<4x32xf32>
    %1284 = arith.divf %1282, %1283 : vector<4x32xf32>
    %c0_622 = arith.constant 0 : index
    %c0_623 = arith.constant 0 : index
    %1285 = vector.load %arg19[%c0_622, %c0_623] : memref<4x32xf32, #tpu.memory_space<vmem>>, vector<4x32xf32>
    %1286 = arith.mulf %1276, %1285 : vector<4x32xf32>
    %1287 = arith.mulf %1270, %1278 : vector<4x32xf32>
    %1288 = arith.addf %1286, %1287 : vector<4x32xf32>
    %1289 = math.tanh %1288 : vector<4x32xf32>
    %1290 = arith.mulf %1284, %1289 : vector<4x32xf32>
    %c0_624 = arith.constant 0 : index
    %c0_625 = arith.constant 0 : index
    %1291 = vector.load %arg18[%c0_624, %c0_625] : memref<4x32xf32, #tpu.memory_space<vmem>>, vector<4x32xf32>
    tpu.vector_store %arg18[%c0_624, %c0_625], %1290 {strides = array<i32>} : memref<4x32xf32, #tpu.memory_space<vmem>>, vector<4x32xf32>,
    %c0_626 = arith.constant 0 : index
    %c0_627 = arith.constant 0 : index
    %1292 = vector.load %arg19[%c0_626, %c0_627] : memref<4x32xf32, #tpu.memory_space<vmem>>, vector<4x32xf32>
    tpu.vector_store %arg19[%c0_626, %c0_627], %1288 {strides = array<i32>} : memref<4x32xf32, #tpu.memory_space<vmem>>, vector<4x32xf32>,
    %1293 = vector.extract_strided_slice %1290 {offsets = [0, 0], sizes = [2, 32], strides = [1, 1]} : vector<4x32xf32> to vector<2x32xf32>
    %c2_i32_628 = arith.constant 2 : i32
    %1294 = arith.muli %c6_i32_610, %c2_i32_628 : i32
    %1295 = arith.index_cast %1294 : i32 to index
    %c0_629 = arith.constant 0 : index
    %1296 = vector.load %arg21[%1295, %c0_629] : memref<16x32xf32, #tpu.memory_space<vmem>>, vector<2x32xf32>
    tpu.vector_store %arg21[%1295, %c0_629], %1293 {strides = array<i32>} : memref<16x32xf32, #tpu.memory_space<vmem>>, vector<2x32xf32>,
    %1297 = vector.extract_strided_slice %1290 {offsets = [2, 0], sizes = [2, 32], strides = [1, 1]} : vector<4x32xf32> to vector<2x32xf32>
    %c2_i32_630 = arith.constant 2 : i32
    %1298 = arith.muli %1249, %c2_i32_630 : i32
    %1299 = arith.index_cast %1298 : i32 to index
    %c0_631 = arith.constant 0 : index
    %1300 = vector.load %arg22[%1299, %c0_631] : memref<16x32xf32, #tpu.memory_space<vmem>>, vector<2x32xf32>
    tpu.vector_store %arg22[%1299, %c0_631], %1297 {strides = array<i32>} : memref<16x32xf32, #tpu.memory_space<vmem>>, vector<2x32xf32>,
    %c7_i32_632 = arith.constant 7 : i32
    %c7_i32_633 = arith.constant 7 : i32
    %1301 = arith.subi %c7_i32_633, %c7_i32_632 : i32
    %c0_634 = arith.constant 0 : index
    %c0_635 = arith.constant 0 : index
    %1302 = vector.load %arg18[%c0_634, %c0_635] : memref<4x32xf32, #tpu.memory_space<vmem>>, vector<4x32xf32>
    %cst_636 = arith.constant dense<0.000000e+00> : vector<4x256xf32>
    %1303 = tpu.matmul %1302, %936, %cst_636 {dimension_numbers = #tpu.dot_dimension_numbers<[1], [0], [0], [1], [0, 0, 1, 1], [], []>} : vector<4x32xf32>, vector<32x256xf32>, vector<4x256xf32> -> vector<4x256xf32>
    %1304 = vector.extract_strided_slice %1303 {offsets = [0, 0], sizes = [4, 128], strides = [1, 1]} : vector<4x256xf32> to vector<4x128xf32>
    %1305 = vector.extract_strided_slice %1303 {offsets = [0, 128], sizes = [4, 128], strides = [1, 1]} : vector<4x256xf32> to vector<4x128xf32>
    %1306 = arith.select %2, %1304, %1305 : vector<4x128xi1>, vector<4x128xf32>
    %c2_i32_637 = arith.constant 2 : i32
    %1307 = arith.muli %c7_i32_632, %c2_i32_637 : i32
    %1308 = arith.index_cast %1307 : i32 to index
    %c0_638 = arith.constant 0 : index
    %1309 = vector.load %arg20[%1308, %c0_638] : memref<16x256xf32, #tpu.memory_space<vmem>>, vector<2x256xf32>
    %1310 = vector.extract_strided_slice %1309 {offsets = [0, 0], sizes = [2, 128], strides = [1, 1]} : vector<2x256xf32> to vector<2x128xf32>
    %c2_i32_639 = arith.constant 2 : i32
    %1311 = arith.muli %1301, %c2_i32_639 : i32
    %1312 = arith.index_cast %1311 : i32 to index
    %c0_640 = arith.constant 0 : index
    %1313 = vector.load %arg20[%1312, %c0_640] : memref<16x256xf32, #tpu.memory_space<vmem>>, vector<2x256xf32>
    %1314 = vector.extract_strided_slice %1313 {offsets = [0, 128], sizes = [2, 128], strides = [1, 1]} : vector<2x256xf32> to vector<2x128xf32>
    %1315 = tpu.concatenate %1310, %1314 in 0 : vector<2x128xf32>, vector<2x128xf32> -> vector<4x128xf32>
    %1316 = arith.addf %1315, %1306 : vector<4x128xf32>
    %1317 = vector.extract_strided_slice %1316 {offsets = [0, 0], sizes = [4, 32], strides = [1, 1]} : vector<4x128xf32> to vector<4x32xf32>
    %1318 = arith.negf %1317 : vector<4x32xf32>
    %1319 = math.exp %1318 : vector<4x32xf32>
    %cst_641 = arith.constant 1.000000e+00 : f32
    %1320 = vector.broadcast %cst_641 : f32 to vector<4x32xf32>
    %1321 = arith.addf %1320, %1319 : vector<4x32xf32>
    %1322 = arith.divf %1320, %1321 : vector<4x32xf32>
    %1323 = vector.extract_strided_slice %1316 {offsets = [0, 32], sizes = [4, 32], strides = [1, 1]} : vector<4x128xf32> to vector<4x32xf32>
    %1324 = arith.negf %1323 : vector<4x32xf32>
    %1325 = math.exp %1324 : vector<4x32xf32>
    %cst_642 = arith.constant 1.000000e+00 : f32
    %1326 = vector.broadcast %cst_642 : f32 to vector<4x32xf32>
    %1327 = arith.addf %1326, %1325 : vector<4x32xf32>
    %1328 = arith.divf %1326, %1327 : vector<4x32xf32>
    %1329 = vector.extract_strided_slice %1316 {offsets = [0, 64], sizes = [4, 32], strides = [1, 1]} : vector<4x128xf32> to vector<4x32xf32>
    %1330 = math.tanh %1329 : vector<4x32xf32>
    %1331 = vector.extract_strided_slice %1316 {offsets = [0, 96], sizes = [4, 32], strides = [1, 1]} : vector<4x128xf32> to vector<4x32xf32>
    %1332 = arith.negf %1331 : vector<4x32xf32>
    %1333 = math.exp %1332 : vector<4x32xf32>
    %cst_643 = arith.constant 1.000000e+00 : f32
    %1334 = vector.broadcast %cst_643 : f32 to vector<4x32xf32>
    %1335 = arith.addf %1334, %1333 : vector<4x32xf32>
    %1336 = arith.divf %1334, %1335 : vector<4x32xf32>
    %c0_644 = arith.constant 0 : index
    %c0_645 = arith.constant 0 : index
    %1337 = vector.load %arg19[%c0_644, %c0_645] : memref<4x32xf32, #tpu.memory_space<vmem>>, vector<4x32xf32>
    %1338 = arith.mulf %1328, %1337 : vector<4x32xf32>
    %1339 = arith.mulf %1322, %1330 : vector<4x32xf32>
    %1340 = arith.addf %1338, %1339 : vector<4x32xf32>
    %1341 = math.tanh %1340 : vector<4x32xf32>
    %1342 = arith.mulf %1336, %1341 : vector<4x32xf32>
    %c0_646 = arith.constant 0 : index
    %c0_647 = arith.constant 0 : index
    %1343 = vector.load %arg18[%c0_646, %c0_647] : memref<4x32xf32, #tpu.memory_space<vmem>>, vector<4x32xf32>
    tpu.vector_store %arg18[%c0_646, %c0_647], %1342 {strides = array<i32>} : memref<4x32xf32, #tpu.memory_space<vmem>>, vector<4x32xf32>,
    %c0_648 = arith.constant 0 : index
    %c0_649 = arith.constant 0 : index
    %1344 = vector.load %arg19[%c0_648, %c0_649] : memref<4x32xf32, #tpu.memory_space<vmem>>, vector<4x32xf32>
    tpu.vector_store %arg19[%c0_648, %c0_649], %1340 {strides = array<i32>} : memref<4x32xf32, #tpu.memory_space<vmem>>, vector<4x32xf32>,
    %1345 = vector.extract_strided_slice %1342 {offsets = [0, 0], sizes = [2, 32], strides = [1, 1]} : vector<4x32xf32> to vector<2x32xf32>
    %c2_i32_650 = arith.constant 2 : i32
    %1346 = arith.muli %c7_i32_632, %c2_i32_650 : i32
    %1347 = arith.index_cast %1346 : i32 to index
    %c0_651 = arith.constant 0 : index
    %1348 = vector.load %arg21[%1347, %c0_651] : memref<16x32xf32, #tpu.memory_space<vmem>>, vector<2x32xf32>
    tpu.vector_store %arg21[%1347, %c0_651], %1345 {strides = array<i32>} : memref<16x32xf32, #tpu.memory_space<vmem>>, vector<2x32xf32>,
    %1349 = vector.extract_strided_slice %1342 {offsets = [2, 0], sizes = [2, 32], strides = [1, 1]} : vector<4x32xf32> to vector<2x32xf32>
    %c2_i32_652 = arith.constant 2 : i32
    %1350 = arith.muli %1301, %c2_i32_652 : i32
    %1351 = arith.index_cast %1350 : i32 to index
    %c0_653 = arith.constant 0 : index
    %1352 = vector.load %arg22[%1351, %c0_653] : memref<16x32xf32, #tpu.memory_space<vmem>>, vector<2x32xf32>
    tpu.vector_store %arg22[%1351, %c0_653], %1349 {strides = array<i32>} : memref<16x32xf32, #tpu.memory_space<vmem>>, vector<2x32xf32>,
    %c8_i32_654 = arith.constant 8 : i32
    %c0_655 = arith.constant 0 : index
    %c0_656 = arith.constant 0 : index
    %1353 = vector.load %arg18[%c0_655, %c0_656] : memref<4x32xf32, #tpu.memory_space<vmem>>, vector<2x32xf32>
    %c4_657 = arith.constant 4 : index
    %c0_658 = arith.constant 0 : index
    %c0_659 = arith.constant 0 : index
    %1354 = vector.load %arg16[%c4_657, %c0_658, %c0_659] : memref<6x2x32xf32, #tpu.memory_space<vmem>>, vector<1x2x32xf32>
    %1355 = vector.shape_cast %1354 : vector<1x2x32xf32> to vector<2x32xf32>
    %1356 = vector.shape_cast %1353 : vector<2x32xf32> to vector<1x2x32xf32>
    tpu.vector_store %arg16[%c4_657, %c0_658, %c0_659], %1356 {strides = array<i32>} : memref<6x2x32xf32, #tpu.memory_space<vmem>>, vector<1x2x32xf32>,
    %c2_660 = arith.constant 2 : index
    %c0_661 = arith.constant 0 : index
    %1357 = vector.load %arg18[%c2_660, %c0_661] : memref<4x32xf32, #tpu.memory_space<vmem>>, vector<2x32xf32>
    %c5_662 = arith.constant 5 : index
    %c0_663 = arith.constant 0 : index
    %c0_664 = arith.constant 0 : index
    %1358 = vector.load %arg16[%c5_662, %c0_663, %c0_664] : memref<6x2x32xf32, #tpu.memory_space<vmem>>, vector<1x2x32xf32>
    %1359 = vector.shape_cast %1358 : vector<1x2x32xf32> to vector<2x32xf32>
    %1360 = vector.shape_cast %1357 : vector<2x32xf32> to vector<1x2x32xf32>
    tpu.vector_store %arg16[%c5_662, %c0_663, %c0_664], %1360 {strides = array<i32>} : memref<6x2x32xf32, #tpu.memory_space<vmem>>, vector<1x2x32xf32>,
    %c0_665 = arith.constant 0 : index
    %c0_666 = arith.constant 0 : index
    %1361 = vector.load %arg19[%c0_665, %c0_666] : memref<4x32xf32, #tpu.memory_space<vmem>>, vector<2x32xf32>
    %c4_667 = arith.constant 4 : index
    %c0_668 = arith.constant 0 : index
    %c0_669 = arith.constant 0 : index
    %1362 = vector.load %arg17[%c4_667, %c0_668, %c0_669] : memref<6x2x32xf32, #tpu.memory_space<vmem>>, vector<1x2x32xf32>
    %1363 = vector.shape_cast %1362 : vector<1x2x32xf32> to vector<2x32xf32>
    %1364 = vector.shape_cast %1361 : vector<2x32xf32> to vector<1x2x32xf32>
    tpu.vector_store %arg17[%c4_667, %c0_668, %c0_669], %1364 {strides = array<i32>} : memref<6x2x32xf32, #tpu.memory_space<vmem>>, vector<1x2x32xf32>,
    %c2_670 = arith.constant 2 : index
    %c0_671 = arith.constant 0 : index
    %1365 = vector.load %arg19[%c2_670, %c0_671] : memref<4x32xf32, #tpu.memory_space<vmem>>, vector<2x32xf32>
    %c5_672 = arith.constant 5 : index
    %c0_673 = arith.constant 0 : index
    %c0_674 = arith.constant 0 : index
    %1366 = vector.load %arg17[%c5_672, %c0_673, %c0_674] : memref<6x2x32xf32, #tpu.memory_space<vmem>>, vector<1x2x32xf32>
    %1367 = vector.shape_cast %1366 : vector<1x2x32xf32> to vector<2x32xf32>
    %1368 = vector.shape_cast %1365 : vector<2x32xf32> to vector<1x2x32xf32>
    tpu.vector_store %arg17[%c5_672, %c0_673, %c0_674], %1368 {strides = array<i32>} : memref<6x2x32xf32, #tpu.memory_space<vmem>>, vector<1x2x32xf32>,
    %c0_675 = arith.constant 0 : index
    %c0_676 = arith.constant 0 : index
    %1369 = vector.load %arg13[%c0_675, %c0_676] : memref<64x128xf32, #tpu.memory_space<vmem>>, vector<64x128xf32>
    %c0_677 = arith.constant 0 : index
    %c0_678 = arith.constant 0 : index
    %1370 = vector.load %arg21[%c0_677, %c0_678] : memref<16x32xf32, #tpu.memory_space<vmem>>, vector<16x32xf32>
    %1371 = vector.extract_strided_slice %1369 {offsets = [0, 0], sizes = [32, 128], strides = [1, 1]} : vector<64x128xf32> to vector<32x128xf32>
    %cst_679 = arith.constant dense<0.000000e+00> : vector<16x128xf32>
    %1372 = tpu.matmul %1370, %1371, %cst_679 {dimension_numbers = #tpu.dot_dimension_numbers<[1], [0], [0], [1], [0, 0, 1, 1], [], []>} : vector<16x32xf32>, vector<32x128xf32>, vector<16x128xf32> -> vector<16x128xf32>
    %c0_680 = arith.constant 0 : index
    %c0_681 = arith.constant 0 : index
    %1373 = vector.load %arg22[%c0_680, %c0_681] : memref<16x32xf32, #tpu.memory_space<vmem>>, vector<16x32xf32>
    %1374 = vector.extract_strided_slice %1369 {offsets = [32, 0], sizes = [32, 128], strides = [1, 1]} : vector<64x128xf32> to vector<32x128xf32>
    %cst_682 = arith.constant dense<0.000000e+00> : vector<16x128xf32>
    %1375 = tpu.matmul %1373, %1374, %cst_682 {dimension_numbers = #tpu.dot_dimension_numbers<[1], [0], [0], [1], [0, 0, 1, 1], [], []>} : vector<16x32xf32>, vector<32x128xf32>, vector<16x128xf32> -> vector<16x128xf32>
    %1376 = arith.addf %1372, %1375 : vector<16x128xf32>
    %c0_683 = arith.constant 0 : index
    %c0_684 = arith.constant 0 : index
    %1377 = vector.load %arg14[%c0_683, %c0_684] : memref<1x128xf32, #tpu.memory_space<vmem>>, vector<1x128xf32>
    %1378 = vector.broadcast %1377 : vector<1x128xf32> to vector<16x128xf32>
    %1379 = arith.addf %1376, %1378 : vector<16x128xf32>
    %cst_685 = arith.constant dense<0xFF800000> : vector<16xf32>
    %1380 = vector.multi_reduction <maximumf>, %1379, %cst_685 [1] : vector<16x128xf32> to vector<16xf32>
    %1381 = vector.shape_cast %1380 : vector<16xf32> to vector<16x1xf32>
    %1382 = vector.broadcast %1381 : vector<16x1xf32> to vector<16x128xf32>
    %1383 = arith.subf %1379, %1382 : vector<16x128xf32>
    %1384 = math.exp %1383 : vector<16x128xf32>
    %cst_686 = arith.constant dense<0.000000e+00> : vector<16xf32>
    %1385 = vector.multi_reduction <add>, %1384, %cst_686 [1] : vector<16x128xf32> to vector<16xf32>
    %1386 = vector.shape_cast %1385 : vector<16xf32> to vector<16x1xf32>
    %1387 = math.log %1386 : vector<16x1xf32>
    %1388 = vector.broadcast %1387 : vector<16x1xf32> to vector<16x128xf32>
    %1389 = arith.subf %1383, %1388 : vector<16x128xf32>
    %c0_687 = arith.constant 0 : index
    %c0_688 = arith.constant 0 : index
    %1390 = vector.load %arg15[%c0_687, %c0_688] : memref<16x128xf32, #tpu.memory_space<vmem>>, vector<16x128xf32>
    tpu.vector_store %arg15[%c0_687, %c0_688], %1389 {strides = array<i32>} : memref<16x128xf32, #tpu.memory_space<vmem>>, vector<16x128xf32>,
    return
  }
  func.func @transform_0(%arg0: i32) -> (i32, i32) {
    %c0_i32 = arith.constant 0 : i32
    %c0_i32_0 = arith.constant 0 : i32
    %c0_i32_1 = arith.constant 0 : i32
    return %c0_i32, %c0_i32_0 : i32, i32
  }
  func.func @transform_1(%arg0: i32) -> (i32, i32, i32) {
    %c0_i32 = arith.constant 0 : i32
    %c0_i32_0 = arith.constant 0 : i32
    %c0_i32_1 = arith.constant 0 : i32
    %c0_i32_2 = arith.constant 0 : i32
    return %c0_i32, %c0_i32_0, %c0_i32_1 : i32, i32, i32
  }
  func.func @transform_2(%arg0: i32) -> (i32, i32, i32) {
    %c0_i32 = arith.constant 0 : i32
    %c0_i32_0 = arith.constant 0 : i32
    %c0_i32_1 = arith.constant 0 : i32
    %c0_i32_2 = arith.constant 0 : i32
    return %c0_i32, %c0_i32_0, %c0_i32_1 : i32, i32, i32
  }
  func.func @transform_3(%arg0: i32) -> (i32, i32) {
    %c0_i32 = arith.constant 0 : i32
    %c0_i32_0 = arith.constant 0 : i32
    %c0_i32_1 = arith.constant 0 : i32
    return %c0_i32, %c0_i32_0 : i32, i32
  }
  func.func @transform_4(%arg0: i32) -> (i32, i32) {
    %c0_i32 = arith.constant 0 : i32
    %c0_i32_0 = arith.constant 0 : i32
    %c0_i32_1 = arith.constant 0 : i32
    return %c0_i32, %c0_i32_0 : i32, i32
  }
  func.func @transform_5(%arg0: i32) -> (i32, i32) {
    %c0_i32 = arith.constant 0 : i32
    %c0_i32_0 = arith.constant 0 : i32
    %c0_i32_1 = arith.constant 0 : i32
    return %c0_i32, %c0_i32_0 : i32, i32
  }
  func.func @transform_6(%arg0: i32) -> (i32, i32) {
    %c0_i32 = arith.constant 0 : i32
    %c0_i32_0 = arith.constant 0 : i32
    %c0_i32_1 = arith.constant 0 : i32
    return %c0_i32, %c0_i32_0 : i32, i32
  }
  func.func @transform_7(%arg0: i32) -> (i32, i32) {
    %c0_i32 = arith.constant 0 : i32
    %c0_i32_0 = arith.constant 0 : i32
    %c0_i32_1 = arith.constant 0 : i32
    return %c0_i32, %c0_i32_0 : i32, i32
  }
  func.func @transform_8(%arg0: i32) -> (i32, i32) {
    %c0_i32 = arith.constant 0 : i32
    %c0_i32_0 = arith.constant 0 : i32
    %c0_i32_1 = arith.constant 0 : i32
    return %c0_i32, %c0_i32_0 : i32, i32
  }
  func.func @transform_9(%arg0: i32) -> (i32, i32) {
    %c0_i32 = arith.constant 0 : i32
    %c0_i32_0 = arith.constant 0 : i32
    %c0_i32_1 = arith.constant 0 : i32
    return %c0_i32, %c0_i32_0 : i32, i32
  }
  func.func @transform_10(%arg0: i32) -> (i32, i32) {
    %c0_i32 = arith.constant 0 : i32
    %c0_i32_0 = arith.constant 0 : i32
    %c0_i32_1 = arith.constant 0 : i32
    return %c0_i32, %c0_i32_0 : i32, i32
  }
  func.func @transform_11(%arg0: i32) -> (i32, i32) {
    %c0_i32 = arith.constant 0 : i32
    %c0_i32_0 = arith.constant 0 : i32
    %c0_i32_1 = arith.constant 0 : i32
    return %c0_i32, %c0_i32_0 : i32, i32
  }
  func.func @transform_12(%arg0: i32) -> (i32, i32) {
    %c0_i32 = arith.constant 0 : i32
    %c0_i32_0 = arith.constant 0 : i32
    %c0_i32_1 = arith.constant 0 : i32
    return %c0_i32, %c0_i32_0 : i32, i32
  }
  func.func @transform_13(%arg0: i32) -> (i32, i32) {
    %c0_i32 = arith.constant 0 : i32
    %c0_i32_0 = arith.constant 0 : i32
    %c0_i32_1 = arith.constant 0 : i32
    return %c0_i32, %c0_i32_0 : i32, i32
  }
  func.func @transform_14(%arg0: i32) -> (i32, i32) {
    %c0_i32 = arith.constant 0 : i32
    %c0_i32_0 = arith.constant 0 : i32
    %c0_i32_1 = arith.constant 0 : i32
    return %c0_i32, %c0_i32_0 : i32, i32
  }
  func.func @transform_15(%arg0: i32) -> (i32, i32, i32) {
    %c0_i32 = arith.constant 0 : i32
    %c0_i32_0 = arith.constant 0 : i32
    %c0_i32_1 = arith.constant 0 : i32
    %c0_i32_2 = arith.constant 0 : i32
    return %c0_i32, %c0_i32_0, %c0_i32_1 : i32, i32, i32
  }
  func.func @transform_16(%arg0: i32) -> (i32, i32, i32) {
    %c0_i32 = arith.constant 0 : i32
    %c0_i32_0 = arith.constant 0 : i32
    %c0_i32_1 = arith.constant 0 : i32
    %c0_i32_2 = arith.constant 0 : i32
    return %c0_i32, %c0_i32_0, %c0_i32_1 : i32, i32, i32
  }
}

</mosaic_0001>

<llo_original>
// kernel: language_model_forward.1
$region0: #{language_model_forward.1}
  #allocation0 [shape = 'u32[]', space=smem, size = 0x4, offset = 0x4, fixed_abs, tag = 'smem constant byte address 0x4 - core index']
  #allocation1 [shape = 'u32[144,128]{1,0:T(1,128)}', space=vmem, size = 0x12000, scoped, tag = 'internal scratch']
  #allocation2 [shape = 'f32[4,32]{1,0:T(4,128)}', space=vmem, size = 0x800, scoped, tag = 'scratch operand']
  #allocation3 [shape = 'f32[4,32]{1,0:T(4,128)}', space=vmem, size = 0x800, scoped, tag = 'scratch operand']
  #allocation4 [shape = 'f32[16,256]{1,0:T(8,128)}', space=vmem, size = 0x4000, scoped, tag = 'scratch operand']
  #allocation5 [shape = 'f32[16,32]{1,0:T(8,128)}', space=vmem, size = 0x2000, scoped, tag = 'scratch operand']
  #allocation6 [shape = 'f32[16,32]{1,0:T(8,128)}', space=vmem, size = 0x2000, scoped, tag = 'scratch operand']
  #allocation7 [shape = 'f32[16,32]{1,0:T(8,128)}', space=vmem, size = 0x2000, scoped, tag = 'scratch operand']
  #allocation8 [shape = 'f32[16,32]{1,0:T(8,128)}', space=vmem, size = 0x2000, scoped, tag = 'scratch operand']
  %s0 = inlined_call_operand.vmem [shape: f32[16,16], index: 0, kind: input, shape index: {}]
  %s1 = inlined_call_operand.hbm [shape: f32[6,2,32], index: 1, kind: input, shape index: {}]
  %s2 = inlined_call_operand.hbm [shape: f32[6,2,32], index: 2, kind: input, shape index: {}]
  %s3 = inlined_call_operand.hbm [shape: f32[16,256], index: 3, kind: input, shape index: {}]
  %s4 = inlined_call_operand.hbm [shape: f32[32,256], index: 4, kind: input, shape index: {}]
  %s5 = inlined_call_operand.vmem [shape: f32[1,256], index: 5, kind: input, shape index: {}]
  %s6 = inlined_call_operand.hbm [shape: f32[64,256], index: 6, kind: input, shape index: {}]
  %s7 = inlined_call_operand.vmem [shape: f32[32,256], index: 7, kind: input, shape index: {}]
  %s8 = inlined_call_operand.vmem [shape: f32[1,256], index: 8, kind: input, shape index: {}]
  %s9 = inlined_call_operand.hbm [shape: f32[64,256], index: 9, kind: input, shape index: {}]
  %s10 = inlined_call_operand.hbm [shape: f32[32,256], index: 10, kind: input, shape index: {}]
  %s11 = inlined_call_operand.vmem [shape: f32[1,256], index: 11, kind: input, shape index: {}]
  %s12 = inlined_call_operand.hbm [shape: f32[64,128], index: 12, kind: input, shape index: {}]
  %s13 = inlined_call_operand.vmem [shape: f32[1,128], index: 13, kind: input, shape index: {}]
  %s14 = inlined_call_operand.vmem [shape: f32[16,128], index: 14, kind: output, shape index: {0}]
  %s15 = inlined_call_operand.hbm [shape: f32[6,2,32], index: 15, kind: output, shape index: {1}]
  %s16 = inlined_call_operand.hbm [shape: f32[6,2,32], index: 16, kind: output, shape index: {2}]
  %17 = xla_tuple %s14, %s15, %s16
  %s18 = sld [smem:[#allocation0]]
  $region114: #{language_model_forward.1} parent=0
    _
  %s20 = ssub.s32 1, %s18
  %s21 = scalar_select 0, %s20, %s18
  $region1: #{language_model_forward.1} parent=0
    #allocation9 [shape = 'u8[6144]{0}', space=vmem, size = 0x1800, scoped, tag = 'input window, operand 1, single buffered']
    #allocation10 [shape = 's32[1]{0}', space=sflag, size = 0x4, scoped, tag = 'scoped memory for language_model_forward.1']
    #allocation11 [shape = 's32[1]{0}', space=sflag, size = 0x4, scoped, tag = 'scoped memory for language_model_forward.1']
    #allocation12 [shape = 'u8[6144]{0}', space=vmem, size = 0x1800, scoped, tag = 'input window, operand 2, single buffered']
    #allocation13 [shape = 's32[1]{0}', space=sflag, size = 0x4, scoped, tag = 'scoped memory for language_model_forward.1']
    #allocation14 [shape = 'u8[16384]{0}', space=vmem, size = 0x4000, scoped, tag = 'input window, operand 3, single buffered']
    #allocation15 [shape = 'u8[32768]{0}', space=vmem, size = 0x8000, scoped, tag = 'input window, operand 4, single buffered']
    #allocation16 [shape = 's32[1]{0}', space=sflag, size = 0x4, scoped, tag = 'scoped memory for language_model_forward.1']
    #allocation17 [shape = 'u8[65536]{0}', space=vmem, size = 0x10000, scoped, tag = 'input window, operand 6, single buffered']
    #allocation18 [shape = 'u8[65536]{0}', space=vmem, size = 0x10000, scoped, tag = 'input window, operand 9, single buffered']
    #allocation19 [shape = 's32[1]{0}', space=sflag, size = 0x4, scoped, tag = 'scoped memory for language_model_forward.1']
    #allocation20 [shape = 'u8[32768]{0}', space=vmem, size = 0x8000, scoped, tag = 'input window, operand 10, single buffered']
    #allocation21 [shape = 'u8[32768]{0}', space=vmem, size = 0x8000, scoped, tag = 'input window, operand 12, single buffered']
    #allocation22 [shape = 's32[1]{0}', space=sflag, size = 0x4, scoped, tag = 'scoped memory for language_model_forward.1']
    #allocation23 [shape = 'u8[6144]{0}', space=vmem, size = 0x1800, scoped, tag = 'output window, operand 1, single buffered']
    #allocation24 [shape = 'u8[6144]{0}', space=vmem, size = 0x1800, scoped, tag = 'output window, operand 2, single buffered']
    #allocation25 [shape = 's32[1]{0}', space=sflag, size = 0x4, scoped, tag = 'scoped memory for language_model_forward.1']
    %22 = vsyncpa [#allocation10], 0
    %23 = vsyncpa [#allocation13], 0
    %24 = vsyncpa [#allocation16], 0
    %25 = vsyncpa [#allocation19], 0
    %26 = vsyncpa [#allocation22], 0
    %27 = vsyncpa [#allocation11], 0
    %28 = vsyncpa [#allocation25], 0
    // Predicated region
    $region2: #{language_model_forward.1} parent=1 // pred_check
      _
    $region3: #{language_model_forward.1} parent=1 // pred_check_branch
      %30 = sbr.rel (0) target = $region5
    $region4: #{language_model_forward.1} parent=1 // pred_region
      _
    $region5: #{language_model_forward.1} parent=1 // pred_fallthru
      _
    // Predicated region
    $region6: #{language_model_forward.1} parent=1 // pred_check
      _
    $region7: #{language_model_forward.1} parent=1 // pred_check_branch
      %32 = sbr.rel (0) target = $region9
    $region8: #{language_model_forward.1} parent=1 // pred_region
      %s34 = ssub.s32 192, 192
      %35 = vsyncadd [#allocation10], %s34
      %s36 = sshll.u32 [#allocation9], 4
      %s37 = int_to_ptr.vmem [resolvable:$true] %s36
      %42 = dma.hbm_to_vmem [thread:$0]  %s1, 192, %s37, [#allocation10], 32, 32, 2
    $region9: #{language_model_forward.1} parent=1 // pred_fallthru
      _
    // Predicated region
    $region10: #{language_model_forward.1} parent=1 // pred_check
      _
    $region11: #{language_model_forward.1} parent=1 // pred_check_branch
      %44 = sbr.rel (0) target = $region13
    $region12: #{language_model_forward.1} parent=1 // pred_region
      %s46 = ssub.s32 192, 192
      %47 = vsyncadd [#allocation13], %s46
      %s48 = sshll.u32 [#allocation12], 4
      %s49 = int_to_ptr.vmem [resolvable:$true] %s48
      %54 = dma.hbm_to_vmem [thread:$0]  %s2, 192, %s49, [#allocation13], 32, 32, 2
    $region13: #{language_model_forward.1} parent=1 // pred_fallthru
      _
    // Predicated region
    $region14: #{language_model_forward.1} parent=1 // pred_check
      _
    $region15: #{language_model_forward.1} parent=1 // pred_check_branch
      %56 = sbr.rel (0) target = $region17
    $region16: #{language_model_forward.1} parent=1 // pred_region
      %s58 = ssub.s32 512, 512
      %59 = vsyncadd [#allocation13], %s58
      %s60 = sshll.u32 [#allocation14], 4
      %s61 = int_to_ptr.vmem [resolvable:$true] %s60
      %66 = dma.hbm_to_vmem [thread:$0]  %s3, 512, %s61, [#allocation13], 256, 256, 16
    $region17: #{language_model_forward.1} parent=1 // pred_fallthru
      _
    // Predicated region
    $region18: #{language_model_forward.1} parent=1 // pred_check
      _
    $region19: #{language_model_forward.1} parent=1 // pred_check_branch
      %68 = sbr.rel (0) target = $region21
    $region20: #{language_model_forward.1} parent=1 // pred_region
      %s70 = ssub.s32 1024, 1024
      %71 = vsyncadd [#allocation16], %s70
      %s72 = sshll.u32 [#allocation15], 4
      %s73 = int_to_ptr.vmem [resolvable:$true] %s72
      %78 = dma.hbm_to_vmem [thread:$0]  %s4, 1024, %s73, [#allocation16], 256, 256, 16
    $region21: #{language_model_forward.1} parent=1 // pred_fallthru
      _
    // Predicated region
    $region22: #{language_model_forward.1} parent=1 // pred_check
      _
    $region23: #{language_model_forward.1} parent=1 // pred_check_branch
      %80 = sbr.rel (0) target = $region25
    $region24: #{language_model_forward.1} parent=1 // pred_region
      _
    $region25: #{language_model_forward.1} parent=1 // pred_fallthru
      _
    // Predicated region
    $region26: #{language_model_forward.1} parent=1 // pred_check
      _
    $region27: #{language_model_forward.1} parent=1 // pred_check_branch
      %82 = sbr.rel (0) target = $region29
    $region28: #{language_model_forward.1} parent=1 // pred_region
      %s84 = ssub.s32 2048, 2048
      %85 = vsyncadd [#allocation16], %s84
      %s86 = sshll.u32 [#allocation17], 4
      %s87 = int_to_ptr.vmem [resolvable:$true] %s86
      %92 = dma.hbm_to_vmem [thread:$0]  %s6, 2048, %s87, [#allocation16], 256, 256, 16
    $region29: #{language_model_forward.1} parent=1 // pred_fallthru
      _
    // Predicated region
    $region30: #{language_model_forward.1} parent=1 // pred_check
      _
    $region31: #{language_model_forward.1} parent=1 // pred_check_branch
      %94 = sbr.rel (0) target = $region33
    $region32: #{language_model_forward.1} parent=1 // pred_region
      _
    $region33: #{language_model_forward.1} parent=1 // pred_fallthru
      _
    // Predicated region
    $region34: #{language_model_forward.1} parent=1 // pred_check
      _
    $region35: #{language_model_forward.1} parent=1 // pred_check_branch
      %96 = sbr.rel (0) target = $region37
    $region36: #{language_model_forward.1} parent=1 // pred_region
      _
    $region37: #{language_model_forward.1} parent=1 // pred_fallthru
      _
    // Predicated region
    $region38: #{language_model_forward.1} parent=1 // pred_check
      _
    $region39: #{language_model_forward.1} parent=1 // pred_check_branch
      %98 = sbr.rel (0) target = $region41
    $region40: #{language_model_forward.1} parent=1 // pred_region
      %s100 = ssub.s32 2048, 2048
      %101 = vsyncadd [#allocation19], %s100
      %s102 = sshll.u32 [#allocation18], 4
      %s103 = int_to_ptr.vmem [resolvable:$true] %s102
      %108 = dma.hbm_to_vmem [thread:$0]  %s9, 2048, %s103, [#allocation19], 256, 256, 16
    $region41: #{language_model_forward.1} parent=1 // pred_fallthru
      _
    // Predicated region
    $region42: #{language_model_forward.1} parent=1 // pred_check
      _
    $region43: #{language_model_forward.1} parent=1 // pred_check_branch
      %110 = sbr.rel (0) target = $region45
    $region44: #{language_model_forward.1} parent=1 // pred_region
      %s112 = ssub.s32 1024, 1024
      %113 = vsyncadd [#allocation19], %s112
      %s114 = sshll.u32 [#allocation20], 4
      %s115 = int_to_ptr.vmem [resolvable:$true] %s114
      %120 = dma.hbm_to_vmem [thread:$0]  %s10, 1024, %s115, [#allocation19], 256, 256, 16
    $region45: #{language_model_forward.1} parent=1 // pred_fallthru
      _
    // Predicated region
    $region46: #{language_model_forward.1} parent=1 // pred_check
      _
    $region47: #{language_model_forward.1} parent=1 // pred_check_branch
      %122 = sbr.rel (0) target = $region49
    $region48: #{language_model_forward.1} parent=1 // pred_region
      _
    $region49: #{language_model_forward.1} parent=1 // pred_fallthru
      _
    // Predicated region
    $region50: #{language_model_forward.1} parent=1 // pred_check
      _
    $region51: #{language_model_forward.1} parent=1 // pred_check_branch
      %124 = sbr.rel (0) target = $region53
    $region52: #{language_model_forward.1} parent=1 // pred_region
      %s126 = ssub.s32 1024, 1024
      %127 = vsyncadd [#allocation22], %s126
      %s128 = sshll.u32 [#allocation21], 4
      %s129 = int_to_ptr.vmem [resolvable:$true] %s128
      %134 = dma.hbm_to_vmem [thread:$0]  %s12, 1024, %s129, [#allocation22], 128, 128, 8
    $region53: #{language_model_forward.1} parent=1 // pred_fallthru
      _
    // Predicated region
    $region54: #{language_model_forward.1} parent=1 // pred_check
      _
    $region55: #{language_model_forward.1} parent=1 // pred_check_branch
      %136 = sbr.rel (0) target = $region57
    $region56: #{language_model_forward.1} parent=1 // pred_region
      _
    $region57: #{language_model_forward.1} parent=1 // pred_fallthru
      _
    // Predicated region
    $region58: #{language_model_forward.1} parent=1 // pred_check
      _
    $region59: #{language_model_forward.1} parent=1 // pred_check_branch
      %138 = sbr.rel (0) target = $region61
    $region60: #{language_model_forward.1} parent=1 // pred_region
      %139 = dma.done [#allocation10], 192
    $region61: #{language_model_forward.1} parent=1 // pred_fallthru
      _
    // Predicated region
    $region62: #{language_model_forward.1} parent=1 // pred_check
      _
    $region63: #{language_model_forward.1} parent=1 // pred_check_branch
      %141 = sbr.rel (0) target = $region65
    $region64: #{language_model_forward.1} parent=1 // pred_region
      %142 = dma.done [#allocation13], 192
    $region65: #{language_model_forward.1} parent=1 // pred_fallthru
      _
    // Predicated region
    $region66: #{language_model_forward.1} parent=1 // pred_check
      _
    $region67: #{language_model_forward.1} parent=1 // pred_check_branch
      %144 = sbr.rel (0) target = $region69
    $region68: #{language_model_forward.1} parent=1 // pred_region
      %145 = dma.done [#allocation13], 512
    $region69: #{language_model_forward.1} parent=1 // pred_fallthru
      _
    // Predicated region
    $region70: #{language_model_forward.1} parent=1 // pred_check
      _
    $region71: #{language_model_forward.1} parent=1 // pred_check_branch
      %147 = sbr.rel (0) target = $region73
    $region72: #{language_model_forward.1} parent=1 // pred_region
      %148 = dma.done [#allocation16], 1024
    $region73: #{language_model_forward.1} parent=1 // pred_fallthru
      _
    // Predicated region
    $region74: #{language_model_forward.1} parent=1 // pred_check
      _
    $region75: #{language_model_forward.1} parent=1 // pred_check_branch
      %150 = sbr.rel (0) target = $region77
    $region76: #{language_model_forward.1} parent=1 // pred_region
      %151 = dma.done [#allocation16], 2048
    $region77: #{language_model_forward.1} parent=1 // pred_fallthru
      _
    // Predicated region
    $region78: #{language_model_forward.1} parent=1 // pred_check
      _
    $region79: #{language_model_forward.1} parent=1 // pred_check_branch
      %153 = sbr.rel (0) target = $region81
    $region80: #{language_model_forward.1} parent=1 // pred_region
      %154 = dma.done [#allocation19], 2048
    $region81: #{language_model_forward.1} parent=1 // pred_fallthru
      _
    // Predicated region
    $region82: #{language_model_forward.1} parent=1 // pred_check
      _
    $region83: #{language_model_forward.1} parent=1 // pred_check_branch
      %156 = sbr.rel (0) target = $region85
    $region84: #{language_model_forward.1} parent=1 // pred_region
      %157 = dma.done [#allocation19], 1024
    $region85: #{language_model_forward.1} parent=1 // pred_fallthru
      _
    // Predicated region
    $region86: #{language_model_forward.1} parent=1 // pred_check
      _
    $region87: #{language_model_forward.1} parent=1 // pred_check_branch
      %159 = sbr.rel (0) target = $region89
    $region88: #{language_model_forward.1} parent=1 // pred_region
      %160 = dma.done [#allocation22], 1024
    $region89: #{language_model_forward.1} parent=1 // pred_fallthru
      _
    %v161 = vlaneseq
    %v162 = vshrl.u32 %v161, 7
    %vm163 = vcmp.lt.s32.totalorder %v162, 2
    %v164 = vld [vmem:[%s0] sm:$0xff]
    %v165 = vld [vmem:[%s0 + $0x8] sm:$0xff]
    %v166 = vld [vmem:[#allocation14] sm:$0xff]
    %v167 = vld [vmem:[#allocation14 + $0x8] sm:$0xff]
    %v168 = vld [vmem:[#allocation14 + $0x10] sm:$0xff]
    %v169 = vld [vmem:[#allocation14 + $0x18] sm:$0xff]
    %v170 = vld [vmem:[%s5] sm:$0x3]
    %v172 = vlaneseq
    %v173 = vshrl.u32 %v172, 7
    %v174 = vsub.s32 0, %v173
    %v175 = vrot.slane %v170, %v174
    %v176 = vlaneseq
    %v177 = vshrl.u32 %v176, 7
    %v178 = vsub.s32 1, %v177
    %v179 = vrot.slane %v170, %v178
    %vm182 = vcmask 130048
    %v184 = vsel %vm182, %v164, 0
    %v187 = vsel %vm182, %v165, 0
    %189 = vmatprep.subr.mxu0 %v167
    %190 = vmatpush1.msra.mxu0 %v166
    %191 = vmatprep.subr.mxu0 %v169
    %192 = vmatpush1.msra.mxu0 %v168
    %193 = vmatprep.subr.mxu0 0.0
    %194 = vmatpush1.msra.mxu0 0.0
    %195 = vmatprep.subr.mxu0 0.0
    %196 = vmatpush1.msra.mxu0 0.0
    %197 = vmatprep.subr.mxu0 0.0
    %198 = vmatpush1.msra.mxu0 0.0
    %199 = vmatprep.subr.mxu0 0.0
    %200 = vmatpush1.msra.mxu0 0.0
    %201 = vmatprep.subr.mxu0 0.0
    %202 = vmatpush1.msra.mxu0 0.0
    %203 = vmatprep.subr.mxu0 0.0
    %204 = vmatpush1.msra.mxu0 0.0
    %205 = vmatprep.subr.mxu0 0.0
    %206 = vmatpush1.msra.mxu0 0.0
    %207 = vmatprep.subr.mxu0 0.0
    %208 = vmatpush1.msra.mxu0 0.0
    %209 = vmatprep.subr.mxu0 0.0
    %210 = vmatpush1.msra.mxu0 0.0
    %211 = vmatprep.subr.mxu0 0.0
    %212 = vmatpush1.msra.mxu0 0.0
    %213 = vmatprep.subr.mxu0 0.0
    %214 = vmatpush1.msra.mxu0 0.0
    %215 = vmatprep.subr.mxu0 0.0
    %216 = vmatpush1.msra.mxu0 0.0
    %217 = vmatprep.subr.mxu0 0.0
    %218 = vmatpush1.msra.mxu0 0.0
    %219 = vmatprep.subr.mxu0 0.0
    %220 = vmatpush1.msra.mxu0 0.0
    %221 = vmatprep.subr.mxu0 0.0
    %222 = vmatpush1.msra.mxu0 0.0
    %223 = vmatprep.subr.mxu0 0.0
    %224 = vmatpush1.msra.mxu0 0.0
    %225 = vmatprep.subr.mxu0 0.0
    %226 = vmatpush1.msra.mxu0 0.0
    %227 = vmatprep.subr.mxu0 0.0
    %228 = vmatpush1.msra.mxu0 0.0
    %229 = vmatprep.subr.mxu0 0.0
    %230 = vmatpush1.msra.mxu0 0.0
    %231 = vmatprep.subr.mxu0 0.0
    %232 = vmatpush1.msra.mxu0 0.0
    %233 = vmatprep.subr.mxu0 0.0
    %234 = vmatpush1.msra.mxu0 0.0
    %235 = vmatprep.subr.mxu0 0.0
    %236 = vmatpush1.msra.mxu0 0.0
    %237 = vmatprep.subr.mxu0 0.0
    %238 = vmatpush1.msra.mxu0 0.0
    %239 = vmatprep.subr.mxu0 0.0
    %240 = vmatpush1.msra.mxu0 0.0
    %241 = vmatprep.subr.mxu0 0.0
    %242 = vmatpush1.msra.mxu0 0.0
    %243 = vmatprep.subr.mxu0 0.0
    %244 = vmatpush1.msra.mxu0 0.0
    %245 = vmatprep.subr.mxu0 0.0
    %246 = vmatpush1.msra.mxu0 0.0
    %247 = vmatprep.subr.mxu0 0.0
    %248 = vmatpush1.msra.mxu0 0.0
    %249 = vmatprep.subr.mxu0 0.0
    %250 = vmatpush1.msra.mxu0 0.0
    %251 = vmatprep.subr.mxu0 0.0
    %252 = vmatpush1.msra.mxu0 0.0
    %253 = vmatprep.mubr.f32.mxu0 0.0
    %254 = vmatmul.mubr.f32.gmra.mrb[0].mxu0 %v184
    %v255 = vpop.f32.mrb[0].mxu0
    %v256 = vadd.f32 %v175, %v255
    %v257 = vpop.f32.mrb[0].mxu0
    %v258 = vadd.f32 %v179, %v257
    %259 = vmatprep.mubr.f32.mxu0 0.0
    %260 = vmatmul.mubr.f32.gmra.mrb[0].mxu0 %v187
    %v261 = vpop.f32.mrb[0].mxu0
    %v262 = vadd.f32 %v175, %v261
    %v263 = vpop.f32.mrb[0].mxu0
    %v264 = vadd.f32 %v179, %v263
    %265 = vdwg.mxu0
    %266 = vst [vmem:[#allocation4] sm:$0xff] %v256
    %267 = vst [vmem:[#allocation4 + $0x8] sm:$0xff] %v258
    %268 = vst [vmem:[#allocation4 + $0x10] sm:$0xff] %v262
    %269 = vst [vmem:[#allocation4 + $0x18] sm:$0xff] %v264
    %v270 = vld [vmem:[#allocation9] sm:$0x3]
    %vm271 = vcmask 254976
    %272 = vst.msk [vmem:[#allocation2] sm:$0x3] %vm271, %v270
    %s273 = scalar_lea.vmem [#allocation9], 2
    %v274 = vld [vmem:[%s273] sm:$0x3]
    %275 = vst.msk [vmem:[#allocation2 + $0x2] sm:$0x3] %vm271, %v274
    %v276 = vld [vmem:[#allocation12] sm:$0x3]
    %277 = vst.msk [vmem:[#allocation3] sm:$0x3] %vm271, %v276
    %s278 = scalar_lea.vmem [#allocation12], 2
    %v279 = vld [vmem:[%s278] sm:$0x3]
    %280 = vst.msk [vmem:[#allocation3 + $0x2] sm:$0x3] %vm271, %v279
    %v281 = vld [vmem:[#allocation15] sm:$0xff]
    %v282 = vld [vmem:[#allocation15 + $0x8] sm:$0xff]
    %v283 = vld [vmem:[#allocation15 + $0x10] sm:$0xff]
    %v284 = vld [vmem:[#allocation15 + $0x18] sm:$0xff]
    %v285 = vld [vmem:[#allocation15 + $0x20] sm:$0xff]
    %v286 = vld [vmem:[#allocation15 + $0x28] sm:$0xff]
    %v287 = vld [vmem:[#allocation15 + $0x30] sm:$0xff]
    %v288 = vld [vmem:[#allocation15 + $0x38] sm:$0xff]
    %v289 = vld [vmem:[#allocation2] sm:$0xf]
    %vm290 = vcmask 261120
    %v292 = vsel %vm290, %v289, 0
    %294 = vmatprep.subr.mxu0 %v282
    %295 = vmatpush1.msra.mxu0 %v281
    %296 = vmatprep.subr.mxu0 %v284
    %297 = vmatpush1.msra.mxu0 %v283
    %298 = vmatprep.subr.mxu0 %v286
    %299 = vmatpush1.msra.mxu0 %v285
    %300 = vmatprep.subr.mxu0 %v288
    %301 = vmatpush1.msra.mxu0 %v287
    %302 = vmatprep.subr.mxu0 0.0
    %303 = vmatpush1.msra.mxu0 0.0
    %304 = vmatprep.subr.mxu0 0.0
    %305 = vmatpush1.msra.mxu0 0.0
    %306 = vmatprep.subr.mxu0 0.0
    %307 = vmatpush1.msra.mxu0 0.0
    %308 = vmatprep.subr.mxu0 0.0
    %309 = vmatpush1.msra.mxu0 0.0
    %310 = vmatprep.subr.mxu0 0.0
    %311 = vmatpush1.msra.mxu0 0.0
    %312 = vmatprep.subr.mxu0 0.0
    %313 = vmatpush1.msra.mxu0 0.0
    %314 = vmatprep.subr.mxu0 0.0
    %315 = vmatpush1.msra.mxu0 0.0
    %316 = vmatprep.subr.mxu0 0.0
    %317 = vmatpush1.msra.mxu0 0.0
    %318 = vmatprep.subr.mxu0 0.0
    %319 = vmatpush1.msra.mxu0 0.0
    %320 = vmatprep.subr.mxu0 0.0
    %321 = vmatpush1.msra.mxu0 0.0
    %322 = vmatprep.subr.mxu0 0.0
    %323 = vmatpush1.msra.mxu0 0.0
    %324 = vmatprep.subr.mxu0 0.0
    %325 = vmatpush1.msra.mxu0 0.0
    %326 = vmatprep.subr.mxu0 0.0
    %327 = vmatpush1.msra.mxu0 0.0
    %328 = vmatprep.subr.mxu0 0.0
    %329 = vmatpush1.msra.mxu0 0.0
    %330 = vmatprep.subr.mxu0 0.0
    %331 = vmatpush1.msra.mxu0 0.0
    %332 = vmatprep.subr.mxu0 0.0
    %333 = vmatpush1.msra.mxu0 0.0
    %334 = vmatprep.subr.mxu0 0.0
    %335 = vmatpush1.msra.mxu0 0.0
    %336 = vmatprep.subr.mxu0 0.0
    %337 = vmatpush1.msra.mxu0 0.0
    %338 = vmatprep.subr.mxu0 0.0
    %339 = vmatpush1.msra.mxu0 0.0
    %340 = vmatprep.subr.mxu0 0.0
    %341 = vmatpush1.msra.mxu0 0.0
    %342 = vmatprep.subr.mxu0 0.0
    %343 = vmatpush1.msra.mxu0 0.0
    %344 = vmatprep.subr.mxu0 0.0
    %345 = vmatpush1.msra.mxu0 0.0
    %346 = vmatprep.subr.mxu0 0.0
    %347 = vmatpush1.msra.mxu0 0.0
    %348 = vmatprep.subr.mxu0 0.0
    %349 = vmatpush1.msra.mxu0 0.0
    %350 = vmatprep.subr.mxu0 0.0
    %351 = vmatpush1.msra.mxu0 0.0
    %352 = vmatprep.subr.mxu0 0.0
    %353 = vmatpush1.msra.mxu0 0.0
    %354 = vmatprep.subr.mxu0 0.0
    %355 = vmatpush1.msra.mxu0 0.0
    %356 = vmatprep.subr.mxu0 0.0
    %357 = vmatpush1.msra.mxu0 0.0
    %358 = vmatprep.mubr.f32.mxu0 0.0
    %359 = vmatmul.mubr.f32.gmra.mrb[0].mxu0 %v292
    %v360 = vpop.f32.mrb[0].mxu0
    %v361 = vadd.f32 0.0, %v360
    %v362 = vpop.f32.mrb[0].mxu0
    %v363 = vadd.f32 0.0, %v362
    %364 = vdwg.mxu0
    %v365 = vsel %vm163, %v361, %v363
    %v366 = vld [vmem:[#allocation4] sm:$0x3]
    %v367 = vld [vmem:[#allocation4 + $0x18] sm:$0xc0]
    %v369 = vrot.slane %v367, 4
    %vm371 = vcmask 1041408
    %v372 = vsel %vm371, %v366, %v369
    %v373 = vadd.f32 %v372, %v365
    %v374 = vxor.u32 %v373, 2147483648
    %v375 = vmul.f32 %v374, 1.442695
    %v376 = vpow.pop %v375
    %v377 = vadd.f32 %v376, 1.0
    %v378 = vrcp.pop %v377
    %v379 = vmul.f32 1.0, %v378
    %v380 = vtanh.pop %v373
    %v381 = vld [vmem:[#allocation3] sm:$0xf]
    %383 = vrot.lane.b32.xlu0 %v381, 32
    %v384 = vpop.permute.xlu0 %383
    %v386 = vmul.f32 %v379, %v384
    %388 = vrot.lane.b32.xlu0 %v380, 64
    %v389 = vpop.permute.xlu0 %388
    %v391 = vmul.f32 %v379, %v389
    %393 = vrot.lane.b32.xlu0 %v391, 32
    %v394 = vpop.permute.xlu0 %393
    %v396 = vadd.f32 %v386, %v394
    %v397 = vtanh.pop %v396
    %399 = vrot.lane.b32.xlu0 %v397, 64
    %v400 = vpop.permute.xlu0 %399
    %v402 = vmul.f32 %v379, %v400
    %404 = vrot.lane.b32.xlu0 %v402, 32
    %v405 = vpop.permute.xlu0 %404
    %vm407 = vcmask 257024
    %408 = vst.msk [vmem:[#allocation2] sm:$0xf] %vm407, %v405
    %410 = vrot.lane.b32.xlu0 %v396, 96
    %v411 = vpop.permute.xlu0 %410
    %413 = vst.msk [vmem:[#allocation3] sm:$0xf] %vm407, %v411
    %414 = vst.msk [vmem:[#allocation5] sm:$0x3] %vm271, %v405
    %vm415 = vcmask 257026
    %416 = vst.msk [vmem:[#allocation6 + $0xc] sm:$0xc] %vm415, %v405
    %v417 = vld [vmem:[#allocation2] sm:$0xf]
    %v419 = vsel %vm290, %v417, 0
    %421 = vmatprep.subr.mxu0 %v282
    %422 = vmatpush1.msra.mxu0 %v281
    %423 = vmatprep.subr.mxu0 %v284
    %424 = vmatpush1.msra.mxu0 %v283
    %425 = vmatprep.subr.mxu0 %v286
    %426 = vmatpush1.msra.mxu0 %v285
    %427 = vmatprep.subr.mxu0 %v288
    %428 = vmatpush1.msra.mxu0 %v287
    %429 = vmatprep.subr.mxu0 0.0
    %430 = vmatpush1.msra.mxu0 0.0
    %431 = vmatprep.subr.mxu0 0.0
    %432 = vmatpush1.msra.mxu0 0.0
    %433 = vmatprep.subr.mxu0 0.0
    %434 = vmatpush1.msra.mxu0 0.0
    %435 = vmatprep.subr.mxu0 0.0
    %436 = vmatpush1.msra.mxu0 0.0
    %437 = vmatprep.subr.mxu0 0.0
    %438 = vmatpush1.msra.mxu0 0.0
    %439 = vmatprep.subr.mxu0 0.0
    %440 = vmatpush1.msra.mxu0 0.0
    %441 = vmatprep.subr.mxu0 0.0
    %442 = vmatpush1.msra.mxu0 0.0
    %443 = vmatprep.subr.mxu0 0.0
    %444 = vmatpush1.msra.mxu0 0.0
    %445 = vmatprep.subr.mxu0 0.0
    %446 = vmatpush1.msra.mxu0 0.0
    %447 = vmatprep.subr.mxu0 0.0
    %448 = vmatpush1.msra.mxu0 0.0
    %449 = vmatprep.subr.mxu0 0.0
    %450 = vmatpush1.msra.mxu0 0.0
    %451 = vmatprep.subr.mxu0 0.0
    %452 = vmatpush1.msra.mxu0 0.0
    %453 = vmatprep.subr.mxu0 0.0
    %454 = vmatpush1.msra.mxu0 0.0
    %455 = vmatprep.subr.mxu0 0.0
    %456 = vmatpush1.msra.mxu0 0.0
    %457 = vmatprep.subr.mxu0 0.0
    %458 = vmatpush1.msra.mxu0 0.0
    %459 = vmatprep.subr.mxu0 0.0
    %460 = vmatpush1.msra.mxu0 0.0
    %461 = vmatprep.subr.mxu0 0.0
    %462 = vmatpush1.msra.mxu0 0.0
    %463 = vmatprep.subr.mxu0 0.0
    %464 = vmatpush1.msra.mxu0 0.0
    %465 = vmatprep.subr.mxu0 0.0
    %466 = vmatpush1.msra.mxu0 0.0
    %467 = vmatprep.subr.mxu0 0.0
    %468 = vmatpush1.msra.mxu0 0.0
    %469 = vmatprep.subr.mxu0 0.0
    %470 = vmatpush1.msra.mxu0 0.0
    %471 = vmatprep.subr.mxu0 0.0
    %472 = vmatpush1.msra.mxu0 0.0
    %473 = vmatprep.subr.mxu0 0.0
    %474 = vmatpush1.msra.mxu0 0.0
    %475 = vmatprep.subr.mxu0 0.0
    %476 = vmatpush1.msra.mxu0 0.0
    %477 = vmatprep.subr.mxu0 0.0
    %478 = vmatpush1.msra.mxu0 0.0
    %479 = vmatprep.subr.mxu0 0.0
    %480 = vmatpush1.msra.mxu0 0.0
    %481 = vmatprep.subr.mxu0 0.0
    %482 = vmatpush1.msra.mxu0 0.0
    %483 = vmatprep.subr.mxu0 0.0
    %484 = vmatpush1.msra.mxu0 0.0
    %485 = vmatprep.mubr.f32.mxu0 0.0
    %486 = vmatmul.mubr.f32.gmra.mrb[0].mxu0 %v419
    %v487 = vpop.f32.mrb[0].mxu0
    %v488 = vadd.f32 0.0, %v487
    %v489 = vpop.f32.mrb[0].mxu0
    %v490 = vadd.f32 0.0, %v489
    %491 = vdwg.mxu0
    %v492 = vsel %vm163, %v488, %v490
    %v493 = vld [vmem:[#allocation4] sm:$0xc]
    %v494 = vld [vmem:[#allocation4 + $0x18] sm:$0x30]
    %v496 = vrot.slane %v493, 2
    %v499 = vrot.slane %v494, 2
    %v501 = vsel %vm371, %v496, %v499
    %v502 = vadd.f32 %v501, %v492
    %v503 = vxor.u32 %v502, 2147483648
    %v504 = vmul.f32 %v503, 1.442695
    %v505 = vpow.pop %v504
    %v506 = vadd.f32 %v505, 1.0
    %v507 = vrcp.pop %v506
    %v508 = vmul.f32 1.0, %v507
    %v509 = vtanh.pop %v502
    %v510 = vld [vmem:[#allocation3] sm:$0xf]
    %512 = vrot.lane.b32.xlu0 %v510, 32
    %v513 = vpop.permute.xlu0 %512
    %v515 = vmul.f32 %v508, %v513
    %517 = vrot.lane.b32.xlu0 %v509, 64
    %v518 = vpop.permute.xlu0 %517
    %v520 = vmul.f32 %v508, %v518
    %522 = vrot.lane.b32.xlu0 %v520, 32
    %v523 = vpop.permute.xlu0 %522
    %v525 = vadd.f32 %v515, %v523
    %v526 = vtanh.pop %v525
    %528 = vrot.lane.b32.xlu0 %v526, 64
    %v529 = vpop.permute.xlu0 %528
    %v531 = vmul.f32 %v508, %v529
    %533 = vrot.lane.b32.xlu0 %v531, 32
    %v534 = vpop.permute.xlu0 %533
    %536 = vst.msk [vmem:[#allocation2] sm:$0xf] %vm407, %v534
    %538 = vrot.lane.b32.xlu0 %v525, 96
    %v539 = vpop.permute.xlu0 %538
    %541 = vst.msk [vmem:[#allocation3] sm:$0xf] %vm407, %v539
    %542 = vst.msk [vmem:[#allocation5 + $0x2] sm:$0x3] %vm271, %v534
    %543 = vst.msk [vmem:[#allocation6 + $0xa] sm:$0xc] %vm415, %v534
    %v544 = vld [vmem:[#allocation2] sm:$0xf]
    %v546 = vsel %vm290, %v544, 0
    %548 = vmatprep.subr.mxu0 %v282
    %549 = vmatpush1.msra.mxu0 %v281
    %550 = vmatprep.subr.mxu0 %v284
    %551 = vmatpush1.msra.mxu0 %v283
    %552 = vmatprep.subr.mxu0 %v286
    %553 = vmatpush1.msra.mxu0 %v285
    %554 = vmatprep.subr.mxu0 %v288
    %555 = vmatpush1.msra.mxu0 %v287
    %556 = vmatprep.subr.mxu0 0.0
    %557 = vmatpush1.msra.mxu0 0.0
    %558 = vmatprep.subr.mxu0 0.0
    %559 = vmatpush1.msra.mxu0 0.0
    %560 = vmatprep.subr.mxu0 0.0
    %561 = vmatpush1.msra.mxu0 0.0
    %562 = vmatprep.subr.mxu0 0.0
    %563 = vmatpush1.msra.mxu0 0.0
    %564 = vmatprep.subr.mxu0 0.0
    %565 = vmatpush1.msra.mxu0 0.0
    %566 = vmatprep.subr.mxu0 0.0
    %567 = vmatpush1.msra.mxu0 0.0
    %568 = vmatprep.subr.mxu0 0.0
    %569 = vmatpush1.msra.mxu0 0.0
    %570 = vmatprep.subr.mxu0 0.0
    %571 = vmatpush1.msra.mxu0 0.0
    %572 = vmatprep.subr.mxu0 0.0
    %573 = vmatpush1.msra.mxu0 0.0
    %574 = vmatprep.subr.mxu0 0.0
    %575 = vmatpush1.msra.mxu0 0.0
    %576 = vmatprep.subr.mxu0 0.0
    %577 = vmatpush1.msra.mxu0 0.0
    %578 = vmatprep.subr.mxu0 0.0
    %579 = vmatpush1.msra.mxu0 0.0
    %580 = vmatprep.subr.mxu0 0.0
    %581 = vmatpush1.msra.mxu0 0.0
    %582 = vmatprep.subr.mxu0 0.0
    %583 = vmatpush1.msra.mxu0 0.0
    %584 = vmatprep.subr.mxu0 0.0
    %585 = vmatpush1.msra.mxu0 0.0
    %586 = vmatprep.subr.mxu0 0.0
    %587 = vmatpush1.msra.mxu0 0.0
    %588 = vmatprep.subr.mxu0 0.0
    %589 = vmatpush1.msra.mxu0 0.0
    %590 = vmatprep.subr.mxu0 0.0
    %591 = vmatpush1.msra.mxu0 0.0
    %592 = vmatprep.subr.mxu0 0.0
    %593 = vmatpush1.msra.mxu0 0.0
    %594 = vmatprep.subr.mxu0 0.0
    %595 = vmatpush1.msra.mxu0 0.0
    %596 = vmatprep.subr.mxu0 0.0
    %597 = vmatpush1.msra.mxu0 0.0
    %598 = vmatprep.subr.mxu0 0.0
    %599 = vmatpush1.msra.mxu0 0.0
    %600 = vmatprep.subr.mxu0 0.0
    %601 = vmatpush1.msra.mxu0 0.0
    %602 = vmatprep.subr.mxu0 0.0
    %603 = vmatpush1.msra.mxu0 0.0
    %604 = vmatprep.subr.mxu0 0.0
    %605 = vmatpush1.msra.mxu0 0.0
    %606 = vmatprep.subr.mxu0 0.0
    %607 = vmatpush1.msra.mxu0 0.0
    %608 = vmatprep.subr.mxu0 0.0
    %609 = vmatpush1.msra.mxu0 0.0
    %610 = vmatprep.subr.mxu0 0.0
    %611 = vmatpush1.msra.mxu0 0.0
    %612 = vmatprep.mubr.f32.mxu0 0.0
    %613 = vmatmul.mubr.f32.gmra.mrb[0].mxu0 %v546
    %v614 = vpop.f32.mrb[0].mxu0
    %v615 = vadd.f32 0.0, %v614
    %v616 = vpop.f32.mrb[0].mxu0
    %v617 = vadd.f32 0.0, %v616
    %618 = vdwg.mxu0
    %v619 = vsel %vm163, %v615, %v617
    %v620 = vld [vmem:[#allocation4] sm:$0x30]
    %v621 = vld [vmem:[#allocation4 + $0x18] sm:$0xc]
    %v623 = vrot.slane %v620, 4
    %v625 = vsel %vm371, %v623, %v621
    %v626 = vadd.f32 %v625, %v619
    %v627 = vxor.u32 %v626, 2147483648
    %v628 = vmul.f32 %v627, 1.442695
    %v629 = vpow.pop %v628
    %v630 = vadd.f32 %v629, 1.0
    %v631 = vrcp.pop %v630
    %v632 = vmul.f32 1.0, %v631
    %v633 = vtanh.pop %v626
    %v634 = vld [vmem:[#allocation3] sm:$0xf]
    %636 = vrot.lane.b32.xlu0 %v634, 32
    %v637 = vpop.permute.xlu0 %636
    %v639 = vmul.f32 %v632, %v637
    %641 = vrot.lane.b32.xlu0 %v633, 64
    %v642 = vpop.permute.xlu0 %641
    %v644 = vmul.f32 %v632, %v642
    %646 = vrot.lane.b32.xlu0 %v644, 32
    %v647 = vpop.permute.xlu0 %646
    %v649 = vadd.f32 %v639, %v647
    %v650 = vtanh.pop %v649
    %652 = vrot.lane.b32.xlu0 %v650, 64
    %v653 = vpop.permute.xlu0 %652
    %v655 = vmul.f32 %v632, %v653
    %657 = vrot.lane.b32.xlu0 %v655, 32
    %v658 = vpop.permute.xlu0 %657
    %660 = vst.msk [vmem:[#allocation2] sm:$0xf] %vm407, %v658
    %662 = vrot.lane.b32.xlu0 %v649, 96
    %v663 = vpop.permute.xlu0 %662
    %665 = vst.msk [vmem:[#allocation3] sm:$0xf] %vm407, %v663
    %666 = vst.msk [vmem:[#allocation5 + $0x4] sm:$0x3] %vm271, %v658
    %667 = vst.msk [vmem:[#allocation6 + $0x8] sm:$0xc] %vm415, %v658
    %v668 = vld [vmem:[#allocation2] sm:$0xf]
    %v670 = vsel %vm290, %v668, 0
    %672 = vmatprep.subr.mxu0 %v282
    %673 = vmatpush1.msra.mxu0 %v281
    %674 = vmatprep.subr.mxu0 %v284
    %675 = vmatpush1.msra.mxu0 %v283
    %676 = vmatprep.subr.mxu0 %v286
    %677 = vmatpush1.msra.mxu0 %v285
    %678 = vmatprep.subr.mxu0 %v288
    %679 = vmatpush1.msra.mxu0 %v287
    %680 = vmatprep.subr.mxu0 0.0
    %681 = vmatpush1.msra.mxu0 0.0
    %682 = vmatprep.subr.mxu0 0.0
    %683 = vmatpush1.msra.mxu0 0.0
    %684 = vmatprep.subr.mxu0 0.0
    %685 = vmatpush1.msra.mxu0 0.0
    %686 = vmatprep.subr.mxu0 0.0
    %687 = vmatpush1.msra.mxu0 0.0
    %688 = vmatprep.subr.mxu0 0.0
    %689 = vmatpush1.msra.mxu0 0.0
    %690 = vmatprep.subr.mxu0 0.0
    %691 = vmatpush1.msra.mxu0 0.0
    %692 = vmatprep.subr.mxu0 0.0
    %693 = vmatpush1.msra.mxu0 0.0
    %694 = vmatprep.subr.mxu0 0.0
    %695 = vmatpush1.msra.mxu0 0.0
    %696 = vmatprep.subr.mxu0 0.0
    %697 = vmatpush1.msra.mxu0 0.0
    %698 = vmatprep.subr.mxu0 0.0
    %699 = vmatpush1.msra.mxu0 0.0
    %700 = vmatprep.subr.mxu0 0.0
    %701 = vmatpush1.msra.mxu0 0.0
    %702 = vmatprep.subr.mxu0 0.0
    %703 = vmatpush1.msra.mxu0 0.0
    %704 = vmatprep.subr.mxu0 0.0
    %705 = vmatpush1.msra.mxu0 0.0
    %706 = vmatprep.subr.mxu0 0.0
    %707 = vmatpush1.msra.mxu0 0.0
    %708 = vmatprep.subr.mxu0 0.0
    %709 = vmatpush1.msra.mxu0 0.0
    %710 = vmatprep.subr.mxu0 0.0
    %711 = vmatpush1.msra.mxu0 0.0
    %712 = vmatprep.subr.mxu0 0.0
    %713 = vmatpush1.msra.mxu0 0.0
    %714 = vmatprep.subr.mxu0 0.0
    %715 = vmatpush1.msra.mxu0 0.0
    %716 = vmatprep.subr.mxu0 0.0
    %717 = vmatpush1.msra.mxu0 0.0
    %718 = vmatprep.subr.mxu0 0.0
    %719 = vmatpush1.msra.mxu0 0.0
    %720 = vmatprep.subr.mxu0 0.0
    %721 = vmatpush1.msra.mxu0 0.0
    %722 = vmatprep.subr.mxu0 0.0
    %723 = vmatpush1.msra.mxu0 0.0
    %724 = vmatprep.subr.mxu0 0.0
    %725 = vmatpush1.msra.mxu0 0.0
    %726 = vmatprep.subr.mxu0 0.0
    %727 = vmatpush1.msra.mxu0 0.0
    %728 = vmatprep.subr.mxu0 0.0
    %729 = vmatpush1.msra.mxu0 0.0
    %730 = vmatprep.subr.mxu0 0.0
    %731 = vmatpush1.msra.mxu0 0.0
    %732 = vmatprep.subr.mxu0 0.0
    %733 = vmatpush1.msra.mxu0 0.0
    %734 = vmatprep.subr.mxu0 0.0
    %735 = vmatpush1.msra.mxu0 0.0
    %736 = vmatprep.mubr.f32.mxu0 0.0
    %737 = vmatmul.mubr.f32.gmra.mrb[0].mxu0 %v670
    %v738 = vpop.f32.mrb[0].mxu0
    %v739 = vadd.f32 0.0, %v738
    %v740 = vpop.f32.mrb[0].mxu0
    %v741 = vadd.f32 0.0, %v740
    %742 = vdwg.mxu0
    %v743 = vsel %vm163, %v739, %v741
    %v744 = vld [vmem:[#allocation4] sm:$0xc0]
    %v745 = vld [vmem:[#allocation4 + $0x18] sm:$0x3]
    %v747 = vrot.slane %v744, 6
    %v750 = vrot.slane %v745, 6
    %v752 = vsel %vm371, %v747, %v750
    %v753 = vadd.f32 %v752, %v743
    %v754 = vxor.u32 %v753, 2147483648
    %v755 = vmul.f32 %v754, 1.442695
    %v756 = vpow.pop %v755
    %v757 = vadd.f32 %v756, 1.0
    %v758 = vrcp.pop %v757
    %v759 = vmul.f32 1.0, %v758
    %v760 = vtanh.pop %v753
    %v761 = vld [vmem:[#allocation3] sm:$0xf]
    %763 = vrot.lane.b32.xlu0 %v761, 32
    %v764 = vpop.permute.xlu0 %763
    %v766 = vmul.f32 %v759, %v764
    %768 = vrot.lane.b32.xlu0 %v760, 64
    %v769 = vpop.permute.xlu0 %768
    %v771 = vmul.f32 %v759, %v769
    %773 = vrot.lane.b32.xlu0 %v771, 32
    %v774 = vpop.permute.xlu0 %773
    %v776 = vadd.f32 %v766, %v774
    %v777 = vtanh.pop %v776
    %779 = vrot.lane.b32.xlu0 %v777, 64
    %v780 = vpop.permute.xlu0 %779
    %v782 = vmul.f32 %v759, %v780
    %784 = vrot.lane.b32.xlu0 %v782, 32
    %v785 = vpop.permute.xlu0 %784
    %787 = vst.msk [vmem:[#allocation2] sm:$0xf] %vm407, %v785
    %789 = vrot.lane.b32.xlu0 %v776, 96
    %v790 = vpop.permute.xlu0 %789
    %792 = vst.msk [vmem:[#allocation3] sm:$0xf] %vm407, %v790
    %793 = vst.msk [vmem:[#allocation5 + $0x6] sm:$0x3] %vm271, %v785
    %794 = vst.msk [vmem:[#allocation6 + $0x6] sm:$0xc] %vm415, %v785
    %v795 = vld [vmem:[#allocation2] sm:$0xf]
    %v797 = vsel %vm290, %v795, 0
    %799 = vmatprep.subr.mxu0 %v282
    %800 = vmatpush1.msra.mxu0 %v281
    %801 = vmatprep.subr.mxu0 %v284
    %802 = vmatpush1.msra.mxu0 %v283
    %803 = vmatprep.subr.mxu0 %v286
    %804 = vmatpush1.msra.mxu0 %v285
    %805 = vmatprep.subr.mxu0 %v288
    %806 = vmatpush1.msra.mxu0 %v287
    %807 = vmatprep.subr.mxu0 0.0
    %808 = vmatpush1.msra.mxu0 0.0
    %809 = vmatprep.subr.mxu0 0.0
    %810 = vmatpush1.msra.mxu0 0.0
    %811 = vmatprep.subr.mxu0 0.0
    %812 = vmatpush1.msra.mxu0 0.0
    %813 = vmatprep.subr.mxu0 0.0
    %814 = vmatpush1.msra.mxu0 0.0
    %815 = vmatprep.subr.mxu0 0.0
    %816 = vmatpush1.msra.mxu0 0.0
    %817 = vmatprep.subr.mxu0 0.0
    %818 = vmatpush1.msra.mxu0 0.0
    %819 = vmatprep.subr.mxu0 0.0
    %820 = vmatpush1.msra.mxu0 0.0
    %821 = vmatprep.subr.mxu0 0.0
    %822 = vmatpush1.msra.mxu0 0.0
    %823 = vmatprep.subr.mxu0 0.0
    %824 = vmatpush1.msra.mxu0 0.0
    %825 = vmatprep.subr.mxu0 0.0
    %826 = vmatpush1.msra.mxu0 0.0
    %827 = vmatprep.subr.mxu0 0.0
    %828 = vmatpush1.msra.mxu0 0.0
    %829 = vmatprep.subr.mxu0 0.0
    %830 = vmatpush1.msra.mxu0 0.0
    %831 = vmatprep.subr.mxu0 0.0
    %832 = vmatpush1.msra.mxu0 0.0
    %833 = vmatprep.subr.mxu0 0.0
    %834 = vmatpush1.msra.mxu0 0.0
    %835 = vmatprep.subr.mxu0 0.0
    %836 = vmatpush1.msra.mxu0 0.0
    %837 = vmatprep.subr.mxu0 0.0
    %838 = vmatpush1.msra.mxu0 0.0
    %839 = vmatprep.subr.mxu0 0.0
    %840 = vmatpush1.msra.mxu0 0.0
    %841 = vmatprep.subr.mxu0 0.0
    %842 = vmatpush1.msra.mxu0 0.0
    %843 = vmatprep.subr.mxu0 0.0
    %844 = vmatpush1.msra.mxu0 0.0
    %845 = vmatprep.subr.mxu0 0.0
    %846 = vmatpush1.msra.mxu0 0.0
    %847 = vmatprep.subr.mxu0 0.0
    %848 = vmatpush1.msra.mxu0 0.0
    %849 = vmatprep.subr.mxu0 0.0
    %850 = vmatpush1.msra.mxu0 0.0
    %851 = vmatprep.subr.mxu0 0.0
    %852 = vmatpush1.msra.mxu0 0.0
    %853 = vmatprep.subr.mxu0 0.0
    %854 = vmatpush1.msra.mxu0 0.0
    %855 = vmatprep.subr.mxu0 0.0
    %856 = vmatpush1.msra.mxu0 0.0
    %857 = vmatprep.subr.mxu0 0.0
    %858 = vmatpush1.msra.mxu0 0.0
    %859 = vmatprep.subr.mxu0 0.0
    %860 = vmatpush1.msra.mxu0 0.0
    %861 = vmatprep.subr.mxu0 0.0
    %862 = vmatpush1.msra.mxu0 0.0
    %863 = vmatprep.mubr.f32.mxu0 0.0
    %864 = vmatmul.mubr.f32.gmra.mrb[0].mxu0 %v797
    %v865 = vpop.f32.mrb[0].mxu0
    %v866 = vadd.f32 0.0, %v865
    %v867 = vpop.f32.mrb[0].mxu0
    %v868 = vadd.f32 0.0, %v867
    %869 = vdwg.mxu0
    %v870 = vsel %vm163, %v866, %v868
    %v871 = vld [vmem:[#allocation4 + $0x10] sm:$0x3]
    %v872 = vld [vmem:[#allocation4 + $0x8] sm:$0xc0]
    %v874 = vrot.slane %v872, 4
    %v876 = vsel %vm371, %v871, %v874
    %v877 = vadd.f32 %v876, %v870
    %v878 = vxor.u32 %v877, 2147483648
    %v879 = vmul.f32 %v878, 1.442695
    %v880 = vpow.pop %v879
    %v881 = vadd.f32 %v880, 1.0
    %v882 = vrcp.pop %v881
    %v883 = vmul.f32 1.0, %v882
    %v884 = vtanh.pop %v877
    %v885 = vld [vmem:[#allocation3] sm:$0xf]
    %887 = vrot.lane.b32.xlu0 %v885, 32
    %v888 = vpop.permute.xlu0 %887
    %v890 = vmul.f32 %v883, %v888
    %892 = vrot.lane.b32.xlu0 %v884, 64
    %v893 = vpop.permute.xlu0 %892
    %v895 = vmul.f32 %v883, %v893
    %897 = vrot.lane.b32.xlu0 %v895, 32
    %v898 = vpop.permute.xlu0 %897
    %v900 = vadd.f32 %v890, %v898
    %v901 = vtanh.pop %v900
    %903 = vrot.lane.b32.xlu0 %v901, 64
    %v904 = vpop.permute.xlu0 %903
    %v906 = vmul.f32 %v883, %v904
    %908 = vrot.lane.b32.xlu0 %v906, 32
    %v909 = vpop.permute.xlu0 %908
    %911 = vst.msk [vmem:[#allocation2] sm:$0xf] %vm407, %v909
    %913 = vrot.lane.b32.xlu0 %v900, 96
    %v914 = vpop.permute.xlu0 %913
    %916 = vst.msk [vmem:[#allocation3] sm:$0xf] %vm407, %v914
    %917 = vst.msk [vmem:[#allocation5 + $0x8] sm:$0x3] %vm271, %v909
    %918 = vst.msk [vmem:[#allocation6 + $0x4] sm:$0xc] %vm415, %v909
    %v919 = vld [vmem:[#allocation2] sm:$0xf]
    %v921 = vsel %vm290, %v919, 0
    %923 = vmatprep.subr.mxu0 %v282
    %924 = vmatpush1.msra.mxu0 %v281
    %925 = vmatprep.subr.mxu0 %v284
    %926 = vmatpush1.msra.mxu0 %v283
    %927 = vmatprep.subr.mxu0 %v286
    %928 = vmatpush1.msra.mxu0 %v285
    %929 = vmatprep.subr.mxu0 %v288
    %930 = vmatpush1.msra.mxu0 %v287
    %931 = vmatprep.subr.mxu0 0.0
    %932 = vmatpush1.msra.mxu0 0.0
    %933 = vmatprep.subr.mxu0 0.0
    %934 = vmatpush1.msra.mxu0 0.0
    %935 = vmatprep.subr.mxu0 0.0
    %936 = vmatpush1.msra.mxu0 0.0
    %937 = vmatprep.subr.mxu0 0.0
    %938 = vmatpush1.msra.mxu0 0.0
    %939 = vmatprep.subr.mxu0 0.0
    %940 = vmatpush1.msra.mxu0 0.0
    %941 = vmatprep.subr.mxu0 0.0
    %942 = vmatpush1.msra.mxu0 0.0
    %943 = vmatprep.subr.mxu0 0.0
    %944 = vmatpush1.msra.mxu0 0.0
    %945 = vmatprep.subr.mxu0 0.0
    %946 = vmatpush1.msra.mxu0 0.0
    %947 = vmatprep.subr.mxu0 0.0
    %948 = vmatpush1.msra.mxu0 0.0
    %949 = vmatprep.subr.mxu0 0.0
    %950 = vmatpush1.msra.mxu0 0.0
    %951 = vmatprep.subr.mxu0 0.0
    %952 = vmatpush1.msra.mxu0 0.0
    %953 = vmatprep.subr.mxu0 0.0
    %954 = vmatpush1.msra.mxu0 0.0
    %955 = vmatprep.subr.mxu0 0.0
    %956 = vmatpush1.msra.mxu0 0.0
    %957 = vmatprep.subr.mxu0 0.0
    %958 = vmatpush1.msra.mxu0 0.0
    %959 = vmatprep.subr.mxu0 0.0
    %960 = vmatpush1.msra.mxu0 0.0
    %961 = vmatprep.subr.mxu0 0.0
    %962 = vmatpush1.msra.mxu0 0.0
    %963 = vmatprep.subr.mxu0 0.0
    %964 = vmatpush1.msra.mxu0 0.0
    %965 = vmatprep.subr.mxu0 0.0
    %966 = vmatpush1.msra.mxu0 0.0
    %967 = vmatprep.subr.mxu0 0.0
    %968 = vmatpush1.msra.mxu0 0.0
    %969 = vmatprep.subr.mxu0 0.0
    %970 = vmatpush1.msra.mxu0 0.0
    %971 = vmatprep.subr.mxu0 0.0
    %972 = vmatpush1.msra.mxu0 0.0
    %973 = vmatprep.subr.mxu0 0.0
    %974 = vmatpush1.msra.mxu0 0.0
    %975 = vmatprep.subr.mxu0 0.0
    %976 = vmatpush1.msra.mxu0 0.0
    %977 = vmatprep.subr.mxu0 0.0
    %978 = vmatpush1.msra.mxu0 0.0
    %979 = vmatprep.subr.mxu0 0.0
    %980 = vmatpush1.msra.mxu0 0.0
    %981 = vmatprep.subr.mxu0 0.0
    %982 = vmatpush1.msra.mxu0 0.0
    %983 = vmatprep.subr.mxu0 0.0
    %984 = vmatpush1.msra.mxu0 0.0
    %985 = vmatprep.subr.mxu0 0.0
    %986 = vmatpush1.msra.mxu0 0.0
    %987 = vmatprep.mubr.f32.mxu0 0.0
    %988 = vmatmul.mubr.f32.gmra.mrb[0].mxu0 %v921
    %v989 = vpop.f32.mrb[0].mxu0
    %v990 = vadd.f32 0.0, %v989
    %v991 = vpop.f32.mrb[0].mxu0
    %v992 = vadd.f32 0.0, %v991
    %993 = vdwg.mxu0
    %v994 = vsel %vm163, %v990, %v992
    %v995 = vld [vmem:[#allocation4 + $0x10] sm:$0xc]
    %v996 = vld [vmem:[#allocation4 + $0x8] sm:$0x30]
    %v998 = vrot.slane %v995, 2
    %v1001 = vrot.slane %v996, 2
    %v1003 = vsel %vm371, %v998, %v1001
    %v1004 = vadd.f32 %v1003, %v994
    %v1005 = vxor.u32 %v1004, 2147483648
    %v1006 = vmul.f32 %v1005, 1.442695
    %v1007 = vpow.pop %v1006
    %v1008 = vadd.f32 %v1007, 1.0
    %v1009 = vrcp.pop %v1008
    %v1010 = vmul.f32 1.0, %v1009
    %v1011 = vtanh.pop %v1004
    %v1012 = vld [vmem:[#allocation3] sm:$0xf]
    %1014 = vrot.lane.b32.xlu0 %v1012, 32
    %v1015 = vpop.permute.xlu0 %1014
    %v1017 = vmul.f32 %v1010, %v1015
    %1019 = vrot.lane.b32.xlu0 %v1011, 64
    %v1020 = vpop.permute.xlu0 %1019
    %v1022 = vmul.f32 %v1010, %v1020
    %1024 = vrot.lane.b32.xlu0 %v1022, 32
    %v1025 = vpop.permute.xlu0 %1024
    %v1027 = vadd.f32 %v1017, %v1025
    %v1028 = vtanh.pop %v1027
    %1030 = vrot.lane.b32.xlu0 %v1028, 64
    %v1031 = vpop.permute.xlu0 %1030
    %v1033 = vmul.f32 %v1010, %v1031
    %1035 = vrot.lane.b32.xlu0 %v1033, 32
    %v1036 = vpop.permute.xlu0 %1035
    %1038 = vst.msk [vmem:[#allocation2] sm:$0xf] %vm407, %v1036
    %1040 = vrot.lane.b32.xlu0 %v1027, 96
    %v1041 = vpop.permute.xlu0 %1040
    %1043 = vst.msk [vmem:[#allocation3] sm:$0xf] %vm407, %v1041
    %1044 = vst.msk [vmem:[#allocation5 + $0xa] sm:$0x3] %vm271, %v1036
    %1045 = vst.msk [vmem:[#allocation6 + $0x2] sm:$0xc] %vm415, %v1036
    %v1046 = vld [vmem:[#allocation2] sm:$0xf]
    %v1048 = vsel %vm290, %v1046, 0
    %1050 = vmatprep.subr.mxu0 %v282
    %1051 = vmatpush1.msra.mxu0 %v281
    %1052 = vmatprep.subr.mxu0 %v284
    %1053 = vmatpush1.msra.mxu0 %v283
    %1054 = vmatprep.subr.mxu0 %v286
    %1055 = vmatpush1.msra.mxu0 %v285
    %1056 = vmatprep.subr.mxu0 %v288
    %1057 = vmatpush1.msra.mxu0 %v287
    %1058 = vmatprep.subr.mxu0 0.0
    %1059 = vmatpush1.msra.mxu0 0.0
    %1060 = vmatprep.subr.mxu0 0.0
    %1061 = vmatpush1.msra.mxu0 0.0
    %1062 = vmatprep.subr.mxu0 0.0
    %1063 = vmatpush1.msra.mxu0 0.0
    %1064 = vmatprep.subr.mxu0 0.0
    %1065 = vmatpush1.msra.mxu0 0.0
    %1066 = vmatprep.subr.mxu0 0.0
    %1067 = vmatpush1.msra.mxu0 0.0
    %1068 = vmatprep.subr.mxu0 0.0
    %1069 = vmatpush1.msra.mxu0 0.0
    %1070 = vmatprep.subr.mxu0 0.0
    %1071 = vmatpush1.msra.mxu0 0.0
    %1072 = vmatprep.subr.mxu0 0.0
    %1073 = vmatpush1.msra.mxu0 0.0
    %1074 = vmatprep.subr.mxu0 0.0
    %1075 = vmatpush1.msra.mxu0 0.0
    %1076 = vmatprep.subr.mxu0 0.0
    %1077 = vmatpush1.msra.mxu0 0.0
    %1078 = vmatprep.subr.mxu0 0.0
    %1079 = vmatpush1.msra.mxu0 0.0
    %1080 = vmatprep.subr.mxu0 0.0
    %1081 = vmatpush1.msra.mxu0 0.0
    %1082 = vmatprep.subr.mxu0 0.0
    %1083 = vmatpush1.msra.mxu0 0.0
    %1084 = vmatprep.subr.mxu0 0.0
    %1085 = vmatpush1.msra.mxu0 0.0
    %1086 = vmatprep.subr.mxu0 0.0
    %1087 = vmatpush1.msra.mxu0 0.0
    %1088 = vmatprep.subr.mxu0 0.0
    %1089 = vmatpush1.msra.mxu0 0.0
    %1090 = vmatprep.subr.mxu0 0.0
    %1091 = vmatpush1.msra.mxu0 0.0
    %1092 = vmatprep.subr.mxu0 0.0
    %1093 = vmatpush1.msra.mxu0 0.0
    %1094 = vmatprep.subr.mxu0 0.0
    %1095 = vmatpush1.msra.mxu0 0.0
    %1096 = vmatprep.subr.mxu0 0.0
    %1097 = vmatpush1.msra.mxu0 0.0
    %1098 = vmatprep.subr.mxu0 0.0
    %1099 = vmatpush1.msra.mxu0 0.0
    %1100 = vmatprep.subr.mxu0 0.0
    %1101 = vmatpush1.msra.mxu0 0.0
    %1102 = vmatprep.subr.mxu0 0.0
    %1103 = vmatpush1.msra.mxu0 0.0
    %1104 = vmatprep.subr.mxu0 0.0
    %1105 = vmatpush1.msra.mxu0 0.0
    %1106 = vmatprep.subr.mxu0 0.0
    %1107 = vmatpush1.msra.mxu0 0.0
    %1108 = vmatprep.subr.mxu0 0.0
    %1109 = vmatpush1.msra.mxu0 0.0
    %1110 = vmatprep.subr.mxu0 0.0
    %1111 = vmatpush1.msra.mxu0 0.0
    %1112 = vmatprep.subr.mxu0 0.0
    %1113 = vmatpush1.msra.mxu0 0.0
    %1114 = vmatprep.mubr.f32.mxu0 0.0
    %1115 = vmatmul.mubr.f32.gmra.mrb[0].mxu0 %v1048
    %v1116 = vpop.f32.mrb[0].mxu0
    %v1117 = vadd.f32 0.0, %v1116
    %v1118 = vpop.f32.mrb[0].mxu0
    %v1119 = vadd.f32 0.0, %v1118
    %1120 = vdwg.mxu0
    %v1121 = vsel %vm163, %v1117, %v1119
    %v1122 = vld [vmem:[#allocation4 + $0x10] sm:$0x30]
    %v1123 = vld [vmem:[#allocation4 + $0x8] sm:$0xc]
    %v1125 = vrot.slane %v1122, 4
    %v1127 = vsel %vm371, %v1125, %v1123
    %v1128 = vadd.f32 %v1127, %v1121
    %v1129 = vxor.u32 %v1128, 2147483648
    %v1130 = vmul.f32 %v1129, 1.442695
    %v1131 = vpow.pop %v1130
    %v1132 = vadd.f32 %v1131, 1.0
    %v1133 = vrcp.pop %v1132
    %v1134 = vmul.f32 1.0, %v1133
    %v1135 = vtanh.pop %v1128
    %v1136 = vld [vmem:[#allocation3] sm:$0xf]
    %1138 = vrot.lane.b32.xlu0 %v1136, 32
    %v1139 = vpop.permute.xlu0 %1138
    %v1141 = vmul.f32 %v1134, %v1139
    %1143 = vrot.lane.b32.xlu0 %v1135, 64
    %v1144 = vpop.permute.xlu0 %1143
    %v1146 = vmul.f32 %v1134, %v1144
    %1148 = vrot.lane.b32.xlu0 %v1146, 32
    %v1149 = vpop.permute.xlu0 %1148
    %v1151 = vadd.f32 %v1141, %v1149
    %v1152 = vtanh.pop %v1151
    %1154 = vrot.lane.b32.xlu0 %v1152, 64
    %v1155 = vpop.permute.xlu0 %1154
    %v1157 = vmul.f32 %v1134, %v1155
    %1159 = vrot.lane.b32.xlu0 %v1157, 32
    %v1160 = vpop.permute.xlu0 %1159
    %1162 = vst.msk [vmem:[#allocation2] sm:$0xf] %vm407, %v1160
    %1164 = vrot.lane.b32.xlu0 %v1151, 96
    %v1165 = vpop.permute.xlu0 %1164
    %1167 = vst.msk [vmem:[#allocation3] sm:$0xf] %vm407, %v1165
    %1168 = vst.msk [vmem:[#allocation5 + $0xc] sm:$0x3] %vm271, %v1160
    %1169 = vst.msk [vmem:[#allocation6] sm:$0xc] %vm415, %v1160
    %v1170 = vld [vmem:[#allocation2] sm:$0xf]
    %v1172 = vsel %vm290, %v1170, 0
    %1174 = vmatprep.subr.mxu0 %v282
    %1175 = vmatpush1.msra.mxu0 %v281
    %1176 = vmatprep.subr.mxu0 %v284
    %1177 = vmatpush1.msra.mxu0 %v283
    %1178 = vmatprep.subr.mxu0 %v286
    %1179 = vmatpush1.msra.mxu0 %v285
    %1180 = vmatprep.subr.mxu0 %v288
    %1181 = vmatpush1.msra.mxu0 %v287
    %1182 = vmatprep.subr.mxu0 0.0
    %1183 = vmatpush1.msra.mxu0 0.0
    %1184 = vmatprep.subr.mxu0 0.0
    %1185 = vmatpush1.msra.mxu0 0.0
    %1186 = vmatprep.subr.mxu0 0.0
    %1187 = vmatpush1.msra.mxu0 0.0
    %1188 = vmatprep.subr.mxu0 0.0
    %1189 = vmatpush1.msra.mxu0 0.0
    %1190 = vmatprep.subr.mxu0 0.0
    %1191 = vmatpush1.msra.mxu0 0.0
    %1192 = vmatprep.subr.mxu0 0.0
    %1193 = vmatpush1.msra.mxu0 0.0
    %1194 = vmatprep.subr.mxu0 0.0
    %1195 = vmatpush1.msra.mxu0 0.0
    %1196 = vmatprep.subr.mxu0 0.0
    %1197 = vmatpush1.msra.mxu0 0.0
    %1198 = vmatprep.subr.mxu0 0.0
    %1199 = vmatpush1.msra.mxu0 0.0
    %1200 = vmatprep.subr.mxu0 0.0
    %1201 = vmatpush1.msra.mxu0 0.0
    %1202 = vmatprep.subr.mxu0 0.0
    %1203 = vmatpush1.msra.mxu0 0.0
    %1204 = vmatprep.subr.mxu0 0.0
    %1205 = vmatpush1.msra.mxu0 0.0
    %1206 = vmatprep.subr.mxu0 0.0
    %1207 = vmatpush1.msra.mxu0 0.0
    %1208 = vmatprep.subr.mxu0 0.0
    %1209 = vmatpush1.msra.mxu0 0.0
    %1210 = vmatprep.subr.mxu0 0.0
    %1211 = vmatpush1.msra.mxu0 0.0
    %1212 = vmatprep.subr.mxu0 0.0
    %1213 = vmatpush1.msra.mxu0 0.0
    %1214 = vmatprep.subr.mxu0 0.0
    %1215 = vmatpush1.msra.mxu0 0.0
    %1216 = vmatprep.subr.mxu0 0.0
    %1217 = vmatpush1.msra.mxu0 0.0
    %1218 = vmatprep.subr.mxu0 0.0
    %1219 = vmatpush1.msra.mxu0 0.0
    %1220 = vmatprep.subr.mxu0 0.0
    %1221 = vmatpush1.msra.mxu0 0.0
    %1222 = vmatprep.subr.mxu0 0.0
    %1223 = vmatpush1.msra.mxu0 0.0
    %1224 = vmatprep.subr.mxu0 0.0
    %1225 = vmatpush1.msra.mxu0 0.0
    %1226 = vmatprep.subr.mxu0 0.0
    %1227 = vmatpush1.msra.mxu0 0.0
    %1228 = vmatprep.subr.mxu0 0.0
    %1229 = vmatpush1.msra.mxu0 0.0
    %1230 = vmatprep.subr.mxu0 0.0
    %1231 = vmatpush1.msra.mxu0 0.0
    %1232 = vmatprep.subr.mxu0 0.0
    %1233 = vmatpush1.msra.mxu0 0.0
    %1234 = vmatprep.subr.mxu0 0.0
    %1235 = vmatpush1.msra.mxu0 0.0
    %1236 = vmatprep.subr.mxu0 0.0
    %1237 = vmatpush1.msra.mxu0 0.0
    %1238 = vmatprep.mubr.f32.mxu0 0.0
    %1239 = vmatmul.mubr.f32.gmra.mrb[0].mxu0 %v1172
    %v1240 = vpop.f32.mrb[0].mxu0
    %v1241 = vadd.f32 0.0, %v1240
    %v1242 = vpop.f32.mrb[0].mxu0
    %v1243 = vadd.f32 0.0, %v1242
    %1244 = vdwg.mxu0
    %v1245 = vsel %vm163, %v1241, %v1243
    %v1246 = vld [vmem:[#allocation4 + $0x10] sm:$0xc0]
    %v1247 = vld [vmem:[#allocation4 + $0x8] sm:$0x3]
    %v1249 = vrot.slane %v1246, 6
    %v1252 = vrot.slane %v1247, 6
    %v1254 = vsel %vm371, %v1249, %v1252
    %v1255 = vadd.f32 %v1254, %v1245
    %v1256 = vxor.u32 %v1255, 2147483648
    %v1257 = vmul.f32 %v1256, 1.442695
    %v1258 = vpow.pop %v1257
    %v1259 = vadd.f32 %v1258, 1.0
    %v1260 = vrcp.pop %v1259
    %v1261 = vmul.f32 1.0, %v1260
    %v1262 = vtanh.pop %v1255
    %v1263 = vld [vmem:[#allocation3] sm:$0xf]
    %1265 = vrot.lane.b32.xlu0 %v1263, 32
    %v1266 = vpop.permute.xlu0 %1265
    %v1268 = vmul.f32 %v1261, %v1266
    %1270 = vrot.lane.b32.xlu0 %v1262, 64
    %v1271 = vpop.permute.xlu0 %1270
    %v1273 = vmul.f32 %v1261, %v1271
    %1275 = vrot.lane.b32.xlu0 %v1273, 32
    %v1276 = vpop.permute.xlu0 %1275
    %v1278 = vadd.f32 %v1268, %v1276
    %v1279 = vtanh.pop %v1278
    %1281 = vrot.lane.b32.xlu0 %v1279, 64
    %v1282 = vpop.permute.xlu0 %1281
    %v1284 = vmul.f32 %v1261, %v1282
    %1286 = vrot.lane.b32.xlu0 %v1284, 32
    %v1287 = vpop.permute.xlu0 %1286
    %1289 = vst.msk [vmem:[#allocation2] sm:$0xf] %vm407, %v1287
    %1291 = vrot.lane.b32.xlu0 %v1278, 96
    %v1292 = vpop.permute.xlu0 %1291
    %1294 = vst.msk [vmem:[#allocation3] sm:$0xf] %vm407, %v1292
    %1295 = vst.msk [vmem:[#allocation5 + $0xe] sm:$0x3] %vm271, %v1287
    %1296 = vst.msk [vmem:[#allocation6 - $0x2] sm:$0xc] %vm415, %v1287
    %v1297 = vld [vmem:[#allocation2] sm:$0x3]
    %1298 = vst.msk [vmem:[#allocation23] sm:$0x3] %vm271, %v1297
    %v1299 = vld [vmem:[#allocation2 + $0x2] sm:$0x3]
    %s1300 = scalar_lea.vmem [#allocation23], 2
    %1301 = vst.msk [vmem:[%s1300] sm:$0x3] %vm271, %v1299
    %v1302 = vld [vmem:[#allocation3] sm:$0x3]
    %1303 = vst.msk [vmem:[#allocation24] sm:$0x3] %vm271, %v1302
    %v1304 = vld [vmem:[#allocation3 + $0x2] sm:$0x3]
    %s1305 = scalar_lea.vmem [#allocation24], 2
    %1306 = vst.msk [vmem:[%s1305] sm:$0x3] %vm271, %v1304
    %v1307 = vld [vmem:[#allocation17] sm:$0xff]
    %v1308 = vld [vmem:[#allocation17 + $0x8] sm:$0xff]
    %v1309 = vld [vmem:[#allocation17 + $0x10] sm:$0xff]
    %v1310 = vld [vmem:[#allocation17 + $0x18] sm:$0xff]
    %v1311 = vld [vmem:[#allocation17 + $0x20] sm:$0xff]
    %v1312 = vld [vmem:[#allocation17 + $0x28] sm:$0xff]
    %v1313 = vld [vmem:[#allocation17 + $0x30] sm:$0xff]
    %v1314 = vld [vmem:[#allocation17 + $0x38] sm:$0xff]
    %v1315 = vld [vmem:[#allocation17 + $0x40] sm:$0xff]
    %v1316 = vld [vmem:[#allocation17 + $0x48] sm:$0xff]
    %v1317 = vld [vmem:[#allocation17 + $0x50] sm:$0xff]
    %v1318 = vld [vmem:[#allocation17 + $0x58] sm:$0xff]
    %v1319 = vld [vmem:[#allocation17 + $0x60] sm:$0xff]
    %v1320 = vld [vmem:[#allocation17 + $0x68] sm:$0xff]
    %v1321 = vld [vmem:[#allocation17 + $0x70] sm:$0xff]
    %v1322 = vld [vmem:[#allocation17 + $0x78] sm:$0xff]
    %v1323 = vld [vmem:[#allocation5] sm:$0xff]
    %v1324 = vld [vmem:[#allocation5 + $0x8] sm:$0xff]
    %v1325 = vld [vmem:[#allocation6] sm:$0xff]
    %v1326 = vld [vmem:[#allocation6 + $0x8] sm:$0xff]
    %v1328 = vsel %vm290, %v1325, 0
    %v1331 = vsel %vm290, %v1326, 0
    %1333 = vmatprep.subr.mxu0 %v1316
    %1334 = vmatpush1.msra.mxu0 %v1315
    %1335 = vmatprep.subr.mxu0 %v1318
    %1336 = vmatpush1.msra.mxu0 %v1317
    %1337 = vmatprep.subr.mxu0 %v1320
    %1338 = vmatpush1.msra.mxu0 %v1319
    %1339 = vmatprep.subr.mxu0 %v1322
    %1340 = vmatpush1.msra.mxu0 %v1321
    %1341 = vmatprep.subr.mxu0 0.0
    %1342 = vmatpush1.msra.mxu0 0.0
    %1343 = vmatprep.subr.mxu0 0.0
    %1344 = vmatpush1.msra.mxu0 0.0
    %1345 = vmatprep.subr.mxu0 0.0
    %1346 = vmatpush1.msra.mxu0 0.0
    %1347 = vmatprep.subr.mxu0 0.0
    %1348 = vmatpush1.msra.mxu0 0.0
    %1349 = vmatprep.subr.mxu0 0.0
    %1350 = vmatpush1.msra.mxu0 0.0
    %1351 = vmatprep.subr.mxu0 0.0
    %1352 = vmatpush1.msra.mxu0 0.0
    %1353 = vmatprep.subr.mxu0 0.0
    %1354 = vmatpush1.msra.mxu0 0.0
    %1355 = vmatprep.subr.mxu0 0.0
    %1356 = vmatpush1.msra.mxu0 0.0
    %1357 = vmatprep.subr.mxu0 0.0
    %1358 = vmatpush1.msra.mxu0 0.0
    %1359 = vmatprep.subr.mxu0 0.0
    %1360 = vmatpush1.msra.mxu0 0.0
    %1361 = vmatprep.subr.mxu0 0.0
    %1362 = vmatpush1.msra.mxu0 0.0
    %1363 = vmatprep.subr.mxu0 0.0
    %1364 = vmatpush1.msra.mxu0 0.0
    %1365 = vmatprep.subr.mxu0 0.0
    %1366 = vmatpush1.msra.mxu0 0.0
    %1367 = vmatprep.subr.mxu0 0.0
    %1368 = vmatpush1.msra.mxu0 0.0
    %1369 = vmatprep.subr.mxu0 0.0
    %1370 = vmatpush1.msra.mxu0 0.0
    %1371 = vmatprep.subr.mxu0 0.0
    %1372 = vmatpush1.msra.mxu0 0.0
    %1373 = vmatprep.subr.mxu0 0.0
    %1374 = vmatpush1.msra.mxu0 0.0
    %1375 = vmatprep.subr.mxu0 0.0
    %1376 = vmatpush1.msra.mxu0 0.0
    %1377 = vmatprep.subr.mxu0 0.0
    %1378 = vmatpush1.msra.mxu0 0.0
    %1379 = vmatprep.subr.mxu0 0.0
    %1380 = vmatpush1.msra.mxu0 0.0
    %1381 = vmatprep.subr.mxu0 0.0
    %1382 = vmatpush1.msra.mxu0 0.0
    %1383 = vmatprep.subr.mxu0 0.0
    %1384 = vmatpush1.msra.mxu0 0.0
    %1385 = vmatprep.subr.mxu0 0.0
    %1386 = vmatpush1.msra.mxu0 0.0
    %1387 = vmatprep.subr.mxu0 0.0
    %1388 = vmatpush1.msra.mxu0 0.0
    %1389 = vmatprep.subr.mxu0 0.0
    %1390 = vmatpush1.msra.mxu0 0.0
    %1391 = vmatprep.subr.mxu0 0.0
    %1392 = vmatpush1.msra.mxu0 0.0
    %1393 = vmatprep.subr.mxu0 0.0
    %1394 = vmatpush1.msra.mxu0 0.0
    %1395 = vmatprep.subr.mxu0 0.0
    %1396 = vmatpush1.msra.mxu0 0.0
    %1397 = vmatprep.mubr.f32.mxu0 0.0
    %1398 = vmatmul.mubr.f32.gmra.mrb[0].mxu0 %v1328
    %v1399 = vpop.f32.mrb[0].mxu0
    %v1400 = vadd.f32 0.0, %v1399
    %v1401 = vpop.f32.mrb[0].mxu0
    %v1402 = vadd.f32 0.0, %v1401
    %1403 = vmatprep.mubr.f32.mxu0 0.0
    %1404 = vmatmul.mubr.f32.gmra.mrb[0].mxu0 %v1331
    %v1405 = vpop.f32.mrb[0].mxu0
    %v1406 = vadd.f32 0.0, %v1405
    %v1407 = vpop.f32.mrb[0].mxu0
    %v1408 = vadd.f32 0.0, %v1407
    %1409 = vdwg.mxu0
    %v1411 = vsel %vm290, %v1323, 0
    %v1414 = vsel %vm290, %v1324, 0
    %1416 = vmatprep.subr.mxu0 %v1308
    %1417 = vmatpush1.msra.mxu0 %v1307
    %1418 = vmatprep.subr.mxu0 %v1310
    %1419 = vmatpush1.msra.mxu0 %v1309
    %1420 = vmatprep.subr.mxu0 %v1312
    %1421 = vmatpush1.msra.mxu0 %v1311
    %1422 = vmatprep.subr.mxu0 %v1314
    %1423 = vmatpush1.msra.mxu0 %v1313
    %1424 = vmatprep.subr.mxu0 0.0
    %1425 = vmatpush1.msra.mxu0 0.0
    %1426 = vmatprep.subr.mxu0 0.0
    %1427 = vmatpush1.msra.mxu0 0.0
    %1428 = vmatprep.subr.mxu0 0.0
    %1429 = vmatpush1.msra.mxu0 0.0
    %1430 = vmatprep.subr.mxu0 0.0
    %1431 = vmatpush1.msra.mxu0 0.0
    %1432 = vmatprep.subr.mxu0 0.0
    %1433 = vmatpush1.msra.mxu0 0.0
    %1434 = vmatprep.subr.mxu0 0.0
    %1435 = vmatpush1.msra.mxu0 0.0
    %1436 = vmatprep.subr.mxu0 0.0
    %1437 = vmatpush1.msra.mxu0 0.0
    %1438 = vmatprep.subr.mxu0 0.0
    %1439 = vmatpush1.msra.mxu0 0.0
    %1440 = vmatprep.subr.mxu0 0.0
    %1441 = vmatpush1.msra.mxu0 0.0
    %1442 = vmatprep.subr.mxu0 0.0
    %1443 = vmatpush1.msra.mxu0 0.0
    %1444 = vmatprep.subr.mxu0 0.0
    %1445 = vmatpush1.msra.mxu0 0.0
    %1446 = vmatprep.subr.mxu0 0.0
    %1447 = vmatpush1.msra.mxu0 0.0
    %1448 = vmatprep.subr.mxu0 0.0
    %1449 = vmatpush1.msra.mxu0 0.0
    %1450 = vmatprep.subr.mxu0 0.0
    %1451 = vmatpush1.msra.mxu0 0.0
    %1452 = vmatprep.subr.mxu0 0.0
    %1453 = vmatpush1.msra.mxu0 0.0
    %1454 = vmatprep.subr.mxu0 0.0
    %1455 = vmatpush1.msra.mxu0 0.0
    %1456 = vmatprep.subr.mxu0 0.0
    %1457 = vmatpush1.msra.mxu0 0.0
    %1458 = vmatprep.subr.mxu0 0.0
    %1459 = vmatpush1.msra.mxu0 0.0
    %1460 = vmatprep.subr.mxu0 0.0
    %1461 = vmatpush1.msra.mxu0 0.0
    %1462 = vmatprep.subr.mxu0 0.0
    %1463 = vmatpush1.msra.mxu0 0.0
    %1464 = vmatprep.subr.mxu0 0.0
    %1465 = vmatpush1.msra.mxu0 0.0
    %1466 = vmatprep.subr.mxu0 0.0
    %1467 = vmatpush1.msra.mxu0 0.0
    %1468 = vmatprep.subr.mxu0 0.0
    %1469 = vmatpush1.msra.mxu0 0.0
    %1470 = vmatprep.subr.mxu0 0.0
    %1471 = vmatpush1.msra.mxu0 0.0
    %1472 = vmatprep.subr.mxu0 0.0
    %1473 = vmatpush1.msra.mxu0 0.0
    %1474 = vmatprep.subr.mxu0 0.0
    %1475 = vmatpush1.msra.mxu0 0.0
    %1476 = vmatprep.subr.mxu0 0.0
    %1477 = vmatpush1.msra.mxu0 0.0
    %1478 = vmatprep.subr.mxu0 0.0
    %1479 = vmatpush1.msra.mxu0 0.0
    %1480 = vmatprep.mubr.f32.mxu0 0.0
    %1481 = vmatmul.mubr.f32.gmra.mrb[0].mxu0 %v1411
    %v1482 = vpop.f32.mrb[0].mxu0
    %v1483 = vadd.f32 %v1400, %v1482
    %v1484 = vpop.f32.mrb[0].mxu0
    %v1485 = vadd.f32 %v1402, %v1484
    %1486 = vmatprep.mubr.f32.mxu0 0.0
    %1487 = vmatmul.mubr.f32.gmra.mrb[0].mxu0 %v1414
    %v1488 = vpop.f32.mrb[0].mxu0
    %v1489 = vadd.f32 %v1406, %v1488
    %v1490 = vpop.f32.mrb[0].mxu0
    %v1491 = vadd.f32 %v1408, %v1490
    %1492 = vdwg.mxu0
    %v1493 = vld [vmem:[%s8] sm:$0x3]
    %v1495 = vlaneseq
    %v1496 = vshrl.u32 %v1495, 7
    %v1497 = vsub.s32 0, %v1496
    %v1498 = vrot.slane %v1493, %v1497
    %v1499 = vlaneseq
    %v1500 = vshrl.u32 %v1499, 7
    %v1501 = vsub.s32 1, %v1500
    %v1502 = vrot.slane %v1493, %v1501
    %v1505 = vadd.f32 %v1483, %v1498
    %v1506 = vadd.f32 %v1485, %v1502
    %v1507 = vadd.f32 %v1489, %v1498
    %v1508 = vadd.f32 %v1491, %v1502
    %1509 = vst [vmem:[#allocation4] sm:$0xff] %v1505
    %1510 = vst [vmem:[#allocation4 + $0x8] sm:$0xff] %v1506
    %1511 = vst [vmem:[#allocation4 + $0x10] sm:$0xff] %v1507
    %1512 = vst [vmem:[#allocation4 + $0x18] sm:$0xff] %v1508
    %s1513 = scalar_lea.vmem [#allocation9], 4
    %v1514 = vld [vmem:[%s1513] sm:$0x3]
    %1515 = vst.msk [vmem:[#allocation2] sm:$0x3] %vm271, %v1514
    %s1516 = scalar_lea.vmem [#allocation9], 6
    %v1517 = vld [vmem:[%s1516] sm:$0x3]
    %1518 = vst.msk [vmem:[#allocation2 + $0x2] sm:$0x3] %vm271, %v1517
    %s1519 = scalar_lea.vmem [#allocation12], 4
    %v1520 = vld [vmem:[%s1519] sm:$0x3]
    %1521 = vst.msk [vmem:[#allocation3] sm:$0x3] %vm271, %v1520
    %s1522 = scalar_lea.vmem [#allocation12], 6
    %v1523 = vld [vmem:[%s1522] sm:$0x3]
    %1524 = vst.msk [vmem:[#allocation3 + $0x2] sm:$0x3] %vm271, %v1523
    %v1525 = vld [vmem:[%s7] sm:$0xff]
    %v1526 = vld [vmem:[%s7 + $0x8] sm:$0xff]
    %v1527 = vld [vmem:[%s7 + $0x10] sm:$0xff]
    %v1528 = vld [vmem:[%s7 + $0x18] sm:$0xff]
    %v1529 = vld [vmem:[%s7 + $0x20] sm:$0xff]
    %v1530 = vld [vmem:[%s7 + $0x28] sm:$0xff]
    %v1531 = vld [vmem:[%s7 + $0x30] sm:$0xff]
    %v1532 = vld [vmem:[%s7 + $0x38] sm:$0xff]
    %v1533 = vld [vmem:[#allocation2] sm:$0xf]
    %v1535 = vsel %vm290, %v1533, 0
    %1537 = vmatprep.subr.mxu0 %v1526
    %1538 = vmatpush1.msra.mxu0 %v1525
    %1539 = vmatprep.subr.mxu0 %v1528
    %1540 = vmatpush1.msra.mxu0 %v1527
    %1541 = vmatprep.subr.mxu0 %v1530
    %1542 = vmatpush1.msra.mxu0 %v1529
    %1543 = vmatprep.subr.mxu0 %v1532
    %1544 = vmatpush1.msra.mxu0 %v1531
    %1545 = vmatprep.subr.mxu0 0.0
    %1546 = vmatpush1.msra.mxu0 0.0
    %1547 = vmatprep.subr.mxu0 0.0
    %1548 = vmatpush1.msra.mxu0 0.0
    %1549 = vmatprep.subr.mxu0 0.0
    %1550 = vmatpush1.msra.mxu0 0.0
    %1551 = vmatprep.subr.mxu0 0.0
    %1552 = vmatpush1.msra.mxu0 0.0
    %1553 = vmatprep.subr.mxu0 0.0
    %1554 = vmatpush1.msra.mxu0 0.0
    %1555 = vmatprep.subr.mxu0 0.0
    %1556 = vmatpush1.msra.mxu0 0.0
    %1557 = vmatprep.subr.mxu0 0.0
    %1558 = vmatpush1.msra.mxu0 0.0
    %1559 = vmatprep.subr.mxu0 0.0
    %1560 = vmatpush1.msra.mxu0 0.0
    %1561 = vmatprep.subr.mxu0 0.0
    %1562 = vmatpush1.msra.mxu0 0.0
    %1563 = vmatprep.subr.mxu0 0.0
    %1564 = vmatpush1.msra.mxu0 0.0
    %1565 = vmatprep.subr.mxu0 0.0
    %1566 = vmatpush1.msra.mxu0 0.0
    %1567 = vmatprep.subr.mxu0 0.0
    %1568 = vmatpush1.msra.mxu0 0.0
    %1569 = vmatprep.subr.mxu0 0.0
    %1570 = vmatpush1.msra.mxu0 0.0
    %1571 = vmatprep.subr.mxu0 0.0
    %1572 = vmatpush1.msra.mxu0 0.0
    %1573 = vmatprep.subr.mxu0 0.0
    %1574 = vmatpush1.msra.mxu0 0.0
    %1575 = vmatprep.subr.mxu0 0.0
    %1576 = vmatpush1.msra.mxu0 0.0
    %1577 = vmatprep.subr.mxu0 0.0
    %1578 = vmatpush1.msra.mxu0 0.0
    %1579 = vmatprep.subr.mxu0 0.0
    %1580 = vmatpush1.msra.mxu0 0.0
    %1581 = vmatprep.subr.mxu0 0.0
    %1582 = vmatpush1.msra.mxu0 0.0
    %1583 = vmatprep.subr.mxu0 0.0
    %1584 = vmatpush1.msra.mxu0 0.0
    %1585 = vmatprep.subr.mxu0 0.0
    %1586 = vmatpush1.msra.mxu0 0.0
    %1587 = vmatprep.subr.mxu0 0.0
    %1588 = vmatpush1.msra.mxu0 0.0
    %1589 = vmatprep.subr.mxu0 0.0
    %1590 = vmatpush1.msra.mxu0 0.0
    %1591 = vmatprep.subr.mxu0 0.0
    %1592 = vmatpush1.msra.mxu0 0.0
    %1593 = vmatprep.subr.mxu0 0.0
    %1594 = vmatpush1.msra.mxu0 0.0
    %1595 = vmatprep.subr.mxu0 0.0
    %1596 = vmatpush1.msra.mxu0 0.0
    %1597 = vmatprep.subr.mxu0 0.0
    %1598 = vmatpush1.msra.mxu0 0.0
    %1599 = vmatprep.subr.mxu0 0.0
    %1600 = vmatpush1.msra.mxu0 0.0
    %1601 = vmatprep.mubr.f32.mxu0 0.0
    %1602 = vmatmul.mubr.f32.gmra.mrb[0].mxu0 %v1535
    %v1603 = vpop.f32.mrb[0].mxu0
    %v1604 = vadd.f32 0.0, %v1603
    %v1605 = vpop.f32.mrb[0].mxu0
    %v1606 = vadd.f32 0.0, %v1605
    %1607 = vdwg.mxu0
    %v1608 = vsel %vm163, %v1604, %v1606
    %v1609 = vld [vmem:[#allocation4] sm:$0x3]
    %v1610 = vld [vmem:[#allocation4 + $0x18] sm:$0xc0]
    %v1612 = vrot.slane %v1610, 4
    %v1614 = vsel %vm371, %v1609, %v1612
    %v1615 = vadd.f32 %v1614, %v1608
    %v1616 = vxor.u32 %v1615, 2147483648
    %v1617 = vmul.f32 %v1616, 1.442695
    %v1618 = vpow.pop %v1617
    %v1619 = vadd.f32 %v1618, 1.0
    %v1620 = vrcp.pop %v1619
    %v1621 = vmul.f32 1.0, %v1620
    %v1622 = vtanh.pop %v1615
    %v1623 = vld [vmem:[#allocation3] sm:$0xf]
    %1625 = vrot.lane.b32.xlu0 %v1623, 32
    %v1626 = vpop.permute.xlu0 %1625
    %v1628 = vmul.f32 %v1621, %v1626
    %1630 = vrot.lane.b32.xlu0 %v1622, 64
    %v1631 = vpop.permute.xlu0 %1630
    %v1633 = vmul.f32 %v1621, %v1631
    %1635 = vrot.lane.b32.xlu0 %v1633, 32
    %v1636 = vpop.permute.xlu0 %1635
    %v1638 = vadd.f32 %v1628, %v1636
    %v1639 = vtanh.pop %v1638
    %1641 = vrot.lane.b32.xlu0 %v1639, 64
    %v1642 = vpop.permute.xlu0 %1641
    %v1644 = vmul.f32 %v1621, %v1642
    %1646 = vrot.lane.b32.xlu0 %v1644, 32
    %v1647 = vpop.permute.xlu0 %1646
    %1649 = vst.msk [vmem:[#allocation2] sm:$0xf] %vm407, %v1647
    %1651 = vrot.lane.b32.xlu0 %v1638, 96
    %v1652 = vpop.permute.xlu0 %1651
    %1654 = vst.msk [vmem:[#allocation3] sm:$0xf] %vm407, %v1652
    %1655 = vst.msk [vmem:[#allocation7] sm:$0x3] %vm271, %v1647
    %1656 = vst.msk [vmem:[#allocation8 + $0xc] sm:$0xc] %vm415, %v1647
    %v1657 = vld [vmem:[#allocation2] sm:$0xf]
    %v1659 = vsel %vm290, %v1657, 0
    %1661 = vmatprep.subr.mxu0 %v1526
    %1662 = vmatpush1.msra.mxu0 %v1525
    %1663 = vmatprep.subr.mxu0 %v1528
    %1664 = vmatpush1.msra.mxu0 %v1527
    %1665 = vmatprep.subr.mxu0 %v1530
    %1666 = vmatpush1.msra.mxu0 %v1529
    %1667 = vmatprep.subr.mxu0 %v1532
    %1668 = vmatpush1.msra.mxu0 %v1531
    %1669 = vmatprep.subr.mxu0 0.0
    %1670 = vmatpush1.msra.mxu0 0.0
    %1671 = vmatprep.subr.mxu0 0.0
    %1672 = vmatpush1.msra.mxu0 0.0
    %1673 = vmatprep.subr.mxu0 0.0
    %1674 = vmatpush1.msra.mxu0 0.0
    %1675 = vmatprep.subr.mxu0 0.0
    %1676 = vmatpush1.msra.mxu0 0.0
    %1677 = vmatprep.subr.mxu0 0.0
    %1678 = vmatpush1.msra.mxu0 0.0
    %1679 = vmatprep.subr.mxu0 0.0
    %1680 = vmatpush1.msra.mxu0 0.0
    %1681 = vmatprep.subr.mxu0 0.0
    %1682 = vmatpush1.msra.mxu0 0.0
    %1683 = vmatprep.subr.mxu0 0.0
    %1684 = vmatpush1.msra.mxu0 0.0
    %1685 = vmatprep.subr.mxu0 0.0
    %1686 = vmatpush1.msra.mxu0 0.0
    %1687 = vmatprep.subr.mxu0 0.0
    %1688 = vmatpush1.msra.mxu0 0.0
    %1689 = vmatprep.subr.mxu0 0.0
    %1690 = vmatpush1.msra.mxu0 0.0
    %1691 = vmatprep.subr.mxu0 0.0
    %1692 = vmatpush1.msra.mxu0 0.0
    %1693 = vmatprep.subr.mxu0 0.0
    %1694 = vmatpush1.msra.mxu0 0.0
    %1695 = vmatprep.subr.mxu0 0.0
    %1696 = vmatpush1.msra.mxu0 0.0
    %1697 = vmatprep.subr.mxu0 0.0
    %1698 = vmatpush1.msra.mxu0 0.0
    %1699 = vmatprep.subr.mxu0 0.0
    %1700 = vmatpush1.msra.mxu0 0.0
    %1701 = vmatprep.subr.mxu0 0.0
    %1702 = vmatpush1.msra.mxu0 0.0
    %1703 = vmatprep.subr.mxu0 0.0
    %1704 = vmatpush1.msra.mxu0 0.0
    %1705 = vmatprep.subr.mxu0 0.0
    %1706 = vmatpush1.msra.mxu0 0.0
    %1707 = vmatprep.subr.mxu0 0.0
    %1708 = vmatpush1.msra.mxu0 0.0
    %1709 = vmatprep.subr.mxu0 0.0
    %1710 = vmatpush1.msra.mxu0 0.0
    %1711 = vmatprep.subr.mxu0 0.0
    %1712 = vmatpush1.msra.mxu0 0.0
    %1713 = vmatprep.subr.mxu0 0.0
    %1714 = vmatpush1.msra.mxu0 0.0
    %1715 = vmatprep.subr.mxu0 0.0
    %1716 = vmatpush1.msra.mxu0 0.0
    %1717 = vmatprep.subr.mxu0 0.0
    %1718 = vmatpush1.msra.mxu0 0.0
    %1719 = vmatprep.subr.mxu0 0.0
    %1720 = vmatpush1.msra.mxu0 0.0
    %1721 = vmatprep.subr.mxu0 0.0
    %1722 = vmatpush1.msra.mxu0 0.0
    %1723 = vmatprep.subr.mxu0 0.0
    %1724 = vmatpush1.msra.mxu0 0.0
    %1725 = vmatprep.mubr.f32.mxu0 0.0
    %1726 = vmatmul.mubr.f32.gmra.mrb[0].mxu0 %v1659
    %v1727 = vpop.f32.mrb[0].mxu0
    %v1728 = vadd.f32 0.0, %v1727
    %v1729 = vpop.f32.mrb[0].mxu0
    %v1730 = vadd.f32 0.0, %v1729
    %1731 = vdwg.mxu0
    %v1732 = vsel %vm163, %v1728, %v1730
    %v1733 = vld [vmem:[#allocation4] sm:$0xc]
    %v1734 = vld [vmem:[#allocation4 + $0x18] sm:$0x30]
    %v1736 = vrot.slane %v1733, 2
    %v1739 = vrot.slane %v1734, 2
    %v1741 = vsel %vm371, %v1736, %v1739
    %v1742 = vadd.f32 %v1741, %v1732
    %v1743 = vxor.u32 %v1742, 2147483648
    %v1744 = vmul.f32 %v1743, 1.442695
    %v1745 = vpow.pop %v1744
    %v1746 = vadd.f32 %v1745, 1.0
    %v1747 = vrcp.pop %v1746
    %v1748 = vmul.f32 1.0, %v1747
    %v1749 = vtanh.pop %v1742
    %v1750 = vld [vmem:[#allocation3] sm:$0xf]
    %1752 = vrot.lane.b32.xlu0 %v1750, 32
    %v1753 = vpop.permute.xlu0 %1752
    %v1755 = vmul.f32 %v1748, %v1753
    %1757 = vrot.lane.b32.xlu0 %v1749, 64
    %v1758 = vpop.permute.xlu0 %1757
    %v1760 = vmul.f32 %v1748, %v1758
    %1762 = vrot.lane.b32.xlu0 %v1760, 32
    %v1763 = vpop.permute.xlu0 %1762
    %v1765 = vadd.f32 %v1755, %v1763
    %v1766 = vtanh.pop %v1765
    %1768 = vrot.lane.b32.xlu0 %v1766, 64
    %v1769 = vpop.permute.xlu0 %1768
    %v1771 = vmul.f32 %v1748, %v1769
    %1773 = vrot.lane.b32.xlu0 %v1771, 32
    %v1774 = vpop.permute.xlu0 %1773
    %1776 = vst.msk [vmem:[#allocation2] sm:$0xf] %vm407, %v1774
    %1778 = vrot.lane.b32.xlu0 %v1765, 96
    %v1779 = vpop.permute.xlu0 %1778
    %1781 = vst.msk [vmem:[#allocation3] sm:$0xf] %vm407, %v1779
    %1782 = vst.msk [vmem:[#allocation7 + $0x2] sm:$0x3] %vm271, %v1774
    %1783 = vst.msk [vmem:[#allocation8 + $0xa] sm:$0xc] %vm415, %v1774
    %v1784 = vld [vmem:[#allocation2] sm:$0xf]
    %v1786 = vsel %vm290, %v1784, 0
    %1788 = vmatprep.subr.mxu0 %v1526
    %1789 = vmatpush1.msra.mxu0 %v1525
    %1790 = vmatprep.subr.mxu0 %v1528
    %1791 = vmatpush1.msra.mxu0 %v1527
    %1792 = vmatprep.subr.mxu0 %v1530
    %1793 = vmatpush1.msra.mxu0 %v1529
    %1794 = vmatprep.subr.mxu0 %v1532
    %1795 = vmatpush1.msra.mxu0 %v1531
    %1796 = vmatprep.subr.mxu0 0.0
    %1797 = vmatpush1.msra.mxu0 0.0
    %1798 = vmatprep.subr.mxu0 0.0
    %1799 = vmatpush1.msra.mxu0 0.0
    %1800 = vmatprep.subr.mxu0 0.0
    %1801 = vmatpush1.msra.mxu0 0.0
    %1802 = vmatprep.subr.mxu0 0.0
    %1803 = vmatpush1.msra.mxu0 0.0
    %1804 = vmatprep.subr.mxu0 0.0
    %1805 = vmatpush1.msra.mxu0 0.0
    %1806 = vmatprep.subr.mxu0 0.0
    %1807 = vmatpush1.msra.mxu0 0.0
    %1808 = vmatprep.subr.mxu0 0.0
    %1809 = vmatpush1.msra.mxu0 0.0
    %1810 = vmatprep.subr.mxu0 0.0
    %1811 = vmatpush1.msra.mxu0 0.0
    %1812 = vmatprep.subr.mxu0 0.0
    %1813 = vmatpush1.msra.mxu0 0.0
    %1814 = vmatprep.subr.mxu0 0.0
    %1815 = vmatpush1.msra.mxu0 0.0
    %1816 = vmatprep.subr.mxu0 0.0
    %1817 = vmatpush1.msra.mxu0 0.0
    %1818 = vmatprep.subr.mxu0 0.0
    %1819 = vmatpush1.msra.mxu0 0.0
    %1820 = vmatprep.subr.mxu0 0.0
    %1821 = vmatpush1.msra.mxu0 0.0
    %1822 = vmatprep.subr.mxu0 0.0
    %1823 = vmatpush1.msra.mxu0 0.0
    %1824 = vmatprep.subr.mxu0 0.0
    %1825 = vmatpush1.msra.mxu0 0.0
    %1826 = vmatprep.subr.mxu0 0.0
    %1827 = vmatpush1.msra.mxu0 0.0
    %1828 = vmatprep.subr.mxu0 0.0
    %1829 = vmatpush1.msra.mxu0 0.0
    %1830 = vmatprep.subr.mxu0 0.0
    %1831 = vmatpush1.msra.mxu0 0.0
    %1832 = vmatprep.subr.mxu0 0.0
    %1833 = vmatpush1.msra.mxu0 0.0
    %1834 = vmatprep.subr.mxu0 0.0
    %1835 = vmatpush1.msra.mxu0 0.0
    %1836 = vmatprep.subr.mxu0 0.0
    %1837 = vmatpush1.msra.mxu0 0.0
    %1838 = vmatprep.subr.mxu0 0.0
    %1839 = vmatpush1.msra.mxu0 0.0
    %1840 = vmatprep.subr.mxu0 0.0
    %1841 = vmatpush1.msra.mxu0 0.0
    %1842 = vmatprep.subr.mxu0 0.0
    %1843 = vmatpush1.msra.mxu0 0.0
    %1844 = vmatprep.subr.mxu0 0.0
    %1845 = vmatpush1.msra.mxu0 0.0
    %1846 = vmatprep.subr.mxu0 0.0
    %1847 = vmatpush1.msra.mxu0 0.0
    %1848 = vmatprep.subr.mxu0 0.0
    %1849 = vmatpush1.msra.mxu0 0.0
    %1850 = vmatprep.subr.mxu0 0.0
    %1851 = vmatpush1.msra.mxu0 0.0
    %1852 = vmatprep.mubr.f32.mxu0 0.0
    %1853 = vmatmul.mubr.f32.gmra.mrb[0].mxu0 %v1786
    %v1854 = vpop.f32.mrb[0].mxu0
    %v1855 = vadd.f32 0.0, %v1854
    %v1856 = vpop.f32.mrb[0].mxu0
    %v1857 = vadd.f32 0.0, %v1856
    %1858 = vdwg.mxu0
    %v1859 = vsel %vm163, %v1855, %v1857
    %v1860 = vld [vmem:[#allocation4] sm:$0x30]
    %v1861 = vld [vmem:[#allocation4 + $0x18] sm:$0xc]
    %v1863 = vrot.slane %v1860, 4
    %v1865 = vsel %vm371, %v1863, %v1861
    %v1866 = vadd.f32 %v1865, %v1859
    %v1867 = vxor.u32 %v1866, 2147483648
    %v1868 = vmul.f32 %v1867, 1.442695
    %v1869 = vpow.pop %v1868
    %v1870 = vadd.f32 %v1869, 1.0
    %v1871 = vrcp.pop %v1870
    %v1872 = vmul.f32 1.0, %v1871
    %v1873 = vtanh.pop %v1866
    %v1874 = vld [vmem:[#allocation3] sm:$0xf]
    %1876 = vrot.lane.b32.xlu0 %v1874, 32
    %v1877 = vpop.permute.xlu0 %1876
    %v1879 = vmul.f32 %v1872, %v1877
    %1881 = vrot.lane.b32.xlu0 %v1873, 64
    %v1882 = vpop.permute.xlu0 %1881
    %v1884 = vmul.f32 %v1872, %v1882
    %1886 = vrot.lane.b32.xlu0 %v1884, 32
    %v1887 = vpop.permute.xlu0 %1886
    %v1889 = vadd.f32 %v1879, %v1887
    %v1890 = vtanh.pop %v1889
    %1892 = vrot.lane.b32.xlu0 %v1890, 64
    %v1893 = vpop.permute.xlu0 %1892
    %v1895 = vmul.f32 %v1872, %v1893
    %1897 = vrot.lane.b32.xlu0 %v1895, 32
    %v1898 = vpop.permute.xlu0 %1897
    %1900 = vst.msk [vmem:[#allocation2] sm:$0xf] %vm407, %v1898
    %1902 = vrot.lane.b32.xlu0 %v1889, 96
    %v1903 = vpop.permute.xlu0 %1902
    %1905 = vst.msk [vmem:[#allocation3] sm:$0xf] %vm407, %v1903
    %1906 = vst.msk [vmem:[#allocation7 + $0x4] sm:$0x3] %vm271, %v1898
    %1907 = vst.msk [vmem:[#allocation8 + $0x8] sm:$0xc] %vm415, %v1898
    %v1908 = vld [vmem:[#allocation2] sm:$0xf]
    %v1910 = vsel %vm290, %v1908, 0
    %1912 = vmatprep.subr.mxu0 %v1526
    %1913 = vmatpush1.msra.mxu0 %v1525
    %1914 = vmatprep.subr.mxu0 %v1528
    %1915 = vmatpush1.msra.mxu0 %v1527
    %1916 = vmatprep.subr.mxu0 %v1530
    %1917 = vmatpush1.msra.mxu0 %v1529
    %1918 = vmatprep.subr.mxu0 %v1532
    %1919 = vmatpush1.msra.mxu0 %v1531
    %1920 = vmatprep.subr.mxu0 0.0
    %1921 = vmatpush1.msra.mxu0 0.0
    %1922 = vmatprep.subr.mxu0 0.0
    %1923 = vmatpush1.msra.mxu0 0.0
    %1924 = vmatprep.subr.mxu0 0.0
    %1925 = vmatpush1.msra.mxu0 0.0
    %1926 = vmatprep.subr.mxu0 0.0
    %1927 = vmatpush1.msra.mxu0 0.0
    %1928 = vmatprep.subr.mxu0 0.0
    %1929 = vmatpush1.msra.mxu0 0.0
    %1930 = vmatprep.subr.mxu0 0.0
    %1931 = vmatpush1.msra.mxu0 0.0
    %1932 = vmatprep.subr.mxu0 0.0
    %1933 = vmatpush1.msra.mxu0 0.0
    %1934 = vmatprep.subr.mxu0 0.0
    %1935 = vmatpush1.msra.mxu0 0.0
    %1936 = vmatprep.subr.mxu0 0.0
    %1937 = vmatpush1.msra.mxu0 0.0
    %1938 = vmatprep.subr.mxu0 0.0
    %1939 = vmatpush1.msra.mxu0 0.0
    %1940 = vmatprep.subr.mxu0 0.0
    %1941 = vmatpush1.msra.mxu0 0.0
    %1942 = vmatprep.subr.mxu0 0.0
    %1943 = vmatpush1.msra.mxu0 0.0
    %1944 = vmatprep.subr.mxu0 0.0
    %1945 = vmatpush1.msra.mxu0 0.0
    %1946 = vmatprep.subr.mxu0 0.0
    %1947 = vmatpush1.msra.mxu0 0.0
    %1948 = vmatprep.subr.mxu0 0.0
    %1949 = vmatpush1.msra.mxu0 0.0
    %1950 = vmatprep.subr.mxu0 0.0
    %1951 = vmatpush1.msra.mxu0 0.0
    %1952 = vmatprep.subr.mxu0 0.0
    %1953 = vmatpush1.msra.mxu0 0.0
    %1954 = vmatprep.subr.mxu0 0.0
    %1955 = vmatpush1.msra.mxu0 0.0
    %1956 = vmatprep.subr.mxu0 0.0
    %1957 = vmatpush1.msra.mxu0 0.0
    %1958 = vmatprep.subr.mxu0 0.0
    %1959 = vmatpush1.msra.mxu0 0.0
    %1960 = vmatprep.subr.mxu0 0.0
    %1961 = vmatpush1.msra.mxu0 0.0
    %1962 = vmatprep.subr.mxu0 0.0
    %1963 = vmatpush1.msra.mxu0 0.0
    %1964 = vmatprep.subr.mxu0 0.0
    %1965 = vmatpush1.msra.mxu0 0.0
    %1966 = vmatprep.subr.mxu0 0.0
    %1967 = vmatpush1.msra.mxu0 0.0
    %1968 = vmatprep.subr.mxu0 0.0
    %1969 = vmatpush1.msra.mxu0 0.0
    %1970 = vmatprep.subr.mxu0 0.0
    %1971 = vmatpush1.msra.mxu0 0.0
    %1972 = vmatprep.subr.mxu0 0.0
    %1973 = vmatpush1.msra.mxu0 0.0
    %1974 = vmatprep.subr.mxu0 0.0
    %1975 = vmatpush1.msra.mxu0 0.0
    %1976 = vmatprep.mubr.f32.mxu0 0.0
    %1977 = vmatmul.mubr.f32.gmra.mrb[0].mxu0 %v1910
    %v1978 = vpop.f32.mrb[0].mxu0
    %v1979 = vadd.f32 0.0, %v1978
    %v1980 = vpop.f32.mrb[0].mxu0
    %v1981 = vadd.f32 0.0, %v1980
    %1982 = vdwg.mxu0
    %v1983 = vsel %vm163, %v1979, %v1981
    %v1984 = vld [vmem:[#allocation4] sm:$0xc0]
    %v1985 = vld [vmem:[#allocation4 + $0x18] sm:$0x3]
    %v1987 = vrot.slane %v1984, 6
    %v1990 = vrot.slane %v1985, 6
    %v1992 = vsel %vm371, %v1987, %v1990
    %v1993 = vadd.f32 %v1992, %v1983
    %v1994 = vxor.u32 %v1993, 2147483648
    %v1995 = vmul.f32 %v1994, 1.442695
    %v1996 = vpow.pop %v1995
    %v1997 = vadd.f32 %v1996, 1.0
    %v1998 = vrcp.pop %v1997
    %v1999 = vmul.f32 1.0, %v1998
    %v2000 = vtanh.pop %v1993
    %v2001 = vld [vmem:[#allocation3] sm:$0xf]
    %2003 = vrot.lane.b32.xlu0 %v2001, 32
    %v2004 = vpop.permute.xlu0 %2003
    %v2006 = vmul.f32 %v1999, %v2004
    %2008 = vrot.lane.b32.xlu0 %v2000, 64
    %v2009 = vpop.permute.xlu0 %2008
    %v2011 = vmul.f32 %v1999, %v2009
    %2013 = vrot.lane.b32.xlu0 %v2011, 32
    %v2014 = vpop.permute.xlu0 %2013
    %v2016 = vadd.f32 %v2006, %v2014
    %v2017 = vtanh.pop %v2016
    %2019 = vrot.lane.b32.xlu0 %v2017, 64
    %v2020 = vpop.permute.xlu0 %2019
    %v2022 = vmul.f32 %v1999, %v2020
    %2024 = vrot.lane.b32.xlu0 %v2022, 32
    %v2025 = vpop.permute.xlu0 %2024
    %2027 = vst.msk [vmem:[#allocation2] sm:$0xf] %vm407, %v2025
    %2029 = vrot.lane.b32.xlu0 %v2016, 96
    %v2030 = vpop.permute.xlu0 %2029
    %2032 = vst.msk [vmem:[#allocation3] sm:$0xf] %vm407, %v2030
    %2033 = vst.msk [vmem:[#allocation7 + $0x6] sm:$0x3] %vm271, %v2025
    %2034 = vst.msk [vmem:[#allocation8 + $0x6] sm:$0xc] %vm415, %v2025
    %v2035 = vld [vmem:[#allocation2] sm:$0xf]
    %v2037 = vsel %vm290, %v2035, 0
    %2039 = vmatprep.subr.mxu0 %v1526
    %2040 = vmatpush1.msra.mxu0 %v1525
    %2041 = vmatprep.subr.mxu0 %v1528
    %2042 = vmatpush1.msra.mxu0 %v1527
    %2043 = vmatprep.subr.mxu0 %v1530
    %2044 = vmatpush1.msra.mxu0 %v1529
    %2045 = vmatprep.subr.mxu0 %v1532
    %2046 = vmatpush1.msra.mxu0 %v1531
    %2047 = vmatprep.subr.mxu0 0.0
    %2048 = vmatpush1.msra.mxu0 0.0
    %2049 = vmatprep.subr.mxu0 0.0
    %2050 = vmatpush1.msra.mxu0 0.0
    %2051 = vmatprep.subr.mxu0 0.0
    %2052 = vmatpush1.msra.mxu0 0.0
    %2053 = vmatprep.subr.mxu0 0.0
    %2054 = vmatpush1.msra.mxu0 0.0
    %2055 = vmatprep.subr.mxu0 0.0
    %2056 = vmatpush1.msra.mxu0 0.0
    %2057 = vmatprep.subr.mxu0 0.0
    %2058 = vmatpush1.msra.mxu0 0.0
    %2059 = vmatprep.subr.mxu0 0.0
    %2060 = vmatpush1.msra.mxu0 0.0
    %2061 = vmatprep.subr.mxu0 0.0
    %2062 = vmatpush1.msra.mxu0 0.0
    %2063 = vmatprep.subr.mxu0 0.0
    %2064 = vmatpush1.msra.mxu0 0.0
    %2065 = vmatprep.subr.mxu0 0.0
    %2066 = vmatpush1.msra.mxu0 0.0
    %2067 = vmatprep.subr.mxu0 0.0
    %2068 = vmatpush1.msra.mxu0 0.0
    %2069 = vmatprep.subr.mxu0 0.0
    %2070 = vmatpush1.msra.mxu0 0.0
    %2071 = vmatprep.subr.mxu0 0.0
    %2072 = vmatpush1.msra.mxu0 0.0
    %2073 = vmatprep.subr.mxu0 0.0
    %2074 = vmatpush1.msra.mxu0 0.0
    %2075 = vmatprep.subr.mxu0 0.0
    %2076 = vmatpush1.msra.mxu0 0.0
    %2077 = vmatprep.subr.mxu0 0.0
    %2078 = vmatpush1.msra.mxu0 0.0
    %2079 = vmatprep.subr.mxu0 0.0
    %2080 = vmatpush1.msra.mxu0 0.0
    %2081 = vmatprep.subr.mxu0 0.0
    %2082 = vmatpush1.msra.mxu0 0.0
    %2083 = vmatprep.subr.mxu0 0.0
    %2084 = vmatpush1.msra.mxu0 0.0
    %2085 = vmatprep.subr.mxu0 0.0
    %2086 = vmatpush1.msra.mxu0 0.0
    %2087 = vmatprep.subr.mxu0 0.0
    %2088 = vmatpush1.msra.mxu0 0.0
    %2089 = vmatprep.subr.mxu0 0.0
    %2090 = vmatpush1.msra.mxu0 0.0
    %2091 = vmatprep.subr.mxu0 0.0
    %2092 = vmatpush1.msra.mxu0 0.0
    %2093 = vmatprep.subr.mxu0 0.0
    %2094 = vmatpush1.msra.mxu0 0.0
    %2095 = vmatprep.subr.mxu0 0.0
    %2096 = vmatpush1.msra.mxu0 0.0
    %2097 = vmatprep.subr.mxu0 0.0
    %2098 = vmatpush1.msra.mxu0 0.0
    %2099 = vmatprep.subr.mxu0 0.0
    %2100 = vmatpush1.msra.mxu0 0.0
    %2101 = vmatprep.subr.mxu0 0.0
    %2102 = vmatpush1.msra.mxu0 0.0
    %2103 = vmatprep.mubr.f32.mxu0 0.0
    %2104 = vmatmul.mubr.f32.gmra.mrb[0].mxu0 %v2037
    %v2105 = vpop.f32.mrb[0].mxu0
    %v2106 = vadd.f32 0.0, %v2105
    %v2107 = vpop.f32.mrb[0].mxu0
    %v2108 = vadd.f32 0.0, %v2107
    %2109 = vdwg.mxu0
    %v2110 = vsel %vm163, %v2106, %v2108
    %v2111 = vld [vmem:[#allocation4 + $0x10] sm:$0x3]
    %v2112 = vld [vmem:[#allocation4 + $0x8] sm:$0xc0]
    %v2114 = vrot.slane %v2112, 4
    %v2116 = vsel %vm371, %v2111, %v2114
    %v2117 = vadd.f32 %v2116, %v2110
    %v2118 = vxor.u32 %v2117, 2147483648
    %v2119 = vmul.f32 %v2118, 1.442695
    %v2120 = vpow.pop %v2119
    %v2121 = vadd.f32 %v2120, 1.0
    %v2122 = vrcp.pop %v2121
    %v2123 = vmul.f32 1.0, %v2122
    %v2124 = vtanh.pop %v2117
    %v2125 = vld [vmem:[#allocation3] sm:$0xf]
    %2127 = vrot.lane.b32.xlu0 %v2125, 32
    %v2128 = vpop.permute.xlu0 %2127
    %v2130 = vmul.f32 %v2123, %v2128
    %2132 = vrot.lane.b32.xlu0 %v2124, 64
    %v2133 = vpop.permute.xlu0 %2132
    %v2135 = vmul.f32 %v2123, %v2133
    %2137 = vrot.lane.b32.xlu0 %v2135, 32
    %v2138 = vpop.permute.xlu0 %2137
    %v2140 = vadd.f32 %v2130, %v2138
    %v2141 = vtanh.pop %v2140
    %2143 = vrot.lane.b32.xlu0 %v2141, 64
    %v2144 = vpop.permute.xlu0 %2143
    %v2146 = vmul.f32 %v2123, %v2144
    %2148 = vrot.lane.b32.xlu0 %v2146, 32
    %v2149 = vpop.permute.xlu0 %2148
    %2151 = vst.msk [vmem:[#allocation2] sm:$0xf] %vm407, %v2149
    %2153 = vrot.lane.b32.xlu0 %v2140, 96
    %v2154 = vpop.permute.xlu0 %2153
    %2156 = vst.msk [vmem:[#allocation3] sm:$0xf] %vm407, %v2154
    %2157 = vst.msk [vmem:[#allocation7 + $0x8] sm:$0x3] %vm271, %v2149
    %2158 = vst.msk [vmem:[#allocation8 + $0x4] sm:$0xc] %vm415, %v2149
    %v2159 = vld [vmem:[#allocation2] sm:$0xf]
    %v2161 = vsel %vm290, %v2159, 0
    %2163 = vmatprep.subr.mxu0 %v1526
    %2164 = vmatpush1.msra.mxu0 %v1525
    %2165 = vmatprep.subr.mxu0 %v1528
    %2166 = vmatpush1.msra.mxu0 %v1527
    %2167 = vmatprep.subr.mxu0 %v1530
    %2168 = vmatpush1.msra.mxu0 %v1529
    %2169 = vmatprep.subr.mxu0 %v1532
    %2170 = vmatpush1.msra.mxu0 %v1531
    %2171 = vmatprep.subr.mxu0 0.0
    %2172 = vmatpush1.msra.mxu0 0.0
    %2173 = vmatprep.subr.mxu0 0.0
    %2174 = vmatpush1.msra.mxu0 0.0
    %2175 = vmatprep.subr.mxu0 0.0
    %2176 = vmatpush1.msra.mxu0 0.0
    %2177 = vmatprep.subr.mxu0 0.0
    %2178 = vmatpush1.msra.mxu0 0.0
    %2179 = vmatprep.subr.mxu0 0.0
    %2180 = vmatpush1.msra.mxu0 0.0
    %2181 = vmatprep.subr.mxu0 0.0
    %2182 = vmatpush1.msra.mxu0 0.0
    %2183 = vmatprep.subr.mxu0 0.0
    %2184 = vmatpush1.msra.mxu0 0.0
    %2185 = vmatprep.subr.mxu0 0.0
    %2186 = vmatpush1.msra.mxu0 0.0
    %2187 = vmatprep.subr.mxu0 0.0
    %2188 = vmatpush1.msra.mxu0 0.0
    %2189 = vmatprep.subr.mxu0 0.0
    %2190 = vmatpush1.msra.mxu0 0.0
    %2191 = vmatprep.subr.mxu0 0.0
    %2192 = vmatpush1.msra.mxu0 0.0
    %2193 = vmatprep.subr.mxu0 0.0
    %2194 = vmatpush1.msra.mxu0 0.0
    %2195 = vmatprep.subr.mxu0 0.0
    %2196 = vmatpush1.msra.mxu0 0.0
    %2197 = vmatprep.subr.mxu0 0.0
    %2198 = vmatpush1.msra.mxu0 0.0
    %2199 = vmatprep.subr.mxu0 0.0
    %2200 = vmatpush1.msra.mxu0 0.0
    %2201 = vmatprep.subr.mxu0 0.0
    %2202 = vmatpush1.msra.mxu0 0.0
    %2203 = vmatprep.subr.mxu0 0.0
    %2204 = vmatpush1.msra.mxu0 0.0
    %2205 = vmatprep.subr.mxu0 0.0
    %2206 = vmatpush1.msra.mxu0 0.0
    %2207 = vmatprep.subr.mxu0 0.0
    %2208 = vmatpush1.msra.mxu0 0.0
    %2209 = vmatprep.subr.mxu0 0.0
    %2210 = vmatpush1.msra.mxu0 0.0
    %2211 = vmatprep.subr.mxu0 0.0
    %2212 = vmatpush1.msra.mxu0 0.0
    %2213 = vmatprep.subr.mxu0 0.0
    %2214 = vmatpush1.msra.mxu0 0.0
    %2215 = vmatprep.subr.mxu0 0.0
    %2216 = vmatpush1.msra.mxu0 0.0
    %2217 = vmatprep.subr.mxu0 0.0
    %2218 = vmatpush1.msra.mxu0 0.0
    %2219 = vmatprep.subr.mxu0 0.0
    %2220 = vmatpush1.msra.mxu0 0.0
    %2221 = vmatprep.subr.mxu0 0.0
    %2222 = vmatpush1.msra.mxu0 0.0
    %2223 = vmatprep.subr.mxu0 0.0
    %2224 = vmatpush1.msra.mxu0 0.0
    %2225 = vmatprep.subr.mxu0 0.0
    %2226 = vmatpush1.msra.mxu0 0.0
    %2227 = vmatprep.mubr.f32.mxu0 0.0
    %2228 = vmatmul.mubr.f32.gmra.mrb[0].mxu0 %v2161
    %v2229 = vpop.f32.mrb[0].mxu0
    %v2230 = vadd.f32 0.0, %v2229
    %v2231 = vpop.f32.mrb[0].mxu0
    %v2232 = vadd.f32 0.0, %v2231
    %2233 = vdwg.mxu0
    %v2234 = vsel %vm163, %v2230, %v2232
    %v2235 = vld [vmem:[#allocation4 + $0x10] sm:$0xc]
    %v2236 = vld [vmem:[#allocation4 + $0x8] sm:$0x30]
    %v2238 = vrot.slane %v2235, 2
    %v2241 = vrot.slane %v2236, 2
    %v2243 = vsel %vm371, %v2238, %v2241
    %v2244 = vadd.f32 %v2243, %v2234
    %v2245 = vxor.u32 %v2244, 2147483648
    %v2246 = vmul.f32 %v2245, 1.442695
    %v2247 = vpow.pop %v2246
    %v2248 = vadd.f32 %v2247, 1.0
    %v2249 = vrcp.pop %v2248
    %v2250 = vmul.f32 1.0, %v2249
    %v2251 = vtanh.pop %v2244
    %v2252 = vld [vmem:[#allocation3] sm:$0xf]
    %2254 = vrot.lane.b32.xlu0 %v2252, 32
    %v2255 = vpop.permute.xlu0 %2254
    %v2257 = vmul.f32 %v2250, %v2255
    %2259 = vrot.lane.b32.xlu0 %v2251, 64
    %v2260 = vpop.permute.xlu0 %2259
    %v2262 = vmul.f32 %v2250, %v2260
    %2264 = vrot.lane.b32.xlu0 %v2262, 32
    %v2265 = vpop.permute.xlu0 %2264
    %v2267 = vadd.f32 %v2257, %v2265
    %v2268 = vtanh.pop %v2267
    %2270 = vrot.lane.b32.xlu0 %v2268, 64
    %v2271 = vpop.permute.xlu0 %2270
    %v2273 = vmul.f32 %v2250, %v2271
    %2275 = vrot.lane.b32.xlu0 %v2273, 32
    %v2276 = vpop.permute.xlu0 %2275
    %2278 = vst.msk [vmem:[#allocation2] sm:$0xf] %vm407, %v2276
    %2280 = vrot.lane.b32.xlu0 %v2267, 96
    %v2281 = vpop.permute.xlu0 %2280
    %2283 = vst.msk [vmem:[#allocation3] sm:$0xf] %vm407, %v2281
    %2284 = vst.msk [vmem:[#allocation7 + $0xa] sm:$0x3] %vm271, %v2276
    %2285 = vst.msk [vmem:[#allocation8 + $0x2] sm:$0xc] %vm415, %v2276
    %v2286 = vld [vmem:[#allocation2] sm:$0xf]
    %v2288 = vsel %vm290, %v2286, 0
    %2290 = vmatprep.subr.mxu0 %v1526
    %2291 = vmatpush1.msra.mxu0 %v1525
    %2292 = vmatprep.subr.mxu0 %v1528
    %2293 = vmatpush1.msra.mxu0 %v1527
    %2294 = vmatprep.subr.mxu0 %v1530
    %2295 = vmatpush1.msra.mxu0 %v1529
    %2296 = vmatprep.subr.mxu0 %v1532
    %2297 = vmatpush1.msra.mxu0 %v1531
    %2298 = vmatprep.subr.mxu0 0.0
    %2299 = vmatpush1.msra.mxu0 0.0
    %2300 = vmatprep.subr.mxu0 0.0
    %2301 = vmatpush1.msra.mxu0 0.0
    %2302 = vmatprep.subr.mxu0 0.0
    %2303 = vmatpush1.msra.mxu0 0.0
    %2304 = vmatprep.subr.mxu0 0.0
    %2305 = vmatpush1.msra.mxu0 0.0
    %2306 = vmatprep.subr.mxu0 0.0
    %2307 = vmatpush1.msra.mxu0 0.0
    %2308 = vmatprep.subr.mxu0 0.0
    %2309 = vmatpush1.msra.mxu0 0.0
    %2310 = vmatprep.subr.mxu0 0.0
    %2311 = vmatpush1.msra.mxu0 0.0
    %2312 = vmatprep.subr.mxu0 0.0
    %2313 = vmatpush1.msra.mxu0 0.0
    %2314 = vmatprep.subr.mxu0 0.0
    %2315 = vmatpush1.msra.mxu0 0.0
    %2316 = vmatprep.subr.mxu0 0.0
    %2317 = vmatpush1.msra.mxu0 0.0
    %2318 = vmatprep.subr.mxu0 0.0
    %2319 = vmatpush1.msra.mxu0 0.0
    %2320 = vmatprep.subr.mxu0 0.0
    %2321 = vmatpush1.msra.mxu0 0.0
    %2322 = vmatprep.subr.mxu0 0.0
    %2323 = vmatpush1.msra.mxu0 0.0
    %2324 = vmatprep.subr.mxu0 0.0
    %2325 = vmatpush1.msra.mxu0 0.0
    %2326 = vmatprep.subr.mxu0 0.0
    %2327 = vmatpush1.msra.mxu0 0.0
    %2328 = vmatprep.subr.mxu0 0.0
    %2329 = vmatpush1.msra.mxu0 0.0
    %2330 = vmatprep.subr.mxu0 0.0
    %2331 = vmatpush1.msra.mxu0 0.0
    %2332 = vmatprep.subr.mxu0 0.0
    %2333 = vmatpush1.msra.mxu0 0.0
    %2334 = vmatprep.subr.mxu0 0.0
    %2335 = vmatpush1.msra.mxu0 0.0
    %2336 = vmatprep.subr.mxu0 0.0
    %2337 = vmatpush1.msra.mxu0 0.0
    %2338 = vmatprep.subr.mxu0 0.0
    %2339 = vmatpush1.msra.mxu0 0.0
    %2340 = vmatprep.subr.mxu0 0.0
    %2341 = vmatpush1.msra.mxu0 0.0
    %2342 = vmatprep.subr.mxu0 0.0
    %2343 = vmatpush1.msra.mxu0 0.0
    %2344 = vmatprep.subr.mxu0 0.0
    %2345 = vmatpush1.msra.mxu0 0.0
    %2346 = vmatprep.subr.mxu0 0.0
    %2347 = vmatpush1.msra.mxu0 0.0
    %2348 = vmatprep.subr.mxu0 0.0
    %2349 = vmatpush1.msra.mxu0 0.0
    %2350 = vmatprep.subr.mxu0 0.0
    %2351 = vmatpush1.msra.mxu0 0.0
    %2352 = vmatprep.subr.mxu0 0.0
    %2353 = vmatpush1.msra.mxu0 0.0
    %2354 = vmatprep.mubr.f32.mxu0 0.0
    %2355 = vmatmul.mubr.f32.gmra.mrb[0].mxu0 %v2288
    %v2356 = vpop.f32.mrb[0].mxu0
    %v2357 = vadd.f32 0.0, %v2356
    %v2358 = vpop.f32.mrb[0].mxu0
    %v2359 = vadd.f32 0.0, %v2358
    %2360 = vdwg.mxu0
    %v2361 = vsel %vm163, %v2357, %v2359
    %v2362 = vld [vmem:[#allocation4 + $0x10] sm:$0x30]
    %v2363 = vld [vmem:[#allocation4 + $0x8] sm:$0xc]
    %v2365 = vrot.slane %v2362, 4
    %v2367 = vsel %vm371, %v2365, %v2363
    %v2368 = vadd.f32 %v2367, %v2361
    %v2369 = vxor.u32 %v2368, 2147483648
    %v2370 = vmul.f32 %v2369, 1.442695
    %v2371 = vpow.pop %v2370
    %v2372 = vadd.f32 %v2371, 1.0
    %v2373 = vrcp.pop %v2372
    %v2374 = vmul.f32 1.0, %v2373
    %v2375 = vtanh.pop %v2368
    %v2376 = vld [vmem:[#allocation3] sm:$0xf]
    %2378 = vrot.lane.b32.xlu0 %v2376, 32
    %v2379 = vpop.permute.xlu0 %2378
    %v2381 = vmul.f32 %v2374, %v2379
    %2383 = vrot.lane.b32.xlu0 %v2375, 64
    %v2384 = vpop.permute.xlu0 %2383
    %v2386 = vmul.f32 %v2374, %v2384
    %2388 = vrot.lane.b32.xlu0 %v2386, 32
    %v2389 = vpop.permute.xlu0 %2388
    %v2391 = vadd.f32 %v2381, %v2389
    %v2392 = vtanh.pop %v2391
    %2394 = vrot.lane.b32.xlu0 %v2392, 64
    %v2395 = vpop.permute.xlu0 %2394
    %v2397 = vmul.f32 %v2374, %v2395
    %2399 = vrot.lane.b32.xlu0 %v2397, 32
    %v2400 = vpop.permute.xlu0 %2399
    %2402 = vst.msk [vmem:[#allocation2] sm:$0xf] %vm407, %v2400
    %2404 = vrot.lane.b32.xlu0 %v2391, 96
    %v2405 = vpop.permute.xlu0 %2404
    %2407 = vst.msk [vmem:[#allocation3] sm:$0xf] %vm407, %v2405
    %2408 = vst.msk [vmem:[#allocation7 + $0xc] sm:$0x3] %vm271, %v2400
    %2409 = vst.msk [vmem:[#allocation8] sm:$0xc] %vm415, %v2400
    %v2410 = vld [vmem:[#allocation2] sm:$0xf]
    %v2412 = vsel %vm290, %v2410, 0
    %2414 = vmatprep.subr.mxu0 %v1526
    %2415 = vmatpush1.msra.mxu0 %v1525
    %2416 = vmatprep.subr.mxu0 %v1528
    %2417 = vmatpush1.msra.mxu0 %v1527
    %2418 = vmatprep.subr.mxu0 %v1530
    %2419 = vmatpush1.msra.mxu0 %v1529
    %2420 = vmatprep.subr.mxu0 %v1532
    %2421 = vmatpush1.msra.mxu0 %v1531
    %2422 = vmatprep.subr.mxu0 0.0
    %2423 = vmatpush1.msra.mxu0 0.0
    %2424 = vmatprep.subr.mxu0 0.0
    %2425 = vmatpush1.msra.mxu0 0.0
    %2426 = vmatprep.subr.mxu0 0.0
    %2427 = vmatpush1.msra.mxu0 0.0
    %2428 = vmatprep.subr.mxu0 0.0
    %2429 = vmatpush1.msra.mxu0 0.0
    %2430 = vmatprep.subr.mxu0 0.0
    %2431 = vmatpush1.msra.mxu0 0.0
    %2432 = vmatprep.subr.mxu0 0.0
    %2433 = vmatpush1.msra.mxu0 0.0
    %2434 = vmatprep.subr.mxu0 0.0
    %2435 = vmatpush1.msra.mxu0 0.0
    %2436 = vmatprep.subr.mxu0 0.0
    %2437 = vmatpush1.msra.mxu0 0.0
    %2438 = vmatprep.subr.mxu0 0.0
    %2439 = vmatpush1.msra.mxu0 0.0
    %2440 = vmatprep.subr.mxu0 0.0
    %2441 = vmatpush1.msra.mxu0 0.0
    %2442 = vmatprep.subr.mxu0 0.0
    %2443 = vmatpush1.msra.mxu0 0.0
    %2444 = vmatprep.subr.mxu0 0.0
    %2445 = vmatpush1.msra.mxu0 0.0
    %2446 = vmatprep.subr.mxu0 0.0
    %2447 = vmatpush1.msra.mxu0 0.0
    %2448 = vmatprep.subr.mxu0 0.0
    %2449 = vmatpush1.msra.mxu0 0.0
    %2450 = vmatprep.subr.mxu0 0.0
    %2451 = vmatpush1.msra.mxu0 0.0
    %2452 = vmatprep.subr.mxu0 0.0
    %2453 = vmatpush1.msra.mxu0 0.0
    %2454 = vmatprep.subr.mxu0 0.0
    %2455 = vmatpush1.msra.mxu0 0.0
    %2456 = vmatprep.subr.mxu0 0.0
    %2457 = vmatpush1.msra.mxu0 0.0
    %2458 = vmatprep.subr.mxu0 0.0
    %2459 = vmatpush1.msra.mxu0 0.0
    %2460 = vmatprep.subr.mxu0 0.0
    %2461 = vmatpush1.msra.mxu0 0.0
    %2462 = vmatprep.subr.mxu0 0.0
    %2463 = vmatpush1.msra.mxu0 0.0
    %2464 = vmatprep.subr.mxu0 0.0
    %2465 = vmatpush1.msra.mxu0 0.0
    %2466 = vmatprep.subr.mxu0 0.0
    %2467 = vmatpush1.msra.mxu0 0.0
    %2468 = vmatprep.subr.mxu0 0.0
    %2469 = vmatpush1.msra.mxu0 0.0
    %2470 = vmatprep.subr.mxu0 0.0
    %2471 = vmatpush1.msra.mxu0 0.0
    %2472 = vmatprep.subr.mxu0 0.0
    %2473 = vmatpush1.msra.mxu0 0.0
    %2474 = vmatprep.subr.mxu0 0.0
    %2475 = vmatpush1.msra.mxu0 0.0
    %2476 = vmatprep.subr.mxu0 0.0
    %2477 = vmatpush1.msra.mxu0 0.0
    %2478 = vmatprep.mubr.f32.mxu0 0.0
    %2479 = vmatmul.mubr.f32.gmra.mrb[0].mxu0 %v2412
    %v2480 = vpop.f32.mrb[0].mxu0
    %v2481 = vadd.f32 0.0, %v2480
    %v2482 = vpop.f32.mrb[0].mxu0
    %v2483 = vadd.f32 0.0, %v2482
    %2484 = vdwg.mxu0
    %v2485 = vsel %vm163, %v2481, %v2483
    %v2486 = vld [vmem:[#allocation4 + $0x10] sm:$0xc0]
    %v2487 = vld [vmem:[#allocation4 + $0x8] sm:$0x3]
    %v2489 = vrot.slane %v2486, 6
    %v2492 = vrot.slane %v2487, 6
    %v2494 = vsel %vm371, %v2489, %v2492
    %v2495 = vadd.f32 %v2494, %v2485
    %v2496 = vxor.u32 %v2495, 2147483648
    %v2497 = vmul.f32 %v2496, 1.442695
    %v2498 = vpow.pop %v2497
    %v2499 = vadd.f32 %v2498, 1.0
    %v2500 = vrcp.pop %v2499
    %v2501 = vmul.f32 1.0, %v2500
    %v2502 = vtanh.pop %v2495
    %v2503 = vld [vmem:[#allocation3] sm:$0xf]
    %2505 = vrot.lane.b32.xlu0 %v2503, 32
    %v2506 = vpop.permute.xlu0 %2505
    %v2508 = vmul.f32 %v2501, %v2506
    %2510 = vrot.lane.b32.xlu0 %v2502, 64
    %v2511 = vpop.permute.xlu0 %2510
    %v2513 = vmul.f32 %v2501, %v2511
    %2515 = vrot.lane.b32.xlu0 %v2513, 32
    %v2516 = vpop.permute.xlu0 %2515
    %v2518 = vadd.f32 %v2508, %v2516
    %v2519 = vtanh.pop %v2518
    %2521 = vrot.lane.b32.xlu0 %v2519, 64
    %v2522 = vpop.permute.xlu0 %2521
    %v2524 = vmul.f32 %v2501, %v2522
    %2526 = vrot.lane.b32.xlu0 %v2524, 32
    %v2527 = vpop.permute.xlu0 %2526
    %2529 = vst.msk [vmem:[#allocation2] sm:$0xf] %vm407, %v2527
    %2531 = vrot.lane.b32.xlu0 %v2518, 96
    %v2532 = vpop.permute.xlu0 %2531
    %2534 = vst.msk [vmem:[#allocation3] sm:$0xf] %vm407, %v2532
    %2535 = vst.msk [vmem:[#allocation7 + $0xe] sm:$0x3] %vm271, %v2527
    %2536 = vst.msk [vmem:[#allocation8 - $0x2] sm:$0xc] %vm415, %v2527
    %v2537 = vld [vmem:[#allocation2] sm:$0x3]
    %s2538 = scalar_lea.vmem [#allocation23], 4
    %2539 = vst.msk [vmem:[%s2538] sm:$0x3] %vm271, %v2537
    %v2540 = vld [vmem:[#allocation2 + $0x2] sm:$0x3]
    %s2541 = scalar_lea.vmem [#allocation23], 6
    %2542 = vst.msk [vmem:[%s2541] sm:$0x3] %vm271, %v2540
    %v2543 = vld [vmem:[#allocation3] sm:$0x3]
    %s2544 = scalar_lea.vmem [#allocation24], 4
    %2545 = vst.msk [vmem:[%s2544] sm:$0x3] %vm271, %v2543
    %v2546 = vld [vmem:[#allocation3 + $0x2] sm:$0x3]
    %s2547 = scalar_lea.vmem [#allocation24], 6
    %2548 = vst.msk [vmem:[%s2547] sm:$0x3] %vm271, %v2546
    %v2549 = vld [vmem:[#allocation18] sm:$0xff]
    %v2550 = vld [vmem:[#allocation18 + $0x8] sm:$0xff]
    %v2551 = vld [vmem:[#allocation18 + $0x10] sm:$0xff]
    %v2552 = vld [vmem:[#allocation18 + $0x18] sm:$0xff]
    %v2553 = vld [vmem:[#allocation18 + $0x20] sm:$0xff]
    %v2554 = vld [vmem:[#allocation18 + $0x28] sm:$0xff]
    %v2555 = vld [vmem:[#allocation18 + $0x30] sm:$0xff]
    %v2556 = vld [vmem:[#allocation18 + $0x38] sm:$0xff]
    %v2557 = vld [vmem:[#allocation18 + $0x40] sm:$0xff]
    %v2558 = vld [vmem:[#allocation18 + $0x48] sm:$0xff]
    %v2559 = vld [vmem:[#allocation18 + $0x50] sm:$0xff]
    %v2560 = vld [vmem:[#allocation18 + $0x58] sm:$0xff]
    %v2561 = vld [vmem:[#allocation18 + $0x60] sm:$0xff]
    %v2562 = vld [vmem:[#allocation18 + $0x68] sm:$0xff]
    %v2563 = vld [vmem:[#allocation18 + $0x70] sm:$0xff]
    %v2564 = vld [vmem:[#allocation18 + $0x78] sm:$0xff]
    %v2565 = vld [vmem:[#allocation7] sm:$0xff]
    %v2566 = vld [vmem:[#allocation7 + $0x8] sm:$0xff]
    %v2567 = vld [vmem:[#allocation8] sm:$0xff]
    %v2568 = vld [vmem:[#allocation8 + $0x8] sm:$0xff]
    %v2570 = vsel %vm290, %v2567, 0
    %v2573 = vsel %vm290, %v2568, 0
    %2575 = vmatprep.subr.mxu0 %v2558
    %2576 = vmatpush1.msra.mxu0 %v2557
    %2577 = vmatprep.subr.mxu0 %v2560
    %2578 = vmatpush1.msra.mxu0 %v2559
    %2579 = vmatprep.subr.mxu0 %v2562
    %2580 = vmatpush1.msra.mxu0 %v2561
    %2581 = vmatprep.subr.mxu0 %v2564
    %2582 = vmatpush1.msra.mxu0 %v2563
    %2583 = vmatprep.subr.mxu0 0.0
    %2584 = vmatpush1.msra.mxu0 0.0
    %2585 = vmatprep.subr.mxu0 0.0
    %2586 = vmatpush1.msra.mxu0 0.0
    %2587 = vmatprep.subr.mxu0 0.0
    %2588 = vmatpush1.msra.mxu0 0.0
    %2589 = vmatprep.subr.mxu0 0.0
    %2590 = vmatpush1.msra.mxu0 0.0
    %2591 = vmatprep.subr.mxu0 0.0
    %2592 = vmatpush1.msra.mxu0 0.0
    %2593 = vmatprep.subr.mxu0 0.0
    %2594 = vmatpush1.msra.mxu0 0.0
    %2595 = vmatprep.subr.mxu0 0.0
    %2596 = vmatpush1.msra.mxu0 0.0
    %2597 = vmatprep.subr.mxu0 0.0
    %2598 = vmatpush1.msra.mxu0 0.0
    %2599 = vmatprep.subr.mxu0 0.0
    %2600 = vmatpush1.msra.mxu0 0.0
    %2601 = vmatprep.subr.mxu0 0.0
    %2602 = vmatpush1.msra.mxu0 0.0
    %2603 = vmatprep.subr.mxu0 0.0
    %2604 = vmatpush1.msra.mxu0 0.0
    %2605 = vmatprep.subr.mxu0 0.0
    %2606 = vmatpush1.msra.mxu0 0.0
    %2607 = vmatprep.subr.mxu0 0.0
    %2608 = vmatpush1.msra.mxu0 0.0
    %2609 = vmatprep.subr.mxu0 0.0
    %2610 = vmatpush1.msra.mxu0 0.0
    %2611 = vmatprep.subr.mxu0 0.0
    %2612 = vmatpush1.msra.mxu0 0.0
    %2613 = vmatprep.subr.mxu0 0.0
    %2614 = vmatpush1.msra.mxu0 0.0
    %2615 = vmatprep.subr.mxu0 0.0
    %2616 = vmatpush1.msra.mxu0 0.0
    %2617 = vmatprep.subr.mxu0 0.0
    %2618 = vmatpush1.msra.mxu0 0.0
    %2619 = vmatprep.subr.mxu0 0.0
    %2620 = vmatpush1.msra.mxu0 0.0
    %2621 = vmatprep.subr.mxu0 0.0
    %2622 = vmatpush1.msra.mxu0 0.0
    %2623 = vmatprep.subr.mxu0 0.0
    %2624 = vmatpush1.msra.mxu0 0.0
    %2625 = vmatprep.subr.mxu0 0.0
    %2626 = vmatpush1.msra.mxu0 0.0
    %2627 = vmatprep.subr.mxu0 0.0
    %2628 = vmatpush1.msra.mxu0 0.0
    %2629 = vmatprep.subr.mxu0 0.0
    %2630 = vmatpush1.msra.mxu0 0.0
    %2631 = vmatprep.subr.mxu0 0.0
    %2632 = vmatpush1.msra.mxu0 0.0
    %2633 = vmatprep.subr.mxu0 0.0
    %2634 = vmatpush1.msra.mxu0 0.0
    %2635 = vmatprep.subr.mxu0 0.0
    %2636 = vmatpush1.msra.mxu0 0.0
    %2637 = vmatprep.subr.mxu0 0.0
    %2638 = vmatpush1.msra.mxu0 0.0
    %2639 = vmatprep.mubr.f32.mxu0 0.0
    %2640 = vmatmul.mubr.f32.gmra.mrb[0].mxu0 %v2570
    %v2641 = vpop.f32.mrb[0].mxu0
    %v2642 = vadd.f32 0.0, %v2641
    %v2643 = vpop.f32.mrb[0].mxu0
    %v2644 = vadd.f32 0.0, %v2643
    %2645 = vmatprep.mubr.f32.mxu0 0.0
    %2646 = vmatmul.mubr.f32.gmra.mrb[0].mxu0 %v2573
    %v2647 = vpop.f32.mrb[0].mxu0
    %v2648 = vadd.f32 0.0, %v2647
    %v2649 = vpop.f32.mrb[0].mxu0
    %v2650 = vadd.f32 0.0, %v2649
    %2651 = vdwg.mxu0
    %v2653 = vsel %vm290, %v2565, 0
    %v2656 = vsel %vm290, %v2566, 0
    %2658 = vmatprep.subr.mxu0 %v2550
    %2659 = vmatpush1.msra.mxu0 %v2549
    %2660 = vmatprep.subr.mxu0 %v2552
    %2661 = vmatpush1.msra.mxu0 %v2551
    %2662 = vmatprep.subr.mxu0 %v2554
    %2663 = vmatpush1.msra.mxu0 %v2553
    %2664 = vmatprep.subr.mxu0 %v2556
    %2665 = vmatpush1.msra.mxu0 %v2555
    %2666 = vmatprep.subr.mxu0 0.0
    %2667 = vmatpush1.msra.mxu0 0.0
    %2668 = vmatprep.subr.mxu0 0.0
    %2669 = vmatpush1.msra.mxu0 0.0
    %2670 = vmatprep.subr.mxu0 0.0
    %2671 = vmatpush1.msra.mxu0 0.0
    %2672 = vmatprep.subr.mxu0 0.0
    %2673 = vmatpush1.msra.mxu0 0.0
    %2674 = vmatprep.subr.mxu0 0.0
    %2675 = vmatpush1.msra.mxu0 0.0
    %2676 = vmatprep.subr.mxu0 0.0
    %2677 = vmatpush1.msra.mxu0 0.0
    %2678 = vmatprep.subr.mxu0 0.0
    %2679 = vmatpush1.msra.mxu0 0.0
    %2680 = vmatprep.subr.mxu0 0.0
    %2681 = vmatpush1.msra.mxu0 0.0
    %2682 = vmatprep.subr.mxu0 0.0
    %2683 = vmatpush1.msra.mxu0 0.0
    %2684 = vmatprep.subr.mxu0 0.0
    %2685 = vmatpush1.msra.mxu0 0.0
    %2686 = vmatprep.subr.mxu0 0.0
    %2687 = vmatpush1.msra.mxu0 0.0
    %2688 = vmatprep.subr.mxu0 0.0
    %2689 = vmatpush1.msra.mxu0 0.0
    %2690 = vmatprep.subr.mxu0 0.0
    %2691 = vmatpush1.msra.mxu0 0.0
    %2692 = vmatprep.subr.mxu0 0.0
    %2693 = vmatpush1.msra.mxu0 0.0
    %2694 = vmatprep.subr.mxu0 0.0
    %2695 = vmatpush1.msra.mxu0 0.0
    %2696 = vmatprep.subr.mxu0 0.0
    %2697 = vmatpush1.msra.mxu0 0.0
    %2698 = vmatprep.subr.mxu0 0.0
    %2699 = vmatpush1.msra.mxu0 0.0
    %2700 = vmatprep.subr.mxu0 0.0
    %2701 = vmatpush1.msra.mxu0 0.0
    %2702 = vmatprep.subr.mxu0 0.0
    %2703 = vmatpush1.msra.mxu0 0.0
    %2704 = vmatprep.subr.mxu0 0.0
    %2705 = vmatpush1.msra.mxu0 0.0
    %2706 = vmatprep.subr.mxu0 0.0
    %2707 = vmatpush1.msra.mxu0 0.0
    %2708 = vmatprep.subr.mxu0 0.0
    %2709 = vmatpush1.msra.mxu0 0.0
    %2710 = vmatprep.subr.mxu0 0.0
    %2711 = vmatpush1.msra.mxu0 0.0
    %2712 = vmatprep.subr.mxu0 0.0
    %2713 = vmatpush1.msra.mxu0 0.0
    %2714 = vmatprep.subr.mxu0 0.0
    %2715 = vmatpush1.msra.mxu0 0.0
    %2716 = vmatprep.subr.mxu0 0.0
    %2717 = vmatpush1.msra.mxu0 0.0
    %2718 = vmatprep.subr.mxu0 0.0
    %2719 = vmatpush1.msra.mxu0 0.0
    %2720 = vmatprep.subr.mxu0 0.0
    %2721 = vmatpush1.msra.mxu0 0.0
    %2722 = vmatprep.mubr.f32.mxu0 0.0
    %2723 = vmatmul.mubr.f32.gmra.mrb[0].mxu0 %v2653
    %v2724 = vpop.f32.mrb[0].mxu0
    %v2725 = vadd.f32 %v2642, %v2724
    %v2726 = vpop.f32.mrb[0].mxu0
    %v2727 = vadd.f32 %v2644, %v2726
    %2728 = vmatprep.mubr.f32.mxu0 0.0
    %2729 = vmatmul.mubr.f32.gmra.mrb[0].mxu0 %v2656
    %v2730 = vpop.f32.mrb[0].mxu0
    %v2731 = vadd.f32 %v2648, %v2730
    %v2732 = vpop.f32.mrb[0].mxu0
    %v2733 = vadd.f32 %v2650, %v2732
    %2734 = vdwg.mxu0
    %v2735 = vld [vmem:[%s11] sm:$0x3]
    %v2737 = vlaneseq
    %v2738 = vshrl.u32 %v2737, 7
    %v2739 = vsub.s32 0, %v2738
    %v2740 = vrot.slane %v2735, %v2739
    %v2741 = vlaneseq
    %v2742 = vshrl.u32 %v2741, 7
    %v2743 = vsub.s32 1, %v2742
    %v2744 = vrot.slane %v2735, %v2743
    %v2747 = vadd.f32 %v2725, %v2740
    %v2748 = vadd.f32 %v2727, %v2744
    %v2749 = vadd.f32 %v2731, %v2740
    %v2750 = vadd.f32 %v2733, %v2744
    %2751 = vst [vmem:[#allocation4] sm:$0xff] %v2747
    %2752 = vst [vmem:[#allocation4 + $0x8] sm:$0xff] %v2748
    %2753 = vst [vmem:[#allocation4 + $0x10] sm:$0xff] %v2749
    %2754 = vst [vmem:[#allocation4 + $0x18] sm:$0xff] %v2750
    %s2755 = scalar_lea.vmem [#allocation9], 8
    %v2756 = vld [vmem:[%s2755] sm:$0x3]
    %2757 = vst.msk [vmem:[#allocation2] sm:$0x3] %vm271, %v2756
    %s2758 = scalar_lea.vmem [#allocation9], 10
    %v2759 = vld [vmem:[%s2758] sm:$0x3]
    %2760 = vst.msk [vmem:[#allocation2 + $0x2] sm:$0x3] %vm271, %v2759
    %s2761 = scalar_lea.vmem [#allocation12], 8
    %v2762 = vld [vmem:[%s2761] sm:$0x3]
    %2763 = vst.msk [vmem:[#allocation3] sm:$0x3] %vm271, %v2762
    %s2764 = scalar_lea.vmem [#allocation12], 10
    %v2765 = vld [vmem:[%s2764] sm:$0x3]
    %2766 = vst.msk [vmem:[#allocation3 + $0x2] sm:$0x3] %vm271, %v2765
    %v2767 = vld [vmem:[#allocation20] sm:$0xff]
    %v2768 = vld [vmem:[#allocation20 + $0x8] sm:$0xff]
    %v2769 = vld [vmem:[#allocation20 + $0x10] sm:$0xff]
    %v2770 = vld [vmem:[#allocation20 + $0x18] sm:$0xff]
    %v2771 = vld [vmem:[#allocation20 + $0x20] sm:$0xff]
    %v2772 = vld [vmem:[#allocation20 + $0x28] sm:$0xff]
    %v2773 = vld [vmem:[#allocation20 + $0x30] sm:$0xff]
    %v2774 = vld [vmem:[#allocation20 + $0x38] sm:$0xff]
    %v2775 = vld [vmem:[#allocation2] sm:$0xf]
    %v2777 = vsel %vm290, %v2775, 0
    %2779 = vmatprep.subr.mxu0 %v2768
    %2780 = vmatpush1.msra.mxu0 %v2767
    %2781 = vmatprep.subr.mxu0 %v2770
    %2782 = vmatpush1.msra.mxu0 %v2769
    %2783 = vmatprep.subr.mxu0 %v2772
    %2784 = vmatpush1.msra.mxu0 %v2771
    %2785 = vmatprep.subr.mxu0 %v2774
    %2786 = vmatpush1.msra.mxu0 %v2773
    %2787 = vmatprep.subr.mxu0 0.0
    %2788 = vmatpush1.msra.mxu0 0.0
    %2789 = vmatprep.subr.mxu0 0.0
    %2790 = vmatpush1.msra.mxu0 0.0
    %2791 = vmatprep.subr.mxu0 0.0
    %2792 = vmatpush1.msra.mxu0 0.0
    %2793 = vmatprep.subr.mxu0 0.0
    %2794 = vmatpush1.msra.mxu0 0.0
    %2795 = vmatprep.subr.mxu0 0.0
    %2796 = vmatpush1.msra.mxu0 0.0
    %2797 = vmatprep.subr.mxu0 0.0
    %2798 = vmatpush1.msra.mxu0 0.0
    %2799 = vmatprep.subr.mxu0 0.0
    %2800 = vmatpush1.msra.mxu0 0.0
    %2801 = vmatprep.subr.mxu0 0.0
    %2802 = vmatpush1.msra.mxu0 0.0
    %2803 = vmatprep.subr.mxu0 0.0
    %2804 = vmatpush1.msra.mxu0 0.0
    %2805 = vmatprep.subr.mxu0 0.0
    %2806 = vmatpush1.msra.mxu0 0.0
    %2807 = vmatprep.subr.mxu0 0.0
    %2808 = vmatpush1.msra.mxu0 0.0
    %2809 = vmatprep.subr.mxu0 0.0
    %2810 = vmatpush1.msra.mxu0 0.0
    %2811 = vmatprep.subr.mxu0 0.0
    %2812 = vmatpush1.msra.mxu0 0.0
    %2813 = vmatprep.subr.mxu0 0.0
    %2814 = vmatpush1.msra.mxu0 0.0
    %2815 = vmatprep.subr.mxu0 0.0
    %2816 = vmatpush1.msra.mxu0 0.0
    %2817 = vmatprep.subr.mxu0 0.0
    %2818 = vmatpush1.msra.mxu0 0.0
    %2819 = vmatprep.subr.mxu0 0.0
    %2820 = vmatpush1.msra.mxu0 0.0
    %2821 = vmatprep.subr.mxu0 0.0
    %2822 = vmatpush1.msra.mxu0 0.0
    %2823 = vmatprep.subr.mxu0 0.0
    %2824 = vmatpush1.msra.mxu0 0.0
    %2825 = vmatprep.subr.mxu0 0.0
    %2826 = vmatpush1.msra.mxu0 0.0
    %2827 = vmatprep.subr.mxu0 0.0
    %2828 = vmatpush1.msra.mxu0 0.0
    %2829 = vmatprep.subr.mxu0 0.0
    %2830 = vmatpush1.msra.mxu0 0.0
    %2831 = vmatprep.subr.mxu0 0.0
    %2832 = vmatpush1.msra.mxu0 0.0
    %2833 = vmatprep.subr.mxu0 0.0
    %2834 = vmatpush1.msra.mxu0 0.0
    %2835 = vmatprep.subr.mxu0 0.0
    %2836 = vmatpush1.msra.mxu0 0.0
    %2837 = vmatprep.subr.mxu0 0.0
    %2838 = vmatpush1.msra.mxu0 0.0
    %2839 = vmatprep.subr.mxu0 0.0
    %2840 = vmatpush1.msra.mxu0 0.0
    %2841 = vmatprep.subr.mxu0 0.0
    %2842 = vmatpush1.msra.mxu0 0.0
    %2843 = vmatprep.mubr.f32.mxu0 0.0
    %2844 = vmatmul.mubr.f32.gmra.mrb[0].mxu0 %v2777
    %v2845 = vpop.f32.mrb[0].mxu0
    %v2846 = vadd.f32 0.0, %v2845
    %v2847 = vpop.f32.mrb[0].mxu0
    %v2848 = vadd.f32 0.0, %v2847
    %2849 = vdwg.mxu0
    %v2850 = vsel %vm163, %v2846, %v2848
    %v2851 = vld [vmem:[#allocation4] sm:$0x3]
    %v2852 = vld [vmem:[#allocation4 + $0x18] sm:$0xc0]
    %v2854 = vrot.slane %v2852, 4
    %v2856 = vsel %vm371, %v2851, %v2854
    %v2857 = vadd.f32 %v2856, %v2850
    %v2858 = vxor.u32 %v2857, 2147483648
    %v2859 = vmul.f32 %v2858, 1.442695
    %v2860 = vpow.pop %v2859
    %v2861 = vadd.f32 %v2860, 1.0
    %v2862 = vrcp.pop %v2861
    %v2863 = vmul.f32 1.0, %v2862
    %v2864 = vtanh.pop %v2857
    %v2865 = vld [vmem:[#allocation3] sm:$0xf]
    %2867 = vrot.lane.b32.xlu0 %v2865, 32
    %v2868 = vpop.permute.xlu0 %2867
    %v2870 = vmul.f32 %v2863, %v2868
    %2872 = vrot.lane.b32.xlu0 %v2864, 64
    %v2873 = vpop.permute.xlu0 %2872
    %v2875 = vmul.f32 %v2863, %v2873
    %2877 = vrot.lane.b32.xlu0 %v2875, 32
    %v2878 = vpop.permute.xlu0 %2877
    %v2880 = vadd.f32 %v2870, %v2878
    %v2881 = vtanh.pop %v2880
    %2883 = vrot.lane.b32.xlu0 %v2881, 64
    %v2884 = vpop.permute.xlu0 %2883
    %v2886 = vmul.f32 %v2863, %v2884
    %2888 = vrot.lane.b32.xlu0 %v2886, 32
    %v2889 = vpop.permute.xlu0 %2888
    %2891 = vst.msk [vmem:[#allocation2] sm:$0xf] %vm407, %v2889
    %2893 = vrot.lane.b32.xlu0 %v2880, 96
    %v2894 = vpop.permute.xlu0 %2893
    %2896 = vst.msk [vmem:[#allocation3] sm:$0xf] %vm407, %v2894
    %2897 = vst.msk [vmem:[#allocation5] sm:$0x3] %vm271, %v2889
    %2898 = vst.msk [vmem:[#allocation6 + $0xc] sm:$0xc] %vm415, %v2889
    %v2899 = vld [vmem:[#allocation2] sm:$0xf]
    %v2901 = vsel %vm290, %v2899, 0
    %2903 = vmatprep.subr.mxu0 %v2768
    %2904 = vmatpush1.msra.mxu0 %v2767
    %2905 = vmatprep.subr.mxu0 %v2770
    %2906 = vmatpush1.msra.mxu0 %v2769
    %2907 = vmatprep.subr.mxu0 %v2772
    %2908 = vmatpush1.msra.mxu0 %v2771
    %2909 = vmatprep.subr.mxu0 %v2774
    %2910 = vmatpush1.msra.mxu0 %v2773
    %2911 = vmatprep.subr.mxu0 0.0
    %2912 = vmatpush1.msra.mxu0 0.0
    %2913 = vmatprep.subr.mxu0 0.0
    %2914 = vmatpush1.msra.mxu0 0.0
    %2915 = vmatprep.subr.mxu0 0.0
    %2916 = vmatpush1.msra.mxu0 0.0
    %2917 = vmatprep.subr.mxu0 0.0
    %2918 = vmatpush1.msra.mxu0 0.0
    %2919 = vmatprep.subr.mxu0 0.0
    %2920 = vmatpush1.msra.mxu0 0.0
    %2921 = vmatprep.subr.mxu0 0.0
    %2922 = vmatpush1.msra.mxu0 0.0
    %2923 = vmatprep.subr.mxu0 0.0
    %2924 = vmatpush1.msra.mxu0 0.0
    %2925 = vmatprep.subr.mxu0 0.0
    %2926 = vmatpush1.msra.mxu0 0.0
    %2927 = vmatprep.subr.mxu0 0.0
    %2928 = vmatpush1.msra.mxu0 0.0
    %2929 = vmatprep.subr.mxu0 0.0
    %2930 = vmatpush1.msra.mxu0 0.0
    %2931 = vmatprep.subr.mxu0 0.0
    %2932 = vmatpush1.msra.mxu0 0.0
    %2933 = vmatprep.subr.mxu0 0.0
    %2934 = vmatpush1.msra.mxu0 0.0
    %2935 = vmatprep.subr.mxu0 0.0
    %2936 = vmatpush1.msra.mxu0 0.0
    %2937 = vmatprep.subr.mxu0 0.0
    %2938 = vmatpush1.msra.mxu0 0.0
    %2939 = vmatprep.subr.mxu0 0.0
    %2940 = vmatpush1.msra.mxu0 0.0
    %2941 = vmatprep.subr.mxu0 0.0
    %2942 = vmatpush1.msra.mxu0 0.0
    %2943 = vmatprep.subr.mxu0 0.0
    %2944 = vmatpush1.msra.mxu0 0.0
    %2945 = vmatprep.subr.mxu0 0.0
    %2946 = vmatpush1.msra.mxu0 0.0
    %2947 = vmatprep.subr.mxu0 0.0
    %2948 = vmatpush1.msra.mxu0 0.0
    %2949 = vmatprep.subr.mxu0 0.0
    %2950 = vmatpush1.msra.mxu0 0.0
    %2951 = vmatprep.subr.mxu0 0.0
    %2952 = vmatpush1.msra.mxu0 0.0
    %2953 = vmatprep.subr.mxu0 0.0
    %2954 = vmatpush1.msra.mxu0 0.0
    %2955 = vmatprep.subr.mxu0 0.0
    %2956 = vmatpush1.msra.mxu0 0.0
    %2957 = vmatprep.subr.mxu0 0.0
    %2958 = vmatpush1.msra.mxu0 0.0
    %2959 = vmatprep.subr.mxu0 0.0
    %2960 = vmatpush1.msra.mxu0 0.0
    %2961 = vmatprep.subr.mxu0 0.0
    %2962 = vmatpush1.msra.mxu0 0.0
    %2963 = vmatprep.subr.mxu0 0.0
    %2964 = vmatpush1.msra.mxu0 0.0
    %2965 = vmatprep.subr.mxu0 0.0
    %2966 = vmatpush1.msra.mxu0 0.0
    %2967 = vmatprep.mubr.f32.mxu0 0.0
    %2968 = vmatmul.mubr.f32.gmra.mrb[0].mxu0 %v2901
    %v2969 = vpop.f32.mrb[0].mxu0
    %v2970 = vadd.f32 0.0, %v2969
    %v2971 = vpop.f32.mrb[0].mxu0
    %v2972 = vadd.f32 0.0, %v2971
    %2973 = vdwg.mxu0
    %v2974 = vsel %vm163, %v2970, %v2972
    %v2975 = vld [vmem:[#allocation4] sm:$0xc]
    %v2976 = vld [vmem:[#allocation4 + $0x18] sm:$0x30]
    %v2978 = vrot.slane %v2975, 2
    %v2981 = vrot.slane %v2976, 2
    %v2983 = vsel %vm371, %v2978, %v2981
    %v2984 = vadd.f32 %v2983, %v2974
    %v2985 = vxor.u32 %v2984, 2147483648
    %v2986 = vmul.f32 %v2985, 1.442695
    %v2987 = vpow.pop %v2986
    %v2988 = vadd.f32 %v2987, 1.0
    %v2989 = vrcp.pop %v2988
    %v2990 = vmul.f32 1.0, %v2989
    %v2991 = vtanh.pop %v2984
    %v2992 = vld [vmem:[#allocation3] sm:$0xf]
    %2994 = vrot.lane.b32.xlu0 %v2992, 32
    %v2995 = vpop.permute.xlu0 %2994
    %v2997 = vmul.f32 %v2990, %v2995
    %2999 = vrot.lane.b32.xlu0 %v2991, 64
    %v3000 = vpop.permute.xlu0 %2999
    %v3002 = vmul.f32 %v2990, %v3000
    %3004 = vrot.lane.b32.xlu0 %v3002, 32
    %v3005 = vpop.permute.xlu0 %3004
    %v3007 = vadd.f32 %v2997, %v3005
    %v3008 = vtanh.pop %v3007
    %3010 = vrot.lane.b32.xlu0 %v3008, 64
    %v3011 = vpop.permute.xlu0 %3010
    %v3013 = vmul.f32 %v2990, %v3011
    %3015 = vrot.lane.b32.xlu0 %v3013, 32
    %v3016 = vpop.permute.xlu0 %3015
    %3018 = vst.msk [vmem:[#allocation2] sm:$0xf] %vm407, %v3016
    %3020 = vrot.lane.b32.xlu0 %v3007, 96
    %v3021 = vpop.permute.xlu0 %3020
    %3023 = vst.msk [vmem:[#allocation3] sm:$0xf] %vm407, %v3021
    %3024 = vst.msk [vmem:[#allocation5 + $0x2] sm:$0x3] %vm271, %v3016
    %3025 = vst.msk [vmem:[#allocation6 + $0xa] sm:$0xc] %vm415, %v3016
    %v3026 = vld [vmem:[#allocation2] sm:$0xf]
    %v3028 = vsel %vm290, %v3026, 0
    %3030 = vmatprep.subr.mxu0 %v2768
    %3031 = vmatpush1.msra.mxu0 %v2767
    %3032 = vmatprep.subr.mxu0 %v2770
    %3033 = vmatpush1.msra.mxu0 %v2769
    %3034 = vmatprep.subr.mxu0 %v2772
    %3035 = vmatpush1.msra.mxu0 %v2771
    %3036 = vmatprep.subr.mxu0 %v2774
    %3037 = vmatpush1.msra.mxu0 %v2773
    %3038 = vmatprep.subr.mxu0 0.0
    %3039 = vmatpush1.msra.mxu0 0.0
    %3040 = vmatprep.subr.mxu0 0.0
    %3041 = vmatpush1.msra.mxu0 0.0
    %3042 = vmatprep.subr.mxu0 0.0
    %3043 = vmatpush1.msra.mxu0 0.0
    %3044 = vmatprep.subr.mxu0 0.0
    %3045 = vmatpush1.msra.mxu0 0.0
    %3046 = vmatprep.subr.mxu0 0.0
    %3047 = vmatpush1.msra.mxu0 0.0
    %3048 = vmatprep.subr.mxu0 0.0
    %3049 = vmatpush1.msra.mxu0 0.0
    %3050 = vmatprep.subr.mxu0 0.0
    %3051 = vmatpush1.msra.mxu0 0.0
    %3052 = vmatprep.subr.mxu0 0.0
    %3053 = vmatpush1.msra.mxu0 0.0
    %3054 = vmatprep.subr.mxu0 0.0
    %3055 = vmatpush1.msra.mxu0 0.0
    %3056 = vmatprep.subr.mxu0 0.0
    %3057 = vmatpush1.msra.mxu0 0.0
    %3058 = vmatprep.subr.mxu0 0.0
    %3059 = vmatpush1.msra.mxu0 0.0
    %3060 = vmatprep.subr.mxu0 0.0
    %3061 = vmatpush1.msra.mxu0 0.0
    %3062 = vmatprep.subr.mxu0 0.0
    %3063 = vmatpush1.msra.mxu0 0.0
    %3064 = vmatprep.subr.mxu0 0.0
    %3065 = vmatpush1.msra.mxu0 0.0
    %3066 = vmatprep.subr.mxu0 0.0
    %3067 = vmatpush1.msra.mxu0 0.0
    %3068 = vmatprep.subr.mxu0 0.0
    %3069 = vmatpush1.msra.mxu0 0.0
    %3070 = vmatprep.subr.mxu0 0.0
    %3071 = vmatpush1.msra.mxu0 0.0
    %3072 = vmatprep.subr.mxu0 0.0
    %3073 = vmatpush1.msra.mxu0 0.0
    %3074 = vmatprep.subr.mxu0 0.0
    %3075 = vmatpush1.msra.mxu0 0.0
    %3076 = vmatprep.subr.mxu0 0.0
    %3077 = vmatpush1.msra.mxu0 0.0
    %3078 = vmatprep.subr.mxu0 0.0
    %3079 = vmatpush1.msra.mxu0 0.0
    %3080 = vmatprep.subr.mxu0 0.0
    %3081 = vmatpush1.msra.mxu0 0.0
    %3082 = vmatprep.subr.mxu0 0.0
    %3083 = vmatpush1.msra.mxu0 0.0
    %3084 = vmatprep.subr.mxu0 0.0
    %3085 = vmatpush1.msra.mxu0 0.0
    %3086 = vmatprep.subr.mxu0 0.0
    %3087 = vmatpush1.msra.mxu0 0.0
    %3088 = vmatprep.subr.mxu0 0.0
    %3089 = vmatpush1.msra.mxu0 0.0
    %3090 = vmatprep.subr.mxu0 0.0
    %3091 = vmatpush1.msra.mxu0 0.0
    %3092 = vmatprep.subr.mxu0 0.0
    %3093 = vmatpush1.msra.mxu0 0.0
    %3094 = vmatprep.mubr.f32.mxu0 0.0
    %3095 = vmatmul.mubr.f32.gmra.mrb[0].mxu0 %v3028
    %v3096 = vpop.f32.mrb[0].mxu0
    %v3097 = vadd.f32 0.0, %v3096
    %v3098 = vpop.f32.mrb[0].mxu0
    %v3099 = vadd.f32 0.0, %v3098
    %3100 = vdwg.mxu0
    %v3101 = vsel %vm163, %v3097, %v3099
    %v3102 = vld [vmem:[#allocation4] sm:$0x30]
    %v3103 = vld [vmem:[#allocation4 + $0x18] sm:$0xc]
    %v3105 = vrot.slane %v3102, 4
    %v3107 = vsel %vm371, %v3105, %v3103
    %v3108 = vadd.f32 %v3107, %v3101
    %v3109 = vxor.u32 %v3108, 2147483648
    %v3110 = vmul.f32 %v3109, 1.442695
    %v3111 = vpow.pop %v3110
    %v3112 = vadd.f32 %v3111, 1.0
    %v3113 = vrcp.pop %v3112
    %v3114 = vmul.f32 1.0, %v3113
    %v3115 = vtanh.pop %v3108
    %v3116 = vld [vmem:[#allocation3] sm:$0xf]
    %3118 = vrot.lane.b32.xlu0 %v3116, 32
    %v3119 = vpop.permute.xlu0 %3118
    %v3121 = vmul.f32 %v3114, %v3119
    %3123 = vrot.lane.b32.xlu0 %v3115, 64
    %v3124 = vpop.permute.xlu0 %3123
    %v3126 = vmul.f32 %v3114, %v3124
    %3128 = vrot.lane.b32.xlu0 %v3126, 32
    %v3129 = vpop.permute.xlu0 %3128
    %v3131 = vadd.f32 %v3121, %v3129
    %v3132 = vtanh.pop %v3131
    %3134 = vrot.lane.b32.xlu0 %v3132, 64
    %v3135 = vpop.permute.xlu0 %3134
    %v3137 = vmul.f32 %v3114, %v3135
    %3139 = vrot.lane.b32.xlu0 %v3137, 32
    %v3140 = vpop.permute.xlu0 %3139
    %3142 = vst.msk [vmem:[#allocation2] sm:$0xf] %vm407, %v3140
    %3144 = vrot.lane.b32.xlu0 %v3131, 96
    %v3145 = vpop.permute.xlu0 %3144
    %3147 = vst.msk [vmem:[#allocation3] sm:$0xf] %vm407, %v3145
    %3148 = vst.msk [vmem:[#allocation5 + $0x4] sm:$0x3] %vm271, %v3140
    %3149 = vst.msk [vmem:[#allocation6 + $0x8] sm:$0xc] %vm415, %v3140
    %v3150 = vld [vmem:[#allocation2] sm:$0xf]
    %v3152 = vsel %vm290, %v3150, 0
    %3154 = vmatprep.subr.mxu0 %v2768
    %3155 = vmatpush1.msra.mxu0 %v2767
    %3156 = vmatprep.subr.mxu0 %v2770
    %3157 = vmatpush1.msra.mxu0 %v2769
    %3158 = vmatprep.subr.mxu0 %v2772
    %3159 = vmatpush1.msra.mxu0 %v2771
    %3160 = vmatprep.subr.mxu0 %v2774
    %3161 = vmatpush1.msra.mxu0 %v2773
    %3162 = vmatprep.subr.mxu0 0.0
    %3163 = vmatpush1.msra.mxu0 0.0
    %3164 = vmatprep.subr.mxu0 0.0
    %3165 = vmatpush1.msra.mxu0 0.0
    %3166 = vmatprep.subr.mxu0 0.0
    %3167 = vmatpush1.msra.mxu0 0.0
    %3168 = vmatprep.subr.mxu0 0.0
    %3169 = vmatpush1.msra.mxu0 0.0
    %3170 = vmatprep.subr.mxu0 0.0
    %3171 = vmatpush1.msra.mxu0 0.0
    %3172 = vmatprep.subr.mxu0 0.0
    %3173 = vmatpush1.msra.mxu0 0.0
    %3174 = vmatprep.subr.mxu0 0.0
    %3175 = vmatpush1.msra.mxu0 0.0
    %3176 = vmatprep.subr.mxu0 0.0
    %3177 = vmatpush1.msra.mxu0 0.0
    %3178 = vmatprep.subr.mxu0 0.0
    %3179 = vmatpush1.msra.mxu0 0.0
    %3180 = vmatprep.subr.mxu0 0.0
    %3181 = vmatpush1.msra.mxu0 0.0
    %3182 = vmatprep.subr.mxu0 0.0
    %3183 = vmatpush1.msra.mxu0 0.0
    %3184 = vmatprep.subr.mxu0 0.0
    %3185 = vmatpush1.msra.mxu0 0.0
    %3186 = vmatprep.subr.mxu0 0.0
    %3187 = vmatpush1.msra.mxu0 0.0
    %3188 = vmatprep.subr.mxu0 0.0
    %3189 = vmatpush1.msra.mxu0 0.0
    %3190 = vmatprep.subr.mxu0 0.0
    %3191 = vmatpush1.msra.mxu0 0.0
    %3192 = vmatprep.subr.mxu0 0.0
    %3193 = vmatpush1.msra.mxu0 0.0
    %3194 = vmatprep.subr.mxu0 0.0
    %3195 = vmatpush1.msra.mxu0 0.0
    %3196 = vmatprep.subr.mxu0 0.0
    %3197 = vmatpush1.msra.mxu0 0.0
    %3198 = vmatprep.subr.mxu0 0.0
    %3199 = vmatpush1.msra.mxu0 0.0
    %3200 = vmatprep.subr.mxu0 0.0
    %3201 = vmatpush1.msra.mxu0 0.0
    %3202 = vmatprep.subr.mxu0 0.0
    %3203 = vmatpush1.msra.mxu0 0.0
    %3204 = vmatprep.subr.mxu0 0.0
    %3205 = vmatpush1.msra.mxu0 0.0
    %3206 = vmatprep.subr.mxu0 0.0
    %3207 = vmatpush1.msra.mxu0 0.0
    %3208 = vmatprep.subr.mxu0 0.0
    %3209 = vmatpush1.msra.mxu0 0.0
    %3210 = vmatprep.subr.mxu0 0.0
    %3211 = vmatpush1.msra.mxu0 0.0
    %3212 = vmatprep.subr.mxu0 0.0
    %3213 = vmatpush1.msra.mxu0 0.0
    %3214 = vmatprep.subr.mxu0 0.0
    %3215 = vmatpush1.msra.mxu0 0.0
    %3216 = vmatprep.subr.mxu0 0.0
    %3217 = vmatpush1.msra.mxu0 0.0
    %3218 = vmatprep.mubr.f32.mxu0 0.0
    %3219 = vmatmul.mubr.f32.gmra.mrb[0].mxu0 %v3152
    %v3220 = vpop.f32.mrb[0].mxu0
    %v3221 = vadd.f32 0.0, %v3220
    %v3222 = vpop.f32.mrb[0].mxu0
    %v3223 = vadd.f32 0.0, %v3222
    %3224 = vdwg.mxu0
    %v3225 = vsel %vm163, %v3221, %v3223
    %v3226 = vld [vmem:[#allocation4] sm:$0xc0]
    %v3227 = vld [vmem:[#allocation4 + $0x18] sm:$0x3]
    %v3229 = vrot.slane %v3226, 6
    %v3232 = vrot.slane %v3227, 6
    %v3234 = vsel %vm371, %v3229, %v3232
    %v3235 = vadd.f32 %v3234, %v3225
    %v3236 = vxor.u32 %v3235, 2147483648
    %v3237 = vmul.f32 %v3236, 1.442695
    %v3238 = vpow.pop %v3237
    %v3239 = vadd.f32 %v3238, 1.0
    %v3240 = vrcp.pop %v3239
    %v3241 = vmul.f32 1.0, %v3240
    %v3242 = vtanh.pop %v3235
    %v3243 = vld [vmem:[#allocation3] sm:$0xf]
    %3245 = vrot.lane.b32.xlu0 %v3243, 32
    %v3246 = vpop.permute.xlu0 %3245
    %v3248 = vmul.f32 %v3241, %v3246
    %3250 = vrot.lane.b32.xlu0 %v3242, 64
    %v3251 = vpop.permute.xlu0 %3250
    %v3253 = vmul.f32 %v3241, %v3251
    %3255 = vrot.lane.b32.xlu0 %v3253, 32
    %v3256 = vpop.permute.xlu0 %3255
    %v3258 = vadd.f32 %v3248, %v3256
    %v3259 = vtanh.pop %v3258
    %3261 = vrot.lane.b32.xlu0 %v3259, 64
    %v3262 = vpop.permute.xlu0 %3261
    %v3264 = vmul.f32 %v3241, %v3262
    %3266 = vrot.lane.b32.xlu0 %v3264, 32
    %v3267 = vpop.permute.xlu0 %3266
    %3269 = vst.msk [vmem:[#allocation2] sm:$0xf] %vm407, %v3267
    %3271 = vrot.lane.b32.xlu0 %v3258, 96
    %v3272 = vpop.permute.xlu0 %3271
    %3274 = vst.msk [vmem:[#allocation3] sm:$0xf] %vm407, %v3272
    %3275 = vst.msk [vmem:[#allocation5 + $0x6] sm:$0x3] %vm271, %v3267
    %3276 = vst.msk [vmem:[#allocation6 + $0x6] sm:$0xc] %vm415, %v3267
    %v3277 = vld [vmem:[#allocation2] sm:$0xf]
    %v3279 = vsel %vm290, %v3277, 0
    %3281 = vmatprep.subr.mxu0 %v2768
    %3282 = vmatpush1.msra.mxu0 %v2767
    %3283 = vmatprep.subr.mxu0 %v2770
    %3284 = vmatpush1.msra.mxu0 %v2769
    %3285 = vmatprep.subr.mxu0 %v2772
    %3286 = vmatpush1.msra.mxu0 %v2771
    %3287 = vmatprep.subr.mxu0 %v2774
    %3288 = vmatpush1.msra.mxu0 %v2773
    %3289 = vmatprep.subr.mxu0 0.0
    %3290 = vmatpush1.msra.mxu0 0.0
    %3291 = vmatprep.subr.mxu0 0.0
    %3292 = vmatpush1.msra.mxu0 0.0
    %3293 = vmatprep.subr.mxu0 0.0
    %3294 = vmatpush1.msra.mxu0 0.0
    %3295 = vmatprep.subr.mxu0 0.0
    %3296 = vmatpush1.msra.mxu0 0.0
    %3297 = vmatprep.subr.mxu0 0.0
    %3298 = vmatpush1.msra.mxu0 0.0
    %3299 = vmatprep.subr.mxu0 0.0
    %3300 = vmatpush1.msra.mxu0 0.0
    %3301 = vmatprep.subr.mxu0 0.0
    %3302 = vmatpush1.msra.mxu0 0.0
    %3303 = vmatprep.subr.mxu0 0.0
    %3304 = vmatpush1.msra.mxu0 0.0
    %3305 = vmatprep.subr.mxu0 0.0
    %3306 = vmatpush1.msra.mxu0 0.0
    %3307 = vmatprep.subr.mxu0 0.0
    %3308 = vmatpush1.msra.mxu0 0.0
    %3309 = vmatprep.subr.mxu0 0.0
    %3310 = vmatpush1.msra.mxu0 0.0
    %3311 = vmatprep.subr.mxu0 0.0
    %3312 = vmatpush1.msra.mxu0 0.0
    %3313 = vmatprep.subr.mxu0 0.0
    %3314 = vmatpush1.msra.mxu0 0.0
    %3315 = vmatprep.subr.mxu0 0.0
    %3316 = vmatpush1.msra.mxu0 0.0
    %3317 = vmatprep.subr.mxu0 0.0
    %3318 = vmatpush1.msra.mxu0 0.0
    %3319 = vmatprep.subr.mxu0 0.0
    %3320 = vmatpush1.msra.mxu0 0.0
    %3321 = vmatprep.subr.mxu0 0.0
    %3322 = vmatpush1.msra.mxu0 0.0
    %3323 = vmatprep.subr.mxu0 0.0
    %3324 = vmatpush1.msra.mxu0 0.0
    %3325 = vmatprep.subr.mxu0 0.0
    %3326 = vmatpush1.msra.mxu0 0.0
    %3327 = vmatprep.subr.mxu0 0.0
    %3328 = vmatpush1.msra.mxu0 0.0
    %3329 = vmatprep.subr.mxu0 0.0
    %3330 = vmatpush1.msra.mxu0 0.0
    %3331 = vmatprep.subr.mxu0 0.0
    %3332 = vmatpush1.msra.mxu0 0.0
    %3333 = vmatprep.subr.mxu0 0.0
    %3334 = vmatpush1.msra.mxu0 0.0
    %3335 = vmatprep.subr.mxu0 0.0
    %3336 = vmatpush1.msra.mxu0 0.0
    %3337 = vmatprep.subr.mxu0 0.0
    %3338 = vmatpush1.msra.mxu0 0.0
    %3339 = vmatprep.subr.mxu0 0.0
    %3340 = vmatpush1.msra.mxu0 0.0
    %3341 = vmatprep.subr.mxu0 0.0
    %3342 = vmatpush1.msra.mxu0 0.0
    %3343 = vmatprep.subr.mxu0 0.0
    %3344 = vmatpush1.msra.mxu0 0.0
    %3345 = vmatprep.mubr.f32.mxu0 0.0
    %3346 = vmatmul.mubr.f32.gmra.mrb[0].mxu0 %v3279
    %v3347 = vpop.f32.mrb[0].mxu0
    %v3348 = vadd.f32 0.0, %v3347
    %v3349 = vpop.f32.mrb[0].mxu0
    %v3350 = vadd.f32 0.0, %v3349
    %3351 = vdwg.mxu0
    %v3352 = vsel %vm163, %v3348, %v3350
    %v3353 = vld [vmem:[#allocation4 + $0x10] sm:$0x3]
    %v3354 = vld [vmem:[#allocation4 + $0x8] sm:$0xc0]
    %v3356 = vrot.slane %v3354, 4
    %v3358 = vsel %vm371, %v3353, %v3356
    %v3359 = vadd.f32 %v3358, %v3352
    %v3360 = vxor.u32 %v3359, 2147483648
    %v3361 = vmul.f32 %v3360, 1.442695
    %v3362 = vpow.pop %v3361
    %v3363 = vadd.f32 %v3362, 1.0
    %v3364 = vrcp.pop %v3363
    %v3365 = vmul.f32 1.0, %v3364
    %v3366 = vtanh.pop %v3359
    %v3367 = vld [vmem:[#allocation3] sm:$0xf]
    %3369 = vrot.lane.b32.xlu0 %v3367, 32
    %v3370 = vpop.permute.xlu0 %3369
    %v3372 = vmul.f32 %v3365, %v3370
    %3374 = vrot.lane.b32.xlu0 %v3366, 64
    %v3375 = vpop.permute.xlu0 %3374
    %v3377 = vmul.f32 %v3365, %v3375
    %3379 = vrot.lane.b32.xlu0 %v3377, 32
    %v3380 = vpop.permute.xlu0 %3379
    %v3382 = vadd.f32 %v3372, %v3380
    %v3383 = vtanh.pop %v3382
    %3385 = vrot.lane.b32.xlu0 %v3383, 64
    %v3386 = vpop.permute.xlu0 %3385
    %v3388 = vmul.f32 %v3365, %v3386
    %3390 = vrot.lane.b32.xlu0 %v3388, 32
    %v3391 = vpop.permute.xlu0 %3390
    %3393 = vst.msk [vmem:[#allocation2] sm:$0xf] %vm407, %v3391
    %3395 = vrot.lane.b32.xlu0 %v3382, 96
    %v3396 = vpop.permute.xlu0 %3395
    %3398 = vst.msk [vmem:[#allocation3] sm:$0xf] %vm407, %v3396
    %3399 = vst.msk [vmem:[#allocation5 + $0x8] sm:$0x3] %vm271, %v3391
    %3400 = vst.msk [vmem:[#allocation6 + $0x4] sm:$0xc] %vm415, %v3391
    %v3401 = vld [vmem:[#allocation2] sm:$0xf]
    %v3403 = vsel %vm290, %v3401, 0
    %3405 = vmatprep.subr.mxu0 %v2768
    %3406 = vmatpush1.msra.mxu0 %v2767
    %3407 = vmatprep.subr.mxu0 %v2770
    %3408 = vmatpush1.msra.mxu0 %v2769
    %3409 = vmatprep.subr.mxu0 %v2772
    %3410 = vmatpush1.msra.mxu0 %v2771
    %3411 = vmatprep.subr.mxu0 %v2774
    %3412 = vmatpush1.msra.mxu0 %v2773
    %3413 = vmatprep.subr.mxu0 0.0
    %3414 = vmatpush1.msra.mxu0 0.0
    %3415 = vmatprep.subr.mxu0 0.0
    %3416 = vmatpush1.msra.mxu0 0.0
    %3417 = vmatprep.subr.mxu0 0.0
    %3418 = vmatpush1.msra.mxu0 0.0
    %3419 = vmatprep.subr.mxu0 0.0
    %3420 = vmatpush1.msra.mxu0 0.0
    %3421 = vmatprep.subr.mxu0 0.0
    %3422 = vmatpush1.msra.mxu0 0.0
    %3423 = vmatprep.subr.mxu0 0.0
    %3424 = vmatpush1.msra.mxu0 0.0
    %3425 = vmatprep.subr.mxu0 0.0
    %3426 = vmatpush1.msra.mxu0 0.0
    %3427 = vmatprep.subr.mxu0 0.0
    %3428 = vmatpush1.msra.mxu0 0.0
    %3429 = vmatprep.subr.mxu0 0.0
    %3430 = vmatpush1.msra.mxu0 0.0
    %3431 = vmatprep.subr.mxu0 0.0
    %3432 = vmatpush1.msra.mxu0 0.0
    %3433 = vmatprep.subr.mxu0 0.0
    %3434 = vmatpush1.msra.mxu0 0.0
    %3435 = vmatprep.subr.mxu0 0.0
    %3436 = vmatpush1.msra.mxu0 0.0
    %3437 = vmatprep.subr.mxu0 0.0
    %3438 = vmatpush1.msra.mxu0 0.0
    %3439 = vmatprep.subr.mxu0 0.0
    %3440 = vmatpush1.msra.mxu0 0.0
    %3441 = vmatprep.subr.mxu0 0.0
    %3442 = vmatpush1.msra.mxu0 0.0
    %3443 = vmatprep.subr.mxu0 0.0
    %3444 = vmatpush1.msra.mxu0 0.0
    %3445 = vmatprep.subr.mxu0 0.0
    %3446 = vmatpush1.msra.mxu0 0.0
    %3447 = vmatprep.subr.mxu0 0.0
    %3448 = vmatpush1.msra.mxu0 0.0
    %3449 = vmatprep.subr.mxu0 0.0
    %3450 = vmatpush1.msra.mxu0 0.0
    %3451 = vmatprep.subr.mxu0 0.0
    %3452 = vmatpush1.msra.mxu0 0.0
    %3453 = vmatprep.subr.mxu0 0.0
    %3454 = vmatpush1.msra.mxu0 0.0
    %3455 = vmatprep.subr.mxu0 0.0
    %3456 = vmatpush1.msra.mxu0 0.0
    %3457 = vmatprep.subr.mxu0 0.0
    %3458 = vmatpush1.msra.mxu0 0.0
    %3459 = vmatprep.subr.mxu0 0.0
    %3460 = vmatpush1.msra.mxu0 0.0
    %3461 = vmatprep.subr.mxu0 0.0
    %3462 = vmatpush1.msra.mxu0 0.0
    %3463 = vmatprep.subr.mxu0 0.0
    %3464 = vmatpush1.msra.mxu0 0.0
    %3465 = vmatprep.subr.mxu0 0.0
    %3466 = vmatpush1.msra.mxu0 0.0
    %3467 = vmatprep.subr.mxu0 0.0
    %3468 = vmatpush1.msra.mxu0 0.0
    %3469 = vmatprep.mubr.f32.mxu0 0.0
    %3470 = vmatmul.mubr.f32.gmra.mrb[0].mxu0 %v3403
    %v3471 = vpop.f32.mrb[0].mxu0
    %v3472 = vadd.f32 0.0, %v3471
    %v3473 = vpop.f32.mrb[0].mxu0
    %v3474 = vadd.f32 0.0, %v3473
    %3475 = vdwg.mxu0
    %v3476 = vsel %vm163, %v3472, %v3474
    %v3477 = vld [vmem:[#allocation4 + $0x10] sm:$0xc]
    %v3478 = vld [vmem:[#allocation4 + $0x8] sm:$0x30]
    %v3480 = vrot.slane %v3477, 2
    %v3483 = vrot.slane %v3478, 2
    %v3485 = vsel %vm371, %v3480, %v3483
    %v3486 = vadd.f32 %v3485, %v3476
    %v3487 = vxor.u32 %v3486, 2147483648
    %v3488 = vmul.f32 %v3487, 1.442695
    %v3489 = vpow.pop %v3488
    %v3490 = vadd.f32 %v3489, 1.0
    %v3491 = vrcp.pop %v3490
    %v3492 = vmul.f32 1.0, %v3491
    %v3493 = vtanh.pop %v3486
    %v3494 = vld [vmem:[#allocation3] sm:$0xf]
    %3496 = vrot.lane.b32.xlu0 %v3494, 32
    %v3497 = vpop.permute.xlu0 %3496
    %v3499 = vmul.f32 %v3492, %v3497
    %3501 = vrot.lane.b32.xlu0 %v3493, 64
    %v3502 = vpop.permute.xlu0 %3501
    %v3504 = vmul.f32 %v3492, %v3502
    %3506 = vrot.lane.b32.xlu0 %v3504, 32
    %v3507 = vpop.permute.xlu0 %3506
    %v3509 = vadd.f32 %v3499, %v3507
    %v3510 = vtanh.pop %v3509
    %3512 = vrot.lane.b32.xlu0 %v3510, 64
    %v3513 = vpop.permute.xlu0 %3512
    %v3515 = vmul.f32 %v3492, %v3513
    %3517 = vrot.lane.b32.xlu0 %v3515, 32
    %v3518 = vpop.permute.xlu0 %3517
    %3520 = vst.msk [vmem:[#allocation2] sm:$0xf] %vm407, %v3518
    %3522 = vrot.lane.b32.xlu0 %v3509, 96
    %v3523 = vpop.permute.xlu0 %3522
    %3525 = vst.msk [vmem:[#allocation3] sm:$0xf] %vm407, %v3523
    %3526 = vst.msk [vmem:[#allocation5 + $0xa] sm:$0x3] %vm271, %v3518
    %3527 = vst.msk [vmem:[#allocation6 + $0x2] sm:$0xc] %vm415, %v3518
    %v3528 = vld [vmem:[#allocation2] sm:$0xf]
    %v3530 = vsel %vm290, %v3528, 0
    %3532 = vmatprep.subr.mxu0 %v2768
    %3533 = vmatpush1.msra.mxu0 %v2767
    %3534 = vmatprep.subr.mxu0 %v2770
    %3535 = vmatpush1.msra.mxu0 %v2769
    %3536 = vmatprep.subr.mxu0 %v2772
    %3537 = vmatpush1.msra.mxu0 %v2771
    %3538 = vmatprep.subr.mxu0 %v2774
    %3539 = vmatpush1.msra.mxu0 %v2773
    %3540 = vmatprep.subr.mxu0 0.0
    %3541 = vmatpush1.msra.mxu0 0.0
    %3542 = vmatprep.subr.mxu0 0.0
    %3543 = vmatpush1.msra.mxu0 0.0
    %3544 = vmatprep.subr.mxu0 0.0
    %3545 = vmatpush1.msra.mxu0 0.0
    %3546 = vmatprep.subr.mxu0 0.0
    %3547 = vmatpush1.msra.mxu0 0.0
    %3548 = vmatprep.subr.mxu0 0.0
    %3549 = vmatpush1.msra.mxu0 0.0
    %3550 = vmatprep.subr.mxu0 0.0
    %3551 = vmatpush1.msra.mxu0 0.0
    %3552 = vmatprep.subr.mxu0 0.0
    %3553 = vmatpush1.msra.mxu0 0.0
    %3554 = vmatprep.subr.mxu0 0.0
    %3555 = vmatpush1.msra.mxu0 0.0
    %3556 = vmatprep.subr.mxu0 0.0
    %3557 = vmatpush1.msra.mxu0 0.0
    %3558 = vmatprep.subr.mxu0 0.0
    %3559 = vmatpush1.msra.mxu0 0.0
    %3560 = vmatprep.subr.mxu0 0.0
    %3561 = vmatpush1.msra.mxu0 0.0
    %3562 = vmatprep.subr.mxu0 0.0
    %3563 = vmatpush1.msra.mxu0 0.0
    %3564 = vmatprep.subr.mxu0 0.0
    %3565 = vmatpush1.msra.mxu0 0.0
    %3566 = vmatprep.subr.mxu0 0.0
    %3567 = vmatpush1.msra.mxu0 0.0
    %3568 = vmatprep.subr.mxu0 0.0
    %3569 = vmatpush1.msra.mxu0 0.0
    %3570 = vmatprep.subr.mxu0 0.0
    %3571 = vmatpush1.msra.mxu0 0.0
    %3572 = vmatprep.subr.mxu0 0.0
    %3573 = vmatpush1.msra.mxu0 0.0
    %3574 = vmatprep.subr.mxu0 0.0
    %3575 = vmatpush1.msra.mxu0 0.0
    %3576 = vmatprep.subr.mxu0 0.0
    %3577 = vmatpush1.msra.mxu0 0.0
    %3578 = vmatprep.subr.mxu0 0.0
    %3579 = vmatpush1.msra.mxu0 0.0
    %3580 = vmatprep.subr.mxu0 0.0
    %3581 = vmatpush1.msra.mxu0 0.0
    %3582 = vmatprep.subr.mxu0 0.0
    %3583 = vmatpush1.msra.mxu0 0.0
    %3584 = vmatprep.subr.mxu0 0.0
    %3585 = vmatpush1.msra.mxu0 0.0
    %3586 = vmatprep.subr.mxu0 0.0
    %3587 = vmatpush1.msra.mxu0 0.0
    %3588 = vmatprep.subr.mxu0 0.0
    %3589 = vmatpush1.msra.mxu0 0.0
    %3590 = vmatprep.subr.mxu0 0.0
    %3591 = vmatpush1.msra.mxu0 0.0
    %3592 = vmatprep.subr.mxu0 0.0
    %3593 = vmatpush1.msra.mxu0 0.0
    %3594 = vmatprep.subr.mxu0 0.0
    %3595 = vmatpush1.msra.mxu0 0.0
    %3596 = vmatprep.mubr.f32.mxu0 0.0
    %3597 = vmatmul.mubr.f32.gmra.mrb[0].mxu0 %v3530
    %v3598 = vpop.f32.mrb[0].mxu0
    %v3599 = vadd.f32 0.0, %v3598
    %v3600 = vpop.f32.mrb[0].mxu0
    %v3601 = vadd.f32 0.0, %v3600
    %3602 = vdwg.mxu0
    %v3603 = vsel %vm163, %v3599, %v3601
    %v3604 = vld [vmem:[#allocation4 + $0x10] sm:$0x30]
    %v3605 = vld [vmem:[#allocation4 + $0x8] sm:$0xc]
    %v3607 = vrot.slane %v3604, 4
    %v3609 = vsel %vm371, %v3607, %v3605
    %v3610 = vadd.f32 %v3609, %v3603
    %v3611 = vxor.u32 %v3610, 2147483648
    %v3612 = vmul.f32 %v3611, 1.442695
    %v3613 = vpow.pop %v3612
    %v3614 = vadd.f32 %v3613, 1.0
    %v3615 = vrcp.pop %v3614
    %v3616 = vmul.f32 1.0, %v3615
    %v3617 = vtanh.pop %v3610
    %v3618 = vld [vmem:[#allocation3] sm:$0xf]
    %3620 = vrot.lane.b32.xlu0 %v3618, 32
    %v3621 = vpop.permute.xlu0 %3620
    %v3623 = vmul.f32 %v3616, %v3621
    %3625 = vrot.lane.b32.xlu0 %v3617, 64
    %v3626 = vpop.permute.xlu0 %3625
    %v3628 = vmul.f32 %v3616, %v3626
    %3630 = vrot.lane.b32.xlu0 %v3628, 32
    %v3631 = vpop.permute.xlu0 %3630
    %v3633 = vadd.f32 %v3623, %v3631
    %v3634 = vtanh.pop %v3633
    %3636 = vrot.lane.b32.xlu0 %v3634, 64
    %v3637 = vpop.permute.xlu0 %3636
    %v3639 = vmul.f32 %v3616, %v3637
    %3641 = vrot.lane.b32.xlu0 %v3639, 32
    %v3642 = vpop.permute.xlu0 %3641
    %3644 = vst.msk [vmem:[#allocation2] sm:$0xf] %vm407, %v3642
    %3646 = vrot.lane.b32.xlu0 %v3633, 96
    %v3647 = vpop.permute.xlu0 %3646
    %3649 = vst.msk [vmem:[#allocation3] sm:$0xf] %vm407, %v3647
    %3650 = vst.msk [vmem:[#allocation5 + $0xc] sm:$0x3] %vm271, %v3642
    %3651 = vst.msk [vmem:[#allocation6] sm:$0xc] %vm415, %v3642
    %v3652 = vld [vmem:[#allocation2] sm:$0xf]
    %v3654 = vsel %vm290, %v3652, 0
    %3656 = vmatprep.subr.mxu0 %v2768
    %3657 = vmatpush1.msra.mxu0 %v2767
    %3658 = vmatprep.subr.mxu0 %v2770
    %3659 = vmatpush1.msra.mxu0 %v2769
    %3660 = vmatprep.subr.mxu0 %v2772
    %3661 = vmatpush1.msra.mxu0 %v2771
    %3662 = vmatprep.subr.mxu0 %v2774
    %3663 = vmatpush1.msra.mxu0 %v2773
    %3664 = vmatprep.subr.mxu0 0.0
    %3665 = vmatpush1.msra.mxu0 0.0
    %3666 = vmatprep.subr.mxu0 0.0
    %3667 = vmatpush1.msra.mxu0 0.0
    %3668 = vmatprep.subr.mxu0 0.0
    %3669 = vmatpush1.msra.mxu0 0.0
    %3670 = vmatprep.subr.mxu0 0.0
    %3671 = vmatpush1.msra.mxu0 0.0
    %3672 = vmatprep.subr.mxu0 0.0
    %3673 = vmatpush1.msra.mxu0 0.0
    %3674 = vmatprep.subr.mxu0 0.0
    %3675 = vmatpush1.msra.mxu0 0.0
    %3676 = vmatprep.subr.mxu0 0.0
    %3677 = vmatpush1.msra.mxu0 0.0
    %3678 = vmatprep.subr.mxu0 0.0
    %3679 = vmatpush1.msra.mxu0 0.0
    %3680 = vmatprep.subr.mxu0 0.0
    %3681 = vmatpush1.msra.mxu0 0.0
    %3682 = vmatprep.subr.mxu0 0.0
    %3683 = vmatpush1.msra.mxu0 0.0
    %3684 = vmatprep.subr.mxu0 0.0
    %3685 = vmatpush1.msra.mxu0 0.0
    %3686 = vmatprep.subr.mxu0 0.0
    %3687 = vmatpush1.msra.mxu0 0.0
    %3688 = vmatprep.subr.mxu0 0.0
    %3689 = vmatpush1.msra.mxu0 0.0
    %3690 = vmatprep.subr.mxu0 0.0
    %3691 = vmatpush1.msra.mxu0 0.0
    %3692 = vmatprep.subr.mxu0 0.0
    %3693 = vmatpush1.msra.mxu0 0.0
    %3694 = vmatprep.subr.mxu0 0.0
    %3695 = vmatpush1.msra.mxu0 0.0
    %3696 = vmatprep.subr.mxu0 0.0
    %3697 = vmatpush1.msra.mxu0 0.0
    %3698 = vmatprep.subr.mxu0 0.0
    %3699 = vmatpush1.msra.mxu0 0.0
    %3700 = vmatprep.subr.mxu0 0.0
    %3701 = vmatpush1.msra.mxu0 0.0
    %3702 = vmatprep.subr.mxu0 0.0
    %3703 = vmatpush1.msra.mxu0 0.0
    %3704 = vmatprep.subr.mxu0 0.0
    %3705 = vmatpush1.msra.mxu0 0.0
    %3706 = vmatprep.subr.mxu0 0.0
    %3707 = vmatpush1.msra.mxu0 0.0
    %3708 = vmatprep.subr.mxu0 0.0
    %3709 = vmatpush1.msra.mxu0 0.0
    %3710 = vmatprep.subr.mxu0 0.0
    %3711 = vmatpush1.msra.mxu0 0.0
    %3712 = vmatprep.subr.mxu0 0.0
    %3713 = vmatpush1.msra.mxu0 0.0
    %3714 = vmatprep.subr.mxu0 0.0
    %3715 = vmatpush1.msra.mxu0 0.0
    %3716 = vmatprep.subr.mxu0 0.0
    %3717 = vmatpush1.msra.mxu0 0.0
    %3718 = vmatprep.subr.mxu0 0.0
    %3719 = vmatpush1.msra.mxu0 0.0
    %3720 = vmatprep.mubr.f32.mxu0 0.0
    %3721 = vmatmul.mubr.f32.gmra.mrb[0].mxu0 %v3654
    %v3722 = vpop.f32.mrb[0].mxu0
    %v3723 = vadd.f32 0.0, %v3722
    %v3724 = vpop.f32.mrb[0].mxu0
    %v3725 = vadd.f32 0.0, %v3724
    %3726 = vdwg.mxu0
    %v3727 = vsel %vm163, %v3723, %v3725
    %v3728 = vld [vmem:[#allocation4 + $0x10] sm:$0xc0]
    %v3729 = vld [vmem:[#allocation4 + $0x8] sm:$0x3]
    %v3731 = vrot.slane %v3728, 6
    %v3734 = vrot.slane %v3729, 6
    %v3736 = vsel %vm371, %v3731, %v3734
    %v3737 = vadd.f32 %v3736, %v3727
    %v3738 = vxor.u32 %v3737, 2147483648
    %v3739 = vmul.f32 %v3738, 1.442695
    %v3740 = vpow.pop %v3739
    %v3741 = vadd.f32 %v3740, 1.0
    %v3742 = vrcp.pop %v3741
    %v3743 = vmul.f32 1.0, %v3742
    %v3744 = vtanh.pop %v3737
    %v3745 = vld [vmem:[#allocation3] sm:$0xf]
    %3747 = vrot.lane.b32.xlu0 %v3745, 32
    %v3748 = vpop.permute.xlu0 %3747
    %v3750 = vmul.f32 %v3743, %v3748
    %3752 = vrot.lane.b32.xlu0 %v3744, 64
    %v3753 = vpop.permute.xlu0 %3752
    %v3755 = vmul.f32 %v3743, %v3753
    %3757 = vrot.lane.b32.xlu0 %v3755, 32
    %v3758 = vpop.permute.xlu0 %3757
    %v3760 = vadd.f32 %v3750, %v3758
    %v3761 = vtanh.pop %v3760
    %3763 = vrot.lane.b32.xlu0 %v3761, 64
    %v3764 = vpop.permute.xlu0 %3763
    %v3766 = vmul.f32 %v3743, %v3764
    %3768 = vrot.lane.b32.xlu0 %v3766, 32
    %v3769 = vpop.permute.xlu0 %3768
    %3771 = vst.msk [vmem:[#allocation2] sm:$0xf] %vm407, %v3769
    %3773 = vrot.lane.b32.xlu0 %v3760, 96
    %v3774 = vpop.permute.xlu0 %3773
    %3776 = vst.msk [vmem:[#allocation3] sm:$0xf] %vm407, %v3774
    %3777 = vst.msk [vmem:[#allocation5 + $0xe] sm:$0x3] %vm271, %v3769
    %3778 = vst.msk [vmem:[#allocation6 - $0x2] sm:$0xc] %vm415, %v3769
    %v3779 = vld [vmem:[#allocation2] sm:$0x3]
    %s3780 = scalar_lea.vmem [#allocation23], 8
    %3781 = vst.msk [vmem:[%s3780] sm:$0x3] %vm271, %v3779
    %v3782 = vld [vmem:[#allocation2 + $0x2] sm:$0x3]
    %s3783 = scalar_lea.vmem [#allocation23], 10
    %3784 = vst.msk [vmem:[%s3783] sm:$0x3] %vm271, %v3782
    %v3785 = vld [vmem:[#allocation3] sm:$0x3]
    %s3786 = scalar_lea.vmem [#allocation24], 8
    %3787 = vst.msk [vmem:[%s3786] sm:$0x3] %vm271, %v3785
    %v3788 = vld [vmem:[#allocation3 + $0x2] sm:$0x3]
    %s3789 = scalar_lea.vmem [#allocation24], 10
    %3790 = vst.msk [vmem:[%s3789] sm:$0x3] %vm271, %v3788
    %v3791 = vld [vmem:[#allocation21] sm:$0xff]
    %v3792 = vld [vmem:[#allocation21 + $0x8] sm:$0xff]
    %v3793 = vld [vmem:[#allocation21 + $0x10] sm:$0xff]
    %v3794 = vld [vmem:[#allocation21 + $0x18] sm:$0xff]
    %v3795 = vld [vmem:[#allocation21 + $0x20] sm:$0xff]
    %v3796 = vld [vmem:[#allocation21 + $0x28] sm:$0xff]
    %v3797 = vld [vmem:[#allocation21 + $0x30] sm:$0xff]
    %v3798 = vld [vmem:[#allocation21 + $0x38] sm:$0xff]
    %v3799 = vld [vmem:[#allocation5] sm:$0xff]
    %v3800 = vld [vmem:[#allocation5 + $0x8] sm:$0xff]
    %v3801 = vld [vmem:[#allocation6] sm:$0xff]
    %v3802 = vld [vmem:[#allocation6 + $0x8] sm:$0xff]
    %v3804 = vsel %vm290, %v3801, 0
    %v3807 = vsel %vm290, %v3802, 0
    %3809 = vmatprep.subr.mxu0 0.0
    %3810 = vmatpush1.msra.mxu0 %v3795
    %3811 = vmatprep.subr.mxu0 0.0
    %3812 = vmatpush1.msra.mxu0 %v3796
    %3813 = vmatprep.subr.mxu0 0.0
    %3814 = vmatpush1.msra.mxu0 %v3797
    %3815 = vmatprep.subr.mxu0 0.0
    %3816 = vmatpush1.msra.mxu0 %v3798
    %3817 = vmatprep.subr.mxu0 0.0
    %3818 = vmatpush1.msra.mxu0 0.0
    %3819 = vmatprep.subr.mxu0 0.0
    %3820 = vmatpush1.msra.mxu0 0.0
    %3821 = vmatprep.subr.mxu0 0.0
    %3822 = vmatpush1.msra.mxu0 0.0
    %3823 = vmatprep.subr.mxu0 0.0
    %3824 = vmatpush1.msra.mxu0 0.0
    %3825 = vmatprep.subr.mxu0 0.0
    %3826 = vmatpush1.msra.mxu0 0.0
    %3827 = vmatprep.subr.mxu0 0.0
    %3828 = vmatpush1.msra.mxu0 0.0
    %3829 = vmatprep.subr.mxu0 0.0
    %3830 = vmatpush1.msra.mxu0 0.0
    %3831 = vmatprep.subr.mxu0 0.0
    %3832 = vmatpush1.msra.mxu0 0.0
    %3833 = vmatprep.subr.mxu0 0.0
    %3834 = vmatpush1.msra.mxu0 0.0
    %3835 = vmatprep.subr.mxu0 0.0
    %3836 = vmatpush1.msra.mxu0 0.0
    %3837 = vmatprep.subr.mxu0 0.0
    %3838 = vmatpush1.msra.mxu0 0.0
    %3839 = vmatprep.subr.mxu0 0.0
    %3840 = vmatpush1.msra.mxu0 0.0
    %3841 = vmatprep.subr.mxu0 0.0
    %3842 = vmatpush1.msra.mxu0 0.0
    %3843 = vmatprep.subr.mxu0 0.0
    %3844 = vmatpush1.msra.mxu0 0.0
    %3845 = vmatprep.subr.mxu0 0.0
    %3846 = vmatpush1.msra.mxu0 0.0
    %3847 = vmatprep.subr.mxu0 0.0
    %3848 = vmatpush1.msra.mxu0 0.0
    %3849 = vmatprep.subr.mxu0 0.0
    %3850 = vmatpush1.msra.mxu0 0.0
    %3851 = vmatprep.subr.mxu0 0.0
    %3852 = vmatpush1.msra.mxu0 0.0
    %3853 = vmatprep.subr.mxu0 0.0
    %3854 = vmatpush1.msra.mxu0 0.0
    %3855 = vmatprep.subr.mxu0 0.0
    %3856 = vmatpush1.msra.mxu0 0.0
    %3857 = vmatprep.subr.mxu0 0.0
    %3858 = vmatpush1.msra.mxu0 0.0
    %3859 = vmatprep.subr.mxu0 0.0
    %3860 = vmatpush1.msra.mxu0 0.0
    %3861 = vmatprep.subr.mxu0 0.0
    %3862 = vmatpush1.msra.mxu0 0.0
    %3863 = vmatprep.subr.mxu0 0.0
    %3864 = vmatpush1.msra.mxu0 0.0
    %3865 = vmatprep.subr.mxu0 0.0
    %3866 = vmatpush1.msra.mxu0 0.0
    %3867 = vmatprep.subr.mxu0 0.0
    %3868 = vmatpush1.msra.mxu0 0.0
    %3869 = vmatprep.subr.mxu0 0.0
    %3870 = vmatpush1.msra.mxu0 0.0
    %3871 = vmatprep.subr.mxu0 0.0
    %3872 = vmatpush1.msra.mxu0 0.0
    %3873 = vmatprep.mubr.f32.mxu0 0.0
    %3874 = vmatmul.mubr.f32.gmra.mrb[0].mxu0 %v3804
    %v3875 = vpop.f32.mrb[0].mxu0
    %v3876 = vadd.f32 0.0, %v3875
    %v3877 = vpop.f32.mrb[0].mxu0
    %3878 = vmatprep.mubr.f32.mxu0 0.0
    %3879 = vmatmul.mubr.f32.gmra.mrb[0].mxu0 %v3807
    %v3880 = vpop.f32.mrb[0].mxu0
    %v3881 = vadd.f32 0.0, %v3880
    %v3882 = vpop.f32.mrb[0].mxu0
    %3883 = vdwg.mxu0
    %v3885 = vsel %vm290, %v3799, 0
    %v3888 = vsel %vm290, %v3800, 0
    %3890 = vmatprep.subr.mxu0 0.0
    %3891 = vmatpush1.msra.mxu0 %v3791
    %3892 = vmatprep.subr.mxu0 0.0
    %3893 = vmatpush1.msra.mxu0 %v3792
    %3894 = vmatprep.subr.mxu0 0.0
    %3895 = vmatpush1.msra.mxu0 %v3793
    %3896 = vmatprep.subr.mxu0 0.0
    %3897 = vmatpush1.msra.mxu0 %v3794
    %3898 = vmatprep.subr.mxu0 0.0
    %3899 = vmatpush1.msra.mxu0 0.0
    %3900 = vmatprep.subr.mxu0 0.0
    %3901 = vmatpush1.msra.mxu0 0.0
    %3902 = vmatprep.subr.mxu0 0.0
    %3903 = vmatpush1.msra.mxu0 0.0
    %3904 = vmatprep.subr.mxu0 0.0
    %3905 = vmatpush1.msra.mxu0 0.0
    %3906 = vmatprep.subr.mxu0 0.0
    %3907 = vmatpush1.msra.mxu0 0.0
    %3908 = vmatprep.subr.mxu0 0.0
    %3909 = vmatpush1.msra.mxu0 0.0
    %3910 = vmatprep.subr.mxu0 0.0
    %3911 = vmatpush1.msra.mxu0 0.0
    %3912 = vmatprep.subr.mxu0 0.0
    %3913 = vmatpush1.msra.mxu0 0.0
    %3914 = vmatprep.subr.mxu0 0.0
    %3915 = vmatpush1.msra.mxu0 0.0
    %3916 = vmatprep.subr.mxu0 0.0
    %3917 = vmatpush1.msra.mxu0 0.0
    %3918 = vmatprep.subr.mxu0 0.0
    %3919 = vmatpush1.msra.mxu0 0.0
    %3920 = vmatprep.subr.mxu0 0.0
    %3921 = vmatpush1.msra.mxu0 0.0
    %3922 = vmatprep.subr.mxu0 0.0
    %3923 = vmatpush1.msra.mxu0 0.0
    %3924 = vmatprep.subr.mxu0 0.0
    %3925 = vmatpush1.msra.mxu0 0.0
    %3926 = vmatprep.subr.mxu0 0.0
    %3927 = vmatpush1.msra.mxu0 0.0
    %3928 = vmatprep.subr.mxu0 0.0
    %3929 = vmatpush1.msra.mxu0 0.0
    %3930 = vmatprep.subr.mxu0 0.0
    %3931 = vmatpush1.msra.mxu0 0.0
    %3932 = vmatprep.subr.mxu0 0.0
    %3933 = vmatpush1.msra.mxu0 0.0
    %3934 = vmatprep.subr.mxu0 0.0
    %3935 = vmatpush1.msra.mxu0 0.0
    %3936 = vmatprep.subr.mxu0 0.0
    %3937 = vmatpush1.msra.mxu0 0.0
    %3938 = vmatprep.subr.mxu0 0.0
    %3939 = vmatpush1.msra.mxu0 0.0
    %3940 = vmatprep.subr.mxu0 0.0
    %3941 = vmatpush1.msra.mxu0 0.0
    %3942 = vmatprep.subr.mxu0 0.0
    %3943 = vmatpush1.msra.mxu0 0.0
    %3944 = vmatprep.subr.mxu0 0.0
    %3945 = vmatpush1.msra.mxu0 0.0
    %3946 = vmatprep.subr.mxu0 0.0
    %3947 = vmatpush1.msra.mxu0 0.0
    %3948 = vmatprep.subr.mxu0 0.0
    %3949 = vmatpush1.msra.mxu0 0.0
    %3950 = vmatprep.subr.mxu0 0.0
    %3951 = vmatpush1.msra.mxu0 0.0
    %3952 = vmatprep.subr.mxu0 0.0
    %3953 = vmatpush1.msra.mxu0 0.0
    %3954 = vmatprep.mubr.f32.mxu0 0.0
    %3955 = vmatmul.mubr.f32.gmra.mrb[0].mxu0 %v3885
    %v3956 = vpop.f32.mrb[0].mxu0
    %v3957 = vadd.f32 %v3876, %v3956
    %v3958 = vpop.f32.mrb[0].mxu0
    %3959 = vmatprep.mubr.f32.mxu0 0.0
    %3960 = vmatmul.mubr.f32.gmra.mrb[0].mxu0 %v3888
    %v3961 = vpop.f32.mrb[0].mxu0
    %v3962 = vadd.f32 %v3881, %v3961
    %v3963 = vpop.f32.mrb[0].mxu0
    %3964 = vdwg.mxu0
    %v3965 = vld [vmem:[%s13] sm:$0x1]
    %v3967 = vlaneseq
    %v3968 = vshrl.u32 %v3967, 7
    %v3969 = vsub.s32 0, %v3968
    %v3970 = vrot.slane %v3965, %v3969
    %v3972 = vadd.f32 %v3957, %v3970
    %v3973 = vadd.f32 %v3962, %v3970
    %3974 = vmax.xlane.f32.xlu0 %v3972
    %v3975 = vpop.xlane.xlu0 %3974
    %3976 = vmax.xlane.f32.xlu0 %v3973
    %v3977 = vpop.xlane.xlu0 %3976
    %v3978 = vsub.f32 %v3972, %v3975
    %v3979 = vsub.f32 %v3973, %v3977
    %v3980 = vmul.f32 %v3978, 1.442695
    %v3981 = vpow.pop %v3980
    %v3982 = vmul.f32 %v3979, 1.442695
    %v3983 = vpow.pop %v3982
    %3984 = vadd.xlane.f32.xlu0 %v3981
    %v3985 = vpop.xlane.xlu0 %3984
    %3986 = vadd.xlane.f32.xlu0 %v3983
    %v3987 = vpop.xlane.xlu0 %3986
    %v3988 = vlog2.pop %v3985
    %v3989 = vmul.f32 %v3988, 0.6931472
    %v3990 = vlog2.pop %v3987
    %v3991 = vmul.f32 %v3990, 0.6931472
    %v3992 = vsub.f32 %v3978, %v3989
    %v3993 = vsub.f32 %v3979, %v3991
    %3994 = vst [vmem:[%s14] sm:$0xff] %v3992
    %3995 = vst [vmem:[%s14 + $0x8] sm:$0xff] %v3993
    // Predicated region
    $region90: #{language_model_forward.1} parent=1 // pred_check
      _
    $region91: #{language_model_forward.1} parent=1 // pred_check_branch
      %3997 = sbr.rel (0) target = $region93
    $region92: #{language_model_forward.1} parent=1 // pred_region
      _
    $region93: #{language_model_forward.1} parent=1 // pred_fallthru
      _
    // Predicated region
    $region94: #{language_model_forward.1} parent=1 // pred_check
      _
    $region95: #{language_model_forward.1} parent=1 // pred_check_branch
      %3999 = sbr.rel (0) target = $region97
    $region96: #{language_model_forward.1} parent=1 // pred_region
      %s4001 = ssub.s32 192, 192
      %4002 = vsyncadd [#allocation11], %s4001
      %s4003 = sshll.u32 [#allocation23], 4
      %s4004 = int_to_ptr.vmem [resolvable:$true] %s4003
      %4009 = dma.vmem_to_hbm [thread:$0]  %s4004, 192, %s15, [#allocation11], 32, 32, 2
    $region97: #{language_model_forward.1} parent=1 // pred_fallthru
      _
    // Predicated region
    $region98: #{language_model_forward.1} parent=1 // pred_check
      _
    $region99: #{language_model_forward.1} parent=1 // pred_check_branch
      %4011 = sbr.rel (0) target = $region101
    $region100: #{language_model_forward.1} parent=1 // pred_region
      %s4013 = ssub.s32 192, 192
      %4014 = vsyncadd [#allocation25], %s4013
      %s4015 = sshll.u32 [#allocation24], 4
      %s4016 = int_to_ptr.vmem [resolvable:$true] %s4015
      %4021 = dma.vmem_to_hbm [thread:$0]  %s4016, 192, %s16, [#allocation25], 32, 32, 2
    $region101: #{language_model_forward.1} parent=1 // pred_fallthru
      _
    // Predicated region
    $region102: #{language_model_forward.1} parent=1 // pred_check
      _
    $region103: #{language_model_forward.1} parent=1 // pred_check_branch
      %4023 = sbr.rel (0) target = $region105
    $region104: #{language_model_forward.1} parent=1 // pred_region
      _
    $region105: #{language_model_forward.1} parent=1 // pred_fallthru
      _
    // Predicated region
    $region106: #{language_model_forward.1} parent=1 // pred_check
      _
    $region107: #{language_model_forward.1} parent=1 // pred_check_branch
      %4025 = sbr.rel (0) target = $region109
    $region108: #{language_model_forward.1} parent=1 // pred_region
      %4026 = dma.done [#allocation11], 192
    $region109: #{language_model_forward.1} parent=1 // pred_fallthru
      _
    // Predicated region
    $region110: #{language_model_forward.1} parent=1 // pred_check
      _
    $region111: #{language_model_forward.1} parent=1 // pred_check_branch
      %4028 = sbr.rel (0) target = $region113
    $region112: #{language_model_forward.1} parent=1 // pred_region
      %4029 = dma.done [#allocation25], 192
    $region113: #{language_model_forward.1} parent=1 // pred_fallthru
      _
    %4030 = vsyncpa [#allocation10], 1
    %4031 = vsyncpa [#allocation13], 1
    %4032 = vsyncpa [#allocation16], 1
    %4033 = vsyncpa [#allocation19], 1
    %4034 = vsyncpa [#allocation22], 1
    %4035 = vsyncpa [#allocation11], 1
    %4036 = vsyncpa [#allocation25], 1

</llo_original>
